<compile_context>
chip_gen: v7x
topology: tpu7x:2x2x1
jax: 0.10.0
libtpu: 0.0.40
codegen_flags: <defaults>
</compile_context>

<pallas_src>
from functools import partial

import jax
import jax.numpy as jnp
from jax import lax
from jax.experimental import pallas as pl
from jax.experimental.pallas import tpu as pltpu

BN_EPS = 1e-5
LANE = 128                           # lane width: hidden channels padded to this
SUBTILE = 16                         # padded inner-spatial stride (bf16 sublane tile)
VMEM_LIMIT_BYTES = 32 * 1024 * 1024  # << 64 MiB (v7x) and physical VMEM on v5e/v6e


def _round_up(n, m):
    return ((n + m - 1) // m) * m


# ---------------------------------------------------------------------------
# Fused kernel: conv(z)+BN, conv(x)+BN, depthwise xcorr — one batch element.
# ---------------------------------------------------------------------------

def _make_fused_kernel(hz, wz, hx, wx, cin, cp, wpad):
    hoz, woz = hz - 2, wz - 2         # z-branch feature (search map) spatial dims
    hox, wox = hx - 2, wx - 2         # x-branch feature (depthwise kernel) dims
    ho, wo = hoz - hox + 1, woz - wox + 1
    band_rows = wox + wo - 1          # = woz, columns of zf needed per (i, p)

    def conv_branch(inp_ref, w_ref, scale_ref, shift_ref, feat_ref, h_out):
        # Build the (h_out*wpad, 9*cin) im2col operand entirely in VMEM/registers:
        # nine shifted (h_out, wpad, cin) slabs, concatenated on the lane axis.
        slabs = []
        for p in range(3):
            for q in range(3):
                slabs.append(inp_ref[p:p + h_out, q:q + wpad, :])      # bf16
        a = jnp.concatenate(slabs, axis=-1)                            # (h_out, wpad, 9*cin)
        a = a.reshape(h_out * wpad, 9 * cin)                           # tile-aligned collapse
        # Single MXU matmul (f32 accumulation), f32 BN scale/shift in the epilogue.
        acc = jnp.dot(a, w_ref[...], preferred_element_type=jnp.float32)
        feat_ref[...] = acc * scale_ref[...] + shift_ref[...]

    def kernel(z_ref, x_ref, wz_ref, wx_ref, scz_ref, shz_ref, scx_ref, shx_ref,
               o_ref, zfeat_ref, xfeat_ref):
        # Both conv+BN branches; features stay resident in VMEM scratch.
        conv_branch(z_ref, wz_ref, scz_ref, shz_ref, zfeat_ref, hoz)
        conv_branch(x_ref, wx_ref, scx_ref, shx_ref, xfeat_ref, hox)

        # Depthwise cross-correlation, one output row at a time.
        for i in range(ho):
            accs = [jnp.zeros((wo, cp), jnp.float32),
                    jnp.zeros((wo, cp), jnp.float32)]
            t = 0
            for p in range(hox):
                row0 = (i + p) * wpad
                band = zfeat_ref[row0:row0 + band_rows, :]        # loaded once per (i, p)
                taps = xfeat_ref[p * wpad:p * wpad + wox, :]      # 6 taps in one load
                for q in range(wox):
                    accs[t & 1] = accs[t & 1] + band[q:q + wo, :] * taps[q]
                    t += 1
            o_ref[i] = accs[0] + accs[1]

    return kernel, (hoz, hox, ho, wo)


# ---------------------------------------------------------------------------
# Wrapper (keeps the PyTorch NCHW interface)
# ---------------------------------------------------------------------------

@partial(jax.jit, static_argnames=("hidden_dim",))
def siamfc_forward(z_nchw, x_nchw, z_params, x_params, *, hidden_dim):
    cin = z_nchw.shape[1]
    cp = _round_up(hidden_dim, LANE)

    B, _, hz, wz = z_nchw.shape
    _, _, hx, wx = x_nchw.shape
    wpad = _round_up(max(wz, wx) - 2, SUBTILE)      # padded inner-spatial stride
    win = wpad + 2                                   # padded input width

    def prep_weights(p):
        # OIHW -> (kh, kw, Cin, Cout) -> (9*Cin, Cout); pad Cout to 128, bf16.
        w2 = jnp.transpose(p["w"], (2, 3, 1, 0)).reshape(9 * cin, hidden_dim)
        w2 = jnp.pad(w2, ((0, 0), (0, cp - hidden_dim))).astype(jnp.bfloat16)
        scale = p["gamma"] / jnp.sqrt(p["var"] + BN_EPS)
        shift = p["beta"] + (p["b"] - p["mean"]) * scale
        scale = jnp.pad(scale, (0, cp - hidden_dim)).reshape(1, cp).astype(jnp.float32)
        shift = jnp.pad(shift, (0, cp - hidden_dim)).reshape(1, cp).astype(jnp.float32)
        return w2, scale, shift

    wz_w, scz, shz = prep_weights(z_params)
    wx_w, scx, shx = prep_weights(x_params)

    def prep_input(a):
        # NCHW -> NHWC, zero-pad W so every in-kernel tap slab stays in range, bf16.
        a = jnp.transpose(a, (0, 2, 3, 1))
        a = jnp.pad(a, ((0, 0), (0, 0), (0, win - a.shape[2]), (0, 0)))
        return a.astype(jnp.bfloat16)

    z_in = prep_input(z_nchw)                        # (B, Hz, win, Cin)
    x_in = prep_input(x_nchw)                        # (B, Hx, win, Cin)

    kernel, (hoz, hox, ho, wo) = _make_fused_kernel(hz, wz, hx, wx, cin, cp, wpad)

    out_nhwc = pl.pallas_call(
        kernel,
        out_shape=jax.ShapeDtypeStruct((B, ho, wo, cp), jnp.float32),
        grid=(B,),
        in_specs=[
            pl.BlockSpec((None, hz, win, cin), lambda b: (b, 0, 0, 0)),
            pl.BlockSpec((None, hx, win, cin), lambda b: (b, 0, 0, 0)),
            pl.BlockSpec((9 * cin, cp), lambda b: (0, 0)),
            pl.BlockSpec((9 * cin, cp), lambda b: (0, 0)),
            pl.BlockSpec((1, cp), lambda b: (0, 0)),
            pl.BlockSpec((1, cp), lambda b: (0, 0)),
            pl.BlockSpec((1, cp), lambda b: (0, 0)),
            pl.BlockSpec((1, cp), lambda b: (0, 0)),
        ],
        out_specs=pl.BlockSpec((None, ho, wo, cp), lambda b: (b, 0, 0, 0)),
        scratch_shapes=[
            pltpu.VMEM((hoz * wpad, cp), jnp.float32),   # z-branch feature (search map)
            pltpu.VMEM((hox * wpad, cp), jnp.float32),   # x-branch feature (kernel)
        ],
        compiler_params=pltpu.CompilerParams(
            dimension_semantics=("parallel",),
            vmem_limit_bytes=VMEM_LIMIT_BYTES),
    )(z_in, x_in, wz_w, wx_w, scz, shz, scx, shx)

    out_nhwc = out_nhwc[..., :hidden_dim]            # drop zero lane padding (tiny)
    return jnp.transpose(out_nhwc, (0, 3, 1, 2))     # back to NCHW


# ---------------------------------------------------------------------------
# Module
# ---------------------------------------------------------------------------

class SiamFCXCorrPallas:
    def __init__(self, input_dim: int, hidden_dim: int, key):
        keys = jax.random.split(key, 12)
        self.hidden_dim = hidden_dim

        def branch(ks):
            return dict(
                # conv weight ~ normal(std=0.01), matching _initialize_weights
                w=0.01 * jax.random.normal(ks[0], (hidden_dim, input_dim, 3, 3), jnp.float32),
                b=0.01 * jax.random.normal(ks[1], (hidden_dim,), jnp.float32),
                gamma=1.0 + 0.1 * jax.random.normal(ks[2], (hidden_dim,), jnp.float32),
                beta=0.1 * jax.random.normal(ks[3], (hidden_dim,), jnp.float32),
                mean=0.1 * jax.random.normal(ks[4], (hidden_dim,), jnp.float32),
                var=1.0 + 0.5 * jax.random.uniform(ks[5], (hidden_dim,), jnp.float32),
            )

        self.z_params = branch(keys[:6])
        self.x_params = branch(keys[6:])

    def __call__(self, z_nchw, x_nchw):
        return siamfc_forward(z_nchw, x_nchw, self.z_params, self.x_params,
                              hidden_dim=self.hidden_dim)


# ---------------------------------------------------------------------------
# Pure-JAX f32 reference (independent, via lax.conv_general_dilated)
# ---------------------------------------------------------------------------

def _ref_conv_bn(inp, p):
    y = lax.conv_general_dilated(
        inp, p["w"], (1, 1), "VALID",
        dimension_numbers=("NCHW", "OIHW", "NCHW"),
        precision=lax.Precision.HIGHEST)
    y = y + p["b"][None, :, None, None]
    return (p["gamma"][None, :, None, None] * (y - p["mean"][None, :, None, None])
            / jnp.sqrt(p["var"][None, :, None, None] + BN_EPS)
            + p["beta"][None, :, None, None])


def ref_forward(z_nchw, x_nchw, z_params, x_params):
    zf = _ref_conv_bn(z_nchw, z_params)
    xf = _ref_conv_bn(x_nchw, x_params)
    B, C, Hs, Ws = zf.shape
    _, _, Hk, Wk = xf.shape
    lhs = zf.reshape(1, B * C, Hs, Ws)
    rhs = xf.reshape(B * C, 1, Hk, Wk)
    out = lax.conv_general_dilated(
        lhs, rhs, (1, 1), "VALID",
        dimension_numbers=("NCHW", "OIHW", "NCHW"),
        feature_group_count=B * C,
        precision=lax.Precision.HIGHEST)
    return out.reshape(B, C, Hs - Hk + 1, Ws - Wk + 1)


# ---------------------------------------------------------------------------

if __name__ == "__main__":
    key = jax.random.PRNGKey(0)
    k_param, k_z, k_x = jax.random.split(key, 3)

    input_dim, hidden_dim = 4, 32
    # z: template-branch input, x: search-branch input (NCHW, like the PyTorch module)
    z = jax.random.normal(k_z, (2, input_dim, 16, 16), jnp.float32)
    x = jax.random.normal(k_x, (2, input_dim, 8, 8), jnp.float32)

    module = SiamFCXCorrPallas(input_dim, hidden_dim, k_param)

    out = jax.block_until_ready(module(z, x))
    ref = jax.block_until_ready(ref_forward(z, x, module.z_params, module.x_params))

    assert out.shape == ref.shape == (2, hidden_dim, 9, 9), (out.shape, ref.shape)
    # Conv matmuls run with bf16 inputs/weights on the MXU (f32 accumulation,
    # f32 BN scale/shift), so the tolerance is looser than pure-f32 would need.
    max_err = float(jnp.max(jnp.abs(out - ref)))
    assert jnp.allclose(out, ref, atol=3e-2, rtol=3e-2), max_err

    print("KERNEL_OK")
</pallas_src>

<mosaic_0001>
module attributes {stable_mosaic.version = 11 : i64} {
  func.func @kernel(%arg0: i32, %arg1: memref<1x16x18x4xbf16, #tpu.memory_space<vmem>>, %arg2: memref<1x8x18x4xbf16, #tpu.memory_space<vmem>>, %arg3: memref<36x128xbf16, #tpu.memory_space<vmem>>, %arg4: memref<36x128xbf16, #tpu.memory_space<vmem>>, %arg5: memref<1x128xf32, #tpu.memory_space<vmem>>, %arg6: memref<1x128xf32, #tpu.memory_space<vmem>>, %arg7: memref<1x128xf32, #tpu.memory_space<vmem>>, %arg8: memref<1x128xf32, #tpu.memory_space<vmem>>, %arg9: memref<1x9x9x128xf32, #tpu.memory_space<vmem>>, %arg10: memref<224x128xf32, #tpu.memory_space<vmem>>, %arg11: memref<96x128xf32, #tpu.memory_space<vmem>>) attributes {dimension_semantics = [#tpu.dimension_semantics<parallel>], iteration_bounds = array<i64: 2>, scalar_prefetch = 0 : i64, scratch_operands = 2 : i64, tpu.core_type = #tpu.core_type<tc>, window_params = [{transform_indices = @transform_0, window_bounds = array<i64: 1, 16, 18, 4>}, {transform_indices = @transform_1, window_bounds = array<i64: 1, 8, 18, 4>}, {pipeline_mode = #tpu.pipeline_mode<synchronous>, transform_indices = @transform_2, window_bounds = array<i64: 36, 128>}, {pipeline_mode = #tpu.pipeline_mode<synchronous>, transform_indices = @transform_3, window_bounds = array<i64: 36, 128>}, {pipeline_mode = #tpu.pipeline_mode<synchronous>, transform_indices = @transform_4, window_bounds = array<i64: 1, 128>}, {pipeline_mode = #tpu.pipeline_mode<synchronous>, transform_indices = @transform_5, window_bounds = array<i64: 1, 128>}, {pipeline_mode = #tpu.pipeline_mode<synchronous>, transform_indices = @transform_6, window_bounds = array<i64: 1, 128>}, {pipeline_mode = #tpu.pipeline_mode<synchronous>, transform_indices = @transform_7, window_bounds = array<i64: 1, 128>}, {transform_indices = @transform_8, window_bounds = array<i64: 1, 9, 9, 128>}]} {
    %c0 = arith.constant 0 : index
    %c0_0 = arith.constant 0 : index
    %c0_1 = arith.constant 0 : index
    %c0_2 = arith.constant 0 : index
    %0 = vector.load %arg1[%c0, %c0_0, %c0_1, %c0_2] : memref<1x16x18x4xbf16, #tpu.memory_space<vmem>>, vector<1x14x16x4xbf16>
    %1 = vector.shape_cast %0 : vector<1x14x16x4xbf16> to vector<14x16x4xbf16>
    %c0_3 = arith.constant 0 : index
    %c0_4 = arith.constant 0 : index
    %c1 = arith.constant 1 : index
    %c0_5 = arith.constant 0 : index
    %2 = vector.load %arg1[%c0_3, %c0_4, %c1, %c0_5] : memref<1x16x18x4xbf16, #tpu.memory_space<vmem>>, vector<1x14x16x4xbf16>
    %3 = vector.shape_cast %2 : vector<1x14x16x4xbf16> to vector<14x16x4xbf16>
    %c0_6 = arith.constant 0 : index
    %c0_7 = arith.constant 0 : index
    %c2 = arith.constant 2 : index
    %c0_8 = arith.constant 0 : index
    %4 = vector.load %arg1[%c0_6, %c0_7, %c2, %c0_8] : memref<1x16x18x4xbf16, #tpu.memory_space<vmem>>, vector<1x14x16x4xbf16>
    %5 = vector.shape_cast %4 : vector<1x14x16x4xbf16> to vector<14x16x4xbf16>
    %c0_9 = arith.constant 0 : index
    %c1_10 = arith.constant 1 : index
    %c0_11 = arith.constant 0 : index
    %c0_12 = arith.constant 0 : index
    %6 = vector.load %arg1[%c0_9, %c1_10, %c0_11, %c0_12] : memref<1x16x18x4xbf16, #tpu.memory_space<vmem>>, vector<1x14x16x4xbf16>
    %7 = vector.shape_cast %6 : vector<1x14x16x4xbf16> to vector<14x16x4xbf16>
    %c0_13 = arith.constant 0 : index
    %c1_14 = arith.constant 1 : index
    %c1_15 = arith.constant 1 : index
    %c0_16 = arith.constant 0 : index
    %8 = vector.load %arg1[%c0_13, %c1_14, %c1_15, %c0_16] : memref<1x16x18x4xbf16, #tpu.memory_space<vmem>>, vector<1x14x16x4xbf16>
    %9 = vector.shape_cast %8 : vector<1x14x16x4xbf16> to vector<14x16x4xbf16>
    %c0_17 = arith.constant 0 : index
    %c1_18 = arith.constant 1 : index
    %c2_19 = arith.constant 2 : index
    %c0_20 = arith.constant 0 : index
    %10 = vector.load %arg1[%c0_17, %c1_18, %c2_19, %c0_20] : memref<1x16x18x4xbf16, #tpu.memory_space<vmem>>, vector<1x14x16x4xbf16>
    %11 = vector.shape_cast %10 : vector<1x14x16x4xbf16> to vector<14x16x4xbf16>
    %c0_21 = arith.constant 0 : index
    %c2_22 = arith.constant 2 : index
    %c0_23 = arith.constant 0 : index
    %c0_24 = arith.constant 0 : index
    %12 = vector.load %arg1[%c0_21, %c2_22, %c0_23, %c0_24] : memref<1x16x18x4xbf16, #tpu.memory_space<vmem>>, vector<1x14x16x4xbf16>
    %13 = vector.shape_cast %12 : vector<1x14x16x4xbf16> to vector<14x16x4xbf16>
    %c0_25 = arith.constant 0 : index
    %c2_26 = arith.constant 2 : index
    %c1_27 = arith.constant 1 : index
    %c0_28 = arith.constant 0 : index
    %14 = vector.load %arg1[%c0_25, %c2_26, %c1_27, %c0_28] : memref<1x16x18x4xbf16, #tpu.memory_space<vmem>>, vector<1x14x16x4xbf16>
    %15 = vector.shape_cast %14 : vector<1x14x16x4xbf16> to vector<14x16x4xbf16>
    %c0_29 = arith.constant 0 : index
    %c2_30 = arith.constant 2 : index
    %c2_31 = arith.constant 2 : index
    %c0_32 = arith.constant 0 : index
    %16 = vector.load %arg1[%c0_29, %c2_30, %c2_31, %c0_32] : memref<1x16x18x4xbf16, #tpu.memory_space<vmem>>, vector<1x14x16x4xbf16>
    %17 = vector.shape_cast %16 : vector<1x14x16x4xbf16> to vector<14x16x4xbf16>
    %18 = tpu.concatenate %1, %3, %5, %7, %9, %11, %13, %15, %17 in 2 : vector<14x16x4xbf16>, vector<14x16x4xbf16>, vector<14x16x4xbf16>, vector<14x16x4xbf16>, vector<14x16x4xbf16>, vector<14x16x4xbf16>, vector<14x16x4xbf16>, vector<14x16x4xbf16>, vector<14x16x4xbf16> -> vector<14x16x36xbf16>
    %19 = vector.shape_cast %18 : vector<14x16x36xbf16> to vector<224x36xbf16>
    %c0_33 = arith.constant 0 : index
    %c0_34 = arith.constant 0 : index
    %20 = vector.load %arg3[%c0_33, %c0_34] : memref<36x128xbf16, #tpu.memory_space<vmem>>, vector<36x128xbf16>
    %cst = arith.constant dense<0.000000e+00> : vector<224x128xf32>
    %21 = tpu.matmul %19, %20, %cst {dimension_numbers = #tpu.dot_dimension_numbers<[1], [0], [0], [1], [0, 0, 1, 1], [], []>} : vector<224x36xbf16>, vector<36x128xbf16>, vector<224x128xf32> -> vector<224x128xf32>
    %c0_35 = arith.constant 0 : index
    %c0_36 = arith.constant 0 : index
    %22 = vector.load %arg5[%c0_35, %c0_36] : memref<1x128xf32, #tpu.memory_space<vmem>>, vector<1x128xf32>
    %23 = vector.broadcast %22 : vector<1x128xf32> to vector<224x128xf32>
    %24 = arith.mulf %21, %23 : vector<224x128xf32>
    %c0_37 = arith.constant 0 : index
    %c0_38 = arith.constant 0 : index
    %25 = vector.load %arg6[%c0_37, %c0_38] : memref<1x128xf32, #tpu.memory_space<vmem>>, vector<1x128xf32>
    %26 = vector.broadcast %25 : vector<1x128xf32> to vector<224x128xf32>
    %27 = arith.addf %24, %26 : vector<224x128xf32>
    %c0_39 = arith.constant 0 : index
    %c0_40 = arith.constant 0 : index
    %28 = vector.load %arg10[%c0_39, %c0_40] : memref<224x128xf32, #tpu.memory_space<vmem>>, vector<224x128xf32>
    tpu.vector_store %arg10[%c0_39, %c0_40], %27 {strides = array<i32>} : memref<224x128xf32, #tpu.memory_space<vmem>>, vector<224x128xf32>,
    %c0_41 = arith.constant 0 : index
    %c0_42 = arith.constant 0 : index
    %c0_43 = arith.constant 0 : index
    %c0_44 = arith.constant 0 : index
    %29 = vector.load %arg2[%c0_41, %c0_42, %c0_43, %c0_44] : memref<1x8x18x4xbf16, #tpu.memory_space<vmem>>, vector<1x6x16x4xbf16>
    %30 = vector.shape_cast %29 : vector<1x6x16x4xbf16> to vector<6x16x4xbf16>
    %c0_45 = arith.constant 0 : index
    %c0_46 = arith.constant 0 : index
    %c1_47 = arith.constant 1 : index
    %c0_48 = arith.constant 0 : index
    %31 = vector.load %arg2[%c0_45, %c0_46, %c1_47, %c0_48] : memref<1x8x18x4xbf16, #tpu.memory_space<vmem>>, vector<1x6x16x4xbf16>
    %32 = vector.shape_cast %31 : vector<1x6x16x4xbf16> to vector<6x16x4xbf16>
    %c0_49 = arith.constant 0 : index
    %c0_50 = arith.constant 0 : index
    %c2_51 = arith.constant 2 : index
    %c0_52 = arith.constant 0 : index
    %33 = vector.load %arg2[%c0_49, %c0_50, %c2_51, %c0_52] : memref<1x8x18x4xbf16, #tpu.memory_space<vmem>>, vector<1x6x16x4xbf16>
    %34 = vector.shape_cast %33 : vector<1x6x16x4xbf16> to vector<6x16x4xbf16>
    %c0_53 = arith.constant 0 : index
    %c1_54 = arith.constant 1 : index
    %c0_55 = arith.constant 0 : index
    %c0_56 = arith.constant 0 : index
    %35 = vector.load %arg2[%c0_53, %c1_54, %c0_55, %c0_56] : memref<1x8x18x4xbf16, #tpu.memory_space<vmem>>, vector<1x6x16x4xbf16>
    %36 = vector.shape_cast %35 : vector<1x6x16x4xbf16> to vector<6x16x4xbf16>
    %c0_57 = arith.constant 0 : index
    %c1_58 = arith.constant 1 : index
    %c1_59 = arith.constant 1 : index
    %c0_60 = arith.constant 0 : index
    %37 = vector.load %arg2[%c0_57, %c1_58, %c1_59, %c0_60] : memref<1x8x18x4xbf16, #tpu.memory_space<vmem>>, vector<1x6x16x4xbf16>
    %38 = vector.shape_cast %37 : vector<1x6x16x4xbf16> to vector<6x16x4xbf16>
    %c0_61 = arith.constant 0 : index
    %c1_62 = arith.constant 1 : index
    %c2_63 = arith.constant 2 : index
    %c0_64 = arith.constant 0 : index
    %39 = vector.load %arg2[%c0_61, %c1_62, %c2_63, %c0_64] : memref<1x8x18x4xbf16, #tpu.memory_space<vmem>>, vector<1x6x16x4xbf16>
    %40 = vector.shape_cast %39 : vector<1x6x16x4xbf16> to vector<6x16x4xbf16>
    %c0_65 = arith.constant 0 : index
    %c2_66 = arith.constant 2 : index
    %c0_67 = arith.constant 0 : index
    %c0_68 = arith.constant 0 : index
    %41 = vector.load %arg2[%c0_65, %c2_66, %c0_67, %c0_68] : memref<1x8x18x4xbf16, #tpu.memory_space<vmem>>, vector<1x6x16x4xbf16>
    %42 = vector.shape_cast %41 : vector<1x6x16x4xbf16> to vector<6x16x4xbf16>
    %c0_69 = arith.constant 0 : index
    %c2_70 = arith.constant 2 : index
    %c1_71 = arith.constant 1 : index
    %c0_72 = arith.constant 0 : index
    %43 = vector.load %arg2[%c0_69, %c2_70, %c1_71, %c0_72] : memref<1x8x18x4xbf16, #tpu.memory_space<vmem>>, vector<1x6x16x4xbf16>
    %44 = vector.shape_cast %43 : vector<1x6x16x4xbf16> to vector<6x16x4xbf16>
    %c0_73 = arith.constant 0 : index
    %c2_74 = arith.constant 2 : index
    %c2_75 = arith.constant 2 : index
    %c0_76 = arith.constant 0 : index
    %45 = vector.load %arg2[%c0_73, %c2_74, %c2_75, %c0_76] : memref<1x8x18x4xbf16, #tpu.memory_space<vmem>>, vector<1x6x16x4xbf16>
    %46 = vector.shape_cast %45 : vector<1x6x16x4xbf16> to vector<6x16x4xbf16>
    %47 = tpu.concatenate %30, %32, %34, %36, %38, %40, %42, %44, %46 in 2 : vector<6x16x4xbf16>, vector<6x16x4xbf16>, vector<6x16x4xbf16>, vector<6x16x4xbf16>, vector<6x16x4xbf16>, vector<6x16x4xbf16>, vector<6x16x4xbf16>, vector<6x16x4xbf16>, vector<6x16x4xbf16> -> vector<6x16x36xbf16>
    %48 = vector.shape_cast %47 : vector<6x16x36xbf16> to vector<96x36xbf16>
    %c0_77 = arith.constant 0 : index
    %c0_78 = arith.constant 0 : index
    %49 = vector.load %arg4[%c0_77, %c0_78] : memref<36x128xbf16, #tpu.memory_space<vmem>>, vector<36x128xbf16>
    %cst_79 = arith.constant dense<0.000000e+00> : vector<96x128xf32>
    %50 = tpu.matmul %48, %49, %cst_79 {dimension_numbers = #tpu.dot_dimension_numbers<[1], [0], [0], [1], [0, 0, 1, 1], [], []>} : vector<96x36xbf16>, vector<36x128xbf16>, vector<96x128xf32> -> vector<96x128xf32>
    %c0_80 = arith.constant 0 : index
    %c0_81 = arith.constant 0 : index
    %51 = vector.load %arg7[%c0_80, %c0_81] : memref<1x128xf32, #tpu.memory_space<vmem>>, vector<1x128xf32>
    %52 = vector.broadcast %51 : vector<1x128xf32> to vector<96x128xf32>
    %53 = arith.mulf %50, %52 : vector<96x128xf32>
    %c0_82 = arith.constant 0 : index
    %c0_83 = arith.constant 0 : index
    %54 = vector.load %arg8[%c0_82, %c0_83] : memref<1x128xf32, #tpu.memory_space<vmem>>, vector<1x128xf32>
    %55 = vector.broadcast %54 : vector<1x128xf32> to vector<96x128xf32>
    %56 = arith.addf %53, %55 : vector<96x128xf32>
    %c0_84 = arith.constant 0 : index
    %c0_85 = arith.constant 0 : index
    %57 = vector.load %arg11[%c0_84, %c0_85] : memref<96x128xf32, #tpu.memory_space<vmem>>, vector<96x128xf32>
    tpu.vector_store %arg11[%c0_84, %c0_85], %56 {strides = array<i32>} : memref<96x128xf32, #tpu.memory_space<vmem>>, vector<96x128xf32>,
    %cst_86 = arith.constant 0.000000e+00 : f32
    %58 = vector.broadcast %cst_86 : f32 to vector<9x128xf32>
    %cst_87 = arith.constant 0.000000e+00 : f32
    %59 = vector.broadcast %cst_87 : f32 to vector<9x128xf32>
    %c0_88 = arith.constant 0 : index
    %c0_89 = arith.constant 0 : index
    %60 = vector.load %arg10[%c0_88, %c0_89] : memref<224x128xf32, #tpu.memory_space<vmem>>, vector<14x128xf32>
    %c0_90 = arith.constant 0 : index
    %c0_91 = arith.constant 0 : index
    %61 = vector.load %arg11[%c0_90, %c0_91] : memref<96x128xf32, #tpu.memory_space<vmem>>, vector<6x128xf32>
    %62 = vector.extract_strided_slice %60 {offsets = [0, 0], sizes = [9, 128], strides = [1, 1]} : vector<14x128xf32> to vector<9x128xf32>
    %63 = vector.extract_strided_slice %61 {offsets = [0, 0], sizes = [1, 128], strides = [1, 1]} : vector<6x128xf32> to vector<1x128xf32>
    %64 = vector.shape_cast %63 : vector<1x128xf32> to vector<128xf32>
    %65 = vector.shape_cast %64 : vector<128xf32> to vector<1x128xf32>
    %66 = vector.broadcast %65 : vector<1x128xf32> to vector<9x128xf32>
    %67 = arith.mulf %62, %66 : vector<9x128xf32>
    %68 = arith.addf %58, %67 : vector<9x128xf32>
    %69 = vector.extract_strided_slice %60 {offsets = [1, 0], sizes = [9, 128], strides = [1, 1]} : vector<14x128xf32> to vector<9x128xf32>
    %70 = vector.extract_strided_slice %61 {offsets = [1, 0], sizes = [1, 128], strides = [1, 1]} : vector<6x128xf32> to vector<1x128xf32>
    %71 = vector.shape_cast %70 : vector<1x128xf32> to vector<128xf32>
    %72 = vector.shape_cast %71 : vector<128xf32> to vector<1x128xf32>
    %73 = vector.broadcast %72 : vector<1x128xf32> to vector<9x128xf32>
    %74 = arith.mulf %69, %73 : vector<9x128xf32>
    %75 = arith.addf %59, %74 : vector<9x128xf32>
    %76 = vector.extract_strided_slice %60 {offsets = [2, 0], sizes = [9, 128], strides = [1, 1]} : vector<14x128xf32> to vector<9x128xf32>
    %77 = vector.extract_strided_slice %61 {offsets = [2, 0], sizes = [1, 128], strides = [1, 1]} : vector<6x128xf32> to vector<1x128xf32>
    %78 = vector.shape_cast %77 : vector<1x128xf32> to vector<128xf32>
    %79 = vector.shape_cast %78 : vector<128xf32> to vector<1x128xf32>
    %80 = vector.broadcast %79 : vector<1x128xf32> to vector<9x128xf32>
    %81 = arith.mulf %76, %80 : vector<9x128xf32>
    %82 = arith.addf %68, %81 : vector<9x128xf32>
    %83 = vector.extract_strided_slice %60 {offsets = [3, 0], sizes = [9, 128], strides = [1, 1]} : vector<14x128xf32> to vector<9x128xf32>
    %84 = vector.extract_strided_slice %61 {offsets = [3, 0], sizes = [1, 128], strides = [1, 1]} : vector<6x128xf32> to vector<1x128xf32>
    %85 = vector.shape_cast %84 : vector<1x128xf32> to vector<128xf32>
    %86 = vector.shape_cast %85 : vector<128xf32> to vector<1x128xf32>
    %87 = vector.broadcast %86 : vector<1x128xf32> to vector<9x128xf32>
    %88 = arith.mulf %83, %87 : vector<9x128xf32>
    %89 = arith.addf %75, %88 : vector<9x128xf32>
    %90 = vector.extract_strided_slice %60 {offsets = [4, 0], sizes = [9, 128], strides = [1, 1]} : vector<14x128xf32> to vector<9x128xf32>
    %91 = vector.extract_strided_slice %61 {offsets = [4, 0], sizes = [1, 128], strides = [1, 1]} : vector<6x128xf32> to vector<1x128xf32>
    %92 = vector.shape_cast %91 : vector<1x128xf32> to vector<128xf32>
    %93 = vector.shape_cast %92 : vector<128xf32> to vector<1x128xf32>
    %94 = vector.broadcast %93 : vector<1x128xf32> to vector<9x128xf32>
    %95 = arith.mulf %90, %94 : vector<9x128xf32>
    %96 = arith.addf %82, %95 : vector<9x128xf32>
    %97 = vector.extract_strided_slice %60 {offsets = [5, 0], sizes = [9, 128], strides = [1, 1]} : vector<14x128xf32> to vector<9x128xf32>
    %98 = vector.extract_strided_slice %61 {offsets = [5, 0], sizes = [1, 128], strides = [1, 1]} : vector<6x128xf32> to vector<1x128xf32>
    %99 = vector.shape_cast %98 : vector<1x128xf32> to vector<128xf32>
    %100 = vector.shape_cast %99 : vector<128xf32> to vector<1x128xf32>
    %101 = vector.broadcast %100 : vector<1x128xf32> to vector<9x128xf32>
    %102 = arith.mulf %97, %101 : vector<9x128xf32>
    %103 = arith.addf %89, %102 : vector<9x128xf32>
    %c16 = arith.constant 16 : index
    %c0_92 = arith.constant 0 : index
    %104 = vector.load %arg10[%c16, %c0_92] : memref<224x128xf32, #tpu.memory_space<vmem>>, vector<14x128xf32>
    %c16_93 = arith.constant 16 : index
    %c0_94 = arith.constant 0 : index
    %105 = vector.load %arg11[%c16_93, %c0_94] : memref<96x128xf32, #tpu.memory_space<vmem>>, vector<6x128xf32>
    %106 = vector.extract_strided_slice %104 {offsets = [0, 0], sizes = [9, 128], strides = [1, 1]} : vector<14x128xf32> to vector<9x128xf32>
    %107 = vector.extract_strided_slice %105 {offsets = [0, 0], sizes = [1, 128], strides = [1, 1]} : vector<6x128xf32> to vector<1x128xf32>
    %108 = vector.shape_cast %107 : vector<1x128xf32> to vector<128xf32>
    %109 = vector.shape_cast %108 : vector<128xf32> to vector<1x128xf32>
    %110 = vector.broadcast %109 : vector<1x128xf32> to vector<9x128xf32>
    %111 = arith.mulf %106, %110 : vector<9x128xf32>
    %112 = arith.addf %96, %111 : vector<9x128xf32>
    %113 = vector.extract_strided_slice %104 {offsets = [1, 0], sizes = [9, 128], strides = [1, 1]} : vector<14x128xf32> to vector<9x128xf32>
    %114 = vector.extract_strided_slice %105 {offsets = [1, 0], sizes = [1, 128], strides = [1, 1]} : vector<6x128xf32> to vector<1x128xf32>
    %115 = vector.shape_cast %114 : vector<1x128xf32> to vector<128xf32>
    %116 = vector.shape_cast %115 : vector<128xf32> to vector<1x128xf32>
    %117 = vector.broadcast %116 : vector<1x128xf32> to vector<9x128xf32>
    %118 = arith.mulf %113, %117 : vector<9x128xf32>
    %119 = arith.addf %103, %118 : vector<9x128xf32>
    %120 = vector.extract_strided_slice %104 {offsets = [2, 0], sizes = [9, 128], strides = [1, 1]} : vector<14x128xf32> to vector<9x128xf32>
    %121 = vector.extract_strided_slice %105 {offsets = [2, 0], sizes = [1, 128], strides = [1, 1]} : vector<6x128xf32> to vector<1x128xf32>
    %122 = vector.shape_cast %121 : vector<1x128xf32> to vector<128xf32>
    %123 = vector.shape_cast %122 : vector<128xf32> to vector<1x128xf32>
    %124 = vector.broadcast %123 : vector<1x128xf32> to vector<9x128xf32>
    %125 = arith.mulf %120, %124 : vector<9x128xf32>
    %126 = arith.addf %112, %125 : vector<9x128xf32>
    %127 = vector.extract_strided_slice %104 {offsets = [3, 0], sizes = [9, 128], strides = [1, 1]} : vector<14x128xf32> to vector<9x128xf32>
    %128 = vector.extract_strided_slice %105 {offsets = [3, 0], sizes = [1, 128], strides = [1, 1]} : vector<6x128xf32> to vector<1x128xf32>
    %129 = vector.shape_cast %128 : vector<1x128xf32> to vector<128xf32>
    %130 = vector.shape_cast %129 : vector<128xf32> to vector<1x128xf32>
    %131 = vector.broadcast %130 : vector<1x128xf32> to vector<9x128xf32>
    %132 = arith.mulf %127, %131 : vector<9x128xf32>
    %133 = arith.addf %119, %132 : vector<9x128xf32>
    %134 = vector.extract_strided_slice %104 {offsets = [4, 0], sizes = [9, 128], strides = [1, 1]} : vector<14x128xf32> to vector<9x128xf32>
    %135 = vector.extract_strided_slice %105 {offsets = [4, 0], sizes = [1, 128], strides = [1, 1]} : vector<6x128xf32> to vector<1x128xf32>
    %136 = vector.shape_cast %135 : vector<1x128xf32> to vector<128xf32>
    %137 = vector.shape_cast %136 : vector<128xf32> to vector<1x128xf32>
    %138 = vector.broadcast %137 : vector<1x128xf32> to vector<9x128xf32>
    %139 = arith.mulf %134, %138 : vector<9x128xf32>
    %140 = arith.addf %126, %139 : vector<9x128xf32>
    %141 = vector.extract_strided_slice %104 {offsets = [5, 0], sizes = [9, 128], strides = [1, 1]} : vector<14x128xf32> to vector<9x128xf32>
    %142 = vector.extract_strided_slice %105 {offsets = [5, 0], sizes = [1, 128], strides = [1, 1]} : vector<6x128xf32> to vector<1x128xf32>
    %143 = vector.shape_cast %142 : vector<1x128xf32> to vector<128xf32>
    %144 = vector.shape_cast %143 : vector<128xf32> to vector<1x128xf32>
    %145 = vector.broadcast %144 : vector<1x128xf32> to vector<9x128xf32>
    %146 = arith.mulf %141, %145 : vector<9x128xf32>
    %147 = arith.addf %133, %146 : vector<9x128xf32>
    %c32 = arith.constant 32 : index
    %c0_95 = arith.constant 0 : index
    %148 = vector.load %arg10[%c32, %c0_95] : memref<224x128xf32, #tpu.memory_space<vmem>>, vector<14x128xf32>
    %c32_96 = arith.constant 32 : index
    %c0_97 = arith.constant 0 : index
    %149 = vector.load %arg11[%c32_96, %c0_97] : memref<96x128xf32, #tpu.memory_space<vmem>>, vector<6x128xf32>
    %150 = vector.extract_strided_slice %148 {offsets = [0, 0], sizes = [9, 128], strides = [1, 1]} : vector<14x128xf32> to vector<9x128xf32>
    %151 = vector.extract_strided_slice %149 {offsets = [0, 0], sizes = [1, 128], strides = [1, 1]} : vector<6x128xf32> to vector<1x128xf32>
    %152 = vector.shape_cast %151 : vector<1x128xf32> to vector<128xf32>
    %153 = vector.shape_cast %152 : vector<128xf32> to vector<1x128xf32>
    %154 = vector.broadcast %153 : vector<1x128xf32> to vector<9x128xf32>
    %155 = arith.mulf %150, %154 : vector<9x128xf32>
    %156 = arith.addf %140, %155 : vector<9x128xf32>
    %157 = vector.extract_strided_slice %148 {offsets = [1, 0], sizes = [9, 128], strides = [1, 1]} : vector<14x128xf32> to vector<9x128xf32>
    %158 = vector.extract_strided_slice %149 {offsets = [1, 0], sizes = [1, 128], strides = [1, 1]} : vector<6x128xf32> to vector<1x128xf32>
    %159 = vector.shape_cast %158 : vector<1x128xf32> to vector<128xf32>
    %160 = vector.shape_cast %159 : vector<128xf32> to vector<1x128xf32>
    %161 = vector.broadcast %160 : vector<1x128xf32> to vector<9x128xf32>
    %162 = arith.mulf %157, %161 : vector<9x128xf32>
    %163 = arith.addf %147, %162 : vector<9x128xf32>
    %164 = vector.extract_strided_slice %148 {offsets = [2, 0], sizes = [9, 128], strides = [1, 1]} : vector<14x128xf32> to vector<9x128xf32>
    %165 = vector.extract_strided_slice %149 {offsets = [2, 0], sizes = [1, 128], strides = [1, 1]} : vector<6x128xf32> to vector<1x128xf32>
    %166 = vector.shape_cast %165 : vector<1x128xf32> to vector<128xf32>
    %167 = vector.shape_cast %166 : vector<128xf32> to vector<1x128xf32>
    %168 = vector.broadcast %167 : vector<1x128xf32> to vector<9x128xf32>
    %169 = arith.mulf %164, %168 : vector<9x128xf32>
    %170 = arith.addf %156, %169 : vector<9x128xf32>
    %171 = vector.extract_strided_slice %148 {offsets = [3, 0], sizes = [9, 128], strides = [1, 1]} : vector<14x128xf32> to vector<9x128xf32>
    %172 = vector.extract_strided_slice %149 {offsets = [3, 0], sizes = [1, 128], strides = [1, 1]} : vector<6x128xf32> to vector<1x128xf32>
    %173 = vector.shape_cast %172 : vector<1x128xf32> to vector<128xf32>
    %174 = vector.shape_cast %173 : vector<128xf32> to vector<1x128xf32>
    %175 = vector.broadcast %174 : vector<1x128xf32> to vector<9x128xf32>
    %176 = arith.mulf %171, %175 : vector<9x128xf32>
    %177 = arith.addf %163, %176 : vector<9x128xf32>
    %178 = vector.extract_strided_slice %148 {offsets = [4, 0], sizes = [9, 128], strides = [1, 1]} : vector<14x128xf32> to vector<9x128xf32>
    %179 = vector.extract_strided_slice %149 {offsets = [4, 0], sizes = [1, 128], strides = [1, 1]} : vector<6x128xf32> to vector<1x128xf32>
    %180 = vector.shape_cast %179 : vector<1x128xf32> to vector<128xf32>
    %181 = vector.shape_cast %180 : vector<128xf32> to vector<1x128xf32>
    %182 = vector.broadcast %181 : vector<1x128xf32> to vector<9x128xf32>
    %183 = arith.mulf %178, %182 : vector<9x128xf32>
    %184 = arith.addf %170, %183 : vector<9x128xf32>
    %185 = vector.extract_strided_slice %148 {offsets = [5, 0], sizes = [9, 128], strides = [1, 1]} : vector<14x128xf32> to vector<9x128xf32>
    %186 = vector.extract_strided_slice %149 {offsets = [5, 0], sizes = [1, 128], strides = [1, 1]} : vector<6x128xf32> to vector<1x128xf32>
    %187 = vector.shape_cast %186 : vector<1x128xf32> to vector<128xf32>
    %188 = vector.shape_cast %187 : vector<128xf32> to vector<1x128xf32>
    %189 = vector.broadcast %188 : vector<1x128xf32> to vector<9x128xf32>
    %190 = arith.mulf %185, %189 : vector<9x128xf32>
    %191 = arith.addf %177, %190 : vector<9x128xf32>
    %c48 = arith.constant 48 : index
    %c0_98 = arith.constant 0 : index
    %192 = vector.load %arg10[%c48, %c0_98] : memref<224x128xf32, #tpu.memory_space<vmem>>, vector<14x128xf32>
    %c48_99 = arith.constant 48 : index
    %c0_100 = arith.constant 0 : index
    %193 = vector.load %arg11[%c48_99, %c0_100] : memref<96x128xf32, #tpu.memory_space<vmem>>, vector<6x128xf32>
    %194 = vector.extract_strided_slice %192 {offsets = [0, 0], sizes = [9, 128], strides = [1, 1]} : vector<14x128xf32> to vector<9x128xf32>
    %195 = vector.extract_strided_slice %193 {offsets = [0, 0], sizes = [1, 128], strides = [1, 1]} : vector<6x128xf32> to vector<1x128xf32>
    %196 = vector.shape_cast %195 : vector<1x128xf32> to vector<128xf32>
    %197 = vector.shape_cast %196 : vector<128xf32> to vector<1x128xf32>
    %198 = vector.broadcast %197 : vector<1x128xf32> to vector<9x128xf32>
    %199 = arith.mulf %194, %198 : vector<9x128xf32>
    %200 = arith.addf %184, %199 : vector<9x128xf32>
    %201 = vector.extract_strided_slice %192 {offsets = [1, 0], sizes = [9, 128], strides = [1, 1]} : vector<14x128xf32> to vector<9x128xf32>
    %202 = vector.extract_strided_slice %193 {offsets = [1, 0], sizes = [1, 128], strides = [1, 1]} : vector<6x128xf32> to vector<1x128xf32>
    %203 = vector.shape_cast %202 : vector<1x128xf32> to vector<128xf32>
    %204 = vector.shape_cast %203 : vector<128xf32> to vector<1x128xf32>
    %205 = vector.broadcast %204 : vector<1x128xf32> to vector<9x128xf32>
    %206 = arith.mulf %201, %205 : vector<9x128xf32>
    %207 = arith.addf %191, %206 : vector<9x128xf32>
    %208 = vector.extract_strided_slice %192 {offsets = [2, 0], sizes = [9, 128], strides = [1, 1]} : vector<14x128xf32> to vector<9x128xf32>
    %209 = vector.extract_strided_slice %193 {offsets = [2, 0], sizes = [1, 128], strides = [1, 1]} : vector<6x128xf32> to vector<1x128xf32>
    %210 = vector.shape_cast %209 : vector<1x128xf32> to vector<128xf32>
    %211 = vector.shape_cast %210 : vector<128xf32> to vector<1x128xf32>
    %212 = vector.broadcast %211 : vector<1x128xf32> to vector<9x128xf32>
    %213 = arith.mulf %208, %212 : vector<9x128xf32>
    %214 = arith.addf %200, %213 : vector<9x128xf32>
    %215 = vector.extract_strided_slice %192 {offsets = [3, 0], sizes = [9, 128], strides = [1, 1]} : vector<14x128xf32> to vector<9x128xf32>
    %216 = vector.extract_strided_slice %193 {offsets = [3, 0], sizes = [1, 128], strides = [1, 1]} : vector<6x128xf32> to vector<1x128xf32>
    %217 = vector.shape_cast %216 : vector<1x128xf32> to vector<128xf32>
    %218 = vector.shape_cast %217 : vector<128xf32> to vector<1x128xf32>
    %219 = vector.broadcast %218 : vector<1x128xf32> to vector<9x128xf32>
    %220 = arith.mulf %215, %219 : vector<9x128xf32>
    %221 = arith.addf %207, %220 : vector<9x128xf32>
    %222 = vector.extract_strided_slice %192 {offsets = [4, 0], sizes = [9, 128], strides = [1, 1]} : vector<14x128xf32> to vector<9x128xf32>
    %223 = vector.extract_strided_slice %193 {offsets = [4, 0], sizes = [1, 128], strides = [1, 1]} : vector<6x128xf32> to vector<1x128xf32>
    %224 = vector.shape_cast %223 : vector<1x128xf32> to vector<128xf32>
    %225 = vector.shape_cast %224 : vector<128xf32> to vector<1x128xf32>
    %226 = vector.broadcast %225 : vector<1x128xf32> to vector<9x128xf32>
    %227 = arith.mulf %222, %226 : vector<9x128xf32>
    %228 = arith.addf %214, %227 : vector<9x128xf32>
    %229 = vector.extract_strided_slice %192 {offsets = [5, 0], sizes = [9, 128], strides = [1, 1]} : vector<14x128xf32> to vector<9x128xf32>
    %230 = vector.extract_strided_slice %193 {offsets = [5, 0], sizes = [1, 128], strides = [1, 1]} : vector<6x128xf32> to vector<1x128xf32>
    %231 = vector.shape_cast %230 : vector<1x128xf32> to vector<128xf32>
    %232 = vector.shape_cast %231 : vector<128xf32> to vector<1x128xf32>
    %233 = vector.broadcast %232 : vector<1x128xf32> to vector<9x128xf32>
    %234 = arith.mulf %229, %233 : vector<9x128xf32>
    %235 = arith.addf %221, %234 : vector<9x128xf32>
    %c64 = arith.constant 64 : index
    %c0_101 = arith.constant 0 : index
    %236 = vector.load %arg10[%c64, %c0_101] : memref<224x128xf32, #tpu.memory_space<vmem>>, vector<14x128xf32>
    %c64_102 = arith.constant 64 : index
    %c0_103 = arith.constant 0 : index
    %237 = vector.load %arg11[%c64_102, %c0_103] : memref<96x128xf32, #tpu.memory_space<vmem>>, vector<6x128xf32>
    %238 = vector.extract_strided_slice %236 {offsets = [0, 0], sizes = [9, 128], strides = [1, 1]} : vector<14x128xf32> to vector<9x128xf32>
    %239 = vector.extract_strided_slice %237 {offsets = [0, 0], sizes = [1, 128], strides = [1, 1]} : vector<6x128xf32> to vector<1x128xf32>
    %240 = vector.shape_cast %239 : vector<1x128xf32> to vector<128xf32>
    %241 = vector.shape_cast %240 : vector<128xf32> to vector<1x128xf32>
    %242 = vector.broadcast %241 : vector<1x128xf32> to vector<9x128xf32>
    %243 = arith.mulf %238, %242 : vector<9x128xf32>
    %244 = arith.addf %228, %243 : vector<9x128xf32>
    %245 = vector.extract_strided_slice %236 {offsets = [1, 0], sizes = [9, 128], strides = [1, 1]} : vector<14x128xf32> to vector<9x128xf32>
    %246 = vector.extract_strided_slice %237 {offsets = [1, 0], sizes = [1, 128], strides = [1, 1]} : vector<6x128xf32> to vector<1x128xf32>
    %247 = vector.shape_cast %246 : vector<1x128xf32> to vector<128xf32>
    %248 = vector.shape_cast %247 : vector<128xf32> to vector<1x128xf32>
    %249 = vector.broadcast %248 : vector<1x128xf32> to vector<9x128xf32>
    %250 = arith.mulf %245, %249 : vector<9x128xf32>
    %251 = arith.addf %235, %250 : vector<9x128xf32>
    %252 = vector.extract_strided_slice %236 {offsets = [2, 0], sizes = [9, 128], strides = [1, 1]} : vector<14x128xf32> to vector<9x128xf32>
    %253 = vector.extract_strided_slice %237 {offsets = [2, 0], sizes = [1, 128], strides = [1, 1]} : vector<6x128xf32> to vector<1x128xf32>
    %254 = vector.shape_cast %253 : vector<1x128xf32> to vector<128xf32>
    %255 = vector.shape_cast %254 : vector<128xf32> to vector<1x128xf32>
    %256 = vector.broadcast %255 : vector<1x128xf32> to vector<9x128xf32>
    %257 = arith.mulf %252, %256 : vector<9x128xf32>
    %258 = arith.addf %244, %257 : vector<9x128xf32>
    %259 = vector.extract_strided_slice %236 {offsets = [3, 0], sizes = [9, 128], strides = [1, 1]} : vector<14x128xf32> to vector<9x128xf32>
    %260 = vector.extract_strided_slice %237 {offsets = [3, 0], sizes = [1, 128], strides = [1, 1]} : vector<6x128xf32> to vector<1x128xf32>
    %261 = vector.shape_cast %260 : vector<1x128xf32> to vector<128xf32>
    %262 = vector.shape_cast %261 : vector<128xf32> to vector<1x128xf32>
    %263 = vector.broadcast %262 : vector<1x128xf32> to vector<9x128xf32>
    %264 = arith.mulf %259, %263 : vector<9x128xf32>
    %265 = arith.addf %251, %264 : vector<9x128xf32>
    %266 = vector.extract_strided_slice %236 {offsets = [4, 0], sizes = [9, 128], strides = [1, 1]} : vector<14x128xf32> to vector<9x128xf32>
    %267 = vector.extract_strided_slice %237 {offsets = [4, 0], sizes = [1, 128], strides = [1, 1]} : vector<6x128xf32> to vector<1x128xf32>
    %268 = vector.shape_cast %267 : vector<1x128xf32> to vector<128xf32>
    %269 = vector.shape_cast %268 : vector<128xf32> to vector<1x128xf32>
    %270 = vector.broadcast %269 : vector<1x128xf32> to vector<9x128xf32>
    %271 = arith.mulf %266, %270 : vector<9x128xf32>
    %272 = arith.addf %258, %271 : vector<9x128xf32>
    %273 = vector.extract_strided_slice %236 {offsets = [5, 0], sizes = [9, 128], strides = [1, 1]} : vector<14x128xf32> to vector<9x128xf32>
    %274 = vector.extract_strided_slice %237 {offsets = [5, 0], sizes = [1, 128], strides = [1, 1]} : vector<6x128xf32> to vector<1x128xf32>
    %275 = vector.shape_cast %274 : vector<1x128xf32> to vector<128xf32>
    %276 = vector.shape_cast %275 : vector<128xf32> to vector<1x128xf32>
    %277 = vector.broadcast %276 : vector<1x128xf32> to vector<9x128xf32>
    %278 = arith.mulf %273, %277 : vector<9x128xf32>
    %279 = arith.addf %265, %278 : vector<9x128xf32>
    %c80 = arith.constant 80 : index
    %c0_104 = arith.constant 0 : index
    %280 = vector.load %arg10[%c80, %c0_104] : memref<224x128xf32, #tpu.memory_space<vmem>>, vector<14x128xf32>
    %c80_105 = arith.constant 80 : index
    %c0_106 = arith.constant 0 : index
    %281 = vector.load %arg11[%c80_105, %c0_106] : memref<96x128xf32, #tpu.memory_space<vmem>>, vector<6x128xf32>
    %282 = vector.extract_strided_slice %280 {offsets = [0, 0], sizes = [9, 128], strides = [1, 1]} : vector<14x128xf32> to vector<9x128xf32>
    %283 = vector.extract_strided_slice %281 {offsets = [0, 0], sizes = [1, 128], strides = [1, 1]} : vector<6x128xf32> to vector<1x128xf32>
    %284 = vector.shape_cast %283 : vector<1x128xf32> to vector<128xf32>
    %285 = vector.shape_cast %284 : vector<128xf32> to vector<1x128xf32>
    %286 = vector.broadcast %285 : vector<1x128xf32> to vector<9x128xf32>
    %287 = arith.mulf %282, %286 : vector<9x128xf32>
    %288 = arith.addf %272, %287 : vector<9x128xf32>
    %289 = vector.extract_strided_slice %280 {offsets = [1, 0], sizes = [9, 128], strides = [1, 1]} : vector<14x128xf32> to vector<9x128xf32>
    %290 = vector.extract_strided_slice %281 {offsets = [1, 0], sizes = [1, 128], strides = [1, 1]} : vector<6x128xf32> to vector<1x128xf32>
    %291 = vector.shape_cast %290 : vector<1x128xf32> to vector<128xf32>
    %292 = vector.shape_cast %291 : vector<128xf32> to vector<1x128xf32>
    %293 = vector.broadcast %292 : vector<1x128xf32> to vector<9x128xf32>
    %294 = arith.mulf %289, %293 : vector<9x128xf32>
    %295 = arith.addf %279, %294 : vector<9x128xf32>
    %296 = vector.extract_strided_slice %280 {offsets = [2, 0], sizes = [9, 128], strides = [1, 1]} : vector<14x128xf32> to vector<9x128xf32>
    %297 = vector.extract_strided_slice %281 {offsets = [2, 0], sizes = [1, 128], strides = [1, 1]} : vector<6x128xf32> to vector<1x128xf32>
    %298 = vector.shape_cast %297 : vector<1x128xf32> to vector<128xf32>
    %299 = vector.shape_cast %298 : vector<128xf32> to vector<1x128xf32>
    %300 = vector.broadcast %299 : vector<1x128xf32> to vector<9x128xf32>
    %301 = arith.mulf %296, %300 : vector<9x128xf32>
    %302 = arith.addf %288, %301 : vector<9x128xf32>
    %303 = vector.extract_strided_slice %280 {offsets = [3, 0], sizes = [9, 128], strides = [1, 1]} : vector<14x128xf32> to vector<9x128xf32>
    %304 = vector.extract_strided_slice %281 {offsets = [3, 0], sizes = [1, 128], strides = [1, 1]} : vector<6x128xf32> to vector<1x128xf32>
    %305 = vector.shape_cast %304 : vector<1x128xf32> to vector<128xf32>
    %306 = vector.shape_cast %305 : vector<128xf32> to vector<1x128xf32>
    %307 = vector.broadcast %306 : vector<1x128xf32> to vector<9x128xf32>
    %308 = arith.mulf %303, %307 : vector<9x128xf32>
    %309 = arith.addf %295, %308 : vector<9x128xf32>
    %310 = vector.extract_strided_slice %280 {offsets = [4, 0], sizes = [9, 128], strides = [1, 1]} : vector<14x128xf32> to vector<9x128xf32>
    %311 = vector.extract_strided_slice %281 {offsets = [4, 0], sizes = [1, 128], strides = [1, 1]} : vector<6x128xf32> to vector<1x128xf32>
    %312 = vector.shape_cast %311 : vector<1x128xf32> to vector<128xf32>
    %313 = vector.shape_cast %312 : vector<128xf32> to vector<1x128xf32>
    %314 = vector.broadcast %313 : vector<1x128xf32> to vector<9x128xf32>
    %315 = arith.mulf %310, %314 : vector<9x128xf32>
    %316 = arith.addf %302, %315 : vector<9x128xf32>
    %317 = vector.extract_strided_slice %280 {offsets = [5, 0], sizes = [9, 128], strides = [1, 1]} : vector<14x128xf32> to vector<9x128xf32>
    %318 = vector.extract_strided_slice %281 {offsets = [5, 0], sizes = [1, 128], strides = [1, 1]} : vector<6x128xf32> to vector<1x128xf32>
    %319 = vector.shape_cast %318 : vector<1x128xf32> to vector<128xf32>
    %320 = vector.shape_cast %319 : vector<128xf32> to vector<1x128xf32>
    %321 = vector.broadcast %320 : vector<1x128xf32> to vector<9x128xf32>
    %322 = arith.mulf %317, %321 : vector<9x128xf32>
    %323 = arith.addf %309, %322 : vector<9x128xf32>
    %324 = arith.addf %316, %323 : vector<9x128xf32>
    %c0_107 = arith.constant 0 : index
    %c0_108 = arith.constant 0 : index
    %c0_109 = arith.constant 0 : index
    %c0_110 = arith.constant 0 : index
    %325 = vector.load %arg9[%c0_107, %c0_108, %c0_109, %c0_110] : memref<1x9x9x128xf32, #tpu.memory_space<vmem>>, vector<1x1x9x128xf32>
    %326 = vector.shape_cast %325 : vector<1x1x9x128xf32> to vector<9x128xf32>
    %327 = vector.shape_cast %324 : vector<9x128xf32> to vector<1x1x9x128xf32>
    tpu.vector_store %arg9[%c0_107, %c0_108, %c0_109, %c0_110], %327 {strides = array<i32>} : memref<1x9x9x128xf32, #tpu.memory_space<vmem>>, vector<1x1x9x128xf32>,
    %cst_111 = arith.constant 0.000000e+00 : f32
    %328 = vector.broadcast %cst_111 : f32 to vector<9x128xf32>
    %cst_112 = arith.constant 0.000000e+00 : f32
    %329 = vector.broadcast %cst_112 : f32 to vector<9x128xf32>
    %c16_113 = arith.constant 16 : index
    %c0_114 = arith.constant 0 : index
    %330 = vector.load %arg10[%c16_113, %c0_114] : memref<224x128xf32, #tpu.memory_space<vmem>>, vector<14x128xf32>
    %c0_115 = arith.constant 0 : index
    %c0_116 = arith.constant 0 : index
    %331 = vector.load %arg11[%c0_115, %c0_116] : memref<96x128xf32, #tpu.memory_space<vmem>>, vector<6x128xf32>
    %332 = vector.extract_strided_slice %330 {offsets = [0, 0], sizes = [9, 128], strides = [1, 1]} : vector<14x128xf32> to vector<9x128xf32>
    %333 = vector.extract_strided_slice %331 {offsets = [0, 0], sizes = [1, 128], strides = [1, 1]} : vector<6x128xf32> to vector<1x128xf32>
    %334 = vector.shape_cast %333 : vector<1x128xf32> to vector<128xf32>
    %335 = vector.shape_cast %334 : vector<128xf32> to vector<1x128xf32>
    %336 = vector.broadcast %335 : vector<1x128xf32> to vector<9x128xf32>
    %337 = arith.mulf %332, %336 : vector<9x128xf32>
    %338 = arith.addf %328, %337 : vector<9x128xf32>
    %339 = vector.extract_strided_slice %330 {offsets = [1, 0], sizes = [9, 128], strides = [1, 1]} : vector<14x128xf32> to vector<9x128xf32>
    %340 = vector.extract_strided_slice %331 {offsets = [1, 0], sizes = [1, 128], strides = [1, 1]} : vector<6x128xf32> to vector<1x128xf32>
    %341 = vector.shape_cast %340 : vector<1x128xf32> to vector<128xf32>
    %342 = vector.shape_cast %341 : vector<128xf32> to vector<1x128xf32>
    %343 = vector.broadcast %342 : vector<1x128xf32> to vector<9x128xf32>
    %344 = arith.mulf %339, %343 : vector<9x128xf32>
    %345 = arith.addf %329, %344 : vector<9x128xf32>
    %346 = vector.extract_strided_slice %330 {offsets = [2, 0], sizes = [9, 128], strides = [1, 1]} : vector<14x128xf32> to vector<9x128xf32>
    %347 = vector.extract_strided_slice %331 {offsets = [2, 0], sizes = [1, 128], strides = [1, 1]} : vector<6x128xf32> to vector<1x128xf32>
    %348 = vector.shape_cast %347 : vector<1x128xf32> to vector<128xf32>
    %349 = vector.shape_cast %348 : vector<128xf32> to vector<1x128xf32>
    %350 = vector.broadcast %349 : vector<1x128xf32> to vector<9x128xf32>
    %351 = arith.mulf %346, %350 : vector<9x128xf32>
    %352 = arith.addf %338, %351 : vector<9x128xf32>
    %353 = vector.extract_strided_slice %330 {offsets = [3, 0], sizes = [9, 128], strides = [1, 1]} : vector<14x128xf32> to vector<9x128xf32>
    %354 = vector.extract_strided_slice %331 {offsets = [3, 0], sizes = [1, 128], strides = [1, 1]} : vector<6x128xf32> to vector<1x128xf32>
    %355 = vector.shape_cast %354 : vector<1x128xf32> to vector<128xf32>
    %356 = vector.shape_cast %355 : vector<128xf32> to vector<1x128xf32>
    %357 = vector.broadcast %356 : vector<1x128xf32> to vector<9x128xf32>
    %358 = arith.mulf %353, %357 : vector<9x128xf32>
    %359 = arith.addf %345, %358 : vector<9x128xf32>
    %360 = vector.extract_strided_slice %330 {offsets = [4, 0], sizes = [9, 128], strides = [1, 1]} : vector<14x128xf32> to vector<9x128xf32>
    %361 = vector.extract_strided_slice %331 {offsets = [4, 0], sizes = [1, 128], strides = [1, 1]} : vector<6x128xf32> to vector<1x128xf32>
    %362 = vector.shape_cast %361 : vector<1x128xf32> to vector<128xf32>
    %363 = vector.shape_cast %362 : vector<128xf32> to vector<1x128xf32>
    %364 = vector.broadcast %363 : vector<1x128xf32> to vector<9x128xf32>
    %365 = arith.mulf %360, %364 : vector<9x128xf32>
    %366 = arith.addf %352, %365 : vector<9x128xf32>
    %367 = vector.extract_strided_slice %330 {offsets = [5, 0], sizes = [9, 128], strides = [1, 1]} : vector<14x128xf32> to vector<9x128xf32>
    %368 = vector.extract_strided_slice %331 {offsets = [5, 0], sizes = [1, 128], strides = [1, 1]} : vector<6x128xf32> to vector<1x128xf32>
    %369 = vector.shape_cast %368 : vector<1x128xf32> to vector<128xf32>
    %370 = vector.shape_cast %369 : vector<128xf32> to vector<1x128xf32>
    %371 = vector.broadcast %370 : vector<1x128xf32> to vector<9x128xf32>
    %372 = arith.mulf %367, %371 : vector<9x128xf32>
    %373 = arith.addf %359, %372 : vector<9x128xf32>
    %c32_117 = arith.constant 32 : index
    %c0_118 = arith.constant 0 : index
    %374 = vector.load %arg10[%c32_117, %c0_118] : memref<224x128xf32, #tpu.memory_space<vmem>>, vector<14x128xf32>
    %c16_119 = arith.constant 16 : index
    %c0_120 = arith.constant 0 : index
    %375 = vector.load %arg11[%c16_119, %c0_120] : memref<96x128xf32, #tpu.memory_space<vmem>>, vector<6x128xf32>
    %376 = vector.extract_strided_slice %374 {offsets = [0, 0], sizes = [9, 128], strides = [1, 1]} : vector<14x128xf32> to vector<9x128xf32>
    %377 = vector.extract_strided_slice %375 {offsets = [0, 0], sizes = [1, 128], strides = [1, 1]} : vector<6x128xf32> to vector<1x128xf32>
    %378 = vector.shape_cast %377 : vector<1x128xf32> to vector<128xf32>
    %379 = vector.shape_cast %378 : vector<128xf32> to vector<1x128xf32>
    %380 = vector.broadcast %379 : vector<1x128xf32> to vector<9x128xf32>
    %381 = arith.mulf %376, %380 : vector<9x128xf32>
    %382 = arith.addf %366, %381 : vector<9x128xf32>
    %383 = vector.extract_strided_slice %374 {offsets = [1, 0], sizes = [9, 128], strides = [1, 1]} : vector<14x128xf32> to vector<9x128xf32>
    %384 = vector.extract_strided_slice %375 {offsets = [1, 0], sizes = [1, 128], strides = [1, 1]} : vector<6x128xf32> to vector<1x128xf32>
    %385 = vector.shape_cast %384 : vector<1x128xf32> to vector<128xf32>
    %386 = vector.shape_cast %385 : vector<128xf32> to vector<1x128xf32>
    %387 = vector.broadcast %386 : vector<1x128xf32> to vector<9x128xf32>
    %388 = arith.mulf %383, %387 : vector<9x128xf32>
    %389 = arith.addf %373, %388 : vector<9x128xf32>
    %390 = vector.extract_strided_slice %374 {offsets = [2, 0], sizes = [9, 128], strides = [1, 1]} : vector<14x128xf32> to vector<9x128xf32>
    %391 = vector.extract_strided_slice %375 {offsets = [2, 0], sizes = [1, 128], strides = [1, 1]} : vector<6x128xf32> to vector<1x128xf32>
    %392 = vector.shape_cast %391 : vector<1x128xf32> to vector<128xf32>
    %393 = vector.shape_cast %392 : vector<128xf32> to vector<1x128xf32>
    %394 = vector.broadcast %393 : vector<1x128xf32> to vector<9x128xf32>
    %395 = arith.mulf %390, %394 : vector<9x128xf32>
    %396 = arith.addf %382, %395 : vector<9x128xf32>
    %397 = vector.extract_strided_slice %374 {offsets = [3, 0], sizes = [9, 128], strides = [1, 1]} : vector<14x128xf32> to vector<9x128xf32>
    %398 = vector.extract_strided_slice %375 {offsets = [3, 0], sizes = [1, 128], strides = [1, 1]} : vector<6x128xf32> to vector<1x128xf32>
    %399 = vector.shape_cast %398 : vector<1x128xf32> to vector<128xf32>
    %400 = vector.shape_cast %399 : vector<128xf32> to vector<1x128xf32>
    %401 = vector.broadcast %400 : vector<1x128xf32> to vector<9x128xf32>
    %402 = arith.mulf %397, %401 : vector<9x128xf32>
    %403 = arith.addf %389, %402 : vector<9x128xf32>
    %404 = vector.extract_strided_slice %374 {offsets = [4, 0], sizes = [9, 128], strides = [1, 1]} : vector<14x128xf32> to vector<9x128xf32>
    %405 = vector.extract_strided_slice %375 {offsets = [4, 0], sizes = [1, 128], strides = [1, 1]} : vector<6x128xf32> to vector<1x128xf32>
    %406 = vector.shape_cast %405 : vector<1x128xf32> to vector<128xf32>
    %407 = vector.shape_cast %406 : vector<128xf32> to vector<1x128xf32>
    %408 = vector.broadcast %407 : vector<1x128xf32> to vector<9x128xf32>
    %409 = arith.mulf %404, %408 : vector<9x128xf32>
    %410 = arith.addf %396, %409 : vector<9x128xf32>
    %411 = vector.extract_strided_slice %374 {offsets = [5, 0], sizes = [9, 128], strides = [1, 1]} : vector<14x128xf32> to vector<9x128xf32>
    %412 = vector.extract_strided_slice %375 {offsets = [5, 0], sizes = [1, 128], strides = [1, 1]} : vector<6x128xf32> to vector<1x128xf32>
    %413 = vector.shape_cast %412 : vector<1x128xf32> to vector<128xf32>
    %414 = vector.shape_cast %413 : vector<128xf32> to vector<1x128xf32>
    %415 = vector.broadcast %414 : vector<1x128xf32> to vector<9x128xf32>
    %416 = arith.mulf %411, %415 : vector<9x128xf32>
    %417 = arith.addf %403, %416 : vector<9x128xf32>
    %c48_121 = arith.constant 48 : index
    %c0_122 = arith.constant 0 : index
    %418 = vector.load %arg10[%c48_121, %c0_122] : memref<224x128xf32, #tpu.memory_space<vmem>>, vector<14x128xf32>
    %c32_123 = arith.constant 32 : index
    %c0_124 = arith.constant 0 : index
    %419 = vector.load %arg11[%c32_123, %c0_124] : memref<96x128xf32, #tpu.memory_space<vmem>>, vector<6x128xf32>
    %420 = vector.extract_strided_slice %418 {offsets = [0, 0], sizes = [9, 128], strides = [1, 1]} : vector<14x128xf32> to vector<9x128xf32>
    %421 = vector.extract_strided_slice %419 {offsets = [0, 0], sizes = [1, 128], strides = [1, 1]} : vector<6x128xf32> to vector<1x128xf32>
    %422 = vector.shape_cast %421 : vector<1x128xf32> to vector<128xf32>
    %423 = vector.shape_cast %422 : vector<128xf32> to vector<1x128xf32>
    %424 = vector.broadcast %423 : vector<1x128xf32> to vector<9x128xf32>
    %425 = arith.mulf %420, %424 : vector<9x128xf32>
    %426 = arith.addf %410, %425 : vector<9x128xf32>
    %427 = vector.extract_strided_slice %418 {offsets = [1, 0], sizes = [9, 128], strides = [1, 1]} : vector<14x128xf32> to vector<9x128xf32>
    %428 = vector.extract_strided_slice %419 {offsets = [1, 0], sizes = [1, 128], strides = [1, 1]} : vector<6x128xf32> to vector<1x128xf32>
    %429 = vector.shape_cast %428 : vector<1x128xf32> to vector<128xf32>
    %430 = vector.shape_cast %429 : vector<128xf32> to vector<1x128xf32>
    %431 = vector.broadcast %430 : vector<1x128xf32> to vector<9x128xf32>
    %432 = arith.mulf %427, %431 : vector<9x128xf32>
    %433 = arith.addf %417, %432 : vector<9x128xf32>
    %434 = vector.extract_strided_slice %418 {offsets = [2, 0], sizes = [9, 128], strides = [1, 1]} : vector<14x128xf32> to vector<9x128xf32>
    %435 = vector.extract_strided_slice %419 {offsets = [2, 0], sizes = [1, 128], strides = [1, 1]} : vector<6x128xf32> to vector<1x128xf32>
    %436 = vector.shape_cast %435 : vector<1x128xf32> to vector<128xf32>
    %437 = vector.shape_cast %436 : vector<128xf32> to vector<1x128xf32>
    %438 = vector.broadcast %437 : vector<1x128xf32> to vector<9x128xf32>
    %439 = arith.mulf %434, %438 : vector<9x128xf32>
    %440 = arith.addf %426, %439 : vector<9x128xf32>
    %441 = vector.extract_strided_slice %418 {offsets = [3, 0], sizes = [9, 128], strides = [1, 1]} : vector<14x128xf32> to vector<9x128xf32>
    %442 = vector.extract_strided_slice %419 {offsets = [3, 0], sizes = [1, 128], strides = [1, 1]} : vector<6x128xf32> to vector<1x128xf32>
    %443 = vector.shape_cast %442 : vector<1x128xf32> to vector<128xf32>
    %444 = vector.shape_cast %443 : vector<128xf32> to vector<1x128xf32>
    %445 = vector.broadcast %444 : vector<1x128xf32> to vector<9x128xf32>
    %446 = arith.mulf %441, %445 : vector<9x128xf32>
    %447 = arith.addf %433, %446 : vector<9x128xf32>
    %448 = vector.extract_strided_slice %418 {offsets = [4, 0], sizes = [9, 128], strides = [1, 1]} : vector<14x128xf32> to vector<9x128xf32>
    %449 = vector.extract_strided_slice %419 {offsets = [4, 0], sizes = [1, 128], strides = [1, 1]} : vector<6x128xf32> to vector<1x128xf32>
    %450 = vector.shape_cast %449 : vector<1x128xf32> to vector<128xf32>
    %451 = vector.shape_cast %450 : vector<128xf32> to vector<1x128xf32>
    %452 = vector.broadcast %451 : vector<1x128xf32> to vector<9x128xf32>
    %453 = arith.mulf %448, %452 : vector<9x128xf32>
    %454 = arith.addf %440, %453 : vector<9x128xf32>
    %455 = vector.extract_strided_slice %418 {offsets = [5, 0], sizes = [9, 128], strides = [1, 1]} : vector<14x128xf32> to vector<9x128xf32>
    %456 = vector.extract_strided_slice %419 {offsets = [5, 0], sizes = [1, 128], strides = [1, 1]} : vector<6x128xf32> to vector<1x128xf32>
    %457 = vector.shape_cast %456 : vector<1x128xf32> to vector<128xf32>
    %458 = vector.shape_cast %457 : vector<128xf32> to vector<1x128xf32>
    %459 = vector.broadcast %458 : vector<1x128xf32> to vector<9x128xf32>
    %460 = arith.mulf %455, %459 : vector<9x128xf32>
    %461 = arith.addf %447, %460 : vector<9x128xf32>
    %c64_125 = arith.constant 64 : index
    %c0_126 = arith.constant 0 : index
    %462 = vector.load %arg10[%c64_125, %c0_126] : memref<224x128xf32, #tpu.memory_space<vmem>>, vector<14x128xf32>
    %c48_127 = arith.constant 48 : index
    %c0_128 = arith.constant 0 : index
    %463 = vector.load %arg11[%c48_127, %c0_128] : memref<96x128xf32, #tpu.memory_space<vmem>>, vector<6x128xf32>
    %464 = vector.extract_strided_slice %462 {offsets = [0, 0], sizes = [9, 128], strides = [1, 1]} : vector<14x128xf32> to vector<9x128xf32>
    %465 = vector.extract_strided_slice %463 {offsets = [0, 0], sizes = [1, 128], strides = [1, 1]} : vector<6x128xf32> to vector<1x128xf32>
    %466 = vector.shape_cast %465 : vector<1x128xf32> to vector<128xf32>
    %467 = vector.shape_cast %466 : vector<128xf32> to vector<1x128xf32>
    %468 = vector.broadcast %467 : vector<1x128xf32> to vector<9x128xf32>
    %469 = arith.mulf %464, %468 : vector<9x128xf32>
    %470 = arith.addf %454, %469 : vector<9x128xf32>
    %471 = vector.extract_strided_slice %462 {offsets = [1, 0], sizes = [9, 128], strides = [1, 1]} : vector<14x128xf32> to vector<9x128xf32>
    %472 = vector.extract_strided_slice %463 {offsets = [1, 0], sizes = [1, 128], strides = [1, 1]} : vector<6x128xf32> to vector<1x128xf32>
    %473 = vector.shape_cast %472 : vector<1x128xf32> to vector<128xf32>
    %474 = vector.shape_cast %473 : vector<128xf32> to vector<1x128xf32>
    %475 = vector.broadcast %474 : vector<1x128xf32> to vector<9x128xf32>
    %476 = arith.mulf %471, %475 : vector<9x128xf32>
    %477 = arith.addf %461, %476 : vector<9x128xf32>
    %478 = vector.extract_strided_slice %462 {offsets = [2, 0], sizes = [9, 128], strides = [1, 1]} : vector<14x128xf32> to vector<9x128xf32>
    %479 = vector.extract_strided_slice %463 {offsets = [2, 0], sizes = [1, 128], strides = [1, 1]} : vector<6x128xf32> to vector<1x128xf32>
    %480 = vector.shape_cast %479 : vector<1x128xf32> to vector<128xf32>
    %481 = vector.shape_cast %480 : vector<128xf32> to vector<1x128xf32>
    %482 = vector.broadcast %481 : vector<1x128xf32> to vector<9x128xf32>
    %483 = arith.mulf %478, %482 : vector<9x128xf32>
    %484 = arith.addf %470, %483 : vector<9x128xf32>
    %485 = vector.extract_strided_slice %462 {offsets = [3, 0], sizes = [9, 128], strides = [1, 1]} : vector<14x128xf32> to vector<9x128xf32>
    %486 = vector.extract_strided_slice %463 {offsets = [3, 0], sizes = [1, 128], strides = [1, 1]} : vector<6x128xf32> to vector<1x128xf32>
    %487 = vector.shape_cast %486 : vector<1x128xf32> to vector<128xf32>
    %488 = vector.shape_cast %487 : vector<128xf32> to vector<1x128xf32>
    %489 = vector.broadcast %488 : vector<1x128xf32> to vector<9x128xf32>
    %490 = arith.mulf %485, %489 : vector<9x128xf32>
    %491 = arith.addf %477, %490 : vector<9x128xf32>
    %492 = vector.extract_strided_slice %462 {offsets = [4, 0], sizes = [9, 128], strides = [1, 1]} : vector<14x128xf32> to vector<9x128xf32>
    %493 = vector.extract_strided_slice %463 {offsets = [4, 0], sizes = [1, 128], strides = [1, 1]} : vector<6x128xf32> to vector<1x128xf32>
    %494 = vector.shape_cast %493 : vector<1x128xf32> to vector<128xf32>
    %495 = vector.shape_cast %494 : vector<128xf32> to vector<1x128xf32>
    %496 = vector.broadcast %495 : vector<1x128xf32> to vector<9x128xf32>
    %497 = arith.mulf %492, %496 : vector<9x128xf32>
    %498 = arith.addf %484, %497 : vector<9x128xf32>
    %499 = vector.extract_strided_slice %462 {offsets = [5, 0], sizes = [9, 128], strides = [1, 1]} : vector<14x128xf32> to vector<9x128xf32>
    %500 = vector.extract_strided_slice %463 {offsets = [5, 0], sizes = [1, 128], strides = [1, 1]} : vector<6x128xf32> to vector<1x128xf32>
    %501 = vector.shape_cast %500 : vector<1x128xf32> to vector<128xf32>
    %502 = vector.shape_cast %501 : vector<128xf32> to vector<1x128xf32>
    %503 = vector.broadcast %502 : vector<1x128xf32> to vector<9x128xf32>
    %504 = arith.mulf %499, %503 : vector<9x128xf32>
    %505 = arith.addf %491, %504 : vector<9x128xf32>
    %c80_129 = arith.constant 80 : index
    %c0_130 = arith.constant 0 : index
    %506 = vector.load %arg10[%c80_129, %c0_130] : memref<224x128xf32, #tpu.memory_space<vmem>>, vector<14x128xf32>
    %c64_131 = arith.constant 64 : index
    %c0_132 = arith.constant 0 : index
    %507 = vector.load %arg11[%c64_131, %c0_132] : memref<96x128xf32, #tpu.memory_space<vmem>>, vector<6x128xf32>
    %508 = vector.extract_strided_slice %506 {offsets = [0, 0], sizes = [9, 128], strides = [1, 1]} : vector<14x128xf32> to vector<9x128xf32>
    %509 = vector.extract_strided_slice %507 {offsets = [0, 0], sizes = [1, 128], strides = [1, 1]} : vector<6x128xf32> to vector<1x128xf32>
    %510 = vector.shape_cast %509 : vector<1x128xf32> to vector<128xf32>
    %511 = vector.shape_cast %510 : vector<128xf32> to vector<1x128xf32>
    %512 = vector.broadcast %511 : vector<1x128xf32> to vector<9x128xf32>
    %513 = arith.mulf %508, %512 : vector<9x128xf32>
    %514 = arith.addf %498, %513 : vector<9x128xf32>
    %515 = vector.extract_strided_slice %506 {offsets = [1, 0], sizes = [9, 128], strides = [1, 1]} : vector<14x128xf32> to vector<9x128xf32>
    %516 = vector.extract_strided_slice %507 {offsets = [1, 0], sizes = [1, 128], strides = [1, 1]} : vector<6x128xf32> to vector<1x128xf32>
    %517 = vector.shape_cast %516 : vector<1x128xf32> to vector<128xf32>
    %518 = vector.shape_cast %517 : vector<128xf32> to vector<1x128xf32>
    %519 = vector.broadcast %518 : vector<1x128xf32> to vector<9x128xf32>
    %520 = arith.mulf %515, %519 : vector<9x128xf32>
    %521 = arith.addf %505, %520 : vector<9x128xf32>
    %522 = vector.extract_strided_slice %506 {offsets = [2, 0], sizes = [9, 128], strides = [1, 1]} : vector<14x128xf32> to vector<9x128xf32>
    %523 = vector.extract_strided_slice %507 {offsets = [2, 0], sizes = [1, 128], strides = [1, 1]} : vector<6x128xf32> to vector<1x128xf32>
    %524 = vector.shape_cast %523 : vector<1x128xf32> to vector<128xf32>
    %525 = vector.shape_cast %524 : vector<128xf32> to vector<1x128xf32>
    %526 = vector.broadcast %525 : vector<1x128xf32> to vector<9x128xf32>
    %527 = arith.mulf %522, %526 : vector<9x128xf32>
    %528 = arith.addf %514, %527 : vector<9x128xf32>
    %529 = vector.extract_strided_slice %506 {offsets = [3, 0], sizes = [9, 128], strides = [1, 1]} : vector<14x128xf32> to vector<9x128xf32>
    %530 = vector.extract_strided_slice %507 {offsets = [3, 0], sizes = [1, 128], strides = [1, 1]} : vector<6x128xf32> to vector<1x128xf32>
    %531 = vector.shape_cast %530 : vector<1x128xf32> to vector<128xf32>
    %532 = vector.shape_cast %531 : vector<128xf32> to vector<1x128xf32>
    %533 = vector.broadcast %532 : vector<1x128xf32> to vector<9x128xf32>
    %534 = arith.mulf %529, %533 : vector<9x128xf32>
    %535 = arith.addf %521, %534 : vector<9x128xf32>
    %536 = vector.extract_strided_slice %506 {offsets = [4, 0], sizes = [9, 128], strides = [1, 1]} : vector<14x128xf32> to vector<9x128xf32>
    %537 = vector.extract_strided_slice %507 {offsets = [4, 0], sizes = [1, 128], strides = [1, 1]} : vector<6x128xf32> to vector<1x128xf32>
    %538 = vector.shape_cast %537 : vector<1x128xf32> to vector<128xf32>
    %539 = vector.shape_cast %538 : vector<128xf32> to vector<1x128xf32>
    %540 = vector.broadcast %539 : vector<1x128xf32> to vector<9x128xf32>
    %541 = arith.mulf %536, %540 : vector<9x128xf32>
    %542 = arith.addf %528, %541 : vector<9x128xf32>
    %543 = vector.extract_strided_slice %506 {offsets = [5, 0], sizes = [9, 128], strides = [1, 1]} : vector<14x128xf32> to vector<9x128xf32>
    %544 = vector.extract_strided_slice %507 {offsets = [5, 0], sizes = [1, 128], strides = [1, 1]} : vector<6x128xf32> to vector<1x128xf32>
    %545 = vector.shape_cast %544 : vector<1x128xf32> to vector<128xf32>
    %546 = vector.shape_cast %545 : vector<128xf32> to vector<1x128xf32>
    %547 = vector.broadcast %546 : vector<1x128xf32> to vector<9x128xf32>
    %548 = arith.mulf %543, %547 : vector<9x128xf32>
    %549 = arith.addf %535, %548 : vector<9x128xf32>
    %c96 = arith.constant 96 : index
    %c0_133 = arith.constant 0 : index
    %550 = vector.load %arg10[%c96, %c0_133] : memref<224x128xf32, #tpu.memory_space<vmem>>, vector<14x128xf32>
    %c80_134 = arith.constant 80 : index
    %c0_135 = arith.constant 0 : index
    %551 = vector.load %arg11[%c80_134, %c0_135] : memref<96x128xf32, #tpu.memory_space<vmem>>, vector<6x128xf32>
    %552 = vector.extract_strided_slice %550 {offsets = [0, 0], sizes = [9, 128], strides = [1, 1]} : vector<14x128xf32> to vector<9x128xf32>
    %553 = vector.extract_strided_slice %551 {offsets = [0, 0], sizes = [1, 128], strides = [1, 1]} : vector<6x128xf32> to vector<1x128xf32>
    %554 = vector.shape_cast %553 : vector<1x128xf32> to vector<128xf32>
    %555 = vector.shape_cast %554 : vector<128xf32> to vector<1x128xf32>
    %556 = vector.broadcast %555 : vector<1x128xf32> to vector<9x128xf32>
    %557 = arith.mulf %552, %556 : vector<9x128xf32>
    %558 = arith.addf %542, %557 : vector<9x128xf32>
    %559 = vector.extract_strided_slice %550 {offsets = [1, 0], sizes = [9, 128], strides = [1, 1]} : vector<14x128xf32> to vector<9x128xf32>
    %560 = vector.extract_strided_slice %551 {offsets = [1, 0], sizes = [1, 128], strides = [1, 1]} : vector<6x128xf32> to vector<1x128xf32>
    %561 = vector.shape_cast %560 : vector<1x128xf32> to vector<128xf32>
    %562 = vector.shape_cast %561 : vector<128xf32> to vector<1x128xf32>
    %563 = vector.broadcast %562 : vector<1x128xf32> to vector<9x128xf32>
    %564 = arith.mulf %559, %563 : vector<9x128xf32>
    %565 = arith.addf %549, %564 : vector<9x128xf32>
    %566 = vector.extract_strided_slice %550 {offsets = [2, 0], sizes = [9, 128], strides = [1, 1]} : vector<14x128xf32> to vector<9x128xf32>
    %567 = vector.extract_strided_slice %551 {offsets = [2, 0], sizes = [1, 128], strides = [1, 1]} : vector<6x128xf32> to vector<1x128xf32>
    %568 = vector.shape_cast %567 : vector<1x128xf32> to vector<128xf32>
    %569 = vector.shape_cast %568 : vector<128xf32> to vector<1x128xf32>
    %570 = vector.broadcast %569 : vector<1x128xf32> to vector<9x128xf32>
    %571 = arith.mulf %566, %570 : vector<9x128xf32>
    %572 = arith.addf %558, %571 : vector<9x128xf32>
    %573 = vector.extract_strided_slice %550 {offsets = [3, 0], sizes = [9, 128], strides = [1, 1]} : vector<14x128xf32> to vector<9x128xf32>
    %574 = vector.extract_strided_slice %551 {offsets = [3, 0], sizes = [1, 128], strides = [1, 1]} : vector<6x128xf32> to vector<1x128xf32>
    %575 = vector.shape_cast %574 : vector<1x128xf32> to vector<128xf32>
    %576 = vector.shape_cast %575 : vector<128xf32> to vector<1x128xf32>
    %577 = vector.broadcast %576 : vector<1x128xf32> to vector<9x128xf32>
    %578 = arith.mulf %573, %577 : vector<9x128xf32>
    %579 = arith.addf %565, %578 : vector<9x128xf32>
    %580 = vector.extract_strided_slice %550 {offsets = [4, 0], sizes = [9, 128], strides = [1, 1]} : vector<14x128xf32> to vector<9x128xf32>
    %581 = vector.extract_strided_slice %551 {offsets = [4, 0], sizes = [1, 128], strides = [1, 1]} : vector<6x128xf32> to vector<1x128xf32>
    %582 = vector.shape_cast %581 : vector<1x128xf32> to vector<128xf32>
    %583 = vector.shape_cast %582 : vector<128xf32> to vector<1x128xf32>
    %584 = vector.broadcast %583 : vector<1x128xf32> to vector<9x128xf32>
    %585 = arith.mulf %580, %584 : vector<9x128xf32>
    %586 = arith.addf %572, %585 : vector<9x128xf32>
    %587 = vector.extract_strided_slice %550 {offsets = [5, 0], sizes = [9, 128], strides = [1, 1]} : vector<14x128xf32> to vector<9x128xf32>
    %588 = vector.extract_strided_slice %551 {offsets = [5, 0], sizes = [1, 128], strides = [1, 1]} : vector<6x128xf32> to vector<1x128xf32>
    %589 = vector.shape_cast %588 : vector<1x128xf32> to vector<128xf32>
    %590 = vector.shape_cast %589 : vector<128xf32> to vector<1x128xf32>
    %591 = vector.broadcast %590 : vector<1x128xf32> to vector<9x128xf32>
    %592 = arith.mulf %587, %591 : vector<9x128xf32>
    %593 = arith.addf %579, %592 : vector<9x128xf32>
    %594 = arith.addf %586, %593 : vector<9x128xf32>
    %c0_136 = arith.constant 0 : index
    %c1_137 = arith.constant 1 : index
    %c0_138 = arith.constant 0 : index
    %c0_139 = arith.constant 0 : index
    %595 = vector.load %arg9[%c0_136, %c1_137, %c0_138, %c0_139] : memref<1x9x9x128xf32, #tpu.memory_space<vmem>>, vector<1x1x9x128xf32>
    %596 = vector.shape_cast %595 : vector<1x1x9x128xf32> to vector<9x128xf32>
    %597 = vector.shape_cast %594 : vector<9x128xf32> to vector<1x1x9x128xf32>
    tpu.vector_store %arg9[%c0_136, %c1_137, %c0_138, %c0_139], %597 {strides = array<i32>} : memref<1x9x9x128xf32, #tpu.memory_space<vmem>>, vector<1x1x9x128xf32>,
    %cst_140 = arith.constant 0.000000e+00 : f32
    %598 = vector.broadcast %cst_140 : f32 to vector<9x128xf32>
    %cst_141 = arith.constant 0.000000e+00 : f32
    %599 = vector.broadcast %cst_141 : f32 to vector<9x128xf32>
    %c32_142 = arith.constant 32 : index
    %c0_143 = arith.constant 0 : index
    %600 = vector.load %arg10[%c32_142, %c0_143] : memref<224x128xf32, #tpu.memory_space<vmem>>, vector<14x128xf32>
    %c0_144 = arith.constant 0 : index
    %c0_145 = arith.constant 0 : index
    %601 = vector.load %arg11[%c0_144, %c0_145] : memref<96x128xf32, #tpu.memory_space<vmem>>, vector<6x128xf32>
    %602 = vector.extract_strided_slice %600 {offsets = [0, 0], sizes = [9, 128], strides = [1, 1]} : vector<14x128xf32> to vector<9x128xf32>
    %603 = vector.extract_strided_slice %601 {offsets = [0, 0], sizes = [1, 128], strides = [1, 1]} : vector<6x128xf32> to vector<1x128xf32>
    %604 = vector.shape_cast %603 : vector<1x128xf32> to vector<128xf32>
    %605 = vector.shape_cast %604 : vector<128xf32> to vector<1x128xf32>
    %606 = vector.broadcast %605 : vector<1x128xf32> to vector<9x128xf32>
    %607 = arith.mulf %602, %606 : vector<9x128xf32>
    %608 = arith.addf %598, %607 : vector<9x128xf32>
    %609 = vector.extract_strided_slice %600 {offsets = [1, 0], sizes = [9, 128], strides = [1, 1]} : vector<14x128xf32> to vector<9x128xf32>
    %610 = vector.extract_strided_slice %601 {offsets = [1, 0], sizes = [1, 128], strides = [1, 1]} : vector<6x128xf32> to vector<1x128xf32>
    %611 = vector.shape_cast %610 : vector<1x128xf32> to vector<128xf32>
    %612 = vector.shape_cast %611 : vector<128xf32> to vector<1x128xf32>
    %613 = vector.broadcast %612 : vector<1x128xf32> to vector<9x128xf32>
    %614 = arith.mulf %609, %613 : vector<9x128xf32>
    %615 = arith.addf %599, %614 : vector<9x128xf32>
    %616 = vector.extract_strided_slice %600 {offsets = [2, 0], sizes = [9, 128], strides = [1, 1]} : vector<14x128xf32> to vector<9x128xf32>
    %617 = vector.extract_strided_slice %601 {offsets = [2, 0], sizes = [1, 128], strides = [1, 1]} : vector<6x128xf32> to vector<1x128xf32>
    %618 = vector.shape_cast %617 : vector<1x128xf32> to vector<128xf32>
    %619 = vector.shape_cast %618 : vector<128xf32> to vector<1x128xf32>
    %620 = vector.broadcast %619 : vector<1x128xf32> to vector<9x128xf32>
    %621 = arith.mulf %616, %620 : vector<9x128xf32>
    %622 = arith.addf %608, %621 : vector<9x128xf32>
    %623 = vector.extract_strided_slice %600 {offsets = [3, 0], sizes = [9, 128], strides = [1, 1]} : vector<14x128xf32> to vector<9x128xf32>
    %624 = vector.extract_strided_slice %601 {offsets = [3, 0], sizes = [1, 128], strides = [1, 1]} : vector<6x128xf32> to vector<1x128xf32>
    %625 = vector.shape_cast %624 : vector<1x128xf32> to vector<128xf32>
    %626 = vector.shape_cast %625 : vector<128xf32> to vector<1x128xf32>
    %627 = vector.broadcast %626 : vector<1x128xf32> to vector<9x128xf32>
    %628 = arith.mulf %623, %627 : vector<9x128xf32>
    %629 = arith.addf %615, %628 : vector<9x128xf32>
    %630 = vector.extract_strided_slice %600 {offsets = [4, 0], sizes = [9, 128], strides = [1, 1]} : vector<14x128xf32> to vector<9x128xf32>
    %631 = vector.extract_strided_slice %601 {offsets = [4, 0], sizes = [1, 128], strides = [1, 1]} : vector<6x128xf32> to vector<1x128xf32>
    %632 = vector.shape_cast %631 : vector<1x128xf32> to vector<128xf32>
    %633 = vector.shape_cast %632 : vector<128xf32> to vector<1x128xf32>
    %634 = vector.broadcast %633 : vector<1x128xf32> to vector<9x128xf32>
    %635 = arith.mulf %630, %634 : vector<9x128xf32>
    %636 = arith.addf %622, %635 : vector<9x128xf32>
    %637 = vector.extract_strided_slice %600 {offsets = [5, 0], sizes = [9, 128], strides = [1, 1]} : vector<14x128xf32> to vector<9x128xf32>
    %638 = vector.extract_strided_slice %601 {offsets = [5, 0], sizes = [1, 128], strides = [1, 1]} : vector<6x128xf32> to vector<1x128xf32>
    %639 = vector.shape_cast %638 : vector<1x128xf32> to vector<128xf32>
    %640 = vector.shape_cast %639 : vector<128xf32> to vector<1x128xf32>
    %641 = vector.broadcast %640 : vector<1x128xf32> to vector<9x128xf32>
    %642 = arith.mulf %637, %641 : vector<9x128xf32>
    %643 = arith.addf %629, %642 : vector<9x128xf32>
    %c48_146 = arith.constant 48 : index
    %c0_147 = arith.constant 0 : index
    %644 = vector.load %arg10[%c48_146, %c0_147] : memref<224x128xf32, #tpu.memory_space<vmem>>, vector<14x128xf32>
    %c16_148 = arith.constant 16 : index
    %c0_149 = arith.constant 0 : index
    %645 = vector.load %arg11[%c16_148, %c0_149] : memref<96x128xf32, #tpu.memory_space<vmem>>, vector<6x128xf32>
    %646 = vector.extract_strided_slice %644 {offsets = [0, 0], sizes = [9, 128], strides = [1, 1]} : vector<14x128xf32> to vector<9x128xf32>
    %647 = vector.extract_strided_slice %645 {offsets = [0, 0], sizes = [1, 128], strides = [1, 1]} : vector<6x128xf32> to vector<1x128xf32>
    %648 = vector.shape_cast %647 : vector<1x128xf32> to vector<128xf32>
    %649 = vector.shape_cast %648 : vector<128xf32> to vector<1x128xf32>
    %650 = vector.broadcast %649 : vector<1x128xf32> to vector<9x128xf32>
    %651 = arith.mulf %646, %650 : vector<9x128xf32>
    %652 = arith.addf %636, %651 : vector<9x128xf32>
    %653 = vector.extract_strided_slice %644 {offsets = [1, 0], sizes = [9, 128], strides = [1, 1]} : vector<14x128xf32> to vector<9x128xf32>
    %654 = vector.extract_strided_slice %645 {offsets = [1, 0], sizes = [1, 128], strides = [1, 1]} : vector<6x128xf32> to vector<1x128xf32>
    %655 = vector.shape_cast %654 : vector<1x128xf32> to vector<128xf32>
    %656 = vector.shape_cast %655 : vector<128xf32> to vector<1x128xf32>
    %657 = vector.broadcast %656 : vector<1x128xf32> to vector<9x128xf32>
    %658 = arith.mulf %653, %657 : vector<9x128xf32>
    %659 = arith.addf %643, %658 : vector<9x128xf32>
    %660 = vector.extract_strided_slice %644 {offsets = [2, 0], sizes = [9, 128], strides = [1, 1]} : vector<14x128xf32> to vector<9x128xf32>
    %661 = vector.extract_strided_slice %645 {offsets = [2, 0], sizes = [1, 128], strides = [1, 1]} : vector<6x128xf32> to vector<1x128xf32>
    %662 = vector.shape_cast %661 : vector<1x128xf32> to vector<128xf32>
    %663 = vector.shape_cast %662 : vector<128xf32> to vector<1x128xf32>
    %664 = vector.broadcast %663 : vector<1x128xf32> to vector<9x128xf32>
    %665 = arith.mulf %660, %664 : vector<9x128xf32>
    %666 = arith.addf %652, %665 : vector<9x128xf32>
    %667 = vector.extract_strided_slice %644 {offsets = [3, 0], sizes = [9, 128], strides = [1, 1]} : vector<14x128xf32> to vector<9x128xf32>
    %668 = vector.extract_strided_slice %645 {offsets = [3, 0], sizes = [1, 128], strides = [1, 1]} : vector<6x128xf32> to vector<1x128xf32>
    %669 = vector.shape_cast %668 : vector<1x128xf32> to vector<128xf32>
    %670 = vector.shape_cast %669 : vector<128xf32> to vector<1x128xf32>
    %671 = vector.broadcast %670 : vector<1x128xf32> to vector<9x128xf32>
    %672 = arith.mulf %667, %671 : vector<9x128xf32>
    %673 = arith.addf %659, %672 : vector<9x128xf32>
    %674 = vector.extract_strided_slice %644 {offsets = [4, 0], sizes = [9, 128], strides = [1, 1]} : vector<14x128xf32> to vector<9x128xf32>
    %675 = vector.extract_strided_slice %645 {offsets = [4, 0], sizes = [1, 128], strides = [1, 1]} : vector<6x128xf32> to vector<1x128xf32>
    %676 = vector.shape_cast %675 : vector<1x128xf32> to vector<128xf32>
    %677 = vector.shape_cast %676 : vector<128xf32> to vector<1x128xf32>
    %678 = vector.broadcast %677 : vector<1x128xf32> to vector<9x128xf32>
    %679 = arith.mulf %674, %678 : vector<9x128xf32>
    %680 = arith.addf %666, %679 : vector<9x128xf32>
    %681 = vector.extract_strided_slice %644 {offsets = [5, 0], sizes = [9, 128], strides = [1, 1]} : vector<14x128xf32> to vector<9x128xf32>
    %682 = vector.extract_strided_slice %645 {offsets = [5, 0], sizes = [1, 128], strides = [1, 1]} : vector<6x128xf32> to vector<1x128xf32>
    %683 = vector.shape_cast %682 : vector<1x128xf32> to vector<128xf32>
    %684 = vector.shape_cast %683 : vector<128xf32> to vector<1x128xf32>
    %685 = vector.broadcast %684 : vector<1x128xf32> to vector<9x128xf32>
    %686 = arith.mulf %681, %685 : vector<9x128xf32>
    %687 = arith.addf %673, %686 : vector<9x128xf32>
    %c64_150 = arith.constant 64 : index
    %c0_151 = arith.constant 0 : index
    %688 = vector.load %arg10[%c64_150, %c0_151] : memref<224x128xf32, #tpu.memory_space<vmem>>, vector<14x128xf32>
    %c32_152 = arith.constant 32 : index
    %c0_153 = arith.constant 0 : index
    %689 = vector.load %arg11[%c32_152, %c0_153] : memref<96x128xf32, #tpu.memory_space<vmem>>, vector<6x128xf32>
    %690 = vector.extract_strided_slice %688 {offsets = [0, 0], sizes = [9, 128], strides = [1, 1]} : vector<14x128xf32> to vector<9x128xf32>
    %691 = vector.extract_strided_slice %689 {offsets = [0, 0], sizes = [1, 128], strides = [1, 1]} : vector<6x128xf32> to vector<1x128xf32>
    %692 = vector.shape_cast %691 : vector<1x128xf32> to vector<128xf32>
    %693 = vector.shape_cast %692 : vector<128xf32> to vector<1x128xf32>
    %694 = vector.broadcast %693 : vector<1x128xf32> to vector<9x128xf32>
    %695 = arith.mulf %690, %694 : vector<9x128xf32>
    %696 = arith.addf %680, %695 : vector<9x128xf32>
    %697 = vector.extract_strided_slice %688 {offsets = [1, 0], sizes = [9, 128], strides = [1, 1]} : vector<14x128xf32> to vector<9x128xf32>
    %698 = vector.extract_strided_slice %689 {offsets = [1, 0], sizes = [1, 128], strides = [1, 1]} : vector<6x128xf32> to vector<1x128xf32>
    %699 = vector.shape_cast %698 : vector<1x128xf32> to vector<128xf32>
    %700 = vector.shape_cast %699 : vector<128xf32> to vector<1x128xf32>
    %701 = vector.broadcast %700 : vector<1x128xf32> to vector<9x128xf32>
    %702 = arith.mulf %697, %701 : vector<9x128xf32>
    %703 = arith.addf %687, %702 : vector<9x128xf32>
    %704 = vector.extract_strided_slice %688 {offsets = [2, 0], sizes = [9, 128], strides = [1, 1]} : vector<14x128xf32> to vector<9x128xf32>
    %705 = vector.extract_strided_slice %689 {offsets = [2, 0], sizes = [1, 128], strides = [1, 1]} : vector<6x128xf32> to vector<1x128xf32>
    %706 = vector.shape_cast %705 : vector<1x128xf32> to vector<128xf32>
    %707 = vector.shape_cast %706 : vector<128xf32> to vector<1x128xf32>
    %708 = vector.broadcast %707 : vector<1x128xf32> to vector<9x128xf32>
    %709 = arith.mulf %704, %708 : vector<9x128xf32>
    %710 = arith.addf %696, %709 : vector<9x128xf32>
    %711 = vector.extract_strided_slice %688 {offsets = [3, 0], sizes = [9, 128], strides = [1, 1]} : vector<14x128xf32> to vector<9x128xf32>
    %712 = vector.extract_strided_slice %689 {offsets = [3, 0], sizes = [1, 128], strides = [1, 1]} : vector<6x128xf32> to vector<1x128xf32>
    %713 = vector.shape_cast %712 : vector<1x128xf32> to vector<128xf32>
    %714 = vector.shape_cast %713 : vector<128xf32> to vector<1x128xf32>
    %715 = vector.broadcast %714 : vector<1x128xf32> to vector<9x128xf32>
    %716 = arith.mulf %711, %715 : vector<9x128xf32>
    %717 = arith.addf %703, %716 : vector<9x128xf32>
    %718 = vector.extract_strided_slice %688 {offsets = [4, 0], sizes = [9, 128], strides = [1, 1]} : vector<14x128xf32> to vector<9x128xf32>
    %719 = vector.extract_strided_slice %689 {offsets = [4, 0], sizes = [1, 128], strides = [1, 1]} : vector<6x128xf32> to vector<1x128xf32>
    %720 = vector.shape_cast %719 : vector<1x128xf32> to vector<128xf32>
    %721 = vector.shape_cast %720 : vector<128xf32> to vector<1x128xf32>
    %722 = vector.broadcast %721 : vector<1x128xf32> to vector<9x128xf32>
    %723 = arith.mulf %718, %722 : vector<9x128xf32>
    %724 = arith.addf %710, %723 : vector<9x128xf32>
    %725 = vector.extract_strided_slice %688 {offsets = [5, 0], sizes = [9, 128], strides = [1, 1]} : vector<14x128xf32> to vector<9x128xf32>
    %726 = vector.extract_strided_slice %689 {offsets = [5, 0], sizes = [1, 128], strides = [1, 1]} : vector<6x128xf32> to vector<1x128xf32>
    %727 = vector.shape_cast %726 : vector<1x128xf32> to vector<128xf32>
    %728 = vector.shape_cast %727 : vector<128xf32> to vector<1x128xf32>
    %729 = vector.broadcast %728 : vector<1x128xf32> to vector<9x128xf32>
    %730 = arith.mulf %725, %729 : vector<9x128xf32>
    %731 = arith.addf %717, %730 : vector<9x128xf32>
    %c80_154 = arith.constant 80 : index
    %c0_155 = arith.constant 0 : index
    %732 = vector.load %arg10[%c80_154, %c0_155] : memref<224x128xf32, #tpu.memory_space<vmem>>, vector<14x128xf32>
    %c48_156 = arith.constant 48 : index
    %c0_157 = arith.constant 0 : index
    %733 = vector.load %arg11[%c48_156, %c0_157] : memref<96x128xf32, #tpu.memory_space<vmem>>, vector<6x128xf32>
    %734 = vector.extract_strided_slice %732 {offsets = [0, 0], sizes = [9, 128], strides = [1, 1]} : vector<14x128xf32> to vector<9x128xf32>
    %735 = vector.extract_strided_slice %733 {offsets = [0, 0], sizes = [1, 128], strides = [1, 1]} : vector<6x128xf32> to vector<1x128xf32>
    %736 = vector.shape_cast %735 : vector<1x128xf32> to vector<128xf32>
    %737 = vector.shape_cast %736 : vector<128xf32> to vector<1x128xf32>
    %738 = vector.broadcast %737 : vector<1x128xf32> to vector<9x128xf32>
    %739 = arith.mulf %734, %738 : vector<9x128xf32>
    %740 = arith.addf %724, %739 : vector<9x128xf32>
    %741 = vector.extract_strided_slice %732 {offsets = [1, 0], sizes = [9, 128], strides = [1, 1]} : vector<14x128xf32> to vector<9x128xf32>
    %742 = vector.extract_strided_slice %733 {offsets = [1, 0], sizes = [1, 128], strides = [1, 1]} : vector<6x128xf32> to vector<1x128xf32>
    %743 = vector.shape_cast %742 : vector<1x128xf32> to vector<128xf32>
    %744 = vector.shape_cast %743 : vector<128xf32> to vector<1x128xf32>
    %745 = vector.broadcast %744 : vector<1x128xf32> to vector<9x128xf32>
    %746 = arith.mulf %741, %745 : vector<9x128xf32>
    %747 = arith.addf %731, %746 : vector<9x128xf32>
    %748 = vector.extract_strided_slice %732 {offsets = [2, 0], sizes = [9, 128], strides = [1, 1]} : vector<14x128xf32> to vector<9x128xf32>
    %749 = vector.extract_strided_slice %733 {offsets = [2, 0], sizes = [1, 128], strides = [1, 1]} : vector<6x128xf32> to vector<1x128xf32>
    %750 = vector.shape_cast %749 : vector<1x128xf32> to vector<128xf32>
    %751 = vector.shape_cast %750 : vector<128xf32> to vector<1x128xf32>
    %752 = vector.broadcast %751 : vector<1x128xf32> to vector<9x128xf32>
    %753 = arith.mulf %748, %752 : vector<9x128xf32>
    %754 = arith.addf %740, %753 : vector<9x128xf32>
    %755 = vector.extract_strided_slice %732 {offsets = [3, 0], sizes = [9, 128], strides = [1, 1]} : vector<14x128xf32> to vector<9x128xf32>
    %756 = vector.extract_strided_slice %733 {offsets = [3, 0], sizes = [1, 128], strides = [1, 1]} : vector<6x128xf32> to vector<1x128xf32>
    %757 = vector.shape_cast %756 : vector<1x128xf32> to vector<128xf32>
    %758 = vector.shape_cast %757 : vector<128xf32> to vector<1x128xf32>
    %759 = vector.broadcast %758 : vector<1x128xf32> to vector<9x128xf32>
    %760 = arith.mulf %755, %759 : vector<9x128xf32>
    %761 = arith.addf %747, %760 : vector<9x128xf32>
    %762 = vector.extract_strided_slice %732 {offsets = [4, 0], sizes = [9, 128], strides = [1, 1]} : vector<14x128xf32> to vector<9x128xf32>
    %763 = vector.extract_strided_slice %733 {offsets = [4, 0], sizes = [1, 128], strides = [1, 1]} : vector<6x128xf32> to vector<1x128xf32>
    %764 = vector.shape_cast %763 : vector<1x128xf32> to vector<128xf32>
    %765 = vector.shape_cast %764 : vector<128xf32> to vector<1x128xf32>
    %766 = vector.broadcast %765 : vector<1x128xf32> to vector<9x128xf32>
    %767 = arith.mulf %762, %766 : vector<9x128xf32>
    %768 = arith.addf %754, %767 : vector<9x128xf32>
    %769 = vector.extract_strided_slice %732 {offsets = [5, 0], sizes = [9, 128], strides = [1, 1]} : vector<14x128xf32> to vector<9x128xf32>
    %770 = vector.extract_strided_slice %733 {offsets = [5, 0], sizes = [1, 128], strides = [1, 1]} : vector<6x128xf32> to vector<1x128xf32>
    %771 = vector.shape_cast %770 : vector<1x128xf32> to vector<128xf32>
    %772 = vector.shape_cast %771 : vector<128xf32> to vector<1x128xf32>
    %773 = vector.broadcast %772 : vector<1x128xf32> to vector<9x128xf32>
    %774 = arith.mulf %769, %773 : vector<9x128xf32>
    %775 = arith.addf %761, %774 : vector<9x128xf32>
    %c96_158 = arith.constant 96 : index
    %c0_159 = arith.constant 0 : index
    %776 = vector.load %arg10[%c96_158, %c0_159] : memref<224x128xf32, #tpu.memory_space<vmem>>, vector<14x128xf32>
    %c64_160 = arith.constant 64 : index
    %c0_161 = arith.constant 0 : index
    %777 = vector.load %arg11[%c64_160, %c0_161] : memref<96x128xf32, #tpu.memory_space<vmem>>, vector<6x128xf32>
    %778 = vector.extract_strided_slice %776 {offsets = [0, 0], sizes = [9, 128], strides = [1, 1]} : vector<14x128xf32> to vector<9x128xf32>
    %779 = vector.extract_strided_slice %777 {offsets = [0, 0], sizes = [1, 128], strides = [1, 1]} : vector<6x128xf32> to vector<1x128xf32>
    %780 = vector.shape_cast %779 : vector<1x128xf32> to vector<128xf32>
    %781 = vector.shape_cast %780 : vector<128xf32> to vector<1x128xf32>
    %782 = vector.broadcast %781 : vector<1x128xf32> to vector<9x128xf32>
    %783 = arith.mulf %778, %782 : vector<9x128xf32>
    %784 = arith.addf %768, %783 : vector<9x128xf32>
    %785 = vector.extract_strided_slice %776 {offsets = [1, 0], sizes = [9, 128], strides = [1, 1]} : vector<14x128xf32> to vector<9x128xf32>
    %786 = vector.extract_strided_slice %777 {offsets = [1, 0], sizes = [1, 128], strides = [1, 1]} : vector<6x128xf32> to vector<1x128xf32>
    %787 = vector.shape_cast %786 : vector<1x128xf32> to vector<128xf32>
    %788 = vector.shape_cast %787 : vector<128xf32> to vector<1x128xf32>
    %789 = vector.broadcast %788 : vector<1x128xf32> to vector<9x128xf32>
    %790 = arith.mulf %785, %789 : vector<9x128xf32>
    %791 = arith.addf %775, %790 : vector<9x128xf32>
    %792 = vector.extract_strided_slice %776 {offsets = [2, 0], sizes = [9, 128], strides = [1, 1]} : vector<14x128xf32> to vector<9x128xf32>
    %793 = vector.extract_strided_slice %777 {offsets = [2, 0], sizes = [1, 128], strides = [1, 1]} : vector<6x128xf32> to vector<1x128xf32>
    %794 = vector.shape_cast %793 : vector<1x128xf32> to vector<128xf32>
    %795 = vector.shape_cast %794 : vector<128xf32> to vector<1x128xf32>
    %796 = vector.broadcast %795 : vector<1x128xf32> to vector<9x128xf32>
    %797 = arith.mulf %792, %796 : vector<9x128xf32>
    %798 = arith.addf %784, %797 : vector<9x128xf32>
    %799 = vector.extract_strided_slice %776 {offsets = [3, 0], sizes = [9, 128], strides = [1, 1]} : vector<14x128xf32> to vector<9x128xf32>
    %800 = vector.extract_strided_slice %777 {offsets = [3, 0], sizes = [1, 128], strides = [1, 1]} : vector<6x128xf32> to vector<1x128xf32>
    %801 = vector.shape_cast %800 : vector<1x128xf32> to vector<128xf32>
    %802 = vector.shape_cast %801 : vector<128xf32> to vector<1x128xf32>
    %803 = vector.broadcast %802 : vector<1x128xf32> to vector<9x128xf32>
    %804 = arith.mulf %799, %803 : vector<9x128xf32>
    %805 = arith.addf %791, %804 : vector<9x128xf32>
    %806 = vector.extract_strided_slice %776 {offsets = [4, 0], sizes = [9, 128], strides = [1, 1]} : vector<14x128xf32> to vector<9x128xf32>
    %807 = vector.extract_strided_slice %777 {offsets = [4, 0], sizes = [1, 128], strides = [1, 1]} : vector<6x128xf32> to vector<1x128xf32>
    %808 = vector.shape_cast %807 : vector<1x128xf32> to vector<128xf32>
    %809 = vector.shape_cast %808 : vector<128xf32> to vector<1x128xf32>
    %810 = vector.broadcast %809 : vector<1x128xf32> to vector<9x128xf32>
    %811 = arith.mulf %806, %810 : vector<9x128xf32>
    %812 = arith.addf %798, %811 : vector<9x128xf32>
    %813 = vector.extract_strided_slice %776 {offsets = [5, 0], sizes = [9, 128], strides = [1, 1]} : vector<14x128xf32> to vector<9x128xf32>
    %814 = vector.extract_strided_slice %777 {offsets = [5, 0], sizes = [1, 128], strides = [1, 1]} : vector<6x128xf32> to vector<1x128xf32>
    %815 = vector.shape_cast %814 : vector<1x128xf32> to vector<128xf32>
    %816 = vector.shape_cast %815 : vector<128xf32> to vector<1x128xf32>
    %817 = vector.broadcast %816 : vector<1x128xf32> to vector<9x128xf32>
    %818 = arith.mulf %813, %817 : vector<9x128xf32>
    %819 = arith.addf %805, %818 : vector<9x128xf32>
    %c112 = arith.constant 112 : index
    %c0_162 = arith.constant 0 : index
    %820 = vector.load %arg10[%c112, %c0_162] : memref<224x128xf32, #tpu.memory_space<vmem>>, vector<14x128xf32>
    %c80_163 = arith.constant 80 : index
    %c0_164 = arith.constant 0 : index
    %821 = vector.load %arg11[%c80_163, %c0_164] : memref<96x128xf32, #tpu.memory_space<vmem>>, vector<6x128xf32>
    %822 = vector.extract_strided_slice %820 {offsets = [0, 0], sizes = [9, 128], strides = [1, 1]} : vector<14x128xf32> to vector<9x128xf32>
    %823 = vector.extract_strided_slice %821 {offsets = [0, 0], sizes = [1, 128], strides = [1, 1]} : vector<6x128xf32> to vector<1x128xf32>
    %824 = vector.shape_cast %823 : vector<1x128xf32> to vector<128xf32>
    %825 = vector.shape_cast %824 : vector<128xf32> to vector<1x128xf32>
    %826 = vector.broadcast %825 : vector<1x128xf32> to vector<9x128xf32>
    %827 = arith.mulf %822, %826 : vector<9x128xf32>
    %828 = arith.addf %812, %827 : vector<9x128xf32>
    %829 = vector.extract_strided_slice %820 {offsets = [1, 0], sizes = [9, 128], strides = [1, 1]} : vector<14x128xf32> to vector<9x128xf32>
    %830 = vector.extract_strided_slice %821 {offsets = [1, 0], sizes = [1, 128], strides = [1, 1]} : vector<6x128xf32> to vector<1x128xf32>
    %831 = vector.shape_cast %830 : vector<1x128xf32> to vector<128xf32>
    %832 = vector.shape_cast %831 : vector<128xf32> to vector<1x128xf32>
    %833 = vector.broadcast %832 : vector<1x128xf32> to vector<9x128xf32>
    %834 = arith.mulf %829, %833 : vector<9x128xf32>
    %835 = arith.addf %819, %834 : vector<9x128xf32>
    %836 = vector.extract_strided_slice %820 {offsets = [2, 0], sizes = [9, 128], strides = [1, 1]} : vector<14x128xf32> to vector<9x128xf32>
    %837 = vector.extract_strided_slice %821 {offsets = [2, 0], sizes = [1, 128], strides = [1, 1]} : vector<6x128xf32> to vector<1x128xf32>
    %838 = vector.shape_cast %837 : vector<1x128xf32> to vector<128xf32>
    %839 = vector.shape_cast %838 : vector<128xf32> to vector<1x128xf32>
    %840 = vector.broadcast %839 : vector<1x128xf32> to vector<9x128xf32>
    %841 = arith.mulf %836, %840 : vector<9x128xf32>
    %842 = arith.addf %828, %841 : vector<9x128xf32>
    %843 = vector.extract_strided_slice %820 {offsets = [3, 0], sizes = [9, 128], strides = [1, 1]} : vector<14x128xf32> to vector<9x128xf32>
    %844 = vector.extract_strided_slice %821 {offsets = [3, 0], sizes = [1, 128], strides = [1, 1]} : vector<6x128xf32> to vector<1x128xf32>
    %845 = vector.shape_cast %844 : vector<1x128xf32> to vector<128xf32>
    %846 = vector.shape_cast %845 : vector<128xf32> to vector<1x128xf32>
    %847 = vector.broadcast %846 : vector<1x128xf32> to vector<9x128xf32>
    %848 = arith.mulf %843, %847 : vector<9x128xf32>
    %849 = arith.addf %835, %848 : vector<9x128xf32>
    %850 = vector.extract_strided_slice %820 {offsets = [4, 0], sizes = [9, 128], strides = [1, 1]} : vector<14x128xf32> to vector<9x128xf32>
    %851 = vector.extract_strided_slice %821 {offsets = [4, 0], sizes = [1, 128], strides = [1, 1]} : vector<6x128xf32> to vector<1x128xf32>
    %852 = vector.shape_cast %851 : vector<1x128xf32> to vector<128xf32>
    %853 = vector.shape_cast %852 : vector<128xf32> to vector<1x128xf32>
    %854 = vector.broadcast %853 : vector<1x128xf32> to vector<9x128xf32>
    %855 = arith.mulf %850, %854 : vector<9x128xf32>
    %856 = arith.addf %842, %855 : vector<9x128xf32>
    %857 = vector.extract_strided_slice %820 {offsets = [5, 0], sizes = [9, 128], strides = [1, 1]} : vector<14x128xf32> to vector<9x128xf32>
    %858 = vector.extract_strided_slice %821 {offsets = [5, 0], sizes = [1, 128], strides = [1, 1]} : vector<6x128xf32> to vector<1x128xf32>
    %859 = vector.shape_cast %858 : vector<1x128xf32> to vector<128xf32>
    %860 = vector.shape_cast %859 : vector<128xf32> to vector<1x128xf32>
    %861 = vector.broadcast %860 : vector<1x128xf32> to vector<9x128xf32>
    %862 = arith.mulf %857, %861 : vector<9x128xf32>
    %863 = arith.addf %849, %862 : vector<9x128xf32>
    %864 = arith.addf %856, %863 : vector<9x128xf32>
    %c0_165 = arith.constant 0 : index
    %c2_166 = arith.constant 2 : index
    %c0_167 = arith.constant 0 : index
    %c0_168 = arith.constant 0 : index
    %865 = vector.load %arg9[%c0_165, %c2_166, %c0_167, %c0_168] : memref<1x9x9x128xf32, #tpu.memory_space<vmem>>, vector<1x1x9x128xf32>
    %866 = vector.shape_cast %865 : vector<1x1x9x128xf32> to vector<9x128xf32>
    %867 = vector.shape_cast %864 : vector<9x128xf32> to vector<1x1x9x128xf32>
    tpu.vector_store %arg9[%c0_165, %c2_166, %c0_167, %c0_168], %867 {strides = array<i32>} : memref<1x9x9x128xf32, #tpu.memory_space<vmem>>, vector<1x1x9x128xf32>,
    %cst_169 = arith.constant 0.000000e+00 : f32
    %868 = vector.broadcast %cst_169 : f32 to vector<9x128xf32>
    %cst_170 = arith.constant 0.000000e+00 : f32
    %869 = vector.broadcast %cst_170 : f32 to vector<9x128xf32>
    %c48_171 = arith.constant 48 : index
    %c0_172 = arith.constant 0 : index
    %870 = vector.load %arg10[%c48_171, %c0_172] : memref<224x128xf32, #tpu.memory_space<vmem>>, vector<14x128xf32>
    %c0_173 = arith.constant 0 : index
    %c0_174 = arith.constant 0 : index
    %871 = vector.load %arg11[%c0_173, %c0_174] : memref<96x128xf32, #tpu.memory_space<vmem>>, vector<6x128xf32>
    %872 = vector.extract_strided_slice %870 {offsets = [0, 0], sizes = [9, 128], strides = [1, 1]} : vector<14x128xf32> to vector<9x128xf32>
    %873 = vector.extract_strided_slice %871 {offsets = [0, 0], sizes = [1, 128], strides = [1, 1]} : vector<6x128xf32> to vector<1x128xf32>
    %874 = vector.shape_cast %873 : vector<1x128xf32> to vector<128xf32>
    %875 = vector.shape_cast %874 : vector<128xf32> to vector<1x128xf32>
    %876 = vector.broadcast %875 : vector<1x128xf32> to vector<9x128xf32>
    %877 = arith.mulf %872, %876 : vector<9x128xf32>
    %878 = arith.addf %868, %877 : vector<9x128xf32>
    %879 = vector.extract_strided_slice %870 {offsets = [1, 0], sizes = [9, 128], strides = [1, 1]} : vector<14x128xf32> to vector<9x128xf32>
    %880 = vector.extract_strided_slice %871 {offsets = [1, 0], sizes = [1, 128], strides = [1, 1]} : vector<6x128xf32> to vector<1x128xf32>
    %881 = vector.shape_cast %880 : vector<1x128xf32> to vector<128xf32>
    %882 = vector.shape_cast %881 : vector<128xf32> to vector<1x128xf32>
    %883 = vector.broadcast %882 : vector<1x128xf32> to vector<9x128xf32>
    %884 = arith.mulf %879, %883 : vector<9x128xf32>
    %885 = arith.addf %869, %884 : vector<9x128xf32>
    %886 = vector.extract_strided_slice %870 {offsets = [2, 0], sizes = [9, 128], strides = [1, 1]} : vector<14x128xf32> to vector<9x128xf32>
    %887 = vector.extract_strided_slice %871 {offsets = [2, 0], sizes = [1, 128], strides = [1, 1]} : vector<6x128xf32> to vector<1x128xf32>
    %888 = vector.shape_cast %887 : vector<1x128xf32> to vector<128xf32>
    %889 = vector.shape_cast %888 : vector<128xf32> to vector<1x128xf32>
    %890 = vector.broadcast %889 : vector<1x128xf32> to vector<9x128xf32>
    %891 = arith.mulf %886, %890 : vector<9x128xf32>
    %892 = arith.addf %878, %891 : vector<9x128xf32>
    %893 = vector.extract_strided_slice %870 {offsets = [3, 0], sizes = [9, 128], strides = [1, 1]} : vector<14x128xf32> to vector<9x128xf32>
    %894 = vector.extract_strided_slice %871 {offsets = [3, 0], sizes = [1, 128], strides = [1, 1]} : vector<6x128xf32> to vector<1x128xf32>
    %895 = vector.shape_cast %894 : vector<1x128xf32> to vector<128xf32>
    %896 = vector.shape_cast %895 : vector<128xf32> to vector<1x128xf32>
    %897 = vector.broadcast %896 : vector<1x128xf32> to vector<9x128xf32>
    %898 = arith.mulf %893, %897 : vector<9x128xf32>
    %899 = arith.addf %885, %898 : vector<9x128xf32>
    %900 = vector.extract_strided_slice %870 {offsets = [4, 0], sizes = [9, 128], strides = [1, 1]} : vector<14x128xf32> to vector<9x128xf32>
    %901 = vector.extract_strided_slice %871 {offsets = [4, 0], sizes = [1, 128], strides = [1, 1]} : vector<6x128xf32> to vector<1x128xf32>
    %902 = vector.shape_cast %901 : vector<1x128xf32> to vector<128xf32>
    %903 = vector.shape_cast %902 : vector<128xf32> to vector<1x128xf32>
    %904 = vector.broadcast %903 : vector<1x128xf32> to vector<9x128xf32>
    %905 = arith.mulf %900, %904 : vector<9x128xf32>
    %906 = arith.addf %892, %905 : vector<9x128xf32>
    %907 = vector.extract_strided_slice %870 {offsets = [5, 0], sizes = [9, 128], strides = [1, 1]} : vector<14x128xf32> to vector<9x128xf32>
    %908 = vector.extract_strided_slice %871 {offsets = [5, 0], sizes = [1, 128], strides = [1, 1]} : vector<6x128xf32> to vector<1x128xf32>
    %909 = vector.shape_cast %908 : vector<1x128xf32> to vector<128xf32>
    %910 = vector.shape_cast %909 : vector<128xf32> to vector<1x128xf32>
    %911 = vector.broadcast %910 : vector<1x128xf32> to vector<9x128xf32>
    %912 = arith.mulf %907, %911 : vector<9x128xf32>
    %913 = arith.addf %899, %912 : vector<9x128xf32>
    %c64_175 = arith.constant 64 : index
    %c0_176 = arith.constant 0 : index
    %914 = vector.load %arg10[%c64_175, %c0_176] : memref<224x128xf32, #tpu.memory_space<vmem>>, vector<14x128xf32>
    %c16_177 = arith.constant 16 : index
    %c0_178 = arith.constant 0 : index
    %915 = vector.load %arg11[%c16_177, %c0_178] : memref<96x128xf32, #tpu.memory_space<vmem>>, vector<6x128xf32>
    %916 = vector.extract_strided_slice %914 {offsets = [0, 0], sizes = [9, 128], strides = [1, 1]} : vector<14x128xf32> to vector<9x128xf32>
    %917 = vector.extract_strided_slice %915 {offsets = [0, 0], sizes = [1, 128], strides = [1, 1]} : vector<6x128xf32> to vector<1x128xf32>
    %918 = vector.shape_cast %917 : vector<1x128xf32> to vector<128xf32>
    %919 = vector.shape_cast %918 : vector<128xf32> to vector<1x128xf32>
    %920 = vector.broadcast %919 : vector<1x128xf32> to vector<9x128xf32>
    %921 = arith.mulf %916, %920 : vector<9x128xf32>
    %922 = arith.addf %906, %921 : vector<9x128xf32>
    %923 = vector.extract_strided_slice %914 {offsets = [1, 0], sizes = [9, 128], strides = [1, 1]} : vector<14x128xf32> to vector<9x128xf32>
    %924 = vector.extract_strided_slice %915 {offsets = [1, 0], sizes = [1, 128], strides = [1, 1]} : vector<6x128xf32> to vector<1x128xf32>
    %925 = vector.shape_cast %924 : vector<1x128xf32> to vector<128xf32>
    %926 = vector.shape_cast %925 : vector<128xf32> to vector<1x128xf32>
    %927 = vector.broadcast %926 : vector<1x128xf32> to vector<9x128xf32>
    %928 = arith.mulf %923, %927 : vector<9x128xf32>
    %929 = arith.addf %913, %928 : vector<9x128xf32>
    %930 = vector.extract_strided_slice %914 {offsets = [2, 0], sizes = [9, 128], strides = [1, 1]} : vector<14x128xf32> to vector<9x128xf32>
    %931 = vector.extract_strided_slice %915 {offsets = [2, 0], sizes = [1, 128], strides = [1, 1]} : vector<6x128xf32> to vector<1x128xf32>
    %932 = vector.shape_cast %931 : vector<1x128xf32> to vector<128xf32>
    %933 = vector.shape_cast %932 : vector<128xf32> to vector<1x128xf32>
    %934 = vector.broadcast %933 : vector<1x128xf32> to vector<9x128xf32>
    %935 = arith.mulf %930, %934 : vector<9x128xf32>
    %936 = arith.addf %922, %935 : vector<9x128xf32>
    %937 = vector.extract_strided_slice %914 {offsets = [3, 0], sizes = [9, 128], strides = [1, 1]} : vector<14x128xf32> to vector<9x128xf32>
    %938 = vector.extract_strided_slice %915 {offsets = [3, 0], sizes = [1, 128], strides = [1, 1]} : vector<6x128xf32> to vector<1x128xf32>
    %939 = vector.shape_cast %938 : vector<1x128xf32> to vector<128xf32>
    %940 = vector.shape_cast %939 : vector<128xf32> to vector<1x128xf32>
    %941 = vector.broadcast %940 : vector<1x128xf32> to vector<9x128xf32>
    %942 = arith.mulf %937, %941 : vector<9x128xf32>
    %943 = arith.addf %929, %942 : vector<9x128xf32>
    %944 = vector.extract_strided_slice %914 {offsets = [4, 0], sizes = [9, 128], strides = [1, 1]} : vector<14x128xf32> to vector<9x128xf32>
    %945 = vector.extract_strided_slice %915 {offsets = [4, 0], sizes = [1, 128], strides = [1, 1]} : vector<6x128xf32> to vector<1x128xf32>
    %946 = vector.shape_cast %945 : vector<1x128xf32> to vector<128xf32>
    %947 = vector.shape_cast %946 : vector<128xf32> to vector<1x128xf32>
    %948 = vector.broadcast %947 : vector<1x128xf32> to vector<9x128xf32>
    %949 = arith.mulf %944, %948 : vector<9x128xf32>
    %950 = arith.addf %936, %949 : vector<9x128xf32>
    %951 = vector.extract_strided_slice %914 {offsets = [5, 0], sizes = [9, 128], strides = [1, 1]} : vector<14x128xf32> to vector<9x128xf32>
    %952 = vector.extract_strided_slice %915 {offsets = [5, 0], sizes = [1, 128], strides = [1, 1]} : vector<6x128xf32> to vector<1x128xf32>
    %953 = vector.shape_cast %952 : vector<1x128xf32> to vector<128xf32>
    %954 = vector.shape_cast %953 : vector<128xf32> to vector<1x128xf32>
    %955 = vector.broadcast %954 : vector<1x128xf32> to vector<9x128xf32>
    %956 = arith.mulf %951, %955 : vector<9x128xf32>
    %957 = arith.addf %943, %956 : vector<9x128xf32>
    %c80_179 = arith.constant 80 : index
    %c0_180 = arith.constant 0 : index
    %958 = vector.load %arg10[%c80_179, %c0_180] : memref<224x128xf32, #tpu.memory_space<vmem>>, vector<14x128xf32>
    %c32_181 = arith.constant 32 : index
    %c0_182 = arith.constant 0 : index
    %959 = vector.load %arg11[%c32_181, %c0_182] : memref<96x128xf32, #tpu.memory_space<vmem>>, vector<6x128xf32>
    %960 = vector.extract_strided_slice %958 {offsets = [0, 0], sizes = [9, 128], strides = [1, 1]} : vector<14x128xf32> to vector<9x128xf32>
    %961 = vector.extract_strided_slice %959 {offsets = [0, 0], sizes = [1, 128], strides = [1, 1]} : vector<6x128xf32> to vector<1x128xf32>
    %962 = vector.shape_cast %961 : vector<1x128xf32> to vector<128xf32>
    %963 = vector.shape_cast %962 : vector<128xf32> to vector<1x128xf32>
    %964 = vector.broadcast %963 : vector<1x128xf32> to vector<9x128xf32>
    %965 = arith.mulf %960, %964 : vector<9x128xf32>
    %966 = arith.addf %950, %965 : vector<9x128xf32>
    %967 = vector.extract_strided_slice %958 {offsets = [1, 0], sizes = [9, 128], strides = [1, 1]} : vector<14x128xf32> to vector<9x128xf32>
    %968 = vector.extract_strided_slice %959 {offsets = [1, 0], sizes = [1, 128], strides = [1, 1]} : vector<6x128xf32> to vector<1x128xf32>
    %969 = vector.shape_cast %968 : vector<1x128xf32> to vector<128xf32>
    %970 = vector.shape_cast %969 : vector<128xf32> to vector<1x128xf32>
    %971 = vector.broadcast %970 : vector<1x128xf32> to vector<9x128xf32>
    %972 = arith.mulf %967, %971 : vector<9x128xf32>
    %973 = arith.addf %957, %972 : vector<9x128xf32>
    %974 = vector.extract_strided_slice %958 {offsets = [2, 0], sizes = [9, 128], strides = [1, 1]} : vector<14x128xf32> to vector<9x128xf32>
    %975 = vector.extract_strided_slice %959 {offsets = [2, 0], sizes = [1, 128], strides = [1, 1]} : vector<6x128xf32> to vector<1x128xf32>
    %976 = vector.shape_cast %975 : vector<1x128xf32> to vector<128xf32>
    %977 = vector.shape_cast %976 : vector<128xf32> to vector<1x128xf32>
    %978 = vector.broadcast %977 : vector<1x128xf32> to vector<9x128xf32>
    %979 = arith.mulf %974, %978 : vector<9x128xf32>
    %980 = arith.addf %966, %979 : vector<9x128xf32>
    %981 = vector.extract_strided_slice %958 {offsets = [3, 0], sizes = [9, 128], strides = [1, 1]} : vector<14x128xf32> to vector<9x128xf32>
    %982 = vector.extract_strided_slice %959 {offsets = [3, 0], sizes = [1, 128], strides = [1, 1]} : vector<6x128xf32> to vector<1x128xf32>
    %983 = vector.shape_cast %982 : vector<1x128xf32> to vector<128xf32>
    %984 = vector.shape_cast %983 : vector<128xf32> to vector<1x128xf32>
    %985 = vector.broadcast %984 : vector<1x128xf32> to vector<9x128xf32>
    %986 = arith.mulf %981, %985 : vector<9x128xf32>
    %987 = arith.addf %973, %986 : vector<9x128xf32>
    %988 = vector.extract_strided_slice %958 {offsets = [4, 0], sizes = [9, 128], strides = [1, 1]} : vector<14x128xf32> to vector<9x128xf32>
    %989 = vector.extract_strided_slice %959 {offsets = [4, 0], sizes = [1, 128], strides = [1, 1]} : vector<6x128xf32> to vector<1x128xf32>
    %990 = vector.shape_cast %989 : vector<1x128xf32> to vector<128xf32>
    %991 = vector.shape_cast %990 : vector<128xf32> to vector<1x128xf32>
    %992 = vector.broadcast %991 : vector<1x128xf32> to vector<9x128xf32>
    %993 = arith.mulf %988, %992 : vector<9x128xf32>
    %994 = arith.addf %980, %993 : vector<9x128xf32>
    %995 = vector.extract_strided_slice %958 {offsets = [5, 0], sizes = [9, 128], strides = [1, 1]} : vector<14x128xf32> to vector<9x128xf32>
    %996 = vector.extract_strided_slice %959 {offsets = [5, 0], sizes = [1, 128], strides = [1, 1]} : vector<6x128xf32> to vector<1x128xf32>
    %997 = vector.shape_cast %996 : vector<1x128xf32> to vector<128xf32>
    %998 = vector.shape_cast %997 : vector<128xf32> to vector<1x128xf32>
    %999 = vector.broadcast %998 : vector<1x128xf32> to vector<9x128xf32>
    %1000 = arith.mulf %995, %999 : vector<9x128xf32>
    %1001 = arith.addf %987, %1000 : vector<9x128xf32>
    %c96_183 = arith.constant 96 : index
    %c0_184 = arith.constant 0 : index
    %1002 = vector.load %arg10[%c96_183, %c0_184] : memref<224x128xf32, #tpu.memory_space<vmem>>, vector<14x128xf32>
    %c48_185 = arith.constant 48 : index
    %c0_186 = arith.constant 0 : index
    %1003 = vector.load %arg11[%c48_185, %c0_186] : memref<96x128xf32, #tpu.memory_space<vmem>>, vector<6x128xf32>
    %1004 = vector.extract_strided_slice %1002 {offsets = [0, 0], sizes = [9, 128], strides = [1, 1]} : vector<14x128xf32> to vector<9x128xf32>
    %1005 = vector.extract_strided_slice %1003 {offsets = [0, 0], sizes = [1, 128], strides = [1, 1]} : vector<6x128xf32> to vector<1x128xf32>
    %1006 = vector.shape_cast %1005 : vector<1x128xf32> to vector<128xf32>
    %1007 = vector.shape_cast %1006 : vector<128xf32> to vector<1x128xf32>
    %1008 = vector.broadcast %1007 : vector<1x128xf32> to vector<9x128xf32>
    %1009 = arith.mulf %1004, %1008 : vector<9x128xf32>
    %1010 = arith.addf %994, %1009 : vector<9x128xf32>
    %1011 = vector.extract_strided_slice %1002 {offsets = [1, 0], sizes = [9, 128], strides = [1, 1]} : vector<14x128xf32> to vector<9x128xf32>
    %1012 = vector.extract_strided_slice %1003 {offsets = [1, 0], sizes = [1, 128], strides = [1, 1]} : vector<6x128xf32> to vector<1x128xf32>
    %1013 = vector.shape_cast %1012 : vector<1x128xf32> to vector<128xf32>
    %1014 = vector.shape_cast %1013 : vector<128xf32> to vector<1x128xf32>
    %1015 = vector.broadcast %1014 : vector<1x128xf32> to vector<9x128xf32>
    %1016 = arith.mulf %1011, %1015 : vector<9x128xf32>
    %1017 = arith.addf %1001, %1016 : vector<9x128xf32>
    %1018 = vector.extract_strided_slice %1002 {offsets = [2, 0], sizes = [9, 128], strides = [1, 1]} : vector<14x128xf32> to vector<9x128xf32>
    %1019 = vector.extract_strided_slice %1003 {offsets = [2, 0], sizes = [1, 128], strides = [1, 1]} : vector<6x128xf32> to vector<1x128xf32>
    %1020 = vector.shape_cast %1019 : vector<1x128xf32> to vector<128xf32>
    %1021 = vector.shape_cast %1020 : vector<128xf32> to vector<1x128xf32>
    %1022 = vector.broadcast %1021 : vector<1x128xf32> to vector<9x128xf32>
    %1023 = arith.mulf %1018, %1022 : vector<9x128xf32>
    %1024 = arith.addf %1010, %1023 : vector<9x128xf32>
    %1025 = vector.extract_strided_slice %1002 {offsets = [3, 0], sizes = [9, 128], strides = [1, 1]} : vector<14x128xf32> to vector<9x128xf32>
    %1026 = vector.extract_strided_slice %1003 {offsets = [3, 0], sizes = [1, 128], strides = [1, 1]} : vector<6x128xf32> to vector<1x128xf32>
    %1027 = vector.shape_cast %1026 : vector<1x128xf32> to vector<128xf32>
    %1028 = vector.shape_cast %1027 : vector<128xf32> to vector<1x128xf32>
    %1029 = vector.broadcast %1028 : vector<1x128xf32> to vector<9x128xf32>
    %1030 = arith.mulf %1025, %1029 : vector<9x128xf32>
    %1031 = arith.addf %1017, %1030 : vector<9x128xf32>
    %1032 = vector.extract_strided_slice %1002 {offsets = [4, 0], sizes = [9, 128], strides = [1, 1]} : vector<14x128xf32> to vector<9x128xf32>
    %1033 = vector.extract_strided_slice %1003 {offsets = [4, 0], sizes = [1, 128], strides = [1, 1]} : vector<6x128xf32> to vector<1x128xf32>
    %1034 = vector.shape_cast %1033 : vector<1x128xf32> to vector<128xf32>
    %1035 = vector.shape_cast %1034 : vector<128xf32> to vector<1x128xf32>
    %1036 = vector.broadcast %1035 : vector<1x128xf32> to vector<9x128xf32>
    %1037 = arith.mulf %1032, %1036 : vector<9x128xf32>
    %1038 = arith.addf %1024, %1037 : vector<9x128xf32>
    %1039 = vector.extract_strided_slice %1002 {offsets = [5, 0], sizes = [9, 128], strides = [1, 1]} : vector<14x128xf32> to vector<9x128xf32>
    %1040 = vector.extract_strided_slice %1003 {offsets = [5, 0], sizes = [1, 128], strides = [1, 1]} : vector<6x128xf32> to vector<1x128xf32>
    %1041 = vector.shape_cast %1040 : vector<1x128xf32> to vector<128xf32>
    %1042 = vector.shape_cast %1041 : vector<128xf32> to vector<1x128xf32>
    %1043 = vector.broadcast %1042 : vector<1x128xf32> to vector<9x128xf32>
    %1044 = arith.mulf %1039, %1043 : vector<9x128xf32>
    %1045 = arith.addf %1031, %1044 : vector<9x128xf32>
    %c112_187 = arith.constant 112 : index
    %c0_188 = arith.constant 0 : index
    %1046 = vector.load %arg10[%c112_187, %c0_188] : memref<224x128xf32, #tpu.memory_space<vmem>>, vector<14x128xf32>
    %c64_189 = arith.constant 64 : index
    %c0_190 = arith.constant 0 : index
    %1047 = vector.load %arg11[%c64_189, %c0_190] : memref<96x128xf32, #tpu.memory_space<vmem>>, vector<6x128xf32>
    %1048 = vector.extract_strided_slice %1046 {offsets = [0, 0], sizes = [9, 128], strides = [1, 1]} : vector<14x128xf32> to vector<9x128xf32>
    %1049 = vector.extract_strided_slice %1047 {offsets = [0, 0], sizes = [1, 128], strides = [1, 1]} : vector<6x128xf32> to vector<1x128xf32>
    %1050 = vector.shape_cast %1049 : vector<1x128xf32> to vector<128xf32>
    %1051 = vector.shape_cast %1050 : vector<128xf32> to vector<1x128xf32>
    %1052 = vector.broadcast %1051 : vector<1x128xf32> to vector<9x128xf32>
    %1053 = arith.mulf %1048, %1052 : vector<9x128xf32>
    %1054 = arith.addf %1038, %1053 : vector<9x128xf32>
    %1055 = vector.extract_strided_slice %1046 {offsets = [1, 0], sizes = [9, 128], strides = [1, 1]} : vector<14x128xf32> to vector<9x128xf32>
    %1056 = vector.extract_strided_slice %1047 {offsets = [1, 0], sizes = [1, 128], strides = [1, 1]} : vector<6x128xf32> to vector<1x128xf32>
    %1057 = vector.shape_cast %1056 : vector<1x128xf32> to vector<128xf32>
    %1058 = vector.shape_cast %1057 : vector<128xf32> to vector<1x128xf32>
    %1059 = vector.broadcast %1058 : vector<1x128xf32> to vector<9x128xf32>
    %1060 = arith.mulf %1055, %1059 : vector<9x128xf32>
    %1061 = arith.addf %1045, %1060 : vector<9x128xf32>
    %1062 = vector.extract_strided_slice %1046 {offsets = [2, 0], sizes = [9, 128], strides = [1, 1]} : vector<14x128xf32> to vector<9x128xf32>
    %1063 = vector.extract_strided_slice %1047 {offsets = [2, 0], sizes = [1, 128], strides = [1, 1]} : vector<6x128xf32> to vector<1x128xf32>
    %1064 = vector.shape_cast %1063 : vector<1x128xf32> to vector<128xf32>
    %1065 = vector.shape_cast %1064 : vector<128xf32> to vector<1x128xf32>
    %1066 = vector.broadcast %1065 : vector<1x128xf32> to vector<9x128xf32>
    %1067 = arith.mulf %1062, %1066 : vector<9x128xf32>
    %1068 = arith.addf %1054, %1067 : vector<9x128xf32>
    %1069 = vector.extract_strided_slice %1046 {offsets = [3, 0], sizes = [9, 128], strides = [1, 1]} : vector<14x128xf32> to vector<9x128xf32>
    %1070 = vector.extract_strided_slice %1047 {offsets = [3, 0], sizes = [1, 128], strides = [1, 1]} : vector<6x128xf32> to vector<1x128xf32>
    %1071 = vector.shape_cast %1070 : vector<1x128xf32> to vector<128xf32>
    %1072 = vector.shape_cast %1071 : vector<128xf32> to vector<1x128xf32>
    %1073 = vector.broadcast %1072 : vector<1x128xf32> to vector<9x128xf32>
    %1074 = arith.mulf %1069, %1073 : vector<9x128xf32>
    %1075 = arith.addf %1061, %1074 : vector<9x128xf32>
    %1076 = vector.extract_strided_slice %1046 {offsets = [4, 0], sizes = [9, 128], strides = [1, 1]} : vector<14x128xf32> to vector<9x128xf32>
    %1077 = vector.extract_strided_slice %1047 {offsets = [4, 0], sizes = [1, 128], strides = [1, 1]} : vector<6x128xf32> to vector<1x128xf32>
    %1078 = vector.shape_cast %1077 : vector<1x128xf32> to vector<128xf32>
    %1079 = vector.shape_cast %1078 : vector<128xf32> to vector<1x128xf32>
    %1080 = vector.broadcast %1079 : vector<1x128xf32> to vector<9x128xf32>
    %1081 = arith.mulf %1076, %1080 : vector<9x128xf32>
    %1082 = arith.addf %1068, %1081 : vector<9x128xf32>
    %1083 = vector.extract_strided_slice %1046 {offsets = [5, 0], sizes = [9, 128], strides = [1, 1]} : vector<14x128xf32> to vector<9x128xf32>
    %1084 = vector.extract_strided_slice %1047 {offsets = [5, 0], sizes = [1, 128], strides = [1, 1]} : vector<6x128xf32> to vector<1x128xf32>
    %1085 = vector.shape_cast %1084 : vector<1x128xf32> to vector<128xf32>
    %1086 = vector.shape_cast %1085 : vector<128xf32> to vector<1x128xf32>
    %1087 = vector.broadcast %1086 : vector<1x128xf32> to vector<9x128xf32>
    %1088 = arith.mulf %1083, %1087 : vector<9x128xf32>
    %1089 = arith.addf %1075, %1088 : vector<9x128xf32>
    %c128 = arith.constant 128 : index
    %c0_191 = arith.constant 0 : index
    %1090 = vector.load %arg10[%c128, %c0_191] : memref<224x128xf32, #tpu.memory_space<vmem>>, vector<14x128xf32>
    %c80_192 = arith.constant 80 : index
    %c0_193 = arith.constant 0 : index
    %1091 = vector.load %arg11[%c80_192, %c0_193] : memref<96x128xf32, #tpu.memory_space<vmem>>, vector<6x128xf32>
    %1092 = vector.extract_strided_slice %1090 {offsets = [0, 0], sizes = [9, 128], strides = [1, 1]} : vector<14x128xf32> to vector<9x128xf32>
    %1093 = vector.extract_strided_slice %1091 {offsets = [0, 0], sizes = [1, 128], strides = [1, 1]} : vector<6x128xf32> to vector<1x128xf32>
    %1094 = vector.shape_cast %1093 : vector<1x128xf32> to vector<128xf32>
    %1095 = vector.shape_cast %1094 : vector<128xf32> to vector<1x128xf32>
    %1096 = vector.broadcast %1095 : vector<1x128xf32> to vector<9x128xf32>
    %1097 = arith.mulf %1092, %1096 : vector<9x128xf32>
    %1098 = arith.addf %1082, %1097 : vector<9x128xf32>
    %1099 = vector.extract_strided_slice %1090 {offsets = [1, 0], sizes = [9, 128], strides = [1, 1]} : vector<14x128xf32> to vector<9x128xf32>
    %1100 = vector.extract_strided_slice %1091 {offsets = [1, 0], sizes = [1, 128], strides = [1, 1]} : vector<6x128xf32> to vector<1x128xf32>
    %1101 = vector.shape_cast %1100 : vector<1x128xf32> to vector<128xf32>
    %1102 = vector.shape_cast %1101 : vector<128xf32> to vector<1x128xf32>
    %1103 = vector.broadcast %1102 : vector<1x128xf32> to vector<9x128xf32>
    %1104 = arith.mulf %1099, %1103 : vector<9x128xf32>
    %1105 = arith.addf %1089, %1104 : vector<9x128xf32>
    %1106 = vector.extract_strided_slice %1090 {offsets = [2, 0], sizes = [9, 128], strides = [1, 1]} : vector<14x128xf32> to vector<9x128xf32>
    %1107 = vector.extract_strided_slice %1091 {offsets = [2, 0], sizes = [1, 128], strides = [1, 1]} : vector<6x128xf32> to vector<1x128xf32>
    %1108 = vector.shape_cast %1107 : vector<1x128xf32> to vector<128xf32>
    %1109 = vector.shape_cast %1108 : vector<128xf32> to vector<1x128xf32>
    %1110 = vector.broadcast %1109 : vector<1x128xf32> to vector<9x128xf32>
    %1111 = arith.mulf %1106, %1110 : vector<9x128xf32>
    %1112 = arith.addf %1098, %1111 : vector<9x128xf32>
    %1113 = vector.extract_strided_slice %1090 {offsets = [3, 0], sizes = [9, 128], strides = [1, 1]} : vector<14x128xf32> to vector<9x128xf32>
    %1114 = vector.extract_strided_slice %1091 {offsets = [3, 0], sizes = [1, 128], strides = [1, 1]} : vector<6x128xf32> to vector<1x128xf32>
    %1115 = vector.shape_cast %1114 : vector<1x128xf32> to vector<128xf32>
    %1116 = vector.shape_cast %1115 : vector<128xf32> to vector<1x128xf32>
    %1117 = vector.broadcast %1116 : vector<1x128xf32> to vector<9x128xf32>
    %1118 = arith.mulf %1113, %1117 : vector<9x128xf32>
    %1119 = arith.addf %1105, %1118 : vector<9x128xf32>
    %1120 = vector.extract_strided_slice %1090 {offsets = [4, 0], sizes = [9, 128], strides = [1, 1]} : vector<14x128xf32> to vector<9x128xf32>
    %1121 = vector.extract_strided_slice %1091 {offsets = [4, 0], sizes = [1, 128], strides = [1, 1]} : vector<6x128xf32> to vector<1x128xf32>
    %1122 = vector.shape_cast %1121 : vector<1x128xf32> to vector<128xf32>
    %1123 = vector.shape_cast %1122 : vector<128xf32> to vector<1x128xf32>
    %1124 = vector.broadcast %1123 : vector<1x128xf32> to vector<9x128xf32>
    %1125 = arith.mulf %1120, %1124 : vector<9x128xf32>
    %1126 = arith.addf %1112, %1125 : vector<9x128xf32>
    %1127 = vector.extract_strided_slice %1090 {offsets = [5, 0], sizes = [9, 128], strides = [1, 1]} : vector<14x128xf32> to vector<9x128xf32>
    %1128 = vector.extract_strided_slice %1091 {offsets = [5, 0], sizes = [1, 128], strides = [1, 1]} : vector<6x128xf32> to vector<1x128xf32>
    %1129 = vector.shape_cast %1128 : vector<1x128xf32> to vector<128xf32>
    %1130 = vector.shape_cast %1129 : vector<128xf32> to vector<1x128xf32>
    %1131 = vector.broadcast %1130 : vector<1x128xf32> to vector<9x128xf32>
    %1132 = arith.mulf %1127, %1131 : vector<9x128xf32>
    %1133 = arith.addf %1119, %1132 : vector<9x128xf32>
    %1134 = arith.addf %1126, %1133 : vector<9x128xf32>
    %c0_194 = arith.constant 0 : index
    %c3 = arith.constant 3 : index
    %c0_195 = arith.constant 0 : index
    %c0_196 = arith.constant 0 : index
    %1135 = vector.load %arg9[%c0_194, %c3, %c0_195, %c0_196] : memref<1x9x9x128xf32, #tpu.memory_space<vmem>>, vector<1x1x9x128xf32>
    %1136 = vector.shape_cast %1135 : vector<1x1x9x128xf32> to vector<9x128xf32>
    %1137 = vector.shape_cast %1134 : vector<9x128xf32> to vector<1x1x9x128xf32>
    tpu.vector_store %arg9[%c0_194, %c3, %c0_195, %c0_196], %1137 {strides = array<i32>} : memref<1x9x9x128xf32, #tpu.memory_space<vmem>>, vector<1x1x9x128xf32>,
    %cst_197 = arith.constant 0.000000e+00 : f32
    %1138 = vector.broadcast %cst_197 : f32 to vector<9x128xf32>
    %cst_198 = arith.constant 0.000000e+00 : f32
    %1139 = vector.broadcast %cst_198 : f32 to vector<9x128xf32>
    %c64_199 = arith.constant 64 : index
    %c0_200 = arith.constant 0 : index
    %1140 = vector.load %arg10[%c64_199, %c0_200] : memref<224x128xf32, #tpu.memory_space<vmem>>, vector<14x128xf32>
    %c0_201 = arith.constant 0 : index
    %c0_202 = arith.constant 0 : index
    %1141 = vector.load %arg11[%c0_201, %c0_202] : memref<96x128xf32, #tpu.memory_space<vmem>>, vector<6x128xf32>
    %1142 = vector.extract_strided_slice %1140 {offsets = [0, 0], sizes = [9, 128], strides = [1, 1]} : vector<14x128xf32> to vector<9x128xf32>
    %1143 = vector.extract_strided_slice %1141 {offsets = [0, 0], sizes = [1, 128], strides = [1, 1]} : vector<6x128xf32> to vector<1x128xf32>
    %1144 = vector.shape_cast %1143 : vector<1x128xf32> to vector<128xf32>
    %1145 = vector.shape_cast %1144 : vector<128xf32> to vector<1x128xf32>
    %1146 = vector.broadcast %1145 : vector<1x128xf32> to vector<9x128xf32>
    %1147 = arith.mulf %1142, %1146 : vector<9x128xf32>
    %1148 = arith.addf %1138, %1147 : vector<9x128xf32>
    %1149 = vector.extract_strided_slice %1140 {offsets = [1, 0], sizes = [9, 128], strides = [1, 1]} : vector<14x128xf32> to vector<9x128xf32>
    %1150 = vector.extract_strided_slice %1141 {offsets = [1, 0], sizes = [1, 128], strides = [1, 1]} : vector<6x128xf32> to vector<1x128xf32>
    %1151 = vector.shape_cast %1150 : vector<1x128xf32> to vector<128xf32>
    %1152 = vector.shape_cast %1151 : vector<128xf32> to vector<1x128xf32>
    %1153 = vector.broadcast %1152 : vector<1x128xf32> to vector<9x128xf32>
    %1154 = arith.mulf %1149, %1153 : vector<9x128xf32>
    %1155 = arith.addf %1139, %1154 : vector<9x128xf32>
    %1156 = vector.extract_strided_slice %1140 {offsets = [2, 0], sizes = [9, 128], strides = [1, 1]} : vector<14x128xf32> to vector<9x128xf32>
    %1157 = vector.extract_strided_slice %1141 {offsets = [2, 0], sizes = [1, 128], strides = [1, 1]} : vector<6x128xf32> to vector<1x128xf32>
    %1158 = vector.shape_cast %1157 : vector<1x128xf32> to vector<128xf32>
    %1159 = vector.shape_cast %1158 : vector<128xf32> to vector<1x128xf32>
    %1160 = vector.broadcast %1159 : vector<1x128xf32> to vector<9x128xf32>
    %1161 = arith.mulf %1156, %1160 : vector<9x128xf32>
    %1162 = arith.addf %1148, %1161 : vector<9x128xf32>
    %1163 = vector.extract_strided_slice %1140 {offsets = [3, 0], sizes = [9, 128], strides = [1, 1]} : vector<14x128xf32> to vector<9x128xf32>
    %1164 = vector.extract_strided_slice %1141 {offsets = [3, 0], sizes = [1, 128], strides = [1, 1]} : vector<6x128xf32> to vector<1x128xf32>
    %1165 = vector.shape_cast %1164 : vector<1x128xf32> to vector<128xf32>
    %1166 = vector.shape_cast %1165 : vector<128xf32> to vector<1x128xf32>
    %1167 = vector.broadcast %1166 : vector<1x128xf32> to vector<9x128xf32>
    %1168 = arith.mulf %1163, %1167 : vector<9x128xf32>
    %1169 = arith.addf %1155, %1168 : vector<9x128xf32>
    %1170 = vector.extract_strided_slice %1140 {offsets = [4, 0], sizes = [9, 128], strides = [1, 1]} : vector<14x128xf32> to vector<9x128xf32>
    %1171 = vector.extract_strided_slice %1141 {offsets = [4, 0], sizes = [1, 128], strides = [1, 1]} : vector<6x128xf32> to vector<1x128xf32>
    %1172 = vector.shape_cast %1171 : vector<1x128xf32> to vector<128xf32>
    %1173 = vector.shape_cast %1172 : vector<128xf32> to vector<1x128xf32>
    %1174 = vector.broadcast %1173 : vector<1x128xf32> to vector<9x128xf32>
    %1175 = arith.mulf %1170, %1174 : vector<9x128xf32>
    %1176 = arith.addf %1162, %1175 : vector<9x128xf32>
    %1177 = vector.extract_strided_slice %1140 {offsets = [5, 0], sizes = [9, 128], strides = [1, 1]} : vector<14x128xf32> to vector<9x128xf32>
    %1178 = vector.extract_strided_slice %1141 {offsets = [5, 0], sizes = [1, 128], strides = [1, 1]} : vector<6x128xf32> to vector<1x128xf32>
    %1179 = vector.shape_cast %1178 : vector<1x128xf32> to vector<128xf32>
    %1180 = vector.shape_cast %1179 : vector<128xf32> to vector<1x128xf32>
    %1181 = vector.broadcast %1180 : vector<1x128xf32> to vector<9x128xf32>
    %1182 = arith.mulf %1177, %1181 : vector<9x128xf32>
    %1183 = arith.addf %1169, %1182 : vector<9x128xf32>
    %c80_203 = arith.constant 80 : index
    %c0_204 = arith.constant 0 : index
    %1184 = vector.load %arg10[%c80_203, %c0_204] : memref<224x128xf32, #tpu.memory_space<vmem>>, vector<14x128xf32>
    %c16_205 = arith.constant 16 : index
    %c0_206 = arith.constant 0 : index
    %1185 = vector.load %arg11[%c16_205, %c0_206] : memref<96x128xf32, #tpu.memory_space<vmem>>, vector<6x128xf32>
    %1186 = vector.extract_strided_slice %1184 {offsets = [0, 0], sizes = [9, 128], strides = [1, 1]} : vector<14x128xf32> to vector<9x128xf32>
    %1187 = vector.extract_strided_slice %1185 {offsets = [0, 0], sizes = [1, 128], strides = [1, 1]} : vector<6x128xf32> to vector<1x128xf32>
    %1188 = vector.shape_cast %1187 : vector<1x128xf32> to vector<128xf32>
    %1189 = vector.shape_cast %1188 : vector<128xf32> to vector<1x128xf32>
    %1190 = vector.broadcast %1189 : vector<1x128xf32> to vector<9x128xf32>
    %1191 = arith.mulf %1186, %1190 : vector<9x128xf32>
    %1192 = arith.addf %1176, %1191 : vector<9x128xf32>
    %1193 = vector.extract_strided_slice %1184 {offsets = [1, 0], sizes = [9, 128], strides = [1, 1]} : vector<14x128xf32> to vector<9x128xf32>
    %1194 = vector.extract_strided_slice %1185 {offsets = [1, 0], sizes = [1, 128], strides = [1, 1]} : vector<6x128xf32> to vector<1x128xf32>
    %1195 = vector.shape_cast %1194 : vector<1x128xf32> to vector<128xf32>
    %1196 = vector.shape_cast %1195 : vector<128xf32> to vector<1x128xf32>
    %1197 = vector.broadcast %1196 : vector<1x128xf32> to vector<9x128xf32>
    %1198 = arith.mulf %1193, %1197 : vector<9x128xf32>
    %1199 = arith.addf %1183, %1198 : vector<9x128xf32>
    %1200 = vector.extract_strided_slice %1184 {offsets = [2, 0], sizes = [9, 128], strides = [1, 1]} : vector<14x128xf32> to vector<9x128xf32>
    %1201 = vector.extract_strided_slice %1185 {offsets = [2, 0], sizes = [1, 128], strides = [1, 1]} : vector<6x128xf32> to vector<1x128xf32>
    %1202 = vector.shape_cast %1201 : vector<1x128xf32> to vector<128xf32>
    %1203 = vector.shape_cast %1202 : vector<128xf32> to vector<1x128xf32>
    %1204 = vector.broadcast %1203 : vector<1x128xf32> to vector<9x128xf32>
    %1205 = arith.mulf %1200, %1204 : vector<9x128xf32>
    %1206 = arith.addf %1192, %1205 : vector<9x128xf32>
    %1207 = vector.extract_strided_slice %1184 {offsets = [3, 0], sizes = [9, 128], strides = [1, 1]} : vector<14x128xf32> to vector<9x128xf32>
    %1208 = vector.extract_strided_slice %1185 {offsets = [3, 0], sizes = [1, 128], strides = [1, 1]} : vector<6x128xf32> to vector<1x128xf32>
    %1209 = vector.shape_cast %1208 : vector<1x128xf32> to vector<128xf32>
    %1210 = vector.shape_cast %1209 : vector<128xf32> to vector<1x128xf32>
    %1211 = vector.broadcast %1210 : vector<1x128xf32> to vector<9x128xf32>
    %1212 = arith.mulf %1207, %1211 : vector<9x128xf32>
    %1213 = arith.addf %1199, %1212 : vector<9x128xf32>
    %1214 = vector.extract_strided_slice %1184 {offsets = [4, 0], sizes = [9, 128], strides = [1, 1]} : vector<14x128xf32> to vector<9x128xf32>
    %1215 = vector.extract_strided_slice %1185 {offsets = [4, 0], sizes = [1, 128], strides = [1, 1]} : vector<6x128xf32> to vector<1x128xf32>
    %1216 = vector.shape_cast %1215 : vector<1x128xf32> to vector<128xf32>
    %1217 = vector.shape_cast %1216 : vector<128xf32> to vector<1x128xf32>
    %1218 = vector.broadcast %1217 : vector<1x128xf32> to vector<9x128xf32>
    %1219 = arith.mulf %1214, %1218 : vector<9x128xf32>
    %1220 = arith.addf %1206, %1219 : vector<9x128xf32>
    %1221 = vector.extract_strided_slice %1184 {offsets = [5, 0], sizes = [9, 128], strides = [1, 1]} : vector<14x128xf32> to vector<9x128xf32>
    %1222 = vector.extract_strided_slice %1185 {offsets = [5, 0], sizes = [1, 128], strides = [1, 1]} : vector<6x128xf32> to vector<1x128xf32>
    %1223 = vector.shape_cast %1222 : vector<1x128xf32> to vector<128xf32>
    %1224 = vector.shape_cast %1223 : vector<128xf32> to vector<1x128xf32>
    %1225 = vector.broadcast %1224 : vector<1x128xf32> to vector<9x128xf32>
    %1226 = arith.mulf %1221, %1225 : vector<9x128xf32>
    %1227 = arith.addf %1213, %1226 : vector<9x128xf32>
    %c96_207 = arith.constant 96 : index
    %c0_208 = arith.constant 0 : index
    %1228 = vector.load %arg10[%c96_207, %c0_208] : memref<224x128xf32, #tpu.memory_space<vmem>>, vector<14x128xf32>
    %c32_209 = arith.constant 32 : index
    %c0_210 = arith.constant 0 : index
    %1229 = vector.load %arg11[%c32_209, %c0_210] : memref<96x128xf32, #tpu.memory_space<vmem>>, vector<6x128xf32>
    %1230 = vector.extract_strided_slice %1228 {offsets = [0, 0], sizes = [9, 128], strides = [1, 1]} : vector<14x128xf32> to vector<9x128xf32>
    %1231 = vector.extract_strided_slice %1229 {offsets = [0, 0], sizes = [1, 128], strides = [1, 1]} : vector<6x128xf32> to vector<1x128xf32>
    %1232 = vector.shape_cast %1231 : vector<1x128xf32> to vector<128xf32>
    %1233 = vector.shape_cast %1232 : vector<128xf32> to vector<1x128xf32>
    %1234 = vector.broadcast %1233 : vector<1x128xf32> to vector<9x128xf32>
    %1235 = arith.mulf %1230, %1234 : vector<9x128xf32>
    %1236 = arith.addf %1220, %1235 : vector<9x128xf32>
    %1237 = vector.extract_strided_slice %1228 {offsets = [1, 0], sizes = [9, 128], strides = [1, 1]} : vector<14x128xf32> to vector<9x128xf32>
    %1238 = vector.extract_strided_slice %1229 {offsets = [1, 0], sizes = [1, 128], strides = [1, 1]} : vector<6x128xf32> to vector<1x128xf32>
    %1239 = vector.shape_cast %1238 : vector<1x128xf32> to vector<128xf32>
    %1240 = vector.shape_cast %1239 : vector<128xf32> to vector<1x128xf32>
    %1241 = vector.broadcast %1240 : vector<1x128xf32> to vector<9x128xf32>
    %1242 = arith.mulf %1237, %1241 : vector<9x128xf32>
    %1243 = arith.addf %1227, %1242 : vector<9x128xf32>
    %1244 = vector.extract_strided_slice %1228 {offsets = [2, 0], sizes = [9, 128], strides = [1, 1]} : vector<14x128xf32> to vector<9x128xf32>
    %1245 = vector.extract_strided_slice %1229 {offsets = [2, 0], sizes = [1, 128], strides = [1, 1]} : vector<6x128xf32> to vector<1x128xf32>
    %1246 = vector.shape_cast %1245 : vector<1x128xf32> to vector<128xf32>
    %1247 = vector.shape_cast %1246 : vector<128xf32> to vector<1x128xf32>
    %1248 = vector.broadcast %1247 : vector<1x128xf32> to vector<9x128xf32>
    %1249 = arith.mulf %1244, %1248 : vector<9x128xf32>
    %1250 = arith.addf %1236, %1249 : vector<9x128xf32>
    %1251 = vector.extract_strided_slice %1228 {offsets = [3, 0], sizes = [9, 128], strides = [1, 1]} : vector<14x128xf32> to vector<9x128xf32>
    %1252 = vector.extract_strided_slice %1229 {offsets = [3, 0], sizes = [1, 128], strides = [1, 1]} : vector<6x128xf32> to vector<1x128xf32>
    %1253 = vector.shape_cast %1252 : vector<1x128xf32> to vector<128xf32>
    %1254 = vector.shape_cast %1253 : vector<128xf32> to vector<1x128xf32>
    %1255 = vector.broadcast %1254 : vector<1x128xf32> to vector<9x128xf32>
    %1256 = arith.mulf %1251, %1255 : vector<9x128xf32>
    %1257 = arith.addf %1243, %1256 : vector<9x128xf32>
    %1258 = vector.extract_strided_slice %1228 {offsets = [4, 0], sizes = [9, 128], strides = [1, 1]} : vector<14x128xf32> to vector<9x128xf32>
    %1259 = vector.extract_strided_slice %1229 {offsets = [4, 0], sizes = [1, 128], strides = [1, 1]} : vector<6x128xf32> to vector<1x128xf32>
    %1260 = vector.shape_cast %1259 : vector<1x128xf32> to vector<128xf32>
    %1261 = vector.shape_cast %1260 : vector<128xf32> to vector<1x128xf32>
    %1262 = vector.broadcast %1261 : vector<1x128xf32> to vector<9x128xf32>
    %1263 = arith.mulf %1258, %1262 : vector<9x128xf32>
    %1264 = arith.addf %1250, %1263 : vector<9x128xf32>
    %1265 = vector.extract_strided_slice %1228 {offsets = [5, 0], sizes = [9, 128], strides = [1, 1]} : vector<14x128xf32> to vector<9x128xf32>
    %1266 = vector.extract_strided_slice %1229 {offsets = [5, 0], sizes = [1, 128], strides = [1, 1]} : vector<6x128xf32> to vector<1x128xf32>
    %1267 = vector.shape_cast %1266 : vector<1x128xf32> to vector<128xf32>
    %1268 = vector.shape_cast %1267 : vector<128xf32> to vector<1x128xf32>
    %1269 = vector.broadcast %1268 : vector<1x128xf32> to vector<9x128xf32>
    %1270 = arith.mulf %1265, %1269 : vector<9x128xf32>
    %1271 = arith.addf %1257, %1270 : vector<9x128xf32>
    %c112_211 = arith.constant 112 : index
    %c0_212 = arith.constant 0 : index
    %1272 = vector.load %arg10[%c112_211, %c0_212] : memref<224x128xf32, #tpu.memory_space<vmem>>, vector<14x128xf32>
    %c48_213 = arith.constant 48 : index
    %c0_214 = arith.constant 0 : index
    %1273 = vector.load %arg11[%c48_213, %c0_214] : memref<96x128xf32, #tpu.memory_space<vmem>>, vector<6x128xf32>
    %1274 = vector.extract_strided_slice %1272 {offsets = [0, 0], sizes = [9, 128], strides = [1, 1]} : vector<14x128xf32> to vector<9x128xf32>
    %1275 = vector.extract_strided_slice %1273 {offsets = [0, 0], sizes = [1, 128], strides = [1, 1]} : vector<6x128xf32> to vector<1x128xf32>
    %1276 = vector.shape_cast %1275 : vector<1x128xf32> to vector<128xf32>
    %1277 = vector.shape_cast %1276 : vector<128xf32> to vector<1x128xf32>
    %1278 = vector.broadcast %1277 : vector<1x128xf32> to vector<9x128xf32>
    %1279 = arith.mulf %1274, %1278 : vector<9x128xf32>
    %1280 = arith.addf %1264, %1279 : vector<9x128xf32>
    %1281 = vector.extract_strided_slice %1272 {offsets = [1, 0], sizes = [9, 128], strides = [1, 1]} : vector<14x128xf32> to vector<9x128xf32>
    %1282 = vector.extract_strided_slice %1273 {offsets = [1, 0], sizes = [1, 128], strides = [1, 1]} : vector<6x128xf32> to vector<1x128xf32>
    %1283 = vector.shape_cast %1282 : vector<1x128xf32> to vector<128xf32>
    %1284 = vector.shape_cast %1283 : vector<128xf32> to vector<1x128xf32>
    %1285 = vector.broadcast %1284 : vector<1x128xf32> to vector<9x128xf32>
    %1286 = arith.mulf %1281, %1285 : vector<9x128xf32>
    %1287 = arith.addf %1271, %1286 : vector<9x128xf32>
    %1288 = vector.extract_strided_slice %1272 {offsets = [2, 0], sizes = [9, 128], strides = [1, 1]} : vector<14x128xf32> to vector<9x128xf32>
    %1289 = vector.extract_strided_slice %1273 {offsets = [2, 0], sizes = [1, 128], strides = [1, 1]} : vector<6x128xf32> to vector<1x128xf32>
    %1290 = vector.shape_cast %1289 : vector<1x128xf32> to vector<128xf32>
    %1291 = vector.shape_cast %1290 : vector<128xf32> to vector<1x128xf32>
    %1292 = vector.broadcast %1291 : vector<1x128xf32> to vector<9x128xf32>
    %1293 = arith.mulf %1288, %1292 : vector<9x128xf32>
    %1294 = arith.addf %1280, %1293 : vector<9x128xf32>
    %1295 = vector.extract_strided_slice %1272 {offsets = [3, 0], sizes = [9, 128], strides = [1, 1]} : vector<14x128xf32> to vector<9x128xf32>
    %1296 = vector.extract_strided_slice %1273 {offsets = [3, 0], sizes = [1, 128], strides = [1, 1]} : vector<6x128xf32> to vector<1x128xf32>
    %1297 = vector.shape_cast %1296 : vector<1x128xf32> to vector<128xf32>
    %1298 = vector.shape_cast %1297 : vector<128xf32> to vector<1x128xf32>
    %1299 = vector.broadcast %1298 : vector<1x128xf32> to vector<9x128xf32>
    %1300 = arith.mulf %1295, %1299 : vector<9x128xf32>
    %1301 = arith.addf %1287, %1300 : vector<9x128xf32>
    %1302 = vector.extract_strided_slice %1272 {offsets = [4, 0], sizes = [9, 128], strides = [1, 1]} : vector<14x128xf32> to vector<9x128xf32>
    %1303 = vector.extract_strided_slice %1273 {offsets = [4, 0], sizes = [1, 128], strides = [1, 1]} : vector<6x128xf32> to vector<1x128xf32>
    %1304 = vector.shape_cast %1303 : vector<1x128xf32> to vector<128xf32>
    %1305 = vector.shape_cast %1304 : vector<128xf32> to vector<1x128xf32>
    %1306 = vector.broadcast %1305 : vector<1x128xf32> to vector<9x128xf32>
    %1307 = arith.mulf %1302, %1306 : vector<9x128xf32>
    %1308 = arith.addf %1294, %1307 : vector<9x128xf32>
    %1309 = vector.extract_strided_slice %1272 {offsets = [5, 0], sizes = [9, 128], strides = [1, 1]} : vector<14x128xf32> to vector<9x128xf32>
    %1310 = vector.extract_strided_slice %1273 {offsets = [5, 0], sizes = [1, 128], strides = [1, 1]} : vector<6x128xf32> to vector<1x128xf32>
    %1311 = vector.shape_cast %1310 : vector<1x128xf32> to vector<128xf32>
    %1312 = vector.shape_cast %1311 : vector<128xf32> to vector<1x128xf32>
    %1313 = vector.broadcast %1312 : vector<1x128xf32> to vector<9x128xf32>
    %1314 = arith.mulf %1309, %1313 : vector<9x128xf32>
    %1315 = arith.addf %1301, %1314 : vector<9x128xf32>
    %c128_215 = arith.constant 128 : index
    %c0_216 = arith.constant 0 : index
    %1316 = vector.load %arg10[%c128_215, %c0_216] : memref<224x128xf32, #tpu.memory_space<vmem>>, vector<14x128xf32>
    %c64_217 = arith.constant 64 : index
    %c0_218 = arith.constant 0 : index
    %1317 = vector.load %arg11[%c64_217, %c0_218] : memref<96x128xf32, #tpu.memory_space<vmem>>, vector<6x128xf32>
    %1318 = vector.extract_strided_slice %1316 {offsets = [0, 0], sizes = [9, 128], strides = [1, 1]} : vector<14x128xf32> to vector<9x128xf32>
    %1319 = vector.extract_strided_slice %1317 {offsets = [0, 0], sizes = [1, 128], strides = [1, 1]} : vector<6x128xf32> to vector<1x128xf32>
    %1320 = vector.shape_cast %1319 : vector<1x128xf32> to vector<128xf32>
    %1321 = vector.shape_cast %1320 : vector<128xf32> to vector<1x128xf32>
    %1322 = vector.broadcast %1321 : vector<1x128xf32> to vector<9x128xf32>
    %1323 = arith.mulf %1318, %1322 : vector<9x128xf32>
    %1324 = arith.addf %1308, %1323 : vector<9x128xf32>
    %1325 = vector.extract_strided_slice %1316 {offsets = [1, 0], sizes = [9, 128], strides = [1, 1]} : vector<14x128xf32> to vector<9x128xf32>
    %1326 = vector.extract_strided_slice %1317 {offsets = [1, 0], sizes = [1, 128], strides = [1, 1]} : vector<6x128xf32> to vector<1x128xf32>
    %1327 = vector.shape_cast %1326 : vector<1x128xf32> to vector<128xf32>
    %1328 = vector.shape_cast %1327 : vector<128xf32> to vector<1x128xf32>
    %1329 = vector.broadcast %1328 : vector<1x128xf32> to vector<9x128xf32>
    %1330 = arith.mulf %1325, %1329 : vector<9x128xf32>
    %1331 = arith.addf %1315, %1330 : vector<9x128xf32>
    %1332 = vector.extract_strided_slice %1316 {offsets = [2, 0], sizes = [9, 128], strides = [1, 1]} : vector<14x128xf32> to vector<9x128xf32>
    %1333 = vector.extract_strided_slice %1317 {offsets = [2, 0], sizes = [1, 128], strides = [1, 1]} : vector<6x128xf32> to vector<1x128xf32>
    %1334 = vector.shape_cast %1333 : vector<1x128xf32> to vector<128xf32>
    %1335 = vector.shape_cast %1334 : vector<128xf32> to vector<1x128xf32>
    %1336 = vector.broadcast %1335 : vector<1x128xf32> to vector<9x128xf32>
    %1337 = arith.mulf %1332, %1336 : vector<9x128xf32>
    %1338 = arith.addf %1324, %1337 : vector<9x128xf32>
    %1339 = vector.extract_strided_slice %1316 {offsets = [3, 0], sizes = [9, 128], strides = [1, 1]} : vector<14x128xf32> to vector<9x128xf32>
    %1340 = vector.extract_strided_slice %1317 {offsets = [3, 0], sizes = [1, 128], strides = [1, 1]} : vector<6x128xf32> to vector<1x128xf32>
    %1341 = vector.shape_cast %1340 : vector<1x128xf32> to vector<128xf32>
    %1342 = vector.shape_cast %1341 : vector<128xf32> to vector<1x128xf32>
    %1343 = vector.broadcast %1342 : vector<1x128xf32> to vector<9x128xf32>
    %1344 = arith.mulf %1339, %1343 : vector<9x128xf32>
    %1345 = arith.addf %1331, %1344 : vector<9x128xf32>
    %1346 = vector.extract_strided_slice %1316 {offsets = [4, 0], sizes = [9, 128], strides = [1, 1]} : vector<14x128xf32> to vector<9x128xf32>
    %1347 = vector.extract_strided_slice %1317 {offsets = [4, 0], sizes = [1, 128], strides = [1, 1]} : vector<6x128xf32> to vector<1x128xf32>
    %1348 = vector.shape_cast %1347 : vector<1x128xf32> to vector<128xf32>
    %1349 = vector.shape_cast %1348 : vector<128xf32> to vector<1x128xf32>
    %1350 = vector.broadcast %1349 : vector<1x128xf32> to vector<9x128xf32>
    %1351 = arith.mulf %1346, %1350 : vector<9x128xf32>
    %1352 = arith.addf %1338, %1351 : vector<9x128xf32>
    %1353 = vector.extract_strided_slice %1316 {offsets = [5, 0], sizes = [9, 128], strides = [1, 1]} : vector<14x128xf32> to vector<9x128xf32>
    %1354 = vector.extract_strided_slice %1317 {offsets = [5, 0], sizes = [1, 128], strides = [1, 1]} : vector<6x128xf32> to vector<1x128xf32>
    %1355 = vector.shape_cast %1354 : vector<1x128xf32> to vector<128xf32>
    %1356 = vector.shape_cast %1355 : vector<128xf32> to vector<1x128xf32>
    %1357 = vector.broadcast %1356 : vector<1x128xf32> to vector<9x128xf32>
    %1358 = arith.mulf %1353, %1357 : vector<9x128xf32>
    %1359 = arith.addf %1345, %1358 : vector<9x128xf32>
    %c144 = arith.constant 144 : index
    %c0_219 = arith.constant 0 : index
    %1360 = vector.load %arg10[%c144, %c0_219] : memref<224x128xf32, #tpu.memory_space<vmem>>, vector<14x128xf32>
    %c80_220 = arith.constant 80 : index
    %c0_221 = arith.constant 0 : index
    %1361 = vector.load %arg11[%c80_220, %c0_221] : memref<96x128xf32, #tpu.memory_space<vmem>>, vector<6x128xf32>
    %1362 = vector.extract_strided_slice %1360 {offsets = [0, 0], sizes = [9, 128], strides = [1, 1]} : vector<14x128xf32> to vector<9x128xf32>
    %1363 = vector.extract_strided_slice %1361 {offsets = [0, 0], sizes = [1, 128], strides = [1, 1]} : vector<6x128xf32> to vector<1x128xf32>
    %1364 = vector.shape_cast %1363 : vector<1x128xf32> to vector<128xf32>
    %1365 = vector.shape_cast %1364 : vector<128xf32> to vector<1x128xf32>
    %1366 = vector.broadcast %1365 : vector<1x128xf32> to vector<9x128xf32>
    %1367 = arith.mulf %1362, %1366 : vector<9x128xf32>
    %1368 = arith.addf %1352, %1367 : vector<9x128xf32>
    %1369 = vector.extract_strided_slice %1360 {offsets = [1, 0], sizes = [9, 128], strides = [1, 1]} : vector<14x128xf32> to vector<9x128xf32>
    %1370 = vector.extract_strided_slice %1361 {offsets = [1, 0], sizes = [1, 128], strides = [1, 1]} : vector<6x128xf32> to vector<1x128xf32>
    %1371 = vector.shape_cast %1370 : vector<1x128xf32> to vector<128xf32>
    %1372 = vector.shape_cast %1371 : vector<128xf32> to vector<1x128xf32>
    %1373 = vector.broadcast %1372 : vector<1x128xf32> to vector<9x128xf32>
    %1374 = arith.mulf %1369, %1373 : vector<9x128xf32>
    %1375 = arith.addf %1359, %1374 : vector<9x128xf32>
    %1376 = vector.extract_strided_slice %1360 {offsets = [2, 0], sizes = [9, 128], strides = [1, 1]} : vector<14x128xf32> to vector<9x128xf32>
    %1377 = vector.extract_strided_slice %1361 {offsets = [2, 0], sizes = [1, 128], strides = [1, 1]} : vector<6x128xf32> to vector<1x128xf32>
    %1378 = vector.shape_cast %1377 : vector<1x128xf32> to vector<128xf32>
    %1379 = vector.shape_cast %1378 : vector<128xf32> to vector<1x128xf32>
    %1380 = vector.broadcast %1379 : vector<1x128xf32> to vector<9x128xf32>
    %1381 = arith.mulf %1376, %1380 : vector<9x128xf32>
    %1382 = arith.addf %1368, %1381 : vector<9x128xf32>
    %1383 = vector.extract_strided_slice %1360 {offsets = [3, 0], sizes = [9, 128], strides = [1, 1]} : vector<14x128xf32> to vector<9x128xf32>
    %1384 = vector.extract_strided_slice %1361 {offsets = [3, 0], sizes = [1, 128], strides = [1, 1]} : vector<6x128xf32> to vector<1x128xf32>
    %1385 = vector.shape_cast %1384 : vector<1x128xf32> to vector<128xf32>
    %1386 = vector.shape_cast %1385 : vector<128xf32> to vector<1x128xf32>
    %1387 = vector.broadcast %1386 : vector<1x128xf32> to vector<9x128xf32>
    %1388 = arith.mulf %1383, %1387 : vector<9x128xf32>
    %1389 = arith.addf %1375, %1388 : vector<9x128xf32>
    %1390 = vector.extract_strided_slice %1360 {offsets = [4, 0], sizes = [9, 128], strides = [1, 1]} : vector<14x128xf32> to vector<9x128xf32>
    %1391 = vector.extract_strided_slice %1361 {offsets = [4, 0], sizes = [1, 128], strides = [1, 1]} : vector<6x128xf32> to vector<1x128xf32>
    %1392 = vector.shape_cast %1391 : vector<1x128xf32> to vector<128xf32>
    %1393 = vector.shape_cast %1392 : vector<128xf32> to vector<1x128xf32>
    %1394 = vector.broadcast %1393 : vector<1x128xf32> to vector<9x128xf32>
    %1395 = arith.mulf %1390, %1394 : vector<9x128xf32>
    %1396 = arith.addf %1382, %1395 : vector<9x128xf32>
    %1397 = vector.extract_strided_slice %1360 {offsets = [5, 0], sizes = [9, 128], strides = [1, 1]} : vector<14x128xf32> to vector<9x128xf32>
    %1398 = vector.extract_strided_slice %1361 {offsets = [5, 0], sizes = [1, 128], strides = [1, 1]} : vector<6x128xf32> to vector<1x128xf32>
    %1399 = vector.shape_cast %1398 : vector<1x128xf32> to vector<128xf32>
    %1400 = vector.shape_cast %1399 : vector<128xf32> to vector<1x128xf32>
    %1401 = vector.broadcast %1400 : vector<1x128xf32> to vector<9x128xf32>
    %1402 = arith.mulf %1397, %1401 : vector<9x128xf32>
    %1403 = arith.addf %1389, %1402 : vector<9x128xf32>
    %1404 = arith.addf %1396, %1403 : vector<9x128xf32>
    %c0_222 = arith.constant 0 : index
    %c4 = arith.constant 4 : index
    %c0_223 = arith.constant 0 : index
    %c0_224 = arith.constant 0 : index
    %1405 = vector.load %arg9[%c0_222, %c4, %c0_223, %c0_224] : memref<1x9x9x128xf32, #tpu.memory_space<vmem>>, vector<1x1x9x128xf32>
    %1406 = vector.shape_cast %1405 : vector<1x1x9x128xf32> to vector<9x128xf32>
    %1407 = vector.shape_cast %1404 : vector<9x128xf32> to vector<1x1x9x128xf32>
    tpu.vector_store %arg9[%c0_222, %c4, %c0_223, %c0_224], %1407 {strides = array<i32>} : memref<1x9x9x128xf32, #tpu.memory_space<vmem>>, vector<1x1x9x128xf32>,
    %cst_225 = arith.constant 0.000000e+00 : f32
    %1408 = vector.broadcast %cst_225 : f32 to vector<9x128xf32>
    %cst_226 = arith.constant 0.000000e+00 : f32
    %1409 = vector.broadcast %cst_226 : f32 to vector<9x128xf32>
    %c80_227 = arith.constant 80 : index
    %c0_228 = arith.constant 0 : index
    %1410 = vector.load %arg10[%c80_227, %c0_228] : memref<224x128xf32, #tpu.memory_space<vmem>>, vector<14x128xf32>
    %c0_229 = arith.constant 0 : index
    %c0_230 = arith.constant 0 : index
    %1411 = vector.load %arg11[%c0_229, %c0_230] : memref<96x128xf32, #tpu.memory_space<vmem>>, vector<6x128xf32>
    %1412 = vector.extract_strided_slice %1410 {offsets = [0, 0], sizes = [9, 128], strides = [1, 1]} : vector<14x128xf32> to vector<9x128xf32>
    %1413 = vector.extract_strided_slice %1411 {offsets = [0, 0], sizes = [1, 128], strides = [1, 1]} : vector<6x128xf32> to vector<1x128xf32>
    %1414 = vector.shape_cast %1413 : vector<1x128xf32> to vector<128xf32>
    %1415 = vector.shape_cast %1414 : vector<128xf32> to vector<1x128xf32>
    %1416 = vector.broadcast %1415 : vector<1x128xf32> to vector<9x128xf32>
    %1417 = arith.mulf %1412, %1416 : vector<9x128xf32>
    %1418 = arith.addf %1408, %1417 : vector<9x128xf32>
    %1419 = vector.extract_strided_slice %1410 {offsets = [1, 0], sizes = [9, 128], strides = [1, 1]} : vector<14x128xf32> to vector<9x128xf32>
    %1420 = vector.extract_strided_slice %1411 {offsets = [1, 0], sizes = [1, 128], strides = [1, 1]} : vector<6x128xf32> to vector<1x128xf32>
    %1421 = vector.shape_cast %1420 : vector<1x128xf32> to vector<128xf32>
    %1422 = vector.shape_cast %1421 : vector<128xf32> to vector<1x128xf32>
    %1423 = vector.broadcast %1422 : vector<1x128xf32> to vector<9x128xf32>
    %1424 = arith.mulf %1419, %1423 : vector<9x128xf32>
    %1425 = arith.addf %1409, %1424 : vector<9x128xf32>
    %1426 = vector.extract_strided_slice %1410 {offsets = [2, 0], sizes = [9, 128], strides = [1, 1]} : vector<14x128xf32> to vector<9x128xf32>
    %1427 = vector.extract_strided_slice %1411 {offsets = [2, 0], sizes = [1, 128], strides = [1, 1]} : vector<6x128xf32> to vector<1x128xf32>
    %1428 = vector.shape_cast %1427 : vector<1x128xf32> to vector<128xf32>
    %1429 = vector.shape_cast %1428 : vector<128xf32> to vector<1x128xf32>
    %1430 = vector.broadcast %1429 : vector<1x128xf32> to vector<9x128xf32>
    %1431 = arith.mulf %1426, %1430 : vector<9x128xf32>
    %1432 = arith.addf %1418, %1431 : vector<9x128xf32>
    %1433 = vector.extract_strided_slice %1410 {offsets = [3, 0], sizes = [9, 128], strides = [1, 1]} : vector<14x128xf32> to vector<9x128xf32>
    %1434 = vector.extract_strided_slice %1411 {offsets = [3, 0], sizes = [1, 128], strides = [1, 1]} : vector<6x128xf32> to vector<1x128xf32>
    %1435 = vector.shape_cast %1434 : vector<1x128xf32> to vector<128xf32>
    %1436 = vector.shape_cast %1435 : vector<128xf32> to vector<1x128xf32>
    %1437 = vector.broadcast %1436 : vector<1x128xf32> to vector<9x128xf32>
    %1438 = arith.mulf %1433, %1437 : vector<9x128xf32>
    %1439 = arith.addf %1425, %1438 : vector<9x128xf32>
    %1440 = vector.extract_strided_slice %1410 {offsets = [4, 0], sizes = [9, 128], strides = [1, 1]} : vector<14x128xf32> to vector<9x128xf32>
    %1441 = vector.extract_strided_slice %1411 {offsets = [4, 0], sizes = [1, 128], strides = [1, 1]} : vector<6x128xf32> to vector<1x128xf32>
    %1442 = vector.shape_cast %1441 : vector<1x128xf32> to vector<128xf32>
    %1443 = vector.shape_cast %1442 : vector<128xf32> to vector<1x128xf32>
    %1444 = vector.broadcast %1443 : vector<1x128xf32> to vector<9x128xf32>
    %1445 = arith.mulf %1440, %1444 : vector<9x128xf32>
    %1446 = arith.addf %1432, %1445 : vector<9x128xf32>
    %1447 = vector.extract_strided_slice %1410 {offsets = [5, 0], sizes = [9, 128], strides = [1, 1]} : vector<14x128xf32> to vector<9x128xf32>
    %1448 = vector.extract_strided_slice %1411 {offsets = [5, 0], sizes = [1, 128], strides = [1, 1]} : vector<6x128xf32> to vector<1x128xf32>
    %1449 = vector.shape_cast %1448 : vector<1x128xf32> to vector<128xf32>
    %1450 = vector.shape_cast %1449 : vector<128xf32> to vector<1x128xf32>
    %1451 = vector.broadcast %1450 : vector<1x128xf32> to vector<9x128xf32>
    %1452 = arith.mulf %1447, %1451 : vector<9x128xf32>
    %1453 = arith.addf %1439, %1452 : vector<9x128xf32>
    %c96_231 = arith.constant 96 : index
    %c0_232 = arith.constant 0 : index
    %1454 = vector.load %arg10[%c96_231, %c0_232] : memref<224x128xf32, #tpu.memory_space<vmem>>, vector<14x128xf32>
    %c16_233 = arith.constant 16 : index
    %c0_234 = arith.constant 0 : index
    %1455 = vector.load %arg11[%c16_233, %c0_234] : memref<96x128xf32, #tpu.memory_space<vmem>>, vector<6x128xf32>
    %1456 = vector.extract_strided_slice %1454 {offsets = [0, 0], sizes = [9, 128], strides = [1, 1]} : vector<14x128xf32> to vector<9x128xf32>
    %1457 = vector.extract_strided_slice %1455 {offsets = [0, 0], sizes = [1, 128], strides = [1, 1]} : vector<6x128xf32> to vector<1x128xf32>
    %1458 = vector.shape_cast %1457 : vector<1x128xf32> to vector<128xf32>
    %1459 = vector.shape_cast %1458 : vector<128xf32> to vector<1x128xf32>
    %1460 = vector.broadcast %1459 : vector<1x128xf32> to vector<9x128xf32>
    %1461 = arith.mulf %1456, %1460 : vector<9x128xf32>
    %1462 = arith.addf %1446, %1461 : vector<9x128xf32>
    %1463 = vector.extract_strided_slice %1454 {offsets = [1, 0], sizes = [9, 128], strides = [1, 1]} : vector<14x128xf32> to vector<9x128xf32>
    %1464 = vector.extract_strided_slice %1455 {offsets = [1, 0], sizes = [1, 128], strides = [1, 1]} : vector<6x128xf32> to vector<1x128xf32>
    %1465 = vector.shape_cast %1464 : vector<1x128xf32> to vector<128xf32>
    %1466 = vector.shape_cast %1465 : vector<128xf32> to vector<1x128xf32>
    %1467 = vector.broadcast %1466 : vector<1x128xf32> to vector<9x128xf32>
    %1468 = arith.mulf %1463, %1467 : vector<9x128xf32>
    %1469 = arith.addf %1453, %1468 : vector<9x128xf32>
    %1470 = vector.extract_strided_slice %1454 {offsets = [2, 0], sizes = [9, 128], strides = [1, 1]} : vector<14x128xf32> to vector<9x128xf32>
    %1471 = vector.extract_strided_slice %1455 {offsets = [2, 0], sizes = [1, 128], strides = [1, 1]} : vector<6x128xf32> to vector<1x128xf32>
    %1472 = vector.shape_cast %1471 : vector<1x128xf32> to vector<128xf32>
    %1473 = vector.shape_cast %1472 : vector<128xf32> to vector<1x128xf32>
    %1474 = vector.broadcast %1473 : vector<1x128xf32> to vector<9x128xf32>
    %1475 = arith.mulf %1470, %1474 : vector<9x128xf32>
    %1476 = arith.addf %1462, %1475 : vector<9x128xf32>
    %1477 = vector.extract_strided_slice %1454 {offsets = [3, 0], sizes = [9, 128], strides = [1, 1]} : vector<14x128xf32> to vector<9x128xf32>
    %1478 = vector.extract_strided_slice %1455 {offsets = [3, 0], sizes = [1, 128], strides = [1, 1]} : vector<6x128xf32> to vector<1x128xf32>
    %1479 = vector.shape_cast %1478 : vector<1x128xf32> to vector<128xf32>
    %1480 = vector.shape_cast %1479 : vector<128xf32> to vector<1x128xf32>
    %1481 = vector.broadcast %1480 : vector<1x128xf32> to vector<9x128xf32>
    %1482 = arith.mulf %1477, %1481 : vector<9x128xf32>
    %1483 = arith.addf %1469, %1482 : vector<9x128xf32>
    %1484 = vector.extract_strided_slice %1454 {offsets = [4, 0], sizes = [9, 128], strides = [1, 1]} : vector<14x128xf32> to vector<9x128xf32>
    %1485 = vector.extract_strided_slice %1455 {offsets = [4, 0], sizes = [1, 128], strides = [1, 1]} : vector<6x128xf32> to vector<1x128xf32>
    %1486 = vector.shape_cast %1485 : vector<1x128xf32> to vector<128xf32>
    %1487 = vector.shape_cast %1486 : vector<128xf32> to vector<1x128xf32>
    %1488 = vector.broadcast %1487 : vector<1x128xf32> to vector<9x128xf32>
    %1489 = arith.mulf %1484, %1488 : vector<9x128xf32>
    %1490 = arith.addf %1476, %1489 : vector<9x128xf32>
    %1491 = vector.extract_strided_slice %1454 {offsets = [5, 0], sizes = [9, 128], strides = [1, 1]} : vector<14x128xf32> to vector<9x128xf32>
    %1492 = vector.extract_strided_slice %1455 {offsets = [5, 0], sizes = [1, 128], strides = [1, 1]} : vector<6x128xf32> to vector<1x128xf32>
    %1493 = vector.shape_cast %1492 : vector<1x128xf32> to vector<128xf32>
    %1494 = vector.shape_cast %1493 : vector<128xf32> to vector<1x128xf32>
    %1495 = vector.broadcast %1494 : vector<1x128xf32> to vector<9x128xf32>
    %1496 = arith.mulf %1491, %1495 : vector<9x128xf32>
    %1497 = arith.addf %1483, %1496 : vector<9x128xf32>
    %c112_235 = arith.constant 112 : index
    %c0_236 = arith.constant 0 : index
    %1498 = vector.load %arg10[%c112_235, %c0_236] : memref<224x128xf32, #tpu.memory_space<vmem>>, vector<14x128xf32>
    %c32_237 = arith.constant 32 : index
    %c0_238 = arith.constant 0 : index
    %1499 = vector.load %arg11[%c32_237, %c0_238] : memref<96x128xf32, #tpu.memory_space<vmem>>, vector<6x128xf32>
    %1500 = vector.extract_strided_slice %1498 {offsets = [0, 0], sizes = [9, 128], strides = [1, 1]} : vector<14x128xf32> to vector<9x128xf32>
    %1501 = vector.extract_strided_slice %1499 {offsets = [0, 0], sizes = [1, 128], strides = [1, 1]} : vector<6x128xf32> to vector<1x128xf32>
    %1502 = vector.shape_cast %1501 : vector<1x128xf32> to vector<128xf32>
    %1503 = vector.shape_cast %1502 : vector<128xf32> to vector<1x128xf32>
    %1504 = vector.broadcast %1503 : vector<1x128xf32> to vector<9x128xf32>
    %1505 = arith.mulf %1500, %1504 : vector<9x128xf32>
    %1506 = arith.addf %1490, %1505 : vector<9x128xf32>
    %1507 = vector.extract_strided_slice %1498 {offsets = [1, 0], sizes = [9, 128], strides = [1, 1]} : vector<14x128xf32> to vector<9x128xf32>
    %1508 = vector.extract_strided_slice %1499 {offsets = [1, 0], sizes = [1, 128], strides = [1, 1]} : vector<6x128xf32> to vector<1x128xf32>
    %1509 = vector.shape_cast %1508 : vector<1x128xf32> to vector<128xf32>
    %1510 = vector.shape_cast %1509 : vector<128xf32> to vector<1x128xf32>
    %1511 = vector.broadcast %1510 : vector<1x128xf32> to vector<9x128xf32>
    %1512 = arith.mulf %1507, %1511 : vector<9x128xf32>
    %1513 = arith.addf %1497, %1512 : vector<9x128xf32>
    %1514 = vector.extract_strided_slice %1498 {offsets = [2, 0], sizes = [9, 128], strides = [1, 1]} : vector<14x128xf32> to vector<9x128xf32>
    %1515 = vector.extract_strided_slice %1499 {offsets = [2, 0], sizes = [1, 128], strides = [1, 1]} : vector<6x128xf32> to vector<1x128xf32>
    %1516 = vector.shape_cast %1515 : vector<1x128xf32> to vector<128xf32>
    %1517 = vector.shape_cast %1516 : vector<128xf32> to vector<1x128xf32>
    %1518 = vector.broadcast %1517 : vector<1x128xf32> to vector<9x128xf32>
    %1519 = arith.mulf %1514, %1518 : vector<9x128xf32>
    %1520 = arith.addf %1506, %1519 : vector<9x128xf32>
    %1521 = vector.extract_strided_slice %1498 {offsets = [3, 0], sizes = [9, 128], strides = [1, 1]} : vector<14x128xf32> to vector<9x128xf32>
    %1522 = vector.extract_strided_slice %1499 {offsets = [3, 0], sizes = [1, 128], strides = [1, 1]} : vector<6x128xf32> to vector<1x128xf32>
    %1523 = vector.shape_cast %1522 : vector<1x128xf32> to vector<128xf32>
    %1524 = vector.shape_cast %1523 : vector<128xf32> to vector<1x128xf32>
    %1525 = vector.broadcast %1524 : vector<1x128xf32> to vector<9x128xf32>
    %1526 = arith.mulf %1521, %1525 : vector<9x128xf32>
    %1527 = arith.addf %1513, %1526 : vector<9x128xf32>
    %1528 = vector.extract_strided_slice %1498 {offsets = [4, 0], sizes = [9, 128], strides = [1, 1]} : vector<14x128xf32> to vector<9x128xf32>
    %1529 = vector.extract_strided_slice %1499 {offsets = [4, 0], sizes = [1, 128], strides = [1, 1]} : vector<6x128xf32> to vector<1x128xf32>
    %1530 = vector.shape_cast %1529 : vector<1x128xf32> to vector<128xf32>
    %1531 = vector.shape_cast %1530 : vector<128xf32> to vector<1x128xf32>
    %1532 = vector.broadcast %1531 : vector<1x128xf32> to vector<9x128xf32>
    %1533 = arith.mulf %1528, %1532 : vector<9x128xf32>
    %1534 = arith.addf %1520, %1533 : vector<9x128xf32>
    %1535 = vector.extract_strided_slice %1498 {offsets = [5, 0], sizes = [9, 128], strides = [1, 1]} : vector<14x128xf32> to vector<9x128xf32>
    %1536 = vector.extract_strided_slice %1499 {offsets = [5, 0], sizes = [1, 128], strides = [1, 1]} : vector<6x128xf32> to vector<1x128xf32>
    %1537 = vector.shape_cast %1536 : vector<1x128xf32> to vector<128xf32>
    %1538 = vector.shape_cast %1537 : vector<128xf32> to vector<1x128xf32>
    %1539 = vector.broadcast %1538 : vector<1x128xf32> to vector<9x128xf32>
    %1540 = arith.mulf %1535, %1539 : vector<9x128xf32>
    %1541 = arith.addf %1527, %1540 : vector<9x128xf32>
    %c128_239 = arith.constant 128 : index
    %c0_240 = arith.constant 0 : index
    %1542 = vector.load %arg10[%c128_239, %c0_240] : memref<224x128xf32, #tpu.memory_space<vmem>>, vector<14x128xf32>
    %c48_241 = arith.constant 48 : index
    %c0_242 = arith.constant 0 : index
    %1543 = vector.load %arg11[%c48_241, %c0_242] : memref<96x128xf32, #tpu.memory_space<vmem>>, vector<6x128xf32>
    %1544 = vector.extract_strided_slice %1542 {offsets = [0, 0], sizes = [9, 128], strides = [1, 1]} : vector<14x128xf32> to vector<9x128xf32>
    %1545 = vector.extract_strided_slice %1543 {offsets = [0, 0], sizes = [1, 128], strides = [1, 1]} : vector<6x128xf32> to vector<1x128xf32>
    %1546 = vector.shape_cast %1545 : vector<1x128xf32> to vector<128xf32>
    %1547 = vector.shape_cast %1546 : vector<128xf32> to vector<1x128xf32>
    %1548 = vector.broadcast %1547 : vector<1x128xf32> to vector<9x128xf32>
    %1549 = arith.mulf %1544, %1548 : vector<9x128xf32>
    %1550 = arith.addf %1534, %1549 : vector<9x128xf32>
    %1551 = vector.extract_strided_slice %1542 {offsets = [1, 0], sizes = [9, 128], strides = [1, 1]} : vector<14x128xf32> to vector<9x128xf32>
    %1552 = vector.extract_strided_slice %1543 {offsets = [1, 0], sizes = [1, 128], strides = [1, 1]} : vector<6x128xf32> to vector<1x128xf32>
    %1553 = vector.shape_cast %1552 : vector<1x128xf32> to vector<128xf32>
    %1554 = vector.shape_cast %1553 : vector<128xf32> to vector<1x128xf32>
    %1555 = vector.broadcast %1554 : vector<1x128xf32> to vector<9x128xf32>
    %1556 = arith.mulf %1551, %1555 : vector<9x128xf32>
    %1557 = arith.addf %1541, %1556 : vector<9x128xf32>
    %1558 = vector.extract_strided_slice %1542 {offsets = [2, 0], sizes = [9, 128], strides = [1, 1]} : vector<14x128xf32> to vector<9x128xf32>
    %1559 = vector.extract_strided_slice %1543 {offsets = [2, 0], sizes = [1, 128], strides = [1, 1]} : vector<6x128xf32> to vector<1x128xf32>
    %1560 = vector.shape_cast %1559 : vector<1x128xf32> to vector<128xf32>
    %1561 = vector.shape_cast %1560 : vector<128xf32> to vector<1x128xf32>
    %1562 = vector.broadcast %1561 : vector<1x128xf32> to vector<9x128xf32>
    %1563 = arith.mulf %1558, %1562 : vector<9x128xf32>
    %1564 = arith.addf %1550, %1563 : vector<9x128xf32>
    %1565 = vector.extract_strided_slice %1542 {offsets = [3, 0], sizes = [9, 128], strides = [1, 1]} : vector<14x128xf32> to vector<9x128xf32>
    %1566 = vector.extract_strided_slice %1543 {offsets = [3, 0], sizes = [1, 128], strides = [1, 1]} : vector<6x128xf32> to vector<1x128xf32>
    %1567 = vector.shape_cast %1566 : vector<1x128xf32> to vector<128xf32>
    %1568 = vector.shape_cast %1567 : vector<128xf32> to vector<1x128xf32>
    %1569 = vector.broadcast %1568 : vector<1x128xf32> to vector<9x128xf32>
    %1570 = arith.mulf %1565, %1569 : vector<9x128xf32>
    %1571 = arith.addf %1557, %1570 : vector<9x128xf32>
    %1572 = vector.extract_strided_slice %1542 {offsets = [4, 0], sizes = [9, 128], strides = [1, 1]} : vector<14x128xf32> to vector<9x128xf32>
    %1573 = vector.extract_strided_slice %1543 {offsets = [4, 0], sizes = [1, 128], strides = [1, 1]} : vector<6x128xf32> to vector<1x128xf32>
    %1574 = vector.shape_cast %1573 : vector<1x128xf32> to vector<128xf32>
    %1575 = vector.shape_cast %1574 : vector<128xf32> to vector<1x128xf32>
    %1576 = vector.broadcast %1575 : vector<1x128xf32> to vector<9x128xf32>
    %1577 = arith.mulf %1572, %1576 : vector<9x128xf32>
    %1578 = arith.addf %1564, %1577 : vector<9x128xf32>
    %1579 = vector.extract_strided_slice %1542 {offsets = [5, 0], sizes = [9, 128], strides = [1, 1]} : vector<14x128xf32> to vector<9x128xf32>
    %1580 = vector.extract_strided_slice %1543 {offsets = [5, 0], sizes = [1, 128], strides = [1, 1]} : vector<6x128xf32> to vector<1x128xf32>
    %1581 = vector.shape_cast %1580 : vector<1x128xf32> to vector<128xf32>
    %1582 = vector.shape_cast %1581 : vector<128xf32> to vector<1x128xf32>
    %1583 = vector.broadcast %1582 : vector<1x128xf32> to vector<9x128xf32>
    %1584 = arith.mulf %1579, %1583 : vector<9x128xf32>
    %1585 = arith.addf %1571, %1584 : vector<9x128xf32>
    %c144_243 = arith.constant 144 : index
    %c0_244 = arith.constant 0 : index
    %1586 = vector.load %arg10[%c144_243, %c0_244] : memref<224x128xf32, #tpu.memory_space<vmem>>, vector<14x128xf32>
    %c64_245 = arith.constant 64 : index
    %c0_246 = arith.constant 0 : index
    %1587 = vector.load %arg11[%c64_245, %c0_246] : memref<96x128xf32, #tpu.memory_space<vmem>>, vector<6x128xf32>
    %1588 = vector.extract_strided_slice %1586 {offsets = [0, 0], sizes = [9, 128], strides = [1, 1]} : vector<14x128xf32> to vector<9x128xf32>
    %1589 = vector.extract_strided_slice %1587 {offsets = [0, 0], sizes = [1, 128], strides = [1, 1]} : vector<6x128xf32> to vector<1x128xf32>
    %1590 = vector.shape_cast %1589 : vector<1x128xf32> to vector<128xf32>
    %1591 = vector.shape_cast %1590 : vector<128xf32> to vector<1x128xf32>
    %1592 = vector.broadcast %1591 : vector<1x128xf32> to vector<9x128xf32>
    %1593 = arith.mulf %1588, %1592 : vector<9x128xf32>
    %1594 = arith.addf %1578, %1593 : vector<9x128xf32>
    %1595 = vector.extract_strided_slice %1586 {offsets = [1, 0], sizes = [9, 128], strides = [1, 1]} : vector<14x128xf32> to vector<9x128xf32>
    %1596 = vector.extract_strided_slice %1587 {offsets = [1, 0], sizes = [1, 128], strides = [1, 1]} : vector<6x128xf32> to vector<1x128xf32>
    %1597 = vector.shape_cast %1596 : vector<1x128xf32> to vector<128xf32>
    %1598 = vector.shape_cast %1597 : vector<128xf32> to vector<1x128xf32>
    %1599 = vector.broadcast %1598 : vector<1x128xf32> to vector<9x128xf32>
    %1600 = arith.mulf %1595, %1599 : vector<9x128xf32>
    %1601 = arith.addf %1585, %1600 : vector<9x128xf32>
    %1602 = vector.extract_strided_slice %1586 {offsets = [2, 0], sizes = [9, 128], strides = [1, 1]} : vector<14x128xf32> to vector<9x128xf32>
    %1603 = vector.extract_strided_slice %1587 {offsets = [2, 0], sizes = [1, 128], strides = [1, 1]} : vector<6x128xf32> to vector<1x128xf32>
    %1604 = vector.shape_cast %1603 : vector<1x128xf32> to vector<128xf32>
    %1605 = vector.shape_cast %1604 : vector<128xf32> to vector<1x128xf32>
    %1606 = vector.broadcast %1605 : vector<1x128xf32> to vector<9x128xf32>
    %1607 = arith.mulf %1602, %1606 : vector<9x128xf32>
    %1608 = arith.addf %1594, %1607 : vector<9x128xf32>
    %1609 = vector.extract_strided_slice %1586 {offsets = [3, 0], sizes = [9, 128], strides = [1, 1]} : vector<14x128xf32> to vector<9x128xf32>
    %1610 = vector.extract_strided_slice %1587 {offsets = [3, 0], sizes = [1, 128], strides = [1, 1]} : vector<6x128xf32> to vector<1x128xf32>
    %1611 = vector.shape_cast %1610 : vector<1x128xf32> to vector<128xf32>
    %1612 = vector.shape_cast %1611 : vector<128xf32> to vector<1x128xf32>
    %1613 = vector.broadcast %1612 : vector<1x128xf32> to vector<9x128xf32>
    %1614 = arith.mulf %1609, %1613 : vector<9x128xf32>
    %1615 = arith.addf %1601, %1614 : vector<9x128xf32>
    %1616 = vector.extract_strided_slice %1586 {offsets = [4, 0], sizes = [9, 128], strides = [1, 1]} : vector<14x128xf32> to vector<9x128xf32>
    %1617 = vector.extract_strided_slice %1587 {offsets = [4, 0], sizes = [1, 128], strides = [1, 1]} : vector<6x128xf32> to vector<1x128xf32>
    %1618 = vector.shape_cast %1617 : vector<1x128xf32> to vector<128xf32>
    %1619 = vector.shape_cast %1618 : vector<128xf32> to vector<1x128xf32>
    %1620 = vector.broadcast %1619 : vector<1x128xf32> to vector<9x128xf32>
    %1621 = arith.mulf %1616, %1620 : vector<9x128xf32>
    %1622 = arith.addf %1608, %1621 : vector<9x128xf32>
    %1623 = vector.extract_strided_slice %1586 {offsets = [5, 0], sizes = [9, 128], strides = [1, 1]} : vector<14x128xf32> to vector<9x128xf32>
    %1624 = vector.extract_strided_slice %1587 {offsets = [5, 0], sizes = [1, 128], strides = [1, 1]} : vector<6x128xf32> to vector<1x128xf32>
    %1625 = vector.shape_cast %1624 : vector<1x128xf32> to vector<128xf32>
    %1626 = vector.shape_cast %1625 : vector<128xf32> to vector<1x128xf32>
    %1627 = vector.broadcast %1626 : vector<1x128xf32> to vector<9x128xf32>
    %1628 = arith.mulf %1623, %1627 : vector<9x128xf32>
    %1629 = arith.addf %1615, %1628 : vector<9x128xf32>
    %c160 = arith.constant 160 : index
    %c0_247 = arith.constant 0 : index
    %1630 = vector.load %arg10[%c160, %c0_247] : memref<224x128xf32, #tpu.memory_space<vmem>>, vector<14x128xf32>
    %c80_248 = arith.constant 80 : index
    %c0_249 = arith.constant 0 : index
    %1631 = vector.load %arg11[%c80_248, %c0_249] : memref<96x128xf32, #tpu.memory_space<vmem>>, vector<6x128xf32>
    %1632 = vector.extract_strided_slice %1630 {offsets = [0, 0], sizes = [9, 128], strides = [1, 1]} : vector<14x128xf32> to vector<9x128xf32>
    %1633 = vector.extract_strided_slice %1631 {offsets = [0, 0], sizes = [1, 128], strides = [1, 1]} : vector<6x128xf32> to vector<1x128xf32>
    %1634 = vector.shape_cast %1633 : vector<1x128xf32> to vector<128xf32>
    %1635 = vector.shape_cast %1634 : vector<128xf32> to vector<1x128xf32>
    %1636 = vector.broadcast %1635 : vector<1x128xf32> to vector<9x128xf32>
    %1637 = arith.mulf %1632, %1636 : vector<9x128xf32>
    %1638 = arith.addf %1622, %1637 : vector<9x128xf32>
    %1639 = vector.extract_strided_slice %1630 {offsets = [1, 0], sizes = [9, 128], strides = [1, 1]} : vector<14x128xf32> to vector<9x128xf32>
    %1640 = vector.extract_strided_slice %1631 {offsets = [1, 0], sizes = [1, 128], strides = [1, 1]} : vector<6x128xf32> to vector<1x128xf32>
    %1641 = vector.shape_cast %1640 : vector<1x128xf32> to vector<128xf32>
    %1642 = vector.shape_cast %1641 : vector<128xf32> to vector<1x128xf32>
    %1643 = vector.broadcast %1642 : vector<1x128xf32> to vector<9x128xf32>
    %1644 = arith.mulf %1639, %1643 : vector<9x128xf32>
    %1645 = arith.addf %1629, %1644 : vector<9x128xf32>
    %1646 = vector.extract_strided_slice %1630 {offsets = [2, 0], sizes = [9, 128], strides = [1, 1]} : vector<14x128xf32> to vector<9x128xf32>
    %1647 = vector.extract_strided_slice %1631 {offsets = [2, 0], sizes = [1, 128], strides = [1, 1]} : vector<6x128xf32> to vector<1x128xf32>
    %1648 = vector.shape_cast %1647 : vector<1x128xf32> to vector<128xf32>
    %1649 = vector.shape_cast %1648 : vector<128xf32> to vector<1x128xf32>
    %1650 = vector.broadcast %1649 : vector<1x128xf32> to vector<9x128xf32>
    %1651 = arith.mulf %1646, %1650 : vector<9x128xf32>
    %1652 = arith.addf %1638, %1651 : vector<9x128xf32>
    %1653 = vector.extract_strided_slice %1630 {offsets = [3, 0], sizes = [9, 128], strides = [1, 1]} : vector<14x128xf32> to vector<9x128xf32>
    %1654 = vector.extract_strided_slice %1631 {offsets = [3, 0], sizes = [1, 128], strides = [1, 1]} : vector<6x128xf32> to vector<1x128xf32>
    %1655 = vector.shape_cast %1654 : vector<1x128xf32> to vector<128xf32>
    %1656 = vector.shape_cast %1655 : vector<128xf32> to vector<1x128xf32>
    %1657 = vector.broadcast %1656 : vector<1x128xf32> to vector<9x128xf32>
    %1658 = arith.mulf %1653, %1657 : vector<9x128xf32>
    %1659 = arith.addf %1645, %1658 : vector<9x128xf32>
    %1660 = vector.extract_strided_slice %1630 {offsets = [4, 0], sizes = [9, 128], strides = [1, 1]} : vector<14x128xf32> to vector<9x128xf32>
    %1661 = vector.extract_strided_slice %1631 {offsets = [4, 0], sizes = [1, 128], strides = [1, 1]} : vector<6x128xf32> to vector<1x128xf32>
    %1662 = vector.shape_cast %1661 : vector<1x128xf32> to vector<128xf32>
    %1663 = vector.shape_cast %1662 : vector<128xf32> to vector<1x128xf32>
    %1664 = vector.broadcast %1663 : vector<1x128xf32> to vector<9x128xf32>
    %1665 = arith.mulf %1660, %1664 : vector<9x128xf32>
    %1666 = arith.addf %1652, %1665 : vector<9x128xf32>
    %1667 = vector.extract_strided_slice %1630 {offsets = [5, 0], sizes = [9, 128], strides = [1, 1]} : vector<14x128xf32> to vector<9x128xf32>
    %1668 = vector.extract_strided_slice %1631 {offsets = [5, 0], sizes = [1, 128], strides = [1, 1]} : vector<6x128xf32> to vector<1x128xf32>
    %1669 = vector.shape_cast %1668 : vector<1x128xf32> to vector<128xf32>
    %1670 = vector.shape_cast %1669 : vector<128xf32> to vector<1x128xf32>
    %1671 = vector.broadcast %1670 : vector<1x128xf32> to vector<9x128xf32>
    %1672 = arith.mulf %1667, %1671 : vector<9x128xf32>
    %1673 = arith.addf %1659, %1672 : vector<9x128xf32>
    %1674 = arith.addf %1666, %1673 : vector<9x128xf32>
    %c0_250 = arith.constant 0 : index
    %c5 = arith.constant 5 : index
    %c0_251 = arith.constant 0 : index
    %c0_252 = arith.constant 0 : index
    %1675 = vector.load %arg9[%c0_250, %c5, %c0_251, %c0_252] : memref<1x9x9x128xf32, #tpu.memory_space<vmem>>, vector<1x1x9x128xf32>
    %1676 = vector.shape_cast %1675 : vector<1x1x9x128xf32> to vector<9x128xf32>
    %1677 = vector.shape_cast %1674 : vector<9x128xf32> to vector<1x1x9x128xf32>
    tpu.vector_store %arg9[%c0_250, %c5, %c0_251, %c0_252], %1677 {strides = array<i32>} : memref<1x9x9x128xf32, #tpu.memory_space<vmem>>, vector<1x1x9x128xf32>,
    %cst_253 = arith.constant 0.000000e+00 : f32
    %1678 = vector.broadcast %cst_253 : f32 to vector<9x128xf32>
    %cst_254 = arith.constant 0.000000e+00 : f32
    %1679 = vector.broadcast %cst_254 : f32 to vector<9x128xf32>
    %c96_255 = arith.constant 96 : index
    %c0_256 = arith.constant 0 : index
    %1680 = vector.load %arg10[%c96_255, %c0_256] : memref<224x128xf32, #tpu.memory_space<vmem>>, vector<14x128xf32>
    %c0_257 = arith.constant 0 : index
    %c0_258 = arith.constant 0 : index
    %1681 = vector.load %arg11[%c0_257, %c0_258] : memref<96x128xf32, #tpu.memory_space<vmem>>, vector<6x128xf32>
    %1682 = vector.extract_strided_slice %1680 {offsets = [0, 0], sizes = [9, 128], strides = [1, 1]} : vector<14x128xf32> to vector<9x128xf32>
    %1683 = vector.extract_strided_slice %1681 {offsets = [0, 0], sizes = [1, 128], strides = [1, 1]} : vector<6x128xf32> to vector<1x128xf32>
    %1684 = vector.shape_cast %1683 : vector<1x128xf32> to vector<128xf32>
    %1685 = vector.shape_cast %1684 : vector<128xf32> to vector<1x128xf32>
    %1686 = vector.broadcast %1685 : vector<1x128xf32> to vector<9x128xf32>
    %1687 = arith.mulf %1682, %1686 : vector<9x128xf32>
    %1688 = arith.addf %1678, %1687 : vector<9x128xf32>
    %1689 = vector.extract_strided_slice %1680 {offsets = [1, 0], sizes = [9, 128], strides = [1, 1]} : vector<14x128xf32> to vector<9x128xf32>
    %1690 = vector.extract_strided_slice %1681 {offsets = [1, 0], sizes = [1, 128], strides = [1, 1]} : vector<6x128xf32> to vector<1x128xf32>
    %1691 = vector.shape_cast %1690 : vector<1x128xf32> to vector<128xf32>
    %1692 = vector.shape_cast %1691 : vector<128xf32> to vector<1x128xf32>
    %1693 = vector.broadcast %1692 : vector<1x128xf32> to vector<9x128xf32>
    %1694 = arith.mulf %1689, %1693 : vector<9x128xf32>
    %1695 = arith.addf %1679, %1694 : vector<9x128xf32>
    %1696 = vector.extract_strided_slice %1680 {offsets = [2, 0], sizes = [9, 128], strides = [1, 1]} : vector<14x128xf32> to vector<9x128xf32>
    %1697 = vector.extract_strided_slice %1681 {offsets = [2, 0], sizes = [1, 128], strides = [1, 1]} : vector<6x128xf32> to vector<1x128xf32>
    %1698 = vector.shape_cast %1697 : vector<1x128xf32> to vector<128xf32>
    %1699 = vector.shape_cast %1698 : vector<128xf32> to vector<1x128xf32>
    %1700 = vector.broadcast %1699 : vector<1x128xf32> to vector<9x128xf32>
    %1701 = arith.mulf %1696, %1700 : vector<9x128xf32>
    %1702 = arith.addf %1688, %1701 : vector<9x128xf32>
    %1703 = vector.extract_strided_slice %1680 {offsets = [3, 0], sizes = [9, 128], strides = [1, 1]} : vector<14x128xf32> to vector<9x128xf32>
    %1704 = vector.extract_strided_slice %1681 {offsets = [3, 0], sizes = [1, 128], strides = [1, 1]} : vector<6x128xf32> to vector<1x128xf32>
    %1705 = vector.shape_cast %1704 : vector<1x128xf32> to vector<128xf32>
    %1706 = vector.shape_cast %1705 : vector<128xf32> to vector<1x128xf32>
    %1707 = vector.broadcast %1706 : vector<1x128xf32> to vector<9x128xf32>
    %1708 = arith.mulf %1703, %1707 : vector<9x128xf32>
    %1709 = arith.addf %1695, %1708 : vector<9x128xf32>
    %1710 = vector.extract_strided_slice %1680 {offsets = [4, 0], sizes = [9, 128], strides = [1, 1]} : vector<14x128xf32> to vector<9x128xf32>
    %1711 = vector.extract_strided_slice %1681 {offsets = [4, 0], sizes = [1, 128], strides = [1, 1]} : vector<6x128xf32> to vector<1x128xf32>
    %1712 = vector.shape_cast %1711 : vector<1x128xf32> to vector<128xf32>
    %1713 = vector.shape_cast %1712 : vector<128xf32> to vector<1x128xf32>
    %1714 = vector.broadcast %1713 : vector<1x128xf32> to vector<9x128xf32>
    %1715 = arith.mulf %1710, %1714 : vector<9x128xf32>
    %1716 = arith.addf %1702, %1715 : vector<9x128xf32>
    %1717 = vector.extract_strided_slice %1680 {offsets = [5, 0], sizes = [9, 128], strides = [1, 1]} : vector<14x128xf32> to vector<9x128xf32>
    %1718 = vector.extract_strided_slice %1681 {offsets = [5, 0], sizes = [1, 128], strides = [1, 1]} : vector<6x128xf32> to vector<1x128xf32>
    %1719 = vector.shape_cast %1718 : vector<1x128xf32> to vector<128xf32>
    %1720 = vector.shape_cast %1719 : vector<128xf32> to vector<1x128xf32>
    %1721 = vector.broadcast %1720 : vector<1x128xf32> to vector<9x128xf32>
    %1722 = arith.mulf %1717, %1721 : vector<9x128xf32>
    %1723 = arith.addf %1709, %1722 : vector<9x128xf32>
    %c112_259 = arith.constant 112 : index
    %c0_260 = arith.constant 0 : index
    %1724 = vector.load %arg10[%c112_259, %c0_260] : memref<224x128xf32, #tpu.memory_space<vmem>>, vector<14x128xf32>
    %c16_261 = arith.constant 16 : index
    %c0_262 = arith.constant 0 : index
    %1725 = vector.load %arg11[%c16_261, %c0_262] : memref<96x128xf32, #tpu.memory_space<vmem>>, vector<6x128xf32>
    %1726 = vector.extract_strided_slice %1724 {offsets = [0, 0], sizes = [9, 128], strides = [1, 1]} : vector<14x128xf32> to vector<9x128xf32>
    %1727 = vector.extract_strided_slice %1725 {offsets = [0, 0], sizes = [1, 128], strides = [1, 1]} : vector<6x128xf32> to vector<1x128xf32>
    %1728 = vector.shape_cast %1727 : vector<1x128xf32> to vector<128xf32>
    %1729 = vector.shape_cast %1728 : vector<128xf32> to vector<1x128xf32>
    %1730 = vector.broadcast %1729 : vector<1x128xf32> to vector<9x128xf32>
    %1731 = arith.mulf %1726, %1730 : vector<9x128xf32>
    %1732 = arith.addf %1716, %1731 : vector<9x128xf32>
    %1733 = vector.extract_strided_slice %1724 {offsets = [1, 0], sizes = [9, 128], strides = [1, 1]} : vector<14x128xf32> to vector<9x128xf32>
    %1734 = vector.extract_strided_slice %1725 {offsets = [1, 0], sizes = [1, 128], strides = [1, 1]} : vector<6x128xf32> to vector<1x128xf32>
    %1735 = vector.shape_cast %1734 : vector<1x128xf32> to vector<128xf32>
    %1736 = vector.shape_cast %1735 : vector<128xf32> to vector<1x128xf32>
    %1737 = vector.broadcast %1736 : vector<1x128xf32> to vector<9x128xf32>
    %1738 = arith.mulf %1733, %1737 : vector<9x128xf32>
    %1739 = arith.addf %1723, %1738 : vector<9x128xf32>
    %1740 = vector.extract_strided_slice %1724 {offsets = [2, 0], sizes = [9, 128], strides = [1, 1]} : vector<14x128xf32> to vector<9x128xf32>
    %1741 = vector.extract_strided_slice %1725 {offsets = [2, 0], sizes = [1, 128], strides = [1, 1]} : vector<6x128xf32> to vector<1x128xf32>
    %1742 = vector.shape_cast %1741 : vector<1x128xf32> to vector<128xf32>
    %1743 = vector.shape_cast %1742 : vector<128xf32> to vector<1x128xf32>
    %1744 = vector.broadcast %1743 : vector<1x128xf32> to vector<9x128xf32>
    %1745 = arith.mulf %1740, %1744 : vector<9x128xf32>
    %1746 = arith.addf %1732, %1745 : vector<9x128xf32>
    %1747 = vector.extract_strided_slice %1724 {offsets = [3, 0], sizes = [9, 128], strides = [1, 1]} : vector<14x128xf32> to vector<9x128xf32>
    %1748 = vector.extract_strided_slice %1725 {offsets = [3, 0], sizes = [1, 128], strides = [1, 1]} : vector<6x128xf32> to vector<1x128xf32>
    %1749 = vector.shape_cast %1748 : vector<1x128xf32> to vector<128xf32>
    %1750 = vector.shape_cast %1749 : vector<128xf32> to vector<1x128xf32>
    %1751 = vector.broadcast %1750 : vector<1x128xf32> to vector<9x128xf32>
    %1752 = arith.mulf %1747, %1751 : vector<9x128xf32>
    %1753 = arith.addf %1739, %1752 : vector<9x128xf32>
    %1754 = vector.extract_strided_slice %1724 {offsets = [4, 0], sizes = [9, 128], strides = [1, 1]} : vector<14x128xf32> to vector<9x128xf32>
    %1755 = vector.extract_strided_slice %1725 {offsets = [4, 0], sizes = [1, 128], strides = [1, 1]} : vector<6x128xf32> to vector<1x128xf32>
    %1756 = vector.shape_cast %1755 : vector<1x128xf32> to vector<128xf32>
    %1757 = vector.shape_cast %1756 : vector<128xf32> to vector<1x128xf32>
    %1758 = vector.broadcast %1757 : vector<1x128xf32> to vector<9x128xf32>
    %1759 = arith.mulf %1754, %1758 : vector<9x128xf32>
    %1760 = arith.addf %1746, %1759 : vector<9x128xf32>
    %1761 = vector.extract_strided_slice %1724 {offsets = [5, 0], sizes = [9, 128], strides = [1, 1]} : vector<14x128xf32> to vector<9x128xf32>
    %1762 = vector.extract_strided_slice %1725 {offsets = [5, 0], sizes = [1, 128], strides = [1, 1]} : vector<6x128xf32> to vector<1x128xf32>
    %1763 = vector.shape_cast %1762 : vector<1x128xf32> to vector<128xf32>
    %1764 = vector.shape_cast %1763 : vector<128xf32> to vector<1x128xf32>
    %1765 = vector.broadcast %1764 : vector<1x128xf32> to vector<9x128xf32>
    %1766 = arith.mulf %1761, %1765 : vector<9x128xf32>
    %1767 = arith.addf %1753, %1766 : vector<9x128xf32>
    %c128_263 = arith.constant 128 : index
    %c0_264 = arith.constant 0 : index
    %1768 = vector.load %arg10[%c128_263, %c0_264] : memref<224x128xf32, #tpu.memory_space<vmem>>, vector<14x128xf32>
    %c32_265 = arith.constant 32 : index
    %c0_266 = arith.constant 0 : index
    %1769 = vector.load %arg11[%c32_265, %c0_266] : memref<96x128xf32, #tpu.memory_space<vmem>>, vector<6x128xf32>
    %1770 = vector.extract_strided_slice %1768 {offsets = [0, 0], sizes = [9, 128], strides = [1, 1]} : vector<14x128xf32> to vector<9x128xf32>
    %1771 = vector.extract_strided_slice %1769 {offsets = [0, 0], sizes = [1, 128], strides = [1, 1]} : vector<6x128xf32> to vector<1x128xf32>
    %1772 = vector.shape_cast %1771 : vector<1x128xf32> to vector<128xf32>
    %1773 = vector.shape_cast %1772 : vector<128xf32> to vector<1x128xf32>
    %1774 = vector.broadcast %1773 : vector<1x128xf32> to vector<9x128xf32>
    %1775 = arith.mulf %1770, %1774 : vector<9x128xf32>
    %1776 = arith.addf %1760, %1775 : vector<9x128xf32>
    %1777 = vector.extract_strided_slice %1768 {offsets = [1, 0], sizes = [9, 128], strides = [1, 1]} : vector<14x128xf32> to vector<9x128xf32>
    %1778 = vector.extract_strided_slice %1769 {offsets = [1, 0], sizes = [1, 128], strides = [1, 1]} : vector<6x128xf32> to vector<1x128xf32>
    %1779 = vector.shape_cast %1778 : vector<1x128xf32> to vector<128xf32>
    %1780 = vector.shape_cast %1779 : vector<128xf32> to vector<1x128xf32>
    %1781 = vector.broadcast %1780 : vector<1x128xf32> to vector<9x128xf32>
    %1782 = arith.mulf %1777, %1781 : vector<9x128xf32>
    %1783 = arith.addf %1767, %1782 : vector<9x128xf32>
    %1784 = vector.extract_strided_slice %1768 {offsets = [2, 0], sizes = [9, 128], strides = [1, 1]} : vector<14x128xf32> to vector<9x128xf32>
    %1785 = vector.extract_strided_slice %1769 {offsets = [2, 0], sizes = [1, 128], strides = [1, 1]} : vector<6x128xf32> to vector<1x128xf32>
    %1786 = vector.shape_cast %1785 : vector<1x128xf32> to vector<128xf32>
    %1787 = vector.shape_cast %1786 : vector<128xf32> to vector<1x128xf32>
    %1788 = vector.broadcast %1787 : vector<1x128xf32> to vector<9x128xf32>
    %1789 = arith.mulf %1784, %1788 : vector<9x128xf32>
    %1790 = arith.addf %1776, %1789 : vector<9x128xf32>
    %1791 = vector.extract_strided_slice %1768 {offsets = [3, 0], sizes = [9, 128], strides = [1, 1]} : vector<14x128xf32> to vector<9x128xf32>
    %1792 = vector.extract_strided_slice %1769 {offsets = [3, 0], sizes = [1, 128], strides = [1, 1]} : vector<6x128xf32> to vector<1x128xf32>
    %1793 = vector.shape_cast %1792 : vector<1x128xf32> to vector<128xf32>
    %1794 = vector.shape_cast %1793 : vector<128xf32> to vector<1x128xf32>
    %1795 = vector.broadcast %1794 : vector<1x128xf32> to vector<9x128xf32>
    %1796 = arith.mulf %1791, %1795 : vector<9x128xf32>
    %1797 = arith.addf %1783, %1796 : vector<9x128xf32>
    %1798 = vector.extract_strided_slice %1768 {offsets = [4, 0], sizes = [9, 128], strides = [1, 1]} : vector<14x128xf32> to vector<9x128xf32>
    %1799 = vector.extract_strided_slice %1769 {offsets = [4, 0], sizes = [1, 128], strides = [1, 1]} : vector<6x128xf32> to vector<1x128xf32>
    %1800 = vector.shape_cast %1799 : vector<1x128xf32> to vector<128xf32>
    %1801 = vector.shape_cast %1800 : vector<128xf32> to vector<1x128xf32>
    %1802 = vector.broadcast %1801 : vector<1x128xf32> to vector<9x128xf32>
    %1803 = arith.mulf %1798, %1802 : vector<9x128xf32>
    %1804 = arith.addf %1790, %1803 : vector<9x128xf32>
    %1805 = vector.extract_strided_slice %1768 {offsets = [5, 0], sizes = [9, 128], strides = [1, 1]} : vector<14x128xf32> to vector<9x128xf32>
    %1806 = vector.extract_strided_slice %1769 {offsets = [5, 0], sizes = [1, 128], strides = [1, 1]} : vector<6x128xf32> to vector<1x128xf32>
    %1807 = vector.shape_cast %1806 : vector<1x128xf32> to vector<128xf32>
    %1808 = vector.shape_cast %1807 : vector<128xf32> to vector<1x128xf32>
    %1809 = vector.broadcast %1808 : vector<1x128xf32> to vector<9x128xf32>
    %1810 = arith.mulf %1805, %1809 : vector<9x128xf32>
    %1811 = arith.addf %1797, %1810 : vector<9x128xf32>
    %c144_267 = arith.constant 144 : index
    %c0_268 = arith.constant 0 : index
    %1812 = vector.load %arg10[%c144_267, %c0_268] : memref<224x128xf32, #tpu.memory_space<vmem>>, vector<14x128xf32>
    %c48_269 = arith.constant 48 : index
    %c0_270 = arith.constant 0 : index
    %1813 = vector.load %arg11[%c48_269, %c0_270] : memref<96x128xf32, #tpu.memory_space<vmem>>, vector<6x128xf32>
    %1814 = vector.extract_strided_slice %1812 {offsets = [0, 0], sizes = [9, 128], strides = [1, 1]} : vector<14x128xf32> to vector<9x128xf32>
    %1815 = vector.extract_strided_slice %1813 {offsets = [0, 0], sizes = [1, 128], strides = [1, 1]} : vector<6x128xf32> to vector<1x128xf32>
    %1816 = vector.shape_cast %1815 : vector<1x128xf32> to vector<128xf32>
    %1817 = vector.shape_cast %1816 : vector<128xf32> to vector<1x128xf32>
    %1818 = vector.broadcast %1817 : vector<1x128xf32> to vector<9x128xf32>
    %1819 = arith.mulf %1814, %1818 : vector<9x128xf32>
    %1820 = arith.addf %1804, %1819 : vector<9x128xf32>
    %1821 = vector.extract_strided_slice %1812 {offsets = [1, 0], sizes = [9, 128], strides = [1, 1]} : vector<14x128xf32> to vector<9x128xf32>
    %1822 = vector.extract_strided_slice %1813 {offsets = [1, 0], sizes = [1, 128], strides = [1, 1]} : vector<6x128xf32> to vector<1x128xf32>
    %1823 = vector.shape_cast %1822 : vector<1x128xf32> to vector<128xf32>
    %1824 = vector.shape_cast %1823 : vector<128xf32> to vector<1x128xf32>
    %1825 = vector.broadcast %1824 : vector<1x128xf32> to vector<9x128xf32>
    %1826 = arith.mulf %1821, %1825 : vector<9x128xf32>
    %1827 = arith.addf %1811, %1826 : vector<9x128xf32>
    %1828 = vector.extract_strided_slice %1812 {offsets = [2, 0], sizes = [9, 128], strides = [1, 1]} : vector<14x128xf32> to vector<9x128xf32>
    %1829 = vector.extract_strided_slice %1813 {offsets = [2, 0], sizes = [1, 128], strides = [1, 1]} : vector<6x128xf32> to vector<1x128xf32>
    %1830 = vector.shape_cast %1829 : vector<1x128xf32> to vector<128xf32>
    %1831 = vector.shape_cast %1830 : vector<128xf32> to vector<1x128xf32>
    %1832 = vector.broadcast %1831 : vector<1x128xf32> to vector<9x128xf32>
    %1833 = arith.mulf %1828, %1832 : vector<9x128xf32>
    %1834 = arith.addf %1820, %1833 : vector<9x128xf32>
    %1835 = vector.extract_strided_slice %1812 {offsets = [3, 0], sizes = [9, 128], strides = [1, 1]} : vector<14x128xf32> to vector<9x128xf32>
    %1836 = vector.extract_strided_slice %1813 {offsets = [3, 0], sizes = [1, 128], strides = [1, 1]} : vector<6x128xf32> to vector<1x128xf32>
    %1837 = vector.shape_cast %1836 : vector<1x128xf32> to vector<128xf32>
    %1838 = vector.shape_cast %1837 : vector<128xf32> to vector<1x128xf32>
    %1839 = vector.broadcast %1838 : vector<1x128xf32> to vector<9x128xf32>
    %1840 = arith.mulf %1835, %1839 : vector<9x128xf32>
    %1841 = arith.addf %1827, %1840 : vector<9x128xf32>
    %1842 = vector.extract_strided_slice %1812 {offsets = [4, 0], sizes = [9, 128], strides = [1, 1]} : vector<14x128xf32> to vector<9x128xf32>
    %1843 = vector.extract_strided_slice %1813 {offsets = [4, 0], sizes = [1, 128], strides = [1, 1]} : vector<6x128xf32> to vector<1x128xf32>
    %1844 = vector.shape_cast %1843 : vector<1x128xf32> to vector<128xf32>
    %1845 = vector.shape_cast %1844 : vector<128xf32> to vector<1x128xf32>
    %1846 = vector.broadcast %1845 : vector<1x128xf32> to vector<9x128xf32>
    %1847 = arith.mulf %1842, %1846 : vector<9x128xf32>
    %1848 = arith.addf %1834, %1847 : vector<9x128xf32>
    %1849 = vector.extract_strided_slice %1812 {offsets = [5, 0], sizes = [9, 128], strides = [1, 1]} : vector<14x128xf32> to vector<9x128xf32>
    %1850 = vector.extract_strided_slice %1813 {offsets = [5, 0], sizes = [1, 128], strides = [1, 1]} : vector<6x128xf32> to vector<1x128xf32>
    %1851 = vector.shape_cast %1850 : vector<1x128xf32> to vector<128xf32>
    %1852 = vector.shape_cast %1851 : vector<128xf32> to vector<1x128xf32>
    %1853 = vector.broadcast %1852 : vector<1x128xf32> to vector<9x128xf32>
    %1854 = arith.mulf %1849, %1853 : vector<9x128xf32>
    %1855 = arith.addf %1841, %1854 : vector<9x128xf32>
    %c160_271 = arith.constant 160 : index
    %c0_272 = arith.constant 0 : index
    %1856 = vector.load %arg10[%c160_271, %c0_272] : memref<224x128xf32, #tpu.memory_space<vmem>>, vector<14x128xf32>
    %c64_273 = arith.constant 64 : index
    %c0_274 = arith.constant 0 : index
    %1857 = vector.load %arg11[%c64_273, %c0_274] : memref<96x128xf32, #tpu.memory_space<vmem>>, vector<6x128xf32>
    %1858 = vector.extract_strided_slice %1856 {offsets = [0, 0], sizes = [9, 128], strides = [1, 1]} : vector<14x128xf32> to vector<9x128xf32>
    %1859 = vector.extract_strided_slice %1857 {offsets = [0, 0], sizes = [1, 128], strides = [1, 1]} : vector<6x128xf32> to vector<1x128xf32>
    %1860 = vector.shape_cast %1859 : vector<1x128xf32> to vector<128xf32>
    %1861 = vector.shape_cast %1860 : vector<128xf32> to vector<1x128xf32>
    %1862 = vector.broadcast %1861 : vector<1x128xf32> to vector<9x128xf32>
    %1863 = arith.mulf %1858, %1862 : vector<9x128xf32>
    %1864 = arith.addf %1848, %1863 : vector<9x128xf32>
    %1865 = vector.extract_strided_slice %1856 {offsets = [1, 0], sizes = [9, 128], strides = [1, 1]} : vector<14x128xf32> to vector<9x128xf32>
    %1866 = vector.extract_strided_slice %1857 {offsets = [1, 0], sizes = [1, 128], strides = [1, 1]} : vector<6x128xf32> to vector<1x128xf32>
    %1867 = vector.shape_cast %1866 : vector<1x128xf32> to vector<128xf32>
    %1868 = vector.shape_cast %1867 : vector<128xf32> to vector<1x128xf32>
    %1869 = vector.broadcast %1868 : vector<1x128xf32> to vector<9x128xf32>
    %1870 = arith.mulf %1865, %1869 : vector<9x128xf32>
    %1871 = arith.addf %1855, %1870 : vector<9x128xf32>
    %1872 = vector.extract_strided_slice %1856 {offsets = [2, 0], sizes = [9, 128], strides = [1, 1]} : vector<14x128xf32> to vector<9x128xf32>
    %1873 = vector.extract_strided_slice %1857 {offsets = [2, 0], sizes = [1, 128], strides = [1, 1]} : vector<6x128xf32> to vector<1x128xf32>
    %1874 = vector.shape_cast %1873 : vector<1x128xf32> to vector<128xf32>
    %1875 = vector.shape_cast %1874 : vector<128xf32> to vector<1x128xf32>
    %1876 = vector.broadcast %1875 : vector<1x128xf32> to vector<9x128xf32>
    %1877 = arith.mulf %1872, %1876 : vector<9x128xf32>
    %1878 = arith.addf %1864, %1877 : vector<9x128xf32>
    %1879 = vector.extract_strided_slice %1856 {offsets = [3, 0], sizes = [9, 128], strides = [1, 1]} : vector<14x128xf32> to vector<9x128xf32>
    %1880 = vector.extract_strided_slice %1857 {offsets = [3, 0], sizes = [1, 128], strides = [1, 1]} : vector<6x128xf32> to vector<1x128xf32>
    %1881 = vector.shape_cast %1880 : vector<1x128xf32> to vector<128xf32>
    %1882 = vector.shape_cast %1881 : vector<128xf32> to vector<1x128xf32>
    %1883 = vector.broadcast %1882 : vector<1x128xf32> to vector<9x128xf32>
    %1884 = arith.mulf %1879, %1883 : vector<9x128xf32>
    %1885 = arith.addf %1871, %1884 : vector<9x128xf32>
    %1886 = vector.extract_strided_slice %1856 {offsets = [4, 0], sizes = [9, 128], strides = [1, 1]} : vector<14x128xf32> to vector<9x128xf32>
    %1887 = vector.extract_strided_slice %1857 {offsets = [4, 0], sizes = [1, 128], strides = [1, 1]} : vector<6x128xf32> to vector<1x128xf32>
    %1888 = vector.shape_cast %1887 : vector<1x128xf32> to vector<128xf32>
    %1889 = vector.shape_cast %1888 : vector<128xf32> to vector<1x128xf32>
    %1890 = vector.broadcast %1889 : vector<1x128xf32> to vector<9x128xf32>
    %1891 = arith.mulf %1886, %1890 : vector<9x128xf32>
    %1892 = arith.addf %1878, %1891 : vector<9x128xf32>
    %1893 = vector.extract_strided_slice %1856 {offsets = [5, 0], sizes = [9, 128], strides = [1, 1]} : vector<14x128xf32> to vector<9x128xf32>
    %1894 = vector.extract_strided_slice %1857 {offsets = [5, 0], sizes = [1, 128], strides = [1, 1]} : vector<6x128xf32> to vector<1x128xf32>
    %1895 = vector.shape_cast %1894 : vector<1x128xf32> to vector<128xf32>
    %1896 = vector.shape_cast %1895 : vector<128xf32> to vector<1x128xf32>
    %1897 = vector.broadcast %1896 : vector<1x128xf32> to vector<9x128xf32>
    %1898 = arith.mulf %1893, %1897 : vector<9x128xf32>
    %1899 = arith.addf %1885, %1898 : vector<9x128xf32>
    %c176 = arith.constant 176 : index
    %c0_275 = arith.constant 0 : index
    %1900 = vector.load %arg10[%c176, %c0_275] : memref<224x128xf32, #tpu.memory_space<vmem>>, vector<14x128xf32>
    %c80_276 = arith.constant 80 : index
    %c0_277 = arith.constant 0 : index
    %1901 = vector.load %arg11[%c80_276, %c0_277] : memref<96x128xf32, #tpu.memory_space<vmem>>, vector<6x128xf32>
    %1902 = vector.extract_strided_slice %1900 {offsets = [0, 0], sizes = [9, 128], strides = [1, 1]} : vector<14x128xf32> to vector<9x128xf32>
    %1903 = vector.extract_strided_slice %1901 {offsets = [0, 0], sizes = [1, 128], strides = [1, 1]} : vector<6x128xf32> to vector<1x128xf32>
    %1904 = vector.shape_cast %1903 : vector<1x128xf32> to vector<128xf32>
    %1905 = vector.shape_cast %1904 : vector<128xf32> to vector<1x128xf32>
    %1906 = vector.broadcast %1905 : vector<1x128xf32> to vector<9x128xf32>
    %1907 = arith.mulf %1902, %1906 : vector<9x128xf32>
    %1908 = arith.addf %1892, %1907 : vector<9x128xf32>
    %1909 = vector.extract_strided_slice %1900 {offsets = [1, 0], sizes = [9, 128], strides = [1, 1]} : vector<14x128xf32> to vector<9x128xf32>
    %1910 = vector.extract_strided_slice %1901 {offsets = [1, 0], sizes = [1, 128], strides = [1, 1]} : vector<6x128xf32> to vector<1x128xf32>
    %1911 = vector.shape_cast %1910 : vector<1x128xf32> to vector<128xf32>
    %1912 = vector.shape_cast %1911 : vector<128xf32> to vector<1x128xf32>
    %1913 = vector.broadcast %1912 : vector<1x128xf32> to vector<9x128xf32>
    %1914 = arith.mulf %1909, %1913 : vector<9x128xf32>
    %1915 = arith.addf %1899, %1914 : vector<9x128xf32>
    %1916 = vector.extract_strided_slice %1900 {offsets = [2, 0], sizes = [9, 128], strides = [1, 1]} : vector<14x128xf32> to vector<9x128xf32>
    %1917 = vector.extract_strided_slice %1901 {offsets = [2, 0], sizes = [1, 128], strides = [1, 1]} : vector<6x128xf32> to vector<1x128xf32>
    %1918 = vector.shape_cast %1917 : vector<1x128xf32> to vector<128xf32>
    %1919 = vector.shape_cast %1918 : vector<128xf32> to vector<1x128xf32>
    %1920 = vector.broadcast %1919 : vector<1x128xf32> to vector<9x128xf32>
    %1921 = arith.mulf %1916, %1920 : vector<9x128xf32>
    %1922 = arith.addf %1908, %1921 : vector<9x128xf32>
    %1923 = vector.extract_strided_slice %1900 {offsets = [3, 0], sizes = [9, 128], strides = [1, 1]} : vector<14x128xf32> to vector<9x128xf32>
    %1924 = vector.extract_strided_slice %1901 {offsets = [3, 0], sizes = [1, 128], strides = [1, 1]} : vector<6x128xf32> to vector<1x128xf32>
    %1925 = vector.shape_cast %1924 : vector<1x128xf32> to vector<128xf32>
    %1926 = vector.shape_cast %1925 : vector<128xf32> to vector<1x128xf32>
    %1927 = vector.broadcast %1926 : vector<1x128xf32> to vector<9x128xf32>
    %1928 = arith.mulf %1923, %1927 : vector<9x128xf32>
    %1929 = arith.addf %1915, %1928 : vector<9x128xf32>
    %1930 = vector.extract_strided_slice %1900 {offsets = [4, 0], sizes = [9, 128], strides = [1, 1]} : vector<14x128xf32> to vector<9x128xf32>
    %1931 = vector.extract_strided_slice %1901 {offsets = [4, 0], sizes = [1, 128], strides = [1, 1]} : vector<6x128xf32> to vector<1x128xf32>
    %1932 = vector.shape_cast %1931 : vector<1x128xf32> to vector<128xf32>
    %1933 = vector.shape_cast %1932 : vector<128xf32> to vector<1x128xf32>
    %1934 = vector.broadcast %1933 : vector<1x128xf32> to vector<9x128xf32>
    %1935 = arith.mulf %1930, %1934 : vector<9x128xf32>
    %1936 = arith.addf %1922, %1935 : vector<9x128xf32>
    %1937 = vector.extract_strided_slice %1900 {offsets = [5, 0], sizes = [9, 128], strides = [1, 1]} : vector<14x128xf32> to vector<9x128xf32>
    %1938 = vector.extract_strided_slice %1901 {offsets = [5, 0], sizes = [1, 128], strides = [1, 1]} : vector<6x128xf32> to vector<1x128xf32>
    %1939 = vector.shape_cast %1938 : vector<1x128xf32> to vector<128xf32>
    %1940 = vector.shape_cast %1939 : vector<128xf32> to vector<1x128xf32>
    %1941 = vector.broadcast %1940 : vector<1x128xf32> to vector<9x128xf32>
    %1942 = arith.mulf %1937, %1941 : vector<9x128xf32>
    %1943 = arith.addf %1929, %1942 : vector<9x128xf32>
    %1944 = arith.addf %1936, %1943 : vector<9x128xf32>
    %c0_278 = arith.constant 0 : index
    %c6 = arith.constant 6 : index
    %c0_279 = arith.constant 0 : index
    %c0_280 = arith.constant 0 : index
    %1945 = vector.load %arg9[%c0_278, %c6, %c0_279, %c0_280] : memref<1x9x9x128xf32, #tpu.memory_space<vmem>>, vector<1x1x9x128xf32>
    %1946 = vector.shape_cast %1945 : vector<1x1x9x128xf32> to vector<9x128xf32>
    %1947 = vector.shape_cast %1944 : vector<9x128xf32> to vector<1x1x9x128xf32>
    tpu.vector_store %arg9[%c0_278, %c6, %c0_279, %c0_280], %1947 {strides = array<i32>} : memref<1x9x9x128xf32, #tpu.memory_space<vmem>>, vector<1x1x9x128xf32>,
    %cst_281 = arith.constant 0.000000e+00 : f32
    %1948 = vector.broadcast %cst_281 : f32 to vector<9x128xf32>
    %cst_282 = arith.constant 0.000000e+00 : f32
    %1949 = vector.broadcast %cst_282 : f32 to vector<9x128xf32>
    %c112_283 = arith.constant 112 : index
    %c0_284 = arith.constant 0 : index
    %1950 = vector.load %arg10[%c112_283, %c0_284] : memref<224x128xf32, #tpu.memory_space<vmem>>, vector<14x128xf32>
    %c0_285 = arith.constant 0 : index
    %c0_286 = arith.constant 0 : index
    %1951 = vector.load %arg11[%c0_285, %c0_286] : memref<96x128xf32, #tpu.memory_space<vmem>>, vector<6x128xf32>
    %1952 = vector.extract_strided_slice %1950 {offsets = [0, 0], sizes = [9, 128], strides = [1, 1]} : vector<14x128xf32> to vector<9x128xf32>
    %1953 = vector.extract_strided_slice %1951 {offsets = [0, 0], sizes = [1, 128], strides = [1, 1]} : vector<6x128xf32> to vector<1x128xf32>
    %1954 = vector.shape_cast %1953 : vector<1x128xf32> to vector<128xf32>
    %1955 = vector.shape_cast %1954 : vector<128xf32> to vector<1x128xf32>
    %1956 = vector.broadcast %1955 : vector<1x128xf32> to vector<9x128xf32>
    %1957 = arith.mulf %1952, %1956 : vector<9x128xf32>
    %1958 = arith.addf %1948, %1957 : vector<9x128xf32>
    %1959 = vector.extract_strided_slice %1950 {offsets = [1, 0], sizes = [9, 128], strides = [1, 1]} : vector<14x128xf32> to vector<9x128xf32>
    %1960 = vector.extract_strided_slice %1951 {offsets = [1, 0], sizes = [1, 128], strides = [1, 1]} : vector<6x128xf32> to vector<1x128xf32>
    %1961 = vector.shape_cast %1960 : vector<1x128xf32> to vector<128xf32>
    %1962 = vector.shape_cast %1961 : vector<128xf32> to vector<1x128xf32>
    %1963 = vector.broadcast %1962 : vector<1x128xf32> to vector<9x128xf32>
    %1964 = arith.mulf %1959, %1963 : vector<9x128xf32>
    %1965 = arith.addf %1949, %1964 : vector<9x128xf32>
    %1966 = vector.extract_strided_slice %1950 {offsets = [2, 0], sizes = [9, 128], strides = [1, 1]} : vector<14x128xf32> to vector<9x128xf32>
    %1967 = vector.extract_strided_slice %1951 {offsets = [2, 0], sizes = [1, 128], strides = [1, 1]} : vector<6x128xf32> to vector<1x128xf32>
    %1968 = vector.shape_cast %1967 : vector<1x128xf32> to vector<128xf32>
    %1969 = vector.shape_cast %1968 : vector<128xf32> to vector<1x128xf32>
    %1970 = vector.broadcast %1969 : vector<1x128xf32> to vector<9x128xf32>
    %1971 = arith.mulf %1966, %1970 : vector<9x128xf32>
    %1972 = arith.addf %1958, %1971 : vector<9x128xf32>
    %1973 = vector.extract_strided_slice %1950 {offsets = [3, 0], sizes = [9, 128], strides = [1, 1]} : vector<14x128xf32> to vector<9x128xf32>
    %1974 = vector.extract_strided_slice %1951 {offsets = [3, 0], sizes = [1, 128], strides = [1, 1]} : vector<6x128xf32> to vector<1x128xf32>
    %1975 = vector.shape_cast %1974 : vector<1x128xf32> to vector<128xf32>
    %1976 = vector.shape_cast %1975 : vector<128xf32> to vector<1x128xf32>
    %1977 = vector.broadcast %1976 : vector<1x128xf32> to vector<9x128xf32>
    %1978 = arith.mulf %1973, %1977 : vector<9x128xf32>
    %1979 = arith.addf %1965, %1978 : vector<9x128xf32>
    %1980 = vector.extract_strided_slice %1950 {offsets = [4, 0], sizes = [9, 128], strides = [1, 1]} : vector<14x128xf32> to vector<9x128xf32>
    %1981 = vector.extract_strided_slice %1951 {offsets = [4, 0], sizes = [1, 128], strides = [1, 1]} : vector<6x128xf32> to vector<1x128xf32>
    %1982 = vector.shape_cast %1981 : vector<1x128xf32> to vector<128xf32>
    %1983 = vector.shape_cast %1982 : vector<128xf32> to vector<1x128xf32>
    %1984 = vector.broadcast %1983 : vector<1x128xf32> to vector<9x128xf32>
    %1985 = arith.mulf %1980, %1984 : vector<9x128xf32>
    %1986 = arith.addf %1972, %1985 : vector<9x128xf32>
    %1987 = vector.extract_strided_slice %1950 {offsets = [5, 0], sizes = [9, 128], strides = [1, 1]} : vector<14x128xf32> to vector<9x128xf32>
    %1988 = vector.extract_strided_slice %1951 {offsets = [5, 0], sizes = [1, 128], strides = [1, 1]} : vector<6x128xf32> to vector<1x128xf32>
    %1989 = vector.shape_cast %1988 : vector<1x128xf32> to vector<128xf32>
    %1990 = vector.shape_cast %1989 : vector<128xf32> to vector<1x128xf32>
    %1991 = vector.broadcast %1990 : vector<1x128xf32> to vector<9x128xf32>
    %1992 = arith.mulf %1987, %1991 : vector<9x128xf32>
    %1993 = arith.addf %1979, %1992 : vector<9x128xf32>
    %c128_287 = arith.constant 128 : index
    %c0_288 = arith.constant 0 : index
    %1994 = vector.load %arg10[%c128_287, %c0_288] : memref<224x128xf32, #tpu.memory_space<vmem>>, vector<14x128xf32>
    %c16_289 = arith.constant 16 : index
    %c0_290 = arith.constant 0 : index
    %1995 = vector.load %arg11[%c16_289, %c0_290] : memref<96x128xf32, #tpu.memory_space<vmem>>, vector<6x128xf32>
    %1996 = vector.extract_strided_slice %1994 {offsets = [0, 0], sizes = [9, 128], strides = [1, 1]} : vector<14x128xf32> to vector<9x128xf32>
    %1997 = vector.extract_strided_slice %1995 {offsets = [0, 0], sizes = [1, 128], strides = [1, 1]} : vector<6x128xf32> to vector<1x128xf32>
    %1998 = vector.shape_cast %1997 : vector<1x128xf32> to vector<128xf32>
    %1999 = vector.shape_cast %1998 : vector<128xf32> to vector<1x128xf32>
    %2000 = vector.broadcast %1999 : vector<1x128xf32> to vector<9x128xf32>
    %2001 = arith.mulf %1996, %2000 : vector<9x128xf32>
    %2002 = arith.addf %1986, %2001 : vector<9x128xf32>
    %2003 = vector.extract_strided_slice %1994 {offsets = [1, 0], sizes = [9, 128], strides = [1, 1]} : vector<14x128xf32> to vector<9x128xf32>
    %2004 = vector.extract_strided_slice %1995 {offsets = [1, 0], sizes = [1, 128], strides = [1, 1]} : vector<6x128xf32> to vector<1x128xf32>
    %2005 = vector.shape_cast %2004 : vector<1x128xf32> to vector<128xf32>
    %2006 = vector.shape_cast %2005 : vector<128xf32> to vector<1x128xf32>
    %2007 = vector.broadcast %2006 : vector<1x128xf32> to vector<9x128xf32>
    %2008 = arith.mulf %2003, %2007 : vector<9x128xf32>
    %2009 = arith.addf %1993, %2008 : vector<9x128xf32>
    %2010 = vector.extract_strided_slice %1994 {offsets = [2, 0], sizes = [9, 128], strides = [1, 1]} : vector<14x128xf32> to vector<9x128xf32>
    %2011 = vector.extract_strided_slice %1995 {offsets = [2, 0], sizes = [1, 128], strides = [1, 1]} : vector<6x128xf32> to vector<1x128xf32>
    %2012 = vector.shape_cast %2011 : vector<1x128xf32> to vector<128xf32>
    %2013 = vector.shape_cast %2012 : vector<128xf32> to vector<1x128xf32>
    %2014 = vector.broadcast %2013 : vector<1x128xf32> to vector<9x128xf32>
    %2015 = arith.mulf %2010, %2014 : vector<9x128xf32>
    %2016 = arith.addf %2002, %2015 : vector<9x128xf32>
    %2017 = vector.extract_strided_slice %1994 {offsets = [3, 0], sizes = [9, 128], strides = [1, 1]} : vector<14x128xf32> to vector<9x128xf32>
    %2018 = vector.extract_strided_slice %1995 {offsets = [3, 0], sizes = [1, 128], strides = [1, 1]} : vector<6x128xf32> to vector<1x128xf32>
    %2019 = vector.shape_cast %2018 : vector<1x128xf32> to vector<128xf32>
    %2020 = vector.shape_cast %2019 : vector<128xf32> to vector<1x128xf32>
    %2021 = vector.broadcast %2020 : vector<1x128xf32> to vector<9x128xf32>
    %2022 = arith.mulf %2017, %2021 : vector<9x128xf32>
    %2023 = arith.addf %2009, %2022 : vector<9x128xf32>
    %2024 = vector.extract_strided_slice %1994 {offsets = [4, 0], sizes = [9, 128], strides = [1, 1]} : vector<14x128xf32> to vector<9x128xf32>
    %2025 = vector.extract_strided_slice %1995 {offsets = [4, 0], sizes = [1, 128], strides = [1, 1]} : vector<6x128xf32> to vector<1x128xf32>
    %2026 = vector.shape_cast %2025 : vector<1x128xf32> to vector<128xf32>
    %2027 = vector.shape_cast %2026 : vector<128xf32> to vector<1x128xf32>
    %2028 = vector.broadcast %2027 : vector<1x128xf32> to vector<9x128xf32>
    %2029 = arith.mulf %2024, %2028 : vector<9x128xf32>
    %2030 = arith.addf %2016, %2029 : vector<9x128xf32>
    %2031 = vector.extract_strided_slice %1994 {offsets = [5, 0], sizes = [9, 128], strides = [1, 1]} : vector<14x128xf32> to vector<9x128xf32>
    %2032 = vector.extract_strided_slice %1995 {offsets = [5, 0], sizes = [1, 128], strides = [1, 1]} : vector<6x128xf32> to vector<1x128xf32>
    %2033 = vector.shape_cast %2032 : vector<1x128xf32> to vector<128xf32>
    %2034 = vector.shape_cast %2033 : vector<128xf32> to vector<1x128xf32>
    %2035 = vector.broadcast %2034 : vector<1x128xf32> to vector<9x128xf32>
    %2036 = arith.mulf %2031, %2035 : vector<9x128xf32>
    %2037 = arith.addf %2023, %2036 : vector<9x128xf32>
    %c144_291 = arith.constant 144 : index
    %c0_292 = arith.constant 0 : index
    %2038 = vector.load %arg10[%c144_291, %c0_292] : memref<224x128xf32, #tpu.memory_space<vmem>>, vector<14x128xf32>
    %c32_293 = arith.constant 32 : index
    %c0_294 = arith.constant 0 : index
    %2039 = vector.load %arg11[%c32_293, %c0_294] : memref<96x128xf32, #tpu.memory_space<vmem>>, vector<6x128xf32>
    %2040 = vector.extract_strided_slice %2038 {offsets = [0, 0], sizes = [9, 128], strides = [1, 1]} : vector<14x128xf32> to vector<9x128xf32>
    %2041 = vector.extract_strided_slice %2039 {offsets = [0, 0], sizes = [1, 128], strides = [1, 1]} : vector<6x128xf32> to vector<1x128xf32>
    %2042 = vector.shape_cast %2041 : vector<1x128xf32> to vector<128xf32>
    %2043 = vector.shape_cast %2042 : vector<128xf32> to vector<1x128xf32>
    %2044 = vector.broadcast %2043 : vector<1x128xf32> to vector<9x128xf32>
    %2045 = arith.mulf %2040, %2044 : vector<9x128xf32>
    %2046 = arith.addf %2030, %2045 : vector<9x128xf32>
    %2047 = vector.extract_strided_slice %2038 {offsets = [1, 0], sizes = [9, 128], strides = [1, 1]} : vector<14x128xf32> to vector<9x128xf32>
    %2048 = vector.extract_strided_slice %2039 {offsets = [1, 0], sizes = [1, 128], strides = [1, 1]} : vector<6x128xf32> to vector<1x128xf32>
    %2049 = vector.shape_cast %2048 : vector<1x128xf32> to vector<128xf32>
    %2050 = vector.shape_cast %2049 : vector<128xf32> to vector<1x128xf32>
    %2051 = vector.broadcast %2050 : vector<1x128xf32> to vector<9x128xf32>
    %2052 = arith.mulf %2047, %2051 : vector<9x128xf32>
    %2053 = arith.addf %2037, %2052 : vector<9x128xf32>
    %2054 = vector.extract_strided_slice %2038 {offsets = [2, 0], sizes = [9, 128], strides = [1, 1]} : vector<14x128xf32> to vector<9x128xf32>
    %2055 = vector.extract_strided_slice %2039 {offsets = [2, 0], sizes = [1, 128], strides = [1, 1]} : vector<6x128xf32> to vector<1x128xf32>
    %2056 = vector.shape_cast %2055 : vector<1x128xf32> to vector<128xf32>
    %2057 = vector.shape_cast %2056 : vector<128xf32> to vector<1x128xf32>
    %2058 = vector.broadcast %2057 : vector<1x128xf32> to vector<9x128xf32>
    %2059 = arith.mulf %2054, %2058 : vector<9x128xf32>
    %2060 = arith.addf %2046, %2059 : vector<9x128xf32>
    %2061 = vector.extract_strided_slice %2038 {offsets = [3, 0], sizes = [9, 128], strides = [1, 1]} : vector<14x128xf32> to vector<9x128xf32>
    %2062 = vector.extract_strided_slice %2039 {offsets = [3, 0], sizes = [1, 128], strides = [1, 1]} : vector<6x128xf32> to vector<1x128xf32>
    %2063 = vector.shape_cast %2062 : vector<1x128xf32> to vector<128xf32>
    %2064 = vector.shape_cast %2063 : vector<128xf32> to vector<1x128xf32>
    %2065 = vector.broadcast %2064 : vector<1x128xf32> to vector<9x128xf32>
    %2066 = arith.mulf %2061, %2065 : vector<9x128xf32>
    %2067 = arith.addf %2053, %2066 : vector<9x128xf32>
    %2068 = vector.extract_strided_slice %2038 {offsets = [4, 0], sizes = [9, 128], strides = [1, 1]} : vector<14x128xf32> to vector<9x128xf32>
    %2069 = vector.extract_strided_slice %2039 {offsets = [4, 0], sizes = [1, 128], strides = [1, 1]} : vector<6x128xf32> to vector<1x128xf32>
    %2070 = vector.shape_cast %2069 : vector<1x128xf32> to vector<128xf32>
    %2071 = vector.shape_cast %2070 : vector<128xf32> to vector<1x128xf32>
    %2072 = vector.broadcast %2071 : vector<1x128xf32> to vector<9x128xf32>
    %2073 = arith.mulf %2068, %2072 : vector<9x128xf32>
    %2074 = arith.addf %2060, %2073 : vector<9x128xf32>
    %2075 = vector.extract_strided_slice %2038 {offsets = [5, 0], sizes = [9, 128], strides = [1, 1]} : vector<14x128xf32> to vector<9x128xf32>
    %2076 = vector.extract_strided_slice %2039 {offsets = [5, 0], sizes = [1, 128], strides = [1, 1]} : vector<6x128xf32> to vector<1x128xf32>
    %2077 = vector.shape_cast %2076 : vector<1x128xf32> to vector<128xf32>
    %2078 = vector.shape_cast %2077 : vector<128xf32> to vector<1x128xf32>
    %2079 = vector.broadcast %2078 : vector<1x128xf32> to vector<9x128xf32>
    %2080 = arith.mulf %2075, %2079 : vector<9x128xf32>
    %2081 = arith.addf %2067, %2080 : vector<9x128xf32>
    %c160_295 = arith.constant 160 : index
    %c0_296 = arith.constant 0 : index
    %2082 = vector.load %arg10[%c160_295, %c0_296] : memref<224x128xf32, #tpu.memory_space<vmem>>, vector<14x128xf32>
    %c48_297 = arith.constant 48 : index
    %c0_298 = arith.constant 0 : index
    %2083 = vector.load %arg11[%c48_297, %c0_298] : memref<96x128xf32, #tpu.memory_space<vmem>>, vector<6x128xf32>
    %2084 = vector.extract_strided_slice %2082 {offsets = [0, 0], sizes = [9, 128], strides = [1, 1]} : vector<14x128xf32> to vector<9x128xf32>
    %2085 = vector.extract_strided_slice %2083 {offsets = [0, 0], sizes = [1, 128], strides = [1, 1]} : vector<6x128xf32> to vector<1x128xf32>
    %2086 = vector.shape_cast %2085 : vector<1x128xf32> to vector<128xf32>
    %2087 = vector.shape_cast %2086 : vector<128xf32> to vector<1x128xf32>
    %2088 = vector.broadcast %2087 : vector<1x128xf32> to vector<9x128xf32>
    %2089 = arith.mulf %2084, %2088 : vector<9x128xf32>
    %2090 = arith.addf %2074, %2089 : vector<9x128xf32>
    %2091 = vector.extract_strided_slice %2082 {offsets = [1, 0], sizes = [9, 128], strides = [1, 1]} : vector<14x128xf32> to vector<9x128xf32>
    %2092 = vector.extract_strided_slice %2083 {offsets = [1, 0], sizes = [1, 128], strides = [1, 1]} : vector<6x128xf32> to vector<1x128xf32>
    %2093 = vector.shape_cast %2092 : vector<1x128xf32> to vector<128xf32>
    %2094 = vector.shape_cast %2093 : vector<128xf32> to vector<1x128xf32>
    %2095 = vector.broadcast %2094 : vector<1x128xf32> to vector<9x128xf32>
    %2096 = arith.mulf %2091, %2095 : vector<9x128xf32>
    %2097 = arith.addf %2081, %2096 : vector<9x128xf32>
    %2098 = vector.extract_strided_slice %2082 {offsets = [2, 0], sizes = [9, 128], strides = [1, 1]} : vector<14x128xf32> to vector<9x128xf32>
    %2099 = vector.extract_strided_slice %2083 {offsets = [2, 0], sizes = [1, 128], strides = [1, 1]} : vector<6x128xf32> to vector<1x128xf32>
    %2100 = vector.shape_cast %2099 : vector<1x128xf32> to vector<128xf32>
    %2101 = vector.shape_cast %2100 : vector<128xf32> to vector<1x128xf32>
    %2102 = vector.broadcast %2101 : vector<1x128xf32> to vector<9x128xf32>
    %2103 = arith.mulf %2098, %2102 : vector<9x128xf32>
    %2104 = arith.addf %2090, %2103 : vector<9x128xf32>
    %2105 = vector.extract_strided_slice %2082 {offsets = [3, 0], sizes = [9, 128], strides = [1, 1]} : vector<14x128xf32> to vector<9x128xf32>
    %2106 = vector.extract_strided_slice %2083 {offsets = [3, 0], sizes = [1, 128], strides = [1, 1]} : vector<6x128xf32> to vector<1x128xf32>
    %2107 = vector.shape_cast %2106 : vector<1x128xf32> to vector<128xf32>
    %2108 = vector.shape_cast %2107 : vector<128xf32> to vector<1x128xf32>
    %2109 = vector.broadcast %2108 : vector<1x128xf32> to vector<9x128xf32>
    %2110 = arith.mulf %2105, %2109 : vector<9x128xf32>
    %2111 = arith.addf %2097, %2110 : vector<9x128xf32>
    %2112 = vector.extract_strided_slice %2082 {offsets = [4, 0], sizes = [9, 128], strides = [1, 1]} : vector<14x128xf32> to vector<9x128xf32>
    %2113 = vector.extract_strided_slice %2083 {offsets = [4, 0], sizes = [1, 128], strides = [1, 1]} : vector<6x128xf32> to vector<1x128xf32>
    %2114 = vector.shape_cast %2113 : vector<1x128xf32> to vector<128xf32>
    %2115 = vector.shape_cast %2114 : vector<128xf32> to vector<1x128xf32>
    %2116 = vector.broadcast %2115 : vector<1x128xf32> to vector<9x128xf32>
    %2117 = arith.mulf %2112, %2116 : vector<9x128xf32>
    %2118 = arith.addf %2104, %2117 : vector<9x128xf32>
    %2119 = vector.extract_strided_slice %2082 {offsets = [5, 0], sizes = [9, 128], strides = [1, 1]} : vector<14x128xf32> to vector<9x128xf32>
    %2120 = vector.extract_strided_slice %2083 {offsets = [5, 0], sizes = [1, 128], strides = [1, 1]} : vector<6x128xf32> to vector<1x128xf32>
    %2121 = vector.shape_cast %2120 : vector<1x128xf32> to vector<128xf32>
    %2122 = vector.shape_cast %2121 : vector<128xf32> to vector<1x128xf32>
    %2123 = vector.broadcast %2122 : vector<1x128xf32> to vector<9x128xf32>
    %2124 = arith.mulf %2119, %2123 : vector<9x128xf32>
    %2125 = arith.addf %2111, %2124 : vector<9x128xf32>
    %c176_299 = arith.constant 176 : index
    %c0_300 = arith.constant 0 : index
    %2126 = vector.load %arg10[%c176_299, %c0_300] : memref<224x128xf32, #tpu.memory_space<vmem>>, vector<14x128xf32>
    %c64_301 = arith.constant 64 : index
    %c0_302 = arith.constant 0 : index
    %2127 = vector.load %arg11[%c64_301, %c0_302] : memref<96x128xf32, #tpu.memory_space<vmem>>, vector<6x128xf32>
    %2128 = vector.extract_strided_slice %2126 {offsets = [0, 0], sizes = [9, 128], strides = [1, 1]} : vector<14x128xf32> to vector<9x128xf32>
    %2129 = vector.extract_strided_slice %2127 {offsets = [0, 0], sizes = [1, 128], strides = [1, 1]} : vector<6x128xf32> to vector<1x128xf32>
    %2130 = vector.shape_cast %2129 : vector<1x128xf32> to vector<128xf32>
    %2131 = vector.shape_cast %2130 : vector<128xf32> to vector<1x128xf32>
    %2132 = vector.broadcast %2131 : vector<1x128xf32> to vector<9x128xf32>
    %2133 = arith.mulf %2128, %2132 : vector<9x128xf32>
    %2134 = arith.addf %2118, %2133 : vector<9x128xf32>
    %2135 = vector.extract_strided_slice %2126 {offsets = [1, 0], sizes = [9, 128], strides = [1, 1]} : vector<14x128xf32> to vector<9x128xf32>
    %2136 = vector.extract_strided_slice %2127 {offsets = [1, 0], sizes = [1, 128], strides = [1, 1]} : vector<6x128xf32> to vector<1x128xf32>
    %2137 = vector.shape_cast %2136 : vector<1x128xf32> to vector<128xf32>
    %2138 = vector.shape_cast %2137 : vector<128xf32> to vector<1x128xf32>
    %2139 = vector.broadcast %2138 : vector<1x128xf32> to vector<9x128xf32>
    %2140 = arith.mulf %2135, %2139 : vector<9x128xf32>
    %2141 = arith.addf %2125, %2140 : vector<9x128xf32>
    %2142 = vector.extract_strided_slice %2126 {offsets = [2, 0], sizes = [9, 128], strides = [1, 1]} : vector<14x128xf32> to vector<9x128xf32>
    %2143 = vector.extract_strided_slice %2127 {offsets = [2, 0], sizes = [1, 128], strides = [1, 1]} : vector<6x128xf32> to vector<1x128xf32>
    %2144 = vector.shape_cast %2143 : vector<1x128xf32> to vector<128xf32>
    %2145 = vector.shape_cast %2144 : vector<128xf32> to vector<1x128xf32>
    %2146 = vector.broadcast %2145 : vector<1x128xf32> to vector<9x128xf32>
    %2147 = arith.mulf %2142, %2146 : vector<9x128xf32>
    %2148 = arith.addf %2134, %2147 : vector<9x128xf32>
    %2149 = vector.extract_strided_slice %2126 {offsets = [3, 0], sizes = [9, 128], strides = [1, 1]} : vector<14x128xf32> to vector<9x128xf32>
    %2150 = vector.extract_strided_slice %2127 {offsets = [3, 0], sizes = [1, 128], strides = [1, 1]} : vector<6x128xf32> to vector<1x128xf32>
    %2151 = vector.shape_cast %2150 : vector<1x128xf32> to vector<128xf32>
    %2152 = vector.shape_cast %2151 : vector<128xf32> to vector<1x128xf32>
    %2153 = vector.broadcast %2152 : vector<1x128xf32> to vector<9x128xf32>
    %2154 = arith.mulf %2149, %2153 : vector<9x128xf32>
    %2155 = arith.addf %2141, %2154 : vector<9x128xf32>
    %2156 = vector.extract_strided_slice %2126 {offsets = [4, 0], sizes = [9, 128], strides = [1, 1]} : vector<14x128xf32> to vector<9x128xf32>
    %2157 = vector.extract_strided_slice %2127 {offsets = [4, 0], sizes = [1, 128], strides = [1, 1]} : vector<6x128xf32> to vector<1x128xf32>
    %2158 = vector.shape_cast %2157 : vector<1x128xf32> to vector<128xf32>
    %2159 = vector.shape_cast %2158 : vector<128xf32> to vector<1x128xf32>
    %2160 = vector.broadcast %2159 : vector<1x128xf32> to vector<9x128xf32>
    %2161 = arith.mulf %2156, %2160 : vector<9x128xf32>
    %2162 = arith.addf %2148, %2161 : vector<9x128xf32>
    %2163 = vector.extract_strided_slice %2126 {offsets = [5, 0], sizes = [9, 128], strides = [1, 1]} : vector<14x128xf32> to vector<9x128xf32>
    %2164 = vector.extract_strided_slice %2127 {offsets = [5, 0], sizes = [1, 128], strides = [1, 1]} : vector<6x128xf32> to vector<1x128xf32>
    %2165 = vector.shape_cast %2164 : vector<1x128xf32> to vector<128xf32>
    %2166 = vector.shape_cast %2165 : vector<128xf32> to vector<1x128xf32>
    %2167 = vector.broadcast %2166 : vector<1x128xf32> to vector<9x128xf32>
    %2168 = arith.mulf %2163, %2167 : vector<9x128xf32>
    %2169 = arith.addf %2155, %2168 : vector<9x128xf32>
    %c192 = arith.constant 192 : index
    %c0_303 = arith.constant 0 : index
    %2170 = vector.load %arg10[%c192, %c0_303] : memref<224x128xf32, #tpu.memory_space<vmem>>, vector<14x128xf32>
    %c80_304 = arith.constant 80 : index
    %c0_305 = arith.constant 0 : index
    %2171 = vector.load %arg11[%c80_304, %c0_305] : memref<96x128xf32, #tpu.memory_space<vmem>>, vector<6x128xf32>
    %2172 = vector.extract_strided_slice %2170 {offsets = [0, 0], sizes = [9, 128], strides = [1, 1]} : vector<14x128xf32> to vector<9x128xf32>
    %2173 = vector.extract_strided_slice %2171 {offsets = [0, 0], sizes = [1, 128], strides = [1, 1]} : vector<6x128xf32> to vector<1x128xf32>
    %2174 = vector.shape_cast %2173 : vector<1x128xf32> to vector<128xf32>
    %2175 = vector.shape_cast %2174 : vector<128xf32> to vector<1x128xf32>
    %2176 = vector.broadcast %2175 : vector<1x128xf32> to vector<9x128xf32>
    %2177 = arith.mulf %2172, %2176 : vector<9x128xf32>
    %2178 = arith.addf %2162, %2177 : vector<9x128xf32>
    %2179 = vector.extract_strided_slice %2170 {offsets = [1, 0], sizes = [9, 128], strides = [1, 1]} : vector<14x128xf32> to vector<9x128xf32>
    %2180 = vector.extract_strided_slice %2171 {offsets = [1, 0], sizes = [1, 128], strides = [1, 1]} : vector<6x128xf32> to vector<1x128xf32>
    %2181 = vector.shape_cast %2180 : vector<1x128xf32> to vector<128xf32>
    %2182 = vector.shape_cast %2181 : vector<128xf32> to vector<1x128xf32>
    %2183 = vector.broadcast %2182 : vector<1x128xf32> to vector<9x128xf32>
    %2184 = arith.mulf %2179, %2183 : vector<9x128xf32>
    %2185 = arith.addf %2169, %2184 : vector<9x128xf32>
    %2186 = vector.extract_strided_slice %2170 {offsets = [2, 0], sizes = [9, 128], strides = [1, 1]} : vector<14x128xf32> to vector<9x128xf32>
    %2187 = vector.extract_strided_slice %2171 {offsets = [2, 0], sizes = [1, 128], strides = [1, 1]} : vector<6x128xf32> to vector<1x128xf32>
    %2188 = vector.shape_cast %2187 : vector<1x128xf32> to vector<128xf32>
    %2189 = vector.shape_cast %2188 : vector<128xf32> to vector<1x128xf32>
    %2190 = vector.broadcast %2189 : vector<1x128xf32> to vector<9x128xf32>
    %2191 = arith.mulf %2186, %2190 : vector<9x128xf32>
    %2192 = arith.addf %2178, %2191 : vector<9x128xf32>
    %2193 = vector.extract_strided_slice %2170 {offsets = [3, 0], sizes = [9, 128], strides = [1, 1]} : vector<14x128xf32> to vector<9x128xf32>
    %2194 = vector.extract_strided_slice %2171 {offsets = [3, 0], sizes = [1, 128], strides = [1, 1]} : vector<6x128xf32> to vector<1x128xf32>
    %2195 = vector.shape_cast %2194 : vector<1x128xf32> to vector<128xf32>
    %2196 = vector.shape_cast %2195 : vector<128xf32> to vector<1x128xf32>
    %2197 = vector.broadcast %2196 : vector<1x128xf32> to vector<9x128xf32>
    %2198 = arith.mulf %2193, %2197 : vector<9x128xf32>
    %2199 = arith.addf %2185, %2198 : vector<9x128xf32>
    %2200 = vector.extract_strided_slice %2170 {offsets = [4, 0], sizes = [9, 128], strides = [1, 1]} : vector<14x128xf32> to vector<9x128xf32>
    %2201 = vector.extract_strided_slice %2171 {offsets = [4, 0], sizes = [1, 128], strides = [1, 1]} : vector<6x128xf32> to vector<1x128xf32>
    %2202 = vector.shape_cast %2201 : vector<1x128xf32> to vector<128xf32>
    %2203 = vector.shape_cast %2202 : vector<128xf32> to vector<1x128xf32>
    %2204 = vector.broadcast %2203 : vector<1x128xf32> to vector<9x128xf32>
    %2205 = arith.mulf %2200, %2204 : vector<9x128xf32>
    %2206 = arith.addf %2192, %2205 : vector<9x128xf32>
    %2207 = vector.extract_strided_slice %2170 {offsets = [5, 0], sizes = [9, 128], strides = [1, 1]} : vector<14x128xf32> to vector<9x128xf32>
    %2208 = vector.extract_strided_slice %2171 {offsets = [5, 0], sizes = [1, 128], strides = [1, 1]} : vector<6x128xf32> to vector<1x128xf32>
    %2209 = vector.shape_cast %2208 : vector<1x128xf32> to vector<128xf32>
    %2210 = vector.shape_cast %2209 : vector<128xf32> to vector<1x128xf32>
    %2211 = vector.broadcast %2210 : vector<1x128xf32> to vector<9x128xf32>
    %2212 = arith.mulf %2207, %2211 : vector<9x128xf32>
    %2213 = arith.addf %2199, %2212 : vector<9x128xf32>
    %2214 = arith.addf %2206, %2213 : vector<9x128xf32>
    %c0_306 = arith.constant 0 : index
    %c7 = arith.constant 7 : index
    %c0_307 = arith.constant 0 : index
    %c0_308 = arith.constant 0 : index
    %2215 = vector.load %arg9[%c0_306, %c7, %c0_307, %c0_308] : memref<1x9x9x128xf32, #tpu.memory_space<vmem>>, vector<1x1x9x128xf32>
    %2216 = vector.shape_cast %2215 : vector<1x1x9x128xf32> to vector<9x128xf32>
    %2217 = vector.shape_cast %2214 : vector<9x128xf32> to vector<1x1x9x128xf32>
    tpu.vector_store %arg9[%c0_306, %c7, %c0_307, %c0_308], %2217 {strides = array<i32>} : memref<1x9x9x128xf32, #tpu.memory_space<vmem>>, vector<1x1x9x128xf32>,
    %cst_309 = arith.constant 0.000000e+00 : f32
    %2218 = vector.broadcast %cst_309 : f32 to vector<9x128xf32>
    %cst_310 = arith.constant 0.000000e+00 : f32
    %2219 = vector.broadcast %cst_310 : f32 to vector<9x128xf32>
    %c128_311 = arith.constant 128 : index
    %c0_312 = arith.constant 0 : index
    %2220 = vector.load %arg10[%c128_311, %c0_312] : memref<224x128xf32, #tpu.memory_space<vmem>>, vector<14x128xf32>
    %c0_313 = arith.constant 0 : index
    %c0_314 = arith.constant 0 : index
    %2221 = vector.load %arg11[%c0_313, %c0_314] : memref<96x128xf32, #tpu.memory_space<vmem>>, vector<6x128xf32>
    %2222 = vector.extract_strided_slice %2220 {offsets = [0, 0], sizes = [9, 128], strides = [1, 1]} : vector<14x128xf32> to vector<9x128xf32>
    %2223 = vector.extract_strided_slice %2221 {offsets = [0, 0], sizes = [1, 128], strides = [1, 1]} : vector<6x128xf32> to vector<1x128xf32>
    %2224 = vector.shape_cast %2223 : vector<1x128xf32> to vector<128xf32>
    %2225 = vector.shape_cast %2224 : vector<128xf32> to vector<1x128xf32>
    %2226 = vector.broadcast %2225 : vector<1x128xf32> to vector<9x128xf32>
    %2227 = arith.mulf %2222, %2226 : vector<9x128xf32>
    %2228 = arith.addf %2218, %2227 : vector<9x128xf32>
    %2229 = vector.extract_strided_slice %2220 {offsets = [1, 0], sizes = [9, 128], strides = [1, 1]} : vector<14x128xf32> to vector<9x128xf32>
    %2230 = vector.extract_strided_slice %2221 {offsets = [1, 0], sizes = [1, 128], strides = [1, 1]} : vector<6x128xf32> to vector<1x128xf32>
    %2231 = vector.shape_cast %2230 : vector<1x128xf32> to vector<128xf32>
    %2232 = vector.shape_cast %2231 : vector<128xf32> to vector<1x128xf32>
    %2233 = vector.broadcast %2232 : vector<1x128xf32> to vector<9x128xf32>
    %2234 = arith.mulf %2229, %2233 : vector<9x128xf32>
    %2235 = arith.addf %2219, %2234 : vector<9x128xf32>
    %2236 = vector.extract_strided_slice %2220 {offsets = [2, 0], sizes = [9, 128], strides = [1, 1]} : vector<14x128xf32> to vector<9x128xf32>
    %2237 = vector.extract_strided_slice %2221 {offsets = [2, 0], sizes = [1, 128], strides = [1, 1]} : vector<6x128xf32> to vector<1x128xf32>
    %2238 = vector.shape_cast %2237 : vector<1x128xf32> to vector<128xf32>
    %2239 = vector.shape_cast %2238 : vector<128xf32> to vector<1x128xf32>
    %2240 = vector.broadcast %2239 : vector<1x128xf32> to vector<9x128xf32>
    %2241 = arith.mulf %2236, %2240 : vector<9x128xf32>
    %2242 = arith.addf %2228, %2241 : vector<9x128xf32>
    %2243 = vector.extract_strided_slice %2220 {offsets = [3, 0], sizes = [9, 128], strides = [1, 1]} : vector<14x128xf32> to vector<9x128xf32>
    %2244 = vector.extract_strided_slice %2221 {offsets = [3, 0], sizes = [1, 128], strides = [1, 1]} : vector<6x128xf32> to vector<1x128xf32>
    %2245 = vector.shape_cast %2244 : vector<1x128xf32> to vector<128xf32>
    %2246 = vector.shape_cast %2245 : vector<128xf32> to vector<1x128xf32>
    %2247 = vector.broadcast %2246 : vector<1x128xf32> to vector<9x128xf32>
    %2248 = arith.mulf %2243, %2247 : vector<9x128xf32>
    %2249 = arith.addf %2235, %2248 : vector<9x128xf32>
    %2250 = vector.extract_strided_slice %2220 {offsets = [4, 0], sizes = [9, 128], strides = [1, 1]} : vector<14x128xf32> to vector<9x128xf32>
    %2251 = vector.extract_strided_slice %2221 {offsets = [4, 0], sizes = [1, 128], strides = [1, 1]} : vector<6x128xf32> to vector<1x128xf32>
    %2252 = vector.shape_cast %2251 : vector<1x128xf32> to vector<128xf32>
    %2253 = vector.shape_cast %2252 : vector<128xf32> to vector<1x128xf32>
    %2254 = vector.broadcast %2253 : vector<1x128xf32> to vector<9x128xf32>
    %2255 = arith.mulf %2250, %2254 : vector<9x128xf32>
    %2256 = arith.addf %2242, %2255 : vector<9x128xf32>
    %2257 = vector.extract_strided_slice %2220 {offsets = [5, 0], sizes = [9, 128], strides = [1, 1]} : vector<14x128xf32> to vector<9x128xf32>
    %2258 = vector.extract_strided_slice %2221 {offsets = [5, 0], sizes = [1, 128], strides = [1, 1]} : vector<6x128xf32> to vector<1x128xf32>
    %2259 = vector.shape_cast %2258 : vector<1x128xf32> to vector<128xf32>
    %2260 = vector.shape_cast %2259 : vector<128xf32> to vector<1x128xf32>
    %2261 = vector.broadcast %2260 : vector<1x128xf32> to vector<9x128xf32>
    %2262 = arith.mulf %2257, %2261 : vector<9x128xf32>
    %2263 = arith.addf %2249, %2262 : vector<9x128xf32>
    %c144_315 = arith.constant 144 : index
    %c0_316 = arith.constant 0 : index
    %2264 = vector.load %arg10[%c144_315, %c0_316] : memref<224x128xf32, #tpu.memory_space<vmem>>, vector<14x128xf32>
    %c16_317 = arith.constant 16 : index
    %c0_318 = arith.constant 0 : index
    %2265 = vector.load %arg11[%c16_317, %c0_318] : memref<96x128xf32, #tpu.memory_space<vmem>>, vector<6x128xf32>
    %2266 = vector.extract_strided_slice %2264 {offsets = [0, 0], sizes = [9, 128], strides = [1, 1]} : vector<14x128xf32> to vector<9x128xf32>
    %2267 = vector.extract_strided_slice %2265 {offsets = [0, 0], sizes = [1, 128], strides = [1, 1]} : vector<6x128xf32> to vector<1x128xf32>
    %2268 = vector.shape_cast %2267 : vector<1x128xf32> to vector<128xf32>
    %2269 = vector.shape_cast %2268 : vector<128xf32> to vector<1x128xf32>
    %2270 = vector.broadcast %2269 : vector<1x128xf32> to vector<9x128xf32>
    %2271 = arith.mulf %2266, %2270 : vector<9x128xf32>
    %2272 = arith.addf %2256, %2271 : vector<9x128xf32>
    %2273 = vector.extract_strided_slice %2264 {offsets = [1, 0], sizes = [9, 128], strides = [1, 1]} : vector<14x128xf32> to vector<9x128xf32>
    %2274 = vector.extract_strided_slice %2265 {offsets = [1, 0], sizes = [1, 128], strides = [1, 1]} : vector<6x128xf32> to vector<1x128xf32>
    %2275 = vector.shape_cast %2274 : vector<1x128xf32> to vector<128xf32>
    %2276 = vector.shape_cast %2275 : vector<128xf32> to vector<1x128xf32>
    %2277 = vector.broadcast %2276 : vector<1x128xf32> to vector<9x128xf32>
    %2278 = arith.mulf %2273, %2277 : vector<9x128xf32>
    %2279 = arith.addf %2263, %2278 : vector<9x128xf32>
    %2280 = vector.extract_strided_slice %2264 {offsets = [2, 0], sizes = [9, 128], strides = [1, 1]} : vector<14x128xf32> to vector<9x128xf32>
    %2281 = vector.extract_strided_slice %2265 {offsets = [2, 0], sizes = [1, 128], strides = [1, 1]} : vector<6x128xf32> to vector<1x128xf32>
    %2282 = vector.shape_cast %2281 : vector<1x128xf32> to vector<128xf32>
    %2283 = vector.shape_cast %2282 : vector<128xf32> to vector<1x128xf32>
    %2284 = vector.broadcast %2283 : vector<1x128xf32> to vector<9x128xf32>
    %2285 = arith.mulf %2280, %2284 : vector<9x128xf32>
    %2286 = arith.addf %2272, %2285 : vector<9x128xf32>
    %2287 = vector.extract_strided_slice %2264 {offsets = [3, 0], sizes = [9, 128], strides = [1, 1]} : vector<14x128xf32> to vector<9x128xf32>
    %2288 = vector.extract_strided_slice %2265 {offsets = [3, 0], sizes = [1, 128], strides = [1, 1]} : vector<6x128xf32> to vector<1x128xf32>
    %2289 = vector.shape_cast %2288 : vector<1x128xf32> to vector<128xf32>
    %2290 = vector.shape_cast %2289 : vector<128xf32> to vector<1x128xf32>
    %2291 = vector.broadcast %2290 : vector<1x128xf32> to vector<9x128xf32>
    %2292 = arith.mulf %2287, %2291 : vector<9x128xf32>
    %2293 = arith.addf %2279, %2292 : vector<9x128xf32>
    %2294 = vector.extract_strided_slice %2264 {offsets = [4, 0], sizes = [9, 128], strides = [1, 1]} : vector<14x128xf32> to vector<9x128xf32>
    %2295 = vector.extract_strided_slice %2265 {offsets = [4, 0], sizes = [1, 128], strides = [1, 1]} : vector<6x128xf32> to vector<1x128xf32>
    %2296 = vector.shape_cast %2295 : vector<1x128xf32> to vector<128xf32>
    %2297 = vector.shape_cast %2296 : vector<128xf32> to vector<1x128xf32>
    %2298 = vector.broadcast %2297 : vector<1x128xf32> to vector<9x128xf32>
    %2299 = arith.mulf %2294, %2298 : vector<9x128xf32>
    %2300 = arith.addf %2286, %2299 : vector<9x128xf32>
    %2301 = vector.extract_strided_slice %2264 {offsets = [5, 0], sizes = [9, 128], strides = [1, 1]} : vector<14x128xf32> to vector<9x128xf32>
    %2302 = vector.extract_strided_slice %2265 {offsets = [5, 0], sizes = [1, 128], strides = [1, 1]} : vector<6x128xf32> to vector<1x128xf32>
    %2303 = vector.shape_cast %2302 : vector<1x128xf32> to vector<128xf32>
    %2304 = vector.shape_cast %2303 : vector<128xf32> to vector<1x128xf32>
    %2305 = vector.broadcast %2304 : vector<1x128xf32> to vector<9x128xf32>
    %2306 = arith.mulf %2301, %2305 : vector<9x128xf32>
    %2307 = arith.addf %2293, %2306 : vector<9x128xf32>
    %c160_319 = arith.constant 160 : index
    %c0_320 = arith.constant 0 : index
    %2308 = vector.load %arg10[%c160_319, %c0_320] : memref<224x128xf32, #tpu.memory_space<vmem>>, vector<14x128xf32>
    %c32_321 = arith.constant 32 : index
    %c0_322 = arith.constant 0 : index
    %2309 = vector.load %arg11[%c32_321, %c0_322] : memref<96x128xf32, #tpu.memory_space<vmem>>, vector<6x128xf32>
    %2310 = vector.extract_strided_slice %2308 {offsets = [0, 0], sizes = [9, 128], strides = [1, 1]} : vector<14x128xf32> to vector<9x128xf32>
    %2311 = vector.extract_strided_slice %2309 {offsets = [0, 0], sizes = [1, 128], strides = [1, 1]} : vector<6x128xf32> to vector<1x128xf32>
    %2312 = vector.shape_cast %2311 : vector<1x128xf32> to vector<128xf32>
    %2313 = vector.shape_cast %2312 : vector<128xf32> to vector<1x128xf32>
    %2314 = vector.broadcast %2313 : vector<1x128xf32> to vector<9x128xf32>
    %2315 = arith.mulf %2310, %2314 : vector<9x128xf32>
    %2316 = arith.addf %2300, %2315 : vector<9x128xf32>
    %2317 = vector.extract_strided_slice %2308 {offsets = [1, 0], sizes = [9, 128], strides = [1, 1]} : vector<14x128xf32> to vector<9x128xf32>
    %2318 = vector.extract_strided_slice %2309 {offsets = [1, 0], sizes = [1, 128], strides = [1, 1]} : vector<6x128xf32> to vector<1x128xf32>
    %2319 = vector.shape_cast %2318 : vector<1x128xf32> to vector<128xf32>
    %2320 = vector.shape_cast %2319 : vector<128xf32> to vector<1x128xf32>
    %2321 = vector.broadcast %2320 : vector<1x128xf32> to vector<9x128xf32>
    %2322 = arith.mulf %2317, %2321 : vector<9x128xf32>
    %2323 = arith.addf %2307, %2322 : vector<9x128xf32>
    %2324 = vector.extract_strided_slice %2308 {offsets = [2, 0], sizes = [9, 128], strides = [1, 1]} : vector<14x128xf32> to vector<9x128xf32>
    %2325 = vector.extract_strided_slice %2309 {offsets = [2, 0], sizes = [1, 128], strides = [1, 1]} : vector<6x128xf32> to vector<1x128xf32>
    %2326 = vector.shape_cast %2325 : vector<1x128xf32> to vector<128xf32>
    %2327 = vector.shape_cast %2326 : vector<128xf32> to vector<1x128xf32>
    %2328 = vector.broadcast %2327 : vector<1x128xf32> to vector<9x128xf32>
    %2329 = arith.mulf %2324, %2328 : vector<9x128xf32>
    %2330 = arith.addf %2316, %2329 : vector<9x128xf32>
    %2331 = vector.extract_strided_slice %2308 {offsets = [3, 0], sizes = [9, 128], strides = [1, 1]} : vector<14x128xf32> to vector<9x128xf32>
    %2332 = vector.extract_strided_slice %2309 {offsets = [3, 0], sizes = [1, 128], strides = [1, 1]} : vector<6x128xf32> to vector<1x128xf32>
    %2333 = vector.shape_cast %2332 : vector<1x128xf32> to vector<128xf32>
    %2334 = vector.shape_cast %2333 : vector<128xf32> to vector<1x128xf32>
    %2335 = vector.broadcast %2334 : vector<1x128xf32> to vector<9x128xf32>
    %2336 = arith.mulf %2331, %2335 : vector<9x128xf32>
    %2337 = arith.addf %2323, %2336 : vector<9x128xf32>
    %2338 = vector.extract_strided_slice %2308 {offsets = [4, 0], sizes = [9, 128], strides = [1, 1]} : vector<14x128xf32> to vector<9x128xf32>
    %2339 = vector.extract_strided_slice %2309 {offsets = [4, 0], sizes = [1, 128], strides = [1, 1]} : vector<6x128xf32> to vector<1x128xf32>
    %2340 = vector.shape_cast %2339 : vector<1x128xf32> to vector<128xf32>
    %2341 = vector.shape_cast %2340 : vector<128xf32> to vector<1x128xf32>
    %2342 = vector.broadcast %2341 : vector<1x128xf32> to vector<9x128xf32>
    %2343 = arith.mulf %2338, %2342 : vector<9x128xf32>
    %2344 = arith.addf %2330, %2343 : vector<9x128xf32>
    %2345 = vector.extract_strided_slice %2308 {offsets = [5, 0], sizes = [9, 128], strides = [1, 1]} : vector<14x128xf32> to vector<9x128xf32>
    %2346 = vector.extract_strided_slice %2309 {offsets = [5, 0], sizes = [1, 128], strides = [1, 1]} : vector<6x128xf32> to vector<1x128xf32>
    %2347 = vector.shape_cast %2346 : vector<1x128xf32> to vector<128xf32>
    %2348 = vector.shape_cast %2347 : vector<128xf32> to vector<1x128xf32>
    %2349 = vector.broadcast %2348 : vector<1x128xf32> to vector<9x128xf32>
    %2350 = arith.mulf %2345, %2349 : vector<9x128xf32>
    %2351 = arith.addf %2337, %2350 : vector<9x128xf32>
    %c176_323 = arith.constant 176 : index
    %c0_324 = arith.constant 0 : index
    %2352 = vector.load %arg10[%c176_323, %c0_324] : memref<224x128xf32, #tpu.memory_space<vmem>>, vector<14x128xf32>
    %c48_325 = arith.constant 48 : index
    %c0_326 = arith.constant 0 : index
    %2353 = vector.load %arg11[%c48_325, %c0_326] : memref<96x128xf32, #tpu.memory_space<vmem>>, vector<6x128xf32>
    %2354 = vector.extract_strided_slice %2352 {offsets = [0, 0], sizes = [9, 128], strides = [1, 1]} : vector<14x128xf32> to vector<9x128xf32>
    %2355 = vector.extract_strided_slice %2353 {offsets = [0, 0], sizes = [1, 128], strides = [1, 1]} : vector<6x128xf32> to vector<1x128xf32>
    %2356 = vector.shape_cast %2355 : vector<1x128xf32> to vector<128xf32>
    %2357 = vector.shape_cast %2356 : vector<128xf32> to vector<1x128xf32>
    %2358 = vector.broadcast %2357 : vector<1x128xf32> to vector<9x128xf32>
    %2359 = arith.mulf %2354, %2358 : vector<9x128xf32>
    %2360 = arith.addf %2344, %2359 : vector<9x128xf32>
    %2361 = vector.extract_strided_slice %2352 {offsets = [1, 0], sizes = [9, 128], strides = [1, 1]} : vector<14x128xf32> to vector<9x128xf32>
    %2362 = vector.extract_strided_slice %2353 {offsets = [1, 0], sizes = [1, 128], strides = [1, 1]} : vector<6x128xf32> to vector<1x128xf32>
    %2363 = vector.shape_cast %2362 : vector<1x128xf32> to vector<128xf32>
    %2364 = vector.shape_cast %2363 : vector<128xf32> to vector<1x128xf32>
    %2365 = vector.broadcast %2364 : vector<1x128xf32> to vector<9x128xf32>
    %2366 = arith.mulf %2361, %2365 : vector<9x128xf32>
    %2367 = arith.addf %2351, %2366 : vector<9x128xf32>
    %2368 = vector.extract_strided_slice %2352 {offsets = [2, 0], sizes = [9, 128], strides = [1, 1]} : vector<14x128xf32> to vector<9x128xf32>
    %2369 = vector.extract_strided_slice %2353 {offsets = [2, 0], sizes = [1, 128], strides = [1, 1]} : vector<6x128xf32> to vector<1x128xf32>
    %2370 = vector.shape_cast %2369 : vector<1x128xf32> to vector<128xf32>
    %2371 = vector.shape_cast %2370 : vector<128xf32> to vector<1x128xf32>
    %2372 = vector.broadcast %2371 : vector<1x128xf32> to vector<9x128xf32>
    %2373 = arith.mulf %2368, %2372 : vector<9x128xf32>
    %2374 = arith.addf %2360, %2373 : vector<9x128xf32>
    %2375 = vector.extract_strided_slice %2352 {offsets = [3, 0], sizes = [9, 128], strides = [1, 1]} : vector<14x128xf32> to vector<9x128xf32>
    %2376 = vector.extract_strided_slice %2353 {offsets = [3, 0], sizes = [1, 128], strides = [1, 1]} : vector<6x128xf32> to vector<1x128xf32>
    %2377 = vector.shape_cast %2376 : vector<1x128xf32> to vector<128xf32>
    %2378 = vector.shape_cast %2377 : vector<128xf32> to vector<1x128xf32>
    %2379 = vector.broadcast %2378 : vector<1x128xf32> to vector<9x128xf32>
    %2380 = arith.mulf %2375, %2379 : vector<9x128xf32>
    %2381 = arith.addf %2367, %2380 : vector<9x128xf32>
    %2382 = vector.extract_strided_slice %2352 {offsets = [4, 0], sizes = [9, 128], strides = [1, 1]} : vector<14x128xf32> to vector<9x128xf32>
    %2383 = vector.extract_strided_slice %2353 {offsets = [4, 0], sizes = [1, 128], strides = [1, 1]} : vector<6x128xf32> to vector<1x128xf32>
    %2384 = vector.shape_cast %2383 : vector<1x128xf32> to vector<128xf32>
    %2385 = vector.shape_cast %2384 : vector<128xf32> to vector<1x128xf32>
    %2386 = vector.broadcast %2385 : vector<1x128xf32> to vector<9x128xf32>
    %2387 = arith.mulf %2382, %2386 : vector<9x128xf32>
    %2388 = arith.addf %2374, %2387 : vector<9x128xf32>
    %2389 = vector.extract_strided_slice %2352 {offsets = [5, 0], sizes = [9, 128], strides = [1, 1]} : vector<14x128xf32> to vector<9x128xf32>
    %2390 = vector.extract_strided_slice %2353 {offsets = [5, 0], sizes = [1, 128], strides = [1, 1]} : vector<6x128xf32> to vector<1x128xf32>
    %2391 = vector.shape_cast %2390 : vector<1x128xf32> to vector<128xf32>
    %2392 = vector.shape_cast %2391 : vector<128xf32> to vector<1x128xf32>
    %2393 = vector.broadcast %2392 : vector<1x128xf32> to vector<9x128xf32>
    %2394 = arith.mulf %2389, %2393 : vector<9x128xf32>
    %2395 = arith.addf %2381, %2394 : vector<9x128xf32>
    %c192_327 = arith.constant 192 : index
    %c0_328 = arith.constant 0 : index
    %2396 = vector.load %arg10[%c192_327, %c0_328] : memref<224x128xf32, #tpu.memory_space<vmem>>, vector<14x128xf32>
    %c64_329 = arith.constant 64 : index
    %c0_330 = arith.constant 0 : index
    %2397 = vector.load %arg11[%c64_329, %c0_330] : memref<96x128xf32, #tpu.memory_space<vmem>>, vector<6x128xf32>
    %2398 = vector.extract_strided_slice %2396 {offsets = [0, 0], sizes = [9, 128], strides = [1, 1]} : vector<14x128xf32> to vector<9x128xf32>
    %2399 = vector.extract_strided_slice %2397 {offsets = [0, 0], sizes = [1, 128], strides = [1, 1]} : vector<6x128xf32> to vector<1x128xf32>
    %2400 = vector.shape_cast %2399 : vector<1x128xf32> to vector<128xf32>
    %2401 = vector.shape_cast %2400 : vector<128xf32> to vector<1x128xf32>
    %2402 = vector.broadcast %2401 : vector<1x128xf32> to vector<9x128xf32>
    %2403 = arith.mulf %2398, %2402 : vector<9x128xf32>
    %2404 = arith.addf %2388, %2403 : vector<9x128xf32>
    %2405 = vector.extract_strided_slice %2396 {offsets = [1, 0], sizes = [9, 128], strides = [1, 1]} : vector<14x128xf32> to vector<9x128xf32>
    %2406 = vector.extract_strided_slice %2397 {offsets = [1, 0], sizes = [1, 128], strides = [1, 1]} : vector<6x128xf32> to vector<1x128xf32>
    %2407 = vector.shape_cast %2406 : vector<1x128xf32> to vector<128xf32>
    %2408 = vector.shape_cast %2407 : vector<128xf32> to vector<1x128xf32>
    %2409 = vector.broadcast %2408 : vector<1x128xf32> to vector<9x128xf32>
    %2410 = arith.mulf %2405, %2409 : vector<9x128xf32>
    %2411 = arith.addf %2395, %2410 : vector<9x128xf32>
    %2412 = vector.extract_strided_slice %2396 {offsets = [2, 0], sizes = [9, 128], strides = [1, 1]} : vector<14x128xf32> to vector<9x128xf32>
    %2413 = vector.extract_strided_slice %2397 {offsets = [2, 0], sizes = [1, 128], strides = [1, 1]} : vector<6x128xf32> to vector<1x128xf32>
    %2414 = vector.shape_cast %2413 : vector<1x128xf32> to vector<128xf32>
    %2415 = vector.shape_cast %2414 : vector<128xf32> to vector<1x128xf32>
    %2416 = vector.broadcast %2415 : vector<1x128xf32> to vector<9x128xf32>
    %2417 = arith.mulf %2412, %2416 : vector<9x128xf32>
    %2418 = arith.addf %2404, %2417 : vector<9x128xf32>
    %2419 = vector.extract_strided_slice %2396 {offsets = [3, 0], sizes = [9, 128], strides = [1, 1]} : vector<14x128xf32> to vector<9x128xf32>
    %2420 = vector.extract_strided_slice %2397 {offsets = [3, 0], sizes = [1, 128], strides = [1, 1]} : vector<6x128xf32> to vector<1x128xf32>
    %2421 = vector.shape_cast %2420 : vector<1x128xf32> to vector<128xf32>
    %2422 = vector.shape_cast %2421 : vector<128xf32> to vector<1x128xf32>
    %2423 = vector.broadcast %2422 : vector<1x128xf32> to vector<9x128xf32>
    %2424 = arith.mulf %2419, %2423 : vector<9x128xf32>
    %2425 = arith.addf %2411, %2424 : vector<9x128xf32>
    %2426 = vector.extract_strided_slice %2396 {offsets = [4, 0], sizes = [9, 128], strides = [1, 1]} : vector<14x128xf32> to vector<9x128xf32>
    %2427 = vector.extract_strided_slice %2397 {offsets = [4, 0], sizes = [1, 128], strides = [1, 1]} : vector<6x128xf32> to vector<1x128xf32>
    %2428 = vector.shape_cast %2427 : vector<1x128xf32> to vector<128xf32>
    %2429 = vector.shape_cast %2428 : vector<128xf32> to vector<1x128xf32>
    %2430 = vector.broadcast %2429 : vector<1x128xf32> to vector<9x128xf32>
    %2431 = arith.mulf %2426, %2430 : vector<9x128xf32>
    %2432 = arith.addf %2418, %2431 : vector<9x128xf32>
    %2433 = vector.extract_strided_slice %2396 {offsets = [5, 0], sizes = [9, 128], strides = [1, 1]} : vector<14x128xf32> to vector<9x128xf32>
    %2434 = vector.extract_strided_slice %2397 {offsets = [5, 0], sizes = [1, 128], strides = [1, 1]} : vector<6x128xf32> to vector<1x128xf32>
    %2435 = vector.shape_cast %2434 : vector<1x128xf32> to vector<128xf32>
    %2436 = vector.shape_cast %2435 : vector<128xf32> to vector<1x128xf32>
    %2437 = vector.broadcast %2436 : vector<1x128xf32> to vector<9x128xf32>
    %2438 = arith.mulf %2433, %2437 : vector<9x128xf32>
    %2439 = arith.addf %2425, %2438 : vector<9x128xf32>
    %c208 = arith.constant 208 : index
    %c0_331 = arith.constant 0 : index
    %2440 = vector.load %arg10[%c208, %c0_331] : memref<224x128xf32, #tpu.memory_space<vmem>>, vector<14x128xf32>
    %c80_332 = arith.constant 80 : index
    %c0_333 = arith.constant 0 : index
    %2441 = vector.load %arg11[%c80_332, %c0_333] : memref<96x128xf32, #tpu.memory_space<vmem>>, vector<6x128xf32>
    %2442 = vector.extract_strided_slice %2440 {offsets = [0, 0], sizes = [9, 128], strides = [1, 1]} : vector<14x128xf32> to vector<9x128xf32>
    %2443 = vector.extract_strided_slice %2441 {offsets = [0, 0], sizes = [1, 128], strides = [1, 1]} : vector<6x128xf32> to vector<1x128xf32>
    %2444 = vector.shape_cast %2443 : vector<1x128xf32> to vector<128xf32>
    %2445 = vector.shape_cast %2444 : vector<128xf32> to vector<1x128xf32>
    %2446 = vector.broadcast %2445 : vector<1x128xf32> to vector<9x128xf32>
    %2447 = arith.mulf %2442, %2446 : vector<9x128xf32>
    %2448 = arith.addf %2432, %2447 : vector<9x128xf32>
    %2449 = vector.extract_strided_slice %2440 {offsets = [1, 0], sizes = [9, 128], strides = [1, 1]} : vector<14x128xf32> to vector<9x128xf32>
    %2450 = vector.extract_strided_slice %2441 {offsets = [1, 0], sizes = [1, 128], strides = [1, 1]} : vector<6x128xf32> to vector<1x128xf32>
    %2451 = vector.shape_cast %2450 : vector<1x128xf32> to vector<128xf32>
    %2452 = vector.shape_cast %2451 : vector<128xf32> to vector<1x128xf32>
    %2453 = vector.broadcast %2452 : vector<1x128xf32> to vector<9x128xf32>
    %2454 = arith.mulf %2449, %2453 : vector<9x128xf32>
    %2455 = arith.addf %2439, %2454 : vector<9x128xf32>
    %2456 = vector.extract_strided_slice %2440 {offsets = [2, 0], sizes = [9, 128], strides = [1, 1]} : vector<14x128xf32> to vector<9x128xf32>
    %2457 = vector.extract_strided_slice %2441 {offsets = [2, 0], sizes = [1, 128], strides = [1, 1]} : vector<6x128xf32> to vector<1x128xf32>
    %2458 = vector.shape_cast %2457 : vector<1x128xf32> to vector<128xf32>
    %2459 = vector.shape_cast %2458 : vector<128xf32> to vector<1x128xf32>
    %2460 = vector.broadcast %2459 : vector<1x128xf32> to vector<9x128xf32>
    %2461 = arith.mulf %2456, %2460 : vector<9x128xf32>
    %2462 = arith.addf %2448, %2461 : vector<9x128xf32>
    %2463 = vector.extract_strided_slice %2440 {offsets = [3, 0], sizes = [9, 128], strides = [1, 1]} : vector<14x128xf32> to vector<9x128xf32>
    %2464 = vector.extract_strided_slice %2441 {offsets = [3, 0], sizes = [1, 128], strides = [1, 1]} : vector<6x128xf32> to vector<1x128xf32>
    %2465 = vector.shape_cast %2464 : vector<1x128xf32> to vector<128xf32>
    %2466 = vector.shape_cast %2465 : vector<128xf32> to vector<1x128xf32>
    %2467 = vector.broadcast %2466 : vector<1x128xf32> to vector<9x128xf32>
    %2468 = arith.mulf %2463, %2467 : vector<9x128xf32>
    %2469 = arith.addf %2455, %2468 : vector<9x128xf32>
    %2470 = vector.extract_strided_slice %2440 {offsets = [4, 0], sizes = [9, 128], strides = [1, 1]} : vector<14x128xf32> to vector<9x128xf32>
    %2471 = vector.extract_strided_slice %2441 {offsets = [4, 0], sizes = [1, 128], strides = [1, 1]} : vector<6x128xf32> to vector<1x128xf32>
    %2472 = vector.shape_cast %2471 : vector<1x128xf32> to vector<128xf32>
    %2473 = vector.shape_cast %2472 : vector<128xf32> to vector<1x128xf32>
    %2474 = vector.broadcast %2473 : vector<1x128xf32> to vector<9x128xf32>
    %2475 = arith.mulf %2470, %2474 : vector<9x128xf32>
    %2476 = arith.addf %2462, %2475 : vector<9x128xf32>
    %2477 = vector.extract_strided_slice %2440 {offsets = [5, 0], sizes = [9, 128], strides = [1, 1]} : vector<14x128xf32> to vector<9x128xf32>
    %2478 = vector.extract_strided_slice %2441 {offsets = [5, 0], sizes = [1, 128], strides = [1, 1]} : vector<6x128xf32> to vector<1x128xf32>
    %2479 = vector.shape_cast %2478 : vector<1x128xf32> to vector<128xf32>
    %2480 = vector.shape_cast %2479 : vector<128xf32> to vector<1x128xf32>
    %2481 = vector.broadcast %2480 : vector<1x128xf32> to vector<9x128xf32>
    %2482 = arith.mulf %2477, %2481 : vector<9x128xf32>
    %2483 = arith.addf %2469, %2482 : vector<9x128xf32>
    %2484 = arith.addf %2476, %2483 : vector<9x128xf32>
    %c0_334 = arith.constant 0 : index
    %c8 = arith.constant 8 : index
    %c0_335 = arith.constant 0 : index
    %c0_336 = arith.constant 0 : index
    %2485 = vector.load %arg9[%c0_334, %c8, %c0_335, %c0_336] : memref<1x9x9x128xf32, #tpu.memory_space<vmem>>, vector<1x1x9x128xf32>
    %2486 = vector.shape_cast %2485 : vector<1x1x9x128xf32> to vector<9x128xf32>
    %2487 = vector.shape_cast %2484 : vector<9x128xf32> to vector<1x1x9x128xf32>
    tpu.vector_store %arg9[%c0_334, %c8, %c0_335, %c0_336], %2487 {strides = array<i32>} : memref<1x9x9x128xf32, #tpu.memory_space<vmem>>, vector<1x1x9x128xf32>,
    return
  }
  func.func @transform_0(%arg0: i32) -> (i32, i32, i32, i32) {
    %c0_i32 = arith.constant 0 : i32
    %c0_i32_0 = arith.constant 0 : i32
    %c0_i32_1 = arith.constant 0 : i32
    %c0_i32_2 = arith.constant 0 : i32
    return %arg0, %c0_i32, %c0_i32_0, %c0_i32_1 : i32, i32, i32, i32
  }
  func.func @transform_1(%arg0: i32) -> (i32, i32, i32, i32) {
    %c0_i32 = arith.constant 0 : i32
    %c0_i32_0 = arith.constant 0 : i32
    %c0_i32_1 = arith.constant 0 : i32
    %c0_i32_2 = arith.constant 0 : i32
    return %arg0, %c0_i32, %c0_i32_0, %c0_i32_1 : i32, i32, i32, i32
  }
  func.func @transform_2(%arg0: i32) -> (i32, i32) {
    %c0_i32 = arith.constant 0 : i32
    %c0_i32_0 = arith.constant 0 : i32
    %c0_i32_1 = arith.constant 0 : i32
    return %c0_i32, %c0_i32_0 : i32, i32
  }
  func.func @transform_3(%arg0: i32) -> (i32, i32) {
    %c0_i32 = arith.constant 0 : i32
    %c0_i32_0 = arith.constant 0 : i32
    %c0_i32_1 = arith.constant 0 : i32
    return %c0_i32, %c0_i32_0 : i32, i32
  }
  func.func @transform_4(%arg0: i32) -> (i32, i32) {
    %c0_i32 = arith.constant 0 : i32
    %c0_i32_0 = arith.constant 0 : i32
    %c0_i32_1 = arith.constant 0 : i32
    return %c0_i32, %c0_i32_0 : i32, i32
  }
  func.func @transform_5(%arg0: i32) -> (i32, i32) {
    %c0_i32 = arith.constant 0 : i32
    %c0_i32_0 = arith.constant 0 : i32
    %c0_i32_1 = arith.constant 0 : i32
    return %c0_i32, %c0_i32_0 : i32, i32
  }
  func.func @transform_6(%arg0: i32) -> (i32, i32) {
    %c0_i32 = arith.constant 0 : i32
    %c0_i32_0 = arith.constant 0 : i32
    %c0_i32_1 = arith.constant 0 : i32
    return %c0_i32, %c0_i32_0 : i32, i32
  }
  func.func @transform_7(%arg0: i32) -> (i32, i32) {
    %c0_i32 = arith.constant 0 : i32
    %c0_i32_0 = arith.constant 0 : i32
    %c0_i32_1 = arith.constant 0 : i32
    return %c0_i32, %c0_i32_0 : i32, i32
  }
  func.func @transform_8(%arg0: i32) -> (i32, i32, i32, i32) {
    %c0_i32 = arith.constant 0 : i32
    %c0_i32_0 = arith.constant 0 : i32
    %c0_i32_1 = arith.constant 0 : i32
    %c0_i32_2 = arith.constant 0 : i32
    return %arg0, %c0_i32, %c0_i32_0, %c0_i32_1 : i32, i32, i32, i32
  }
}

</mosaic_0001>

<llo_original>
// kernel: siamfc_forward.1
$region0: #{siamfc_forward.1}
  #allocation0 [shape = 'u32[]', space=smem, size = 0x4, offset = 0x4, fixed_abs, tag = 'smem constant byte address 0x4 - core index']
  #allocation1 [shape = 'u32[144,128]{1,0:T(1,128)}', space=vmem, size = 0x12000, scoped, tag = 'internal scratch']
  #allocation2 [shape = 'f32[224,128]{1,0:T(8,128)}', space=vmem, size = 0x1c000, scoped, tag = 'scratch operand']
  #allocation3 [shape = 'f32[96,128]{1,0:T(8,128)}', space=vmem, size = 0xc000, scoped, tag = 'scratch operand']
  %s0 = inlined_call_operand.vmem [shape: bf16[2,16,18,4], index: 0, kind: input, shape index: {}]
  %s1 = inlined_call_operand.vmem [shape: bf16[2,8,18,4], index: 1, kind: input, shape index: {}]
  %s2 = inlined_call_operand.vmem [shape: bf16[36,128], index: 2, kind: input, shape index: {}]
  %s3 = inlined_call_operand.vmem [shape: bf16[36,128], index: 3, kind: input, shape index: {}]
  %s4 = inlined_call_operand.vmem [shape: f32[1,128], index: 4, kind: input, shape index: {}]
  %s5 = inlined_call_operand.vmem [shape: f32[1,128], index: 5, kind: input, shape index: {}]
  %s6 = inlined_call_operand.vmem [shape: f32[1,128], index: 6, kind: input, shape index: {}]
  %s7 = inlined_call_operand.vmem [shape: f32[1,128], index: 7, kind: input, shape index: {}]
  %s8 = inlined_call_operand.vmem [shape: f32[2,9,9,128], index: 8, kind: output, shape index: {}]
  %s9 = sld [smem:[#allocation0]]
  $region65: #{siamfc_forward.1} parent=0
    _
  %s11 = ssub.s32 1, %s9
  %s12 = scalar_select 0, %s11, %s9
  loop: start=0, step=1, limit=4
  $region2: #{siamfc_forward.1} parent=0 // loop_pre_header
    _
  $region3: #{siamfc_forward.1} parent=0 // loop_header
    %s14 = sphi 0, %s18
    %p15 = scmp.ge.s32.totalorder %s14, 4
    %s24 = sphi 0, %s26
    %s27 = sphi 0, %s24
    %s28 = sphi 0, %s27
    %s44 = sphi 0, %s28
    %s50 = sphi 0, %s52
    %s53 = sphi 0, %s50
    %s54 = sphi 0, %s53
    %s70 = sphi 0, %s54
    %s74 = sphi 0, %s74
    %s76 = sphi 0, %s74
    %s77 = sphi 0, %s76
    %s91 = sphi 0, %s77
    %s95 = sphi 0, %s95
    %s97 = sphi 0, %s95
    %s98 = sphi 0, %s97
    %s112 = sphi 0, %s98
    %s116 = sphi 0, %s116
    %s118 = sphi 0, %s116
    %s119 = sphi 0, %s118
    %s133 = sphi 0, %s119
    %s137 = sphi 0, %s137
    %s139 = sphi 0, %s137
    %s140 = sphi 0, %s139
    %s154 = sphi 0, %s140
    %s158 = sphi 0, %s158
    %s160 = sphi 0, %s158
    %s161 = sphi 0, %s160
    %s175 = sphi 0, %s161
    %s179 = sphi 0, %s179
    %s181 = sphi 0, %s179
    %s182 = sphi 0, %s181
    %s196 = sphi 0, %s182
    %s202 = sphi 0, %s204
    %s205 = sphi 0, %s202
    %s206 = sphi 0, %s205
    %s222 = sphi 0, %s206
  $region4: #{siamfc_forward.1} parent=0 // loop_header_branch
    %17 = sbr.rel (%p15) target = $region8
  $region5: #{siamfc_forward.1} parent=0 // loop_body
    %s19 = ssub.s32 %s14, 1
    %s20 = ssub.s32 %s14, 2
    %s21 = sadd.s32 %s14, 1
    %s22 = ssub.s32 %s14, %s21
    %p23 = scmp.eq.s32.totalorder %s22, 0
    %s25 = sadd.s32 %s24, 1
    %s26 = scalar_select %p23, %s24, %s25
    %p29 = pneg %p23
    %p30 = scmp.eq.s32.totalorder %s14, 1
    %p31 = por %p29, %p30
    %p32 = scmp.ne.s32.totalorder %s24, %s27
    %p33 = scmp.eq.s32.totalorder %s14, 0
    %p34 = por %p32, %p33
    %p35 = scmp.ne.s32.totalorder %s24, %s27
    %p36 = scmp.eq.s32.totalorder %s19, 1
    %p37 = por %p35, %p36
    %p38 = scmp.ne.s32.totalorder %s27, %s28
    %p39 = scmp.eq.s32.totalorder %s19, 0
    %p40 = por %p38, %p39
    %p41 = scmp.ne.s32.totalorder %s27, %s28
    %p42 = scmp.eq.s32.totalorder %s20, 1
    %p43 = por %p41, %p42
    %p45 = scmp.ne.s32.totalorder %s28, %s44
    %p46 = scmp.eq.s32.totalorder %s20, 0
    %p47 = por %p45, %p46
    %s48 = ssub.s32 %s14, %s21
    %p49 = scmp.eq.s32.totalorder %s48, 0
    %s51 = sadd.s32 %s50, 1
    %s52 = scalar_select %p49, %s50, %s51
    %p55 = pneg %p49
    %p56 = scmp.eq.s32.totalorder %s14, 1
    %p57 = por %p55, %p56
    %p58 = scmp.ne.s32.totalorder %s50, %s53
    %p59 = scmp.eq.s32.totalorder %s14, 0
    %p60 = por %p58, %p59
    %p61 = scmp.ne.s32.totalorder %s50, %s53
    %p62 = scmp.eq.s32.totalorder %s19, 1
    %p63 = por %p61, %p62
    %p64 = scmp.ne.s32.totalorder %s53, %s54
    %p65 = scmp.eq.s32.totalorder %s19, 0
    %p66 = por %p64, %p65
    %p67 = scmp.ne.s32.totalorder %s53, %s54
    %p68 = scmp.eq.s32.totalorder %s20, 1
    %p69 = por %p67, %p68
    %p71 = scmp.ne.s32.totalorder %s54, %s70
    %p72 = scmp.eq.s32.totalorder %s20, 0
    %p73 = por %p71, %p72
    %s75 = sadd.s32 %s74, 1
    %p78 = scmp.eq.s32.totalorder %s14, 1
    %p79 = scmp.ne.s32.totalorder %s74, %s76
    %p80 = scmp.eq.s32.totalorder %s14, 0
    %p81 = por %p79, %p80
    %p82 = scmp.ne.s32.totalorder %s74, %s76
    %p83 = scmp.eq.s32.totalorder %s19, 1
    %p84 = por %p82, %p83
    %p85 = scmp.ne.s32.totalorder %s76, %s77
    %p86 = scmp.eq.s32.totalorder %s19, 0
    %p87 = por %p85, %p86
    %p88 = scmp.ne.s32.totalorder %s76, %s77
    %p89 = scmp.eq.s32.totalorder %s20, 1
    %p90 = por %p88, %p89
    %p92 = scmp.ne.s32.totalorder %s77, %s91
    %p93 = scmp.eq.s32.totalorder %s20, 0
    %p94 = por %p92, %p93
    %s96 = sadd.s32 %s95, 1
    %p99 = scmp.eq.s32.totalorder %s14, 1
    %p100 = scmp.ne.s32.totalorder %s95, %s97
    %p101 = scmp.eq.s32.totalorder %s14, 0
    %p102 = por %p100, %p101
    %p103 = scmp.ne.s32.totalorder %s95, %s97
    %p104 = scmp.eq.s32.totalorder %s19, 1
    %p105 = por %p103, %p104
    %p106 = scmp.ne.s32.totalorder %s97, %s98
    %p107 = scmp.eq.s32.totalorder %s19, 0
    %p108 = por %p106, %p107
    %p109 = scmp.ne.s32.totalorder %s97, %s98
    %p110 = scmp.eq.s32.totalorder %s20, 1
    %p111 = por %p109, %p110
    %p113 = scmp.ne.s32.totalorder %s98, %s112
    %p114 = scmp.eq.s32.totalorder %s20, 0
    %p115 = por %p113, %p114
    %s117 = sadd.s32 %s116, 1
    %p120 = scmp.eq.s32.totalorder %s14, 1
    %p121 = scmp.ne.s32.totalorder %s116, %s118
    %p122 = scmp.eq.s32.totalorder %s14, 0
    %p123 = por %p121, %p122
    %p124 = scmp.ne.s32.totalorder %s116, %s118
    %p125 = scmp.eq.s32.totalorder %s19, 1
    %p126 = por %p124, %p125
    %p127 = scmp.ne.s32.totalorder %s118, %s119
    %p128 = scmp.eq.s32.totalorder %s19, 0
    %p129 = por %p127, %p128
    %p130 = scmp.ne.s32.totalorder %s118, %s119
    %p131 = scmp.eq.s32.totalorder %s20, 1
    %p132 = por %p130, %p131
    %p134 = scmp.ne.s32.totalorder %s119, %s133
    %p135 = scmp.eq.s32.totalorder %s20, 0
    %p136 = por %p134, %p135
    %s138 = sadd.s32 %s137, 1
    %p141 = scmp.eq.s32.totalorder %s14, 1
    %p142 = scmp.ne.s32.totalorder %s137, %s139
    %p143 = scmp.eq.s32.totalorder %s14, 0
    %p144 = por %p142, %p143
    %p145 = scmp.ne.s32.totalorder %s137, %s139
    %p146 = scmp.eq.s32.totalorder %s19, 1
    %p147 = por %p145, %p146
    %p148 = scmp.ne.s32.totalorder %s139, %s140
    %p149 = scmp.eq.s32.totalorder %s19, 0
    %p150 = por %p148, %p149
    %p151 = scmp.ne.s32.totalorder %s139, %s140
    %p152 = scmp.eq.s32.totalorder %s20, 1
    %p153 = por %p151, %p152
    %p155 = scmp.ne.s32.totalorder %s140, %s154
    %p156 = scmp.eq.s32.totalorder %s20, 0
    %p157 = por %p155, %p156
    %s159 = sadd.s32 %s158, 1
    %p162 = scmp.eq.s32.totalorder %s14, 1
    %p163 = scmp.ne.s32.totalorder %s158, %s160
    %p164 = scmp.eq.s32.totalorder %s14, 0
    %p165 = por %p163, %p164
    %p166 = scmp.ne.s32.totalorder %s158, %s160
    %p167 = scmp.eq.s32.totalorder %s19, 1
    %p168 = por %p166, %p167
    %p169 = scmp.ne.s32.totalorder %s160, %s161
    %p170 = scmp.eq.s32.totalorder %s19, 0
    %p171 = por %p169, %p170
    %p172 = scmp.ne.s32.totalorder %s160, %s161
    %p173 = scmp.eq.s32.totalorder %s20, 1
    %p174 = por %p172, %p173
    %p176 = scmp.ne.s32.totalorder %s161, %s175
    %p177 = scmp.eq.s32.totalorder %s20, 0
    %p178 = por %p176, %p177
    %s180 = sadd.s32 %s179, 1
    %p183 = scmp.eq.s32.totalorder %s14, 1
    %p184 = scmp.ne.s32.totalorder %s179, %s181
    %p185 = scmp.eq.s32.totalorder %s14, 0
    %p186 = por %p184, %p185
    %p187 = scmp.ne.s32.totalorder %s179, %s181
    %p188 = scmp.eq.s32.totalorder %s19, 1
    %p189 = por %p187, %p188
    %p190 = scmp.ne.s32.totalorder %s181, %s182
    %p191 = scmp.eq.s32.totalorder %s19, 0
    %p192 = por %p190, %p191
    %p193 = scmp.ne.s32.totalorder %s181, %s182
    %p194 = scmp.eq.s32.totalorder %s20, 1
    %p195 = por %p193, %p194
    %p197 = scmp.ne.s32.totalorder %s182, %s196
    %p198 = scmp.eq.s32.totalorder %s20, 0
    %p199 = por %p197, %p198
    %s200 = ssub.s32 %s14, %s21
    %p201 = scmp.eq.s32.totalorder %s200, 0
    %s203 = sadd.s32 %s202, 1
    %s204 = scalar_select %p201, %s202, %s203
    %p207 = pneg %p201
    %p208 = scmp.eq.s32.totalorder %s14, 1
    %p209 = por %p207, %p208
    %p210 = scmp.ne.s32.totalorder %s202, %s205
    %p211 = scmp.eq.s32.totalorder %s14, 0
    %p212 = por %p210, %p211
    %p213 = scmp.ne.s32.totalorder %s202, %s205
    %p214 = scmp.eq.s32.totalorder %s19, 1
    %p215 = por %p213, %p214
    %p216 = scmp.ne.s32.totalorder %s205, %s206
    %p217 = scmp.eq.s32.totalorder %s19, 0
    %p218 = por %p216, %p217
    %p219 = scmp.ne.s32.totalorder %s205, %s206
    %p220 = scmp.eq.s32.totalorder %s20, 1
    %p221 = por %p219, %p220
    %p223 = scmp.ne.s32.totalorder %s206, %s222
    %p224 = scmp.eq.s32.totalorder %s20, 0
    %p225 = por %p223, %p224
    %p226 = scmp.le.s32.totalorder 1, %s14
    %p227 = scmp.lt.s32.totalorder %s14, 3
    %p228 = pnand %p226, %p227
    %p229 = pneg %p228
    // Predicated region
    $region9: #{siamfc_forward.1} parent=5 // pred_check
      _
    $region10: #{siamfc_forward.1} parent=5 // pred_check_branch
      %231 = sbr.rel (%p228) target = $region12
    $region11: #{siamfc_forward.1} parent=5 // pred_region
      %s232 = ssub.s32 %s14, 1
      // Predicated region
      $region13: #{siamfc_forward.1} parent=11 // pred_check
        %p233 = pneg %p87
      $region14: #{siamfc_forward.1} parent=11 // pred_check_branch
        %235 = sbr.rel (%p233) target = $region16
      $region15: #{siamfc_forward.1} parent=11 // pred_region
        _
      $region16: #{siamfc_forward.1} parent=11 // pred_fallthru
        _
      // Predicated region
      $region17: #{siamfc_forward.1} parent=11 // pred_check
        %p236 = pneg %p108
      $region18: #{siamfc_forward.1} parent=11 // pred_check_branch
        %238 = sbr.rel (%p236) target = $region20
      $region19: #{siamfc_forward.1} parent=11 // pred_region
        _
      $region20: #{siamfc_forward.1} parent=11 // pred_fallthru
        _
      // Predicated region
      $region21: #{siamfc_forward.1} parent=11 // pred_check
        %p239 = pneg %p129
      $region22: #{siamfc_forward.1} parent=11 // pred_check_branch
        %241 = sbr.rel (%p239) target = $region24
      $region23: #{siamfc_forward.1} parent=11 // pred_region
        _
      $region24: #{siamfc_forward.1} parent=11 // pred_fallthru
        _
      // Predicated region
      $region25: #{siamfc_forward.1} parent=11 // pred_check
        %p242 = pneg %p150
      $region26: #{siamfc_forward.1} parent=11 // pred_check_branch
        %244 = sbr.rel (%p242) target = $region28
      $region27: #{siamfc_forward.1} parent=11 // pred_region
        _
      $region28: #{siamfc_forward.1} parent=11 // pred_fallthru
        _
      // Predicated region
      $region29: #{siamfc_forward.1} parent=11 // pred_check
        %p245 = pneg %p171
      $region30: #{siamfc_forward.1} parent=11 // pred_check_branch
        %247 = sbr.rel (%p245) target = $region32
      $region31: #{siamfc_forward.1} parent=11 // pred_region
        _
      $region32: #{siamfc_forward.1} parent=11 // pred_fallthru
        _
      // Predicated region
      $region33: #{siamfc_forward.1} parent=11 // pred_check
        %p248 = pneg %p192
      $region34: #{siamfc_forward.1} parent=11 // pred_check_branch
        %250 = sbr.rel (%p248) target = $region36
      $region35: #{siamfc_forward.1} parent=11 // pred_region
        _
      $region36: #{siamfc_forward.1} parent=11 // pred_fallthru
        _
    $region12: #{siamfc_forward.1} parent=5 // pred_fallthru
      _
    %p251 = scmp.lt.s32.totalorder %s14, 2
    // Predicated region
    $region37: #{siamfc_forward.1} parent=5 // pred_check
      %p252 = pneg %p251
    $region38: #{siamfc_forward.1} parent=5 // pred_check_branch
      %254 = sbr.rel (%p252) target = $region40
    $region39: #{siamfc_forward.1} parent=5 // pred_region
      // Predicated region
      $region41: #{siamfc_forward.1} parent=39 // pred_check
        %p255 = pneg %p34
      $region42: #{siamfc_forward.1} parent=39 // pred_check_branch
        %257 = sbr.rel (%p255) target = $region44
      $region43: #{siamfc_forward.1} parent=39 // pred_region
        %p258 = scmp.lt.s32.totalorder %s14, 1
        %s259 = scalar_select %p258, %s14, 1
        %s260 = smul.addr %s259, 48
        %s261 = smul.addr %s260, 4
        %s262 = scalar_lea.vmem %s0, %s261
      $region44: #{siamfc_forward.1} parent=39 // pred_fallthru
        _
      // Predicated region
      $region45: #{siamfc_forward.1} parent=39 // pred_check
        %p263 = pneg %p60
      $region46: #{siamfc_forward.1} parent=39 // pred_check_branch
        %265 = sbr.rel (%p263) target = $region48
      $region47: #{siamfc_forward.1} parent=39 // pred_region
        %p266 = scmp.lt.s32.totalorder %s14, 1
        %s267 = scalar_select %p266, %s14, 1
        %s268 = smul.addr %s267, 24
        %s269 = smul.addr %s268, 4
        %s270 = scalar_lea.vmem %s1, %s269
      $region48: #{siamfc_forward.1} parent=39 // pred_fallthru
        _
    $region40: #{siamfc_forward.1} parent=5 // pred_fallthru
      _
    %p271 = scmp.le.s32.totalorder 1, %s14
    %p272 = scmp.lt.s32.totalorder %s14, 3
    %p273 = pnand %p271, %p272
    %p274 = pneg %p273
    // Predicated region
    $region49: #{siamfc_forward.1} parent=5 // pred_check
      _
    $region50: #{siamfc_forward.1} parent=5 // pred_check_branch
      %276 = sbr.rel (%p273) target = $region52
    $region51: #{siamfc_forward.1} parent=5 // pred_region
      %s277 = ssub.s32 %s14, 1
      %p278 = scmp.lt.s32.totalorder %s19, 1
      %s279 = scalar_select %p278, %s19, 1
      %s280 = smul.addr %s279, 48
      %s281 = smul.addr %s280, 4
      %s282 = scalar_lea.vmem %s0, %s281
      %p283 = pneg %p40
      %p284 = pneg %p37
      %p285 = scmp.lt.s32.totalorder %s19, 1
      %s286 = scalar_select %p285, %s19, 1
      %s287 = smul.addr %s286, 24
      %s288 = smul.addr %s287, 4
      %s289 = scalar_lea.vmem %s1, %s288
      %p290 = pneg %p66
      %p291 = pneg %p63
      %p292 = pneg %p87
      %p293 = pneg %p84
      %p294 = pneg %p108
      %p295 = pneg %p105
      %p296 = pneg %p129
      %p297 = pneg %p126
      %p298 = pneg %p150
      %p299 = pneg %p147
      %p300 = pneg %p171
      %p301 = pneg %p168
      %p302 = pneg %p192
      %p303 = pneg %p189
      %p304 = pneg %p218
      %p305 = pneg %p215
      %p306 = scmp.lt.s32.totalorder %s19, 1
      %s307 = scalar_select %p306, %s19, 1
      %s308 = smul.addr %s307, 18
      %s309 = smul.addr %s308, 8
      %s310 = scalar_lea.vmem %s8, %s309
      %p311 = scmp.lt.s32.totalorder %s19, 1
      %s312 = scalar_select %p311, %s19, 1
      %s313 = smul.addr %s312, 48
      %s314 = smul.addr %s313, 4
      %s315 = scalar_lea.vmem %s0, %s314
      %p316 = scmp.lt.s32.totalorder %s19, 1
      %s317 = scalar_select %p316, %s19, 1
      %s318 = smul.addr %s317, 24
      %s319 = smul.addr %s318, 4
      %s320 = scalar_lea.vmem %s1, %s319
      %p321 = scmp.lt.s32.totalorder %s19, 1
      %s322 = scalar_select %p321, %s19, 1
      %s323 = smul.addr %s322, 18
      %s324 = smul.addr %s323, 8
      %s325 = scalar_lea.vmem %s8, %s324
      %v327 = vld [vmem:[%s315] sm:$0xf]
      %v328 = vld [vmem:[%s315 + $0x4] sm:$0xf]
      %v329 = vld [vmem:[%s315 + $0xc] sm:$0xf]
      %v330 = vld [vmem:[%s315 + $0x10] sm:$0xf]
      %v331 = vld [vmem:[%s315 + $0x18] sm:$0xf]
      %v332 = vld [vmem:[%s315 + $0x1c] sm:$0xf]
      %v333 = vld [vmem:[%s315 + $0x24] sm:$0xf]
      %v334 = vld [vmem:[%s315 + $0x28] sm:$0xf]
      %v335 = vld [vmem:[%s315 + $0x30] sm:$0xf]
      %v336 = vld [vmem:[%s315 + $0x34] sm:$0xf]
      %v337 = vld [vmem:[%s315 + $0x3c] sm:$0xf]
      %v338 = vld [vmem:[%s315 + $0x40] sm:$0xf]
      %v339 = vld [vmem:[%s315 + $0x48] sm:$0xf]
      %v340 = vld [vmem:[%s315 + $0x4c] sm:$0xf]
      %v341 = vld [vmem:[%s315 + $0x54] sm:$0xf]
      %v342 = vld [vmem:[%s315 + $0x58] sm:$0xf]
      %v343 = vld [vmem:[%s315 + $0x60] sm:$0xf]
      %v344 = vld [vmem:[%s315 + $0x64] sm:$0xf]
      %v345 = vld [vmem:[%s315 + $0x6c] sm:$0xf]
      %v346 = vld [vmem:[%s315 + $0x70] sm:$0xf]
      %v347 = vld [vmem:[%s315 + $0x78] sm:$0xf]
      %v348 = vld [vmem:[%s315 + $0x7c] sm:$0xf]
      %v349 = vld [vmem:[%s315 + $0x84] sm:$0xf]
      %v350 = vld [vmem:[%s315 + $0x88] sm:$0xf]
      %v351 = vld [vmem:[%s315 + $0x90] sm:$0xf]
      %v352 = vld [vmem:[%s315 + $0x94] sm:$0xf]
      %v353 = vld [vmem:[%s315 + $0x9c] sm:$0xf]
      %v354 = vld [vmem:[%s315 + $0xa0] sm:$0xf]
      %v355 = vld [vmem:[%s315 + $0x8] sm:$0x1]
      %v356 = vld [vmem:[%s315 + $0x14] sm:$0x1]
      %v357 = vld [vmem:[%s315 + $0x20] sm:$0x1]
      %v358 = vld [vmem:[%s315 + $0x2c] sm:$0x1]
      %v359 = vld [vmem:[%s315 + $0x38] sm:$0x1]
      %v360 = vld [vmem:[%s315 + $0x44] sm:$0x1]
      %v361 = vld [vmem:[%s315 + $0x50] sm:$0x1]
      %v362 = vld [vmem:[%s315 + $0x5c] sm:$0x1]
      %v363 = vld [vmem:[%s315 + $0x68] sm:$0x1]
      %v364 = vld [vmem:[%s315 + $0x74] sm:$0x1]
      %v365 = vld [vmem:[%s315 + $0x80] sm:$0x1]
      %v366 = vld [vmem:[%s315 + $0x8c] sm:$0x1]
      %v367 = vld [vmem:[%s315 + $0x98] sm:$0x1]
      %v368 = vld [vmem:[%s315 + $0xa4] sm:$0x1]
      %v369 = vld [vmem:[%s315] sm:$0xe]
      %v370 = vld [vmem:[%s315 + $0xc] sm:$0xe]
      %v371 = vld [vmem:[%s315 + $0x18] sm:$0xe]
      %v372 = vld [vmem:[%s315 + $0x24] sm:$0xe]
      %v373 = vld [vmem:[%s315 + $0x30] sm:$0xe]
      %v374 = vld [vmem:[%s315 + $0x3c] sm:$0xe]
      %v375 = vld [vmem:[%s315 + $0x48] sm:$0xe]
      %v376 = vld [vmem:[%s315 + $0x54] sm:$0xe]
      %v377 = vld [vmem:[%s315 + $0x60] sm:$0xe]
      %v378 = vld [vmem:[%s315 + $0x6c] sm:$0xe]
      %v379 = vld [vmem:[%s315 + $0x78] sm:$0xe]
      %v380 = vld [vmem:[%s315 + $0x84] sm:$0xe]
      %v381 = vld [vmem:[%s315 + $0x90] sm:$0xe]
      %v382 = vld [vmem:[%s315 + $0x9c] sm:$0xe]
      %s383 = scalar_lea.vmem %s315, 12
      %v384 = vld [vmem:[%s383] sm:$0xf]
      %v385 = vld [vmem:[%s383 + $0x4] sm:$0xf]
      %v386 = vld [vmem:[%s383 + $0xc] sm:$0xf]
      %v387 = vld [vmem:[%s383 + $0x10] sm:$0xf]
      %v388 = vld [vmem:[%s383 + $0x18] sm:$0xf]
      %v389 = vld [vmem:[%s383 + $0x1c] sm:$0xf]
      %v390 = vld [vmem:[%s383 + $0x24] sm:$0xf]
      %v391 = vld [vmem:[%s383 + $0x28] sm:$0xf]
      %v392 = vld [vmem:[%s383 + $0x30] sm:$0xf]
      %v393 = vld [vmem:[%s383 + $0x34] sm:$0xf]
      %v394 = vld [vmem:[%s383 + $0x3c] sm:$0xf]
      %v395 = vld [vmem:[%s383 + $0x40] sm:$0xf]
      %v396 = vld [vmem:[%s383 + $0x48] sm:$0xf]
      %v397 = vld [vmem:[%s383 + $0x4c] sm:$0xf]
      %v398 = vld [vmem:[%s383 + $0x54] sm:$0xf]
      %v399 = vld [vmem:[%s383 + $0x58] sm:$0xf]
      %v400 = vld [vmem:[%s383 + $0x60] sm:$0xf]
      %v401 = vld [vmem:[%s383 + $0x64] sm:$0xf]
      %v402 = vld [vmem:[%s383 + $0x6c] sm:$0xf]
      %v403 = vld [vmem:[%s383 + $0x70] sm:$0xf]
      %v404 = vld [vmem:[%s383 + $0x78] sm:$0xf]
      %v405 = vld [vmem:[%s383 + $0x7c] sm:$0xf]
      %v406 = vld [vmem:[%s383 + $0x84] sm:$0xf]
      %v407 = vld [vmem:[%s383 + $0x88] sm:$0xf]
      %v408 = vld [vmem:[%s383 + $0x90] sm:$0xf]
      %v409 = vld [vmem:[%s383 + $0x94] sm:$0xf]
      %v410 = vld [vmem:[%s383 + $0x9c] sm:$0xf]
      %v411 = vld [vmem:[%s383 + $0xa0] sm:$0xf]
      %v412 = vld [vmem:[%s383 + $0x8] sm:$0x1]
      %v413 = vld [vmem:[%s383 + $0x14] sm:$0x1]
      %v414 = vld [vmem:[%s383 + $0x20] sm:$0x1]
      %v415 = vld [vmem:[%s383 + $0x2c] sm:$0x1]
      %v416 = vld [vmem:[%s383 + $0x38] sm:$0x1]
      %v417 = vld [vmem:[%s383 + $0x44] sm:$0x1]
      %v418 = vld [vmem:[%s383 + $0x50] sm:$0x1]
      %v419 = vld [vmem:[%s383 + $0x5c] sm:$0x1]
      %v420 = vld [vmem:[%s383 + $0x68] sm:$0x1]
      %v421 = vld [vmem:[%s383 + $0x74] sm:$0x1]
      %v422 = vld [vmem:[%s383 + $0x80] sm:$0x1]
      %v423 = vld [vmem:[%s383 + $0x8c] sm:$0x1]
      %v424 = vld [vmem:[%s383 + $0x98] sm:$0x1]
      %v425 = vld [vmem:[%s383 + $0xa4] sm:$0x1]
      %v426 = vld [vmem:[%s383] sm:$0xe]
      %v427 = vld [vmem:[%s383 + $0xc] sm:$0xe]
      %v428 = vld [vmem:[%s383 + $0x18] sm:$0xe]
      %v429 = vld [vmem:[%s383 + $0x24] sm:$0xe]
      %v430 = vld [vmem:[%s383 + $0x30] sm:$0xe]
      %v431 = vld [vmem:[%s383 + $0x3c] sm:$0xe]
      %v432 = vld [vmem:[%s383 + $0x48] sm:$0xe]
      %v433 = vld [vmem:[%s383 + $0x54] sm:$0xe]
      %v434 = vld [vmem:[%s383 + $0x60] sm:$0xe]
      %v435 = vld [vmem:[%s383 + $0x6c] sm:$0xe]
      %v436 = vld [vmem:[%s383 + $0x78] sm:$0xe]
      %v437 = vld [vmem:[%s383 + $0x84] sm:$0xe]
      %v438 = vld [vmem:[%s383 + $0x90] sm:$0xe]
      %v439 = vld [vmem:[%s383 + $0x9c] sm:$0xe]
      %s440 = scalar_lea.vmem %s315, 24
      %v441 = vld [vmem:[%s440] sm:$0xf]
      %v442 = vld [vmem:[%s440 + $0x4] sm:$0xf]
      %v443 = vld [vmem:[%s440 + $0xc] sm:$0xf]
      %v444 = vld [vmem:[%s440 + $0x10] sm:$0xf]
      %v445 = vld [vmem:[%s440 + $0x18] sm:$0xf]
      %v446 = vld [vmem:[%s440 + $0x1c] sm:$0xf]
      %v447 = vld [vmem:[%s440 + $0x24] sm:$0xf]
      %v448 = vld [vmem:[%s440 + $0x28] sm:$0xf]
      %v449 = vld [vmem:[%s440 + $0x30] sm:$0xf]
      %v450 = vld [vmem:[%s440 + $0x34] sm:$0xf]
      %v451 = vld [vmem:[%s440 + $0x3c] sm:$0xf]
      %v452 = vld [vmem:[%s440 + $0x40] sm:$0xf]
      %v453 = vld [vmem:[%s440 + $0x48] sm:$0xf]
      %v454 = vld [vmem:[%s440 + $0x4c] sm:$0xf]
      %v455 = vld [vmem:[%s440 + $0x54] sm:$0xf]
      %v456 = vld [vmem:[%s440 + $0x58] sm:$0xf]
      %v457 = vld [vmem:[%s440 + $0x60] sm:$0xf]
      %v458 = vld [vmem:[%s440 + $0x64] sm:$0xf]
      %v459 = vld [vmem:[%s440 + $0x6c] sm:$0xf]
      %v460 = vld [vmem:[%s440 + $0x70] sm:$0xf]
      %v461 = vld [vmem:[%s440 + $0x78] sm:$0xf]
      %v462 = vld [vmem:[%s440 + $0x7c] sm:$0xf]
      %v463 = vld [vmem:[%s440 + $0x84] sm:$0xf]
      %v464 = vld [vmem:[%s440 + $0x88] sm:$0xf]
      %v465 = vld [vmem:[%s440 + $0x90] sm:$0xf]
      %v466 = vld [vmem:[%s440 + $0x94] sm:$0xf]
      %v467 = vld [vmem:[%s440 + $0x9c] sm:$0xf]
      %v468 = vld [vmem:[%s440 + $0xa0] sm:$0xf]
      %v469 = vld [vmem:[%s440 + $0x8] sm:$0x1]
      %v470 = vld [vmem:[%s440 + $0x14] sm:$0x1]
      %v471 = vld [vmem:[%s440 + $0x20] sm:$0x1]
      %v472 = vld [vmem:[%s440 + $0x2c] sm:$0x1]
      %v473 = vld [vmem:[%s440 + $0x38] sm:$0x1]
      %v474 = vld [vmem:[%s440 + $0x44] sm:$0x1]
      %v475 = vld [vmem:[%s440 + $0x50] sm:$0x1]
      %v476 = vld [vmem:[%s440 + $0x5c] sm:$0x1]
      %v477 = vld [vmem:[%s440 + $0x68] sm:$0x1]
      %v478 = vld [vmem:[%s440 + $0x74] sm:$0x1]
      %v479 = vld [vmem:[%s440 + $0x80] sm:$0x1]
      %v480 = vld [vmem:[%s440 + $0x8c] sm:$0x1]
      %v481 = vld [vmem:[%s440 + $0x98] sm:$0x1]
      %v482 = vld [vmem:[%s440 + $0xa4] sm:$0x1]
      %v483 = vld [vmem:[%s440] sm:$0xe]
      %v484 = vld [vmem:[%s440 + $0xc] sm:$0xe]
      %v485 = vld [vmem:[%s440 + $0x18] sm:$0xe]
      %v486 = vld [vmem:[%s440 + $0x24] sm:$0xe]
      %v487 = vld [vmem:[%s440 + $0x30] sm:$0xe]
      %v488 = vld [vmem:[%s440 + $0x3c] sm:$0xe]
      %v489 = vld [vmem:[%s440 + $0x48] sm:$0xe]
      %v490 = vld [vmem:[%s440 + $0x54] sm:$0xe]
      %v491 = vld [vmem:[%s440 + $0x60] sm:$0xe]
      %v492 = vld [vmem:[%s440 + $0x6c] sm:$0xe]
      %v493 = vld [vmem:[%s440 + $0x78] sm:$0xe]
      %v494 = vld [vmem:[%s440 + $0x84] sm:$0xe]
      %v495 = vld [vmem:[%s440 + $0x90] sm:$0xe]
      %v496 = vld [vmem:[%s440 + $0x9c] sm:$0xe]
      %v525 = vunpack.c.l.b16 %v327
      %v526 = vunpack.c.l.b16 %v328
      %v527 = vunpack.c.l.b16 %v329
      %v528 = vunpack.c.l.b16 %v330
      %v529 = vunpack.c.l.b16 %v331
      %v530 = vunpack.c.l.b16 %v332
      %v531 = vunpack.c.l.b16 %v333
      %v532 = vunpack.c.l.b16 %v334
      %v533 = vunpack.c.l.b16 %v335
      %v534 = vunpack.c.l.b16 %v336
      %v535 = vunpack.c.l.b16 %v337
      %v536 = vunpack.c.l.b16 %v338
      %v537 = vunpack.c.l.b16 %v339
      %v538 = vunpack.c.l.b16 %v340
      %v539 = vunpack.c.l.b16 %v341
      %v540 = vunpack.c.l.b16 %v342
      %v541 = vunpack.c.l.b16 %v343
      %v542 = vunpack.c.l.b16 %v344
      %v543 = vunpack.c.l.b16 %v345
      %v544 = vunpack.c.l.b16 %v346
      %v545 = vunpack.c.l.b16 %v347
      %v546 = vunpack.c.l.b16 %v348
      %v547 = vunpack.c.l.b16 %v349
      %v548 = vunpack.c.l.b16 %v350
      %v549 = vunpack.c.l.b16 %v351
      %v550 = vunpack.c.l.b16 %v352
      %v551 = vunpack.c.l.b16 %v353
      %v552 = vunpack.c.l.b16 %v354
      %v553 = vpack.c.b16 %v526, %v525
      %v554 = vpack.c.b16 %v528, %v527
      %v555 = vpack.c.b16 %v530, %v529
      %v556 = vpack.c.b16 %v532, %v531
      %v557 = vpack.c.b16 %v534, %v533
      %v558 = vpack.c.b16 %v536, %v535
      %v559 = vpack.c.b16 %v538, %v537
      %v560 = vpack.c.b16 %v540, %v539
      %v561 = vpack.c.b16 %v542, %v541
      %v562 = vpack.c.b16 %v544, %v543
      %v563 = vpack.c.b16 %v546, %v545
      %v564 = vpack.c.b16 %v548, %v547
      %v565 = vpack.c.b16 %v550, %v549
      %v566 = vpack.c.b16 %v552, %v551
      %v581 = vunpack.c.l.b16 %v355
      %v582 = vunpack.c.l.b16 %v356
      %v583 = vunpack.c.l.b16 %v357
      %v584 = vunpack.c.l.b16 %v358
      %v585 = vunpack.c.l.b16 %v359
      %v586 = vunpack.c.l.b16 %v360
      %v587 = vunpack.c.l.b16 %v361
      %v588 = vunpack.c.l.b16 %v362
      %v589 = vunpack.c.l.b16 %v363
      %v590 = vunpack.c.l.b16 %v364
      %v591 = vunpack.c.l.b16 %v365
      %v592 = vunpack.c.l.b16 %v366
      %v593 = vunpack.c.l.b16 %v367
      %v594 = vunpack.c.l.b16 %v368
      %v595 = vpack.c.b16 %v581, %v581
      %v596 = vpack.c.b16 %v582, %v582
      %v597 = vpack.c.b16 %v583, %v583
      %v598 = vpack.c.b16 %v584, %v584
      %v599 = vpack.c.b16 %v585, %v585
      %v600 = vpack.c.b16 %v586, %v586
      %v601 = vpack.c.b16 %v587, %v587
      %v602 = vpack.c.b16 %v588, %v588
      %v603 = vpack.c.b16 %v589, %v589
      %v604 = vpack.c.b16 %v590, %v590
      %v605 = vpack.c.b16 %v591, %v591
      %v606 = vpack.c.b16 %v592, %v592
      %v607 = vpack.c.b16 %v593, %v593
      %v608 = vpack.c.b16 %v594, %v594
      %vm609 = vsmask.f32 7424
      %v611 = vshrl.u32 %v553, 16
      %v613 = vshll.u32 %v553, 16
      %v615 = vrot.slane %v613, 1
      %v616 = vor.u32 %v611, %v615
      %v618 = vshll.u32 %v595, 16
      %v620 = vrot.slane %v618, 1
      %v621 = vsel %vm609, %v616, %v620
      %v623 = vshrl.u32 %v554, 16
      %v625 = vshll.u32 %v554, 16
      %v627 = vrot.slane %v625, 1
      %v628 = vor.u32 %v623, %v627
      %v630 = vshll.u32 %v596, 16
      %v632 = vrot.slane %v630, 1
      %v633 = vsel %vm609, %v628, %v632
      %v635 = vshrl.u32 %v555, 16
      %v637 = vshll.u32 %v555, 16
      %v639 = vrot.slane %v637, 1
      %v640 = vor.u32 %v635, %v639
      %v642 = vshll.u32 %v597, 16
      %v644 = vrot.slane %v642, 1
      %v645 = vsel %vm609, %v640, %v644
      %v647 = vshrl.u32 %v556, 16
      %v649 = vshll.u32 %v556, 16
      %v651 = vrot.slane %v649, 1
      %v652 = vor.u32 %v647, %v651
      %v654 = vshll.u32 %v598, 16
      %v656 = vrot.slane %v654, 1
      %v657 = vsel %vm609, %v652, %v656
      %v659 = vshrl.u32 %v557, 16
      %v661 = vshll.u32 %v557, 16
      %v663 = vrot.slane %v661, 1
      %v664 = vor.u32 %v659, %v663
      %v666 = vshll.u32 %v599, 16
      %v668 = vrot.slane %v666, 1
      %v669 = vsel %vm609, %v664, %v668
      %v671 = vshrl.u32 %v558, 16
      %v673 = vshll.u32 %v558, 16
      %v675 = vrot.slane %v673, 1
      %v676 = vor.u32 %v671, %v675
      %v678 = vshll.u32 %v600, 16
      %v680 = vrot.slane %v678, 1
      %v681 = vsel %vm609, %v676, %v680
      %v683 = vshrl.u32 %v559, 16
      %v685 = vshll.u32 %v559, 16
      %v687 = vrot.slane %v685, 1
      %v688 = vor.u32 %v683, %v687
      %v690 = vshll.u32 %v601, 16
      %v692 = vrot.slane %v690, 1
      %v693 = vsel %vm609, %v688, %v692
      %v695 = vshrl.u32 %v560, 16
      %v697 = vshll.u32 %v560, 16
      %v699 = vrot.slane %v697, 1
      %v700 = vor.u32 %v695, %v699
      %v702 = vshll.u32 %v602, 16
      %v704 = vrot.slane %v702, 1
      %v705 = vsel %vm609, %v700, %v704
      %v707 = vshrl.u32 %v561, 16
      %v709 = vshll.u32 %v561, 16
      %v711 = vrot.slane %v709, 1
      %v712 = vor.u32 %v707, %v711
      %v714 = vshll.u32 %v603, 16
      %v716 = vrot.slane %v714, 1
      %v717 = vsel %vm609, %v712, %v716
      %v719 = vshrl.u32 %v562, 16
      %v721 = vshll.u32 %v562, 16
      %v723 = vrot.slane %v721, 1
      %v724 = vor.u32 %v719, %v723
      %v726 = vshll.u32 %v604, 16
      %v728 = vrot.slane %v726, 1
      %v729 = vsel %vm609, %v724, %v728
      %v731 = vshrl.u32 %v563, 16
      %v733 = vshll.u32 %v563, 16
      %v735 = vrot.slane %v733, 1
      %v736 = vor.u32 %v731, %v735
      %v738 = vshll.u32 %v605, 16
      %v740 = vrot.slane %v738, 1
      %v741 = vsel %vm609, %v736, %v740
      %v743 = vshrl.u32 %v564, 16
      %v745 = vshll.u32 %v564, 16
      %v747 = vrot.slane %v745, 1
      %v748 = vor.u32 %v743, %v747
      %v750 = vshll.u32 %v606, 16
      %v752 = vrot.slane %v750, 1
      %v753 = vsel %vm609, %v748, %v752
      %v755 = vshrl.u32 %v565, 16
      %v757 = vshll.u32 %v565, 16
      %v759 = vrot.slane %v757, 1
      %v760 = vor.u32 %v755, %v759
      %v762 = vshll.u32 %v607, 16
      %v764 = vrot.slane %v762, 1
      %v765 = vsel %vm609, %v760, %v764
      %v767 = vshrl.u32 %v566, 16
      %v769 = vshll.u32 %v566, 16
      %v771 = vrot.slane %v769, 1
      %v772 = vor.u32 %v767, %v771
      %v774 = vshll.u32 %v608, 16
      %v776 = vrot.slane %v774, 1
      %v777 = vsel %vm609, %v772, %v776
      %778 = vrot.lane.b32.xlu0 %v621, 4
      %v779 = vpop.permute.xlu0 %778
      %780 = vrot.lane.b32.xlu0 %v633, 4
      %v781 = vpop.permute.xlu0 %780
      %782 = vrot.lane.b32.xlu0 %v645, 4
      %v783 = vpop.permute.xlu0 %782
      %784 = vrot.lane.b32.xlu0 %v657, 4
      %v785 = vpop.permute.xlu0 %784
      %786 = vrot.lane.b32.xlu0 %v669, 4
      %v787 = vpop.permute.xlu0 %786
      %788 = vrot.lane.b32.xlu0 %v681, 4
      %v789 = vpop.permute.xlu0 %788
      %790 = vrot.lane.b32.xlu0 %v693, 4
      %v791 = vpop.permute.xlu0 %790
      %792 = vrot.lane.b32.xlu0 %v705, 4
      %v793 = vpop.permute.xlu0 %792
      %794 = vrot.lane.b32.xlu0 %v717, 4
      %v795 = vpop.permute.xlu0 %794
      %796 = vrot.lane.b32.xlu0 %v729, 4
      %v797 = vpop.permute.xlu0 %796
      %798 = vrot.lane.b32.xlu0 %v741, 4
      %v799 = vpop.permute.xlu0 %798
      %800 = vrot.lane.b32.xlu0 %v753, 4
      %v801 = vpop.permute.xlu0 %800
      %802 = vrot.lane.b32.xlu0 %v765, 4
      %v803 = vpop.permute.xlu0 %802
      %804 = vrot.lane.b32.xlu0 %v777, 4
      %v805 = vpop.permute.xlu0 %804
      %v820 = vunpack.c.l.b16 %v369
      %v821 = vunpack.c.l.b16 %v370
      %v822 = vunpack.c.l.b16 %v371
      %v823 = vunpack.c.l.b16 %v372
      %v824 = vunpack.c.l.b16 %v373
      %v825 = vunpack.c.l.b16 %v374
      %v826 = vunpack.c.l.b16 %v375
      %v827 = vunpack.c.l.b16 %v376
      %v828 = vunpack.c.l.b16 %v377
      %v829 = vunpack.c.l.b16 %v378
      %v830 = vunpack.c.l.b16 %v379
      %v831 = vunpack.c.l.b16 %v380
      %v832 = vunpack.c.l.b16 %v381
      %v833 = vunpack.c.l.b16 %v382
      %v834 = vpack.c.b16 %v526, %v820
      %v835 = vpack.c.b16 %v528, %v821
      %v836 = vpack.c.b16 %v530, %v822
      %v837 = vpack.c.b16 %v532, %v823
      %v838 = vpack.c.b16 %v534, %v824
      %v839 = vpack.c.b16 %v536, %v825
      %v840 = vpack.c.b16 %v538, %v826
      %v841 = vpack.c.b16 %v540, %v827
      %v842 = vpack.c.b16 %v542, %v828
      %v843 = vpack.c.b16 %v544, %v829
      %v844 = vpack.c.b16 %v546, %v830
      %v845 = vpack.c.b16 %v548, %v831
      %v846 = vpack.c.b16 %v550, %v832
      %v847 = vpack.c.b16 %v552, %v833
      %vm848 = vcmask 1046528
      %v849 = vrot.slane %v834, 1
      %v850 = vrot.slane %v595, 1
      %v851 = vsel %vm848, %v849, %v850
      %v852 = vrot.slane %v835, 1
      %v853 = vrot.slane %v596, 1
      %v854 = vsel %vm848, %v852, %v853
      %v855 = vrot.slane %v836, 1
      %v856 = vrot.slane %v597, 1
      %v857 = vsel %vm848, %v855, %v856
      %v858 = vrot.slane %v837, 1
      %v859 = vrot.slane %v598, 1
      %v860 = vsel %vm848, %v858, %v859
      %v861 = vrot.slane %v838, 1
      %v862 = vrot.slane %v599, 1
      %v863 = vsel %vm848, %v861, %v862
      %v864 = vrot.slane %v839, 1
      %v865 = vrot.slane %v600, 1
      %v866 = vsel %vm848, %v864, %v865
      %v867 = vrot.slane %v840, 1
      %v868 = vrot.slane %v601, 1
      %v869 = vsel %vm848, %v867, %v868
      %v870 = vrot.slane %v841, 1
      %v871 = vrot.slane %v602, 1
      %v872 = vsel %vm848, %v870, %v871
      %v873 = vrot.slane %v842, 1
      %v874 = vrot.slane %v603, 1
      %v875 = vsel %vm848, %v873, %v874
      %v876 = vrot.slane %v843, 1
      %v877 = vrot.slane %v604, 1
      %v878 = vsel %vm848, %v876, %v877
      %v879 = vrot.slane %v844, 1
      %v880 = vrot.slane %v605, 1
      %v881 = vsel %vm848, %v879, %v880
      %v882 = vrot.slane %v845, 1
      %v883 = vrot.slane %v606, 1
      %v884 = vsel %vm848, %v882, %v883
      %v885 = vrot.slane %v846, 1
      %v886 = vrot.slane %v607, 1
      %v887 = vsel %vm848, %v885, %v886
      %v888 = vrot.slane %v847, 1
      %v889 = vrot.slane %v608, 1
      %v890 = vsel %vm848, %v888, %v889
      %891 = vrot.lane.b32.xlu0 %v851, 8
      %v892 = vpop.permute.xlu0 %891
      %893 = vrot.lane.b32.xlu0 %v854, 8
      %v894 = vpop.permute.xlu0 %893
      %895 = vrot.lane.b32.xlu0 %v857, 8
      %v896 = vpop.permute.xlu0 %895
      %897 = vrot.lane.b32.xlu0 %v860, 8
      %v898 = vpop.permute.xlu0 %897
      %899 = vrot.lane.b32.xlu0 %v863, 8
      %v900 = vpop.permute.xlu0 %899
      %901 = vrot.lane.b32.xlu0 %v866, 8
      %v902 = vpop.permute.xlu0 %901
      %903 = vrot.lane.b32.xlu0 %v869, 8
      %v904 = vpop.permute.xlu0 %903
      %905 = vrot.lane.b32.xlu0 %v872, 8
      %v906 = vpop.permute.xlu0 %905
      %907 = vrot.lane.b32.xlu0 %v875, 8
      %v908 = vpop.permute.xlu0 %907
      %909 = vrot.lane.b32.xlu0 %v878, 8
      %v910 = vpop.permute.xlu0 %909
      %911 = vrot.lane.b32.xlu0 %v881, 8
      %v912 = vpop.permute.xlu0 %911
      %913 = vrot.lane.b32.xlu0 %v884, 8
      %v914 = vpop.permute.xlu0 %913
      %915 = vrot.lane.b32.xlu0 %v887, 8
      %v916 = vpop.permute.xlu0 %915
      %917 = vrot.lane.b32.xlu0 %v890, 8
      %v918 = vpop.permute.xlu0 %917
      %v947 = vunpack.c.l.b16 %v384
      %v948 = vunpack.c.l.b16 %v385
      %v949 = vunpack.c.l.b16 %v386
      %v950 = vunpack.c.l.b16 %v387
      %v951 = vunpack.c.l.b16 %v388
      %v952 = vunpack.c.l.b16 %v389
      %v953 = vunpack.c.l.b16 %v390
      %v954 = vunpack.c.l.b16 %v391
      %v955 = vunpack.c.l.b16 %v392
      %v956 = vunpack.c.l.b16 %v393
      %v957 = vunpack.c.l.b16 %v394
      %v958 = vunpack.c.l.b16 %v395
      %v959 = vunpack.c.l.b16 %v396
      %v960 = vunpack.c.l.b16 %v397
      %v961 = vunpack.c.l.b16 %v398
      %v962 = vunpack.c.l.b16 %v399
      %v963 = vunpack.c.l.b16 %v400
      %v964 = vunpack.c.l.b16 %v401
      %v965 = vunpack.c.l.b16 %v402
      %v966 = vunpack.c.l.b16 %v403
      %v967 = vunpack.c.l.b16 %v404
      %v968 = vunpack.c.l.b16 %v405
      %v969 = vunpack.c.l.b16 %v406
      %v970 = vunpack.c.l.b16 %v407
      %v971 = vunpack.c.l.b16 %v408
      %v972 = vunpack.c.l.b16 %v409
      %v973 = vunpack.c.l.b16 %v410
      %v974 = vunpack.c.l.b16 %v411
      %v975 = vpack.c.b16 %v948, %v947
      %v976 = vpack.c.b16 %v950, %v949
      %v977 = vpack.c.b16 %v952, %v951
      %v978 = vpack.c.b16 %v954, %v953
      %v979 = vpack.c.b16 %v956, %v955
      %v980 = vpack.c.b16 %v958, %v957
      %v981 = vpack.c.b16 %v960, %v959
      %v982 = vpack.c.b16 %v962, %v961
      %v983 = vpack.c.b16 %v964, %v963
      %v984 = vpack.c.b16 %v966, %v965
      %v985 = vpack.c.b16 %v968, %v967
      %v986 = vpack.c.b16 %v970, %v969
      %v987 = vpack.c.b16 %v972, %v971
      %v988 = vpack.c.b16 %v974, %v973
      %989 = vrot.lane.b32.xlu0 %v975, 12
      %v990 = vpop.permute.xlu0 %989
      %991 = vrot.lane.b32.xlu0 %v976, 12
      %v992 = vpop.permute.xlu0 %991
      %993 = vrot.lane.b32.xlu0 %v977, 12
      %v994 = vpop.permute.xlu0 %993
      %995 = vrot.lane.b32.xlu0 %v978, 12
      %v996 = vpop.permute.xlu0 %995
      %997 = vrot.lane.b32.xlu0 %v979, 12
      %v998 = vpop.permute.xlu0 %997
      %999 = vrot.lane.b32.xlu0 %v980, 12
      %v1000 = vpop.permute.xlu0 %999
      %1001 = vrot.lane.b32.xlu0 %v981, 12
      %v1002 = vpop.permute.xlu0 %1001
      %1003 = vrot.lane.b32.xlu0 %v982, 12
      %v1004 = vpop.permute.xlu0 %1003
      %1005 = vrot.lane.b32.xlu0 %v983, 12
      %v1006 = vpop.permute.xlu0 %1005
      %1007 = vrot.lane.b32.xlu0 %v984, 12
      %v1008 = vpop.permute.xlu0 %1007
      %1009 = vrot.lane.b32.xlu0 %v985, 12
      %v1010 = vpop.permute.xlu0 %1009
      %1011 = vrot.lane.b32.xlu0 %v986, 12
      %v1012 = vpop.permute.xlu0 %1011
      %1013 = vrot.lane.b32.xlu0 %v987, 12
      %v1014 = vpop.permute.xlu0 %1013
      %1015 = vrot.lane.b32.xlu0 %v988, 12
      %v1016 = vpop.permute.xlu0 %1015
      %v1031 = vunpack.c.l.b16 %v412
      %v1032 = vunpack.c.l.b16 %v413
      %v1033 = vunpack.c.l.b16 %v414
      %v1034 = vunpack.c.l.b16 %v415
      %v1035 = vunpack.c.l.b16 %v416
      %v1036 = vunpack.c.l.b16 %v417
      %v1037 = vunpack.c.l.b16 %v418
      %v1038 = vunpack.c.l.b16 %v419
      %v1039 = vunpack.c.l.b16 %v420
      %v1040 = vunpack.c.l.b16 %v421
      %v1041 = vunpack.c.l.b16 %v422
      %v1042 = vunpack.c.l.b16 %v423
      %v1043 = vunpack.c.l.b16 %v424
      %v1044 = vunpack.c.l.b16 %v425
      %v1045 = vpack.c.b16 %v1031, %v1031
      %v1046 = vpack.c.b16 %v1032, %v1032
      %v1047 = vpack.c.b16 %v1033, %v1033
      %v1048 = vpack.c.b16 %v1034, %v1034
      %v1049 = vpack.c.b16 %v1035, %v1035
      %v1050 = vpack.c.b16 %v1036, %v1036
      %v1051 = vpack.c.b16 %v1037, %v1037
      %v1052 = vpack.c.b16 %v1038, %v1038
      %v1053 = vpack.c.b16 %v1039, %v1039
      %v1054 = vpack.c.b16 %v1040, %v1040
      %v1055 = vpack.c.b16 %v1041, %v1041
      %v1056 = vpack.c.b16 %v1042, %v1042
      %v1057 = vpack.c.b16 %v1043, %v1043
      %v1058 = vpack.c.b16 %v1044, %v1044
      %v1060 = vshrl.u32 %v975, 16
      %v1062 = vshll.u32 %v975, 16
      %v1064 = vrot.slane %v1062, 1
      %v1065 = vor.u32 %v1060, %v1064
      %v1067 = vshll.u32 %v1045, 16
      %v1069 = vrot.slane %v1067, 1
      %v1070 = vsel %vm609, %v1065, %v1069
      %v1072 = vshrl.u32 %v976, 16
      %v1074 = vshll.u32 %v976, 16
      %v1076 = vrot.slane %v1074, 1
      %v1077 = vor.u32 %v1072, %v1076
      %v1079 = vshll.u32 %v1046, 16
      %v1081 = vrot.slane %v1079, 1
      %v1082 = vsel %vm609, %v1077, %v1081
      %v1084 = vshrl.u32 %v977, 16
      %v1086 = vshll.u32 %v977, 16
      %v1088 = vrot.slane %v1086, 1
      %v1089 = vor.u32 %v1084, %v1088
      %v1091 = vshll.u32 %v1047, 16
      %v1093 = vrot.slane %v1091, 1
      %v1094 = vsel %vm609, %v1089, %v1093
      %v1096 = vshrl.u32 %v978, 16
      %v1098 = vshll.u32 %v978, 16
      %v1100 = vrot.slane %v1098, 1
      %v1101 = vor.u32 %v1096, %v1100
      %v1103 = vshll.u32 %v1048, 16
      %v1105 = vrot.slane %v1103, 1
      %v1106 = vsel %vm609, %v1101, %v1105
      %v1108 = vshrl.u32 %v979, 16
      %v1110 = vshll.u32 %v979, 16
      %v1112 = vrot.slane %v1110, 1
      %v1113 = vor.u32 %v1108, %v1112
      %v1115 = vshll.u32 %v1049, 16
      %v1117 = vrot.slane %v1115, 1
      %v1118 = vsel %vm609, %v1113, %v1117
      %v1120 = vshrl.u32 %v980, 16
      %v1122 = vshll.u32 %v980, 16
      %v1124 = vrot.slane %v1122, 1
      %v1125 = vor.u32 %v1120, %v1124
      %v1127 = vshll.u32 %v1050, 16
      %v1129 = vrot.slane %v1127, 1
      %v1130 = vsel %vm609, %v1125, %v1129
      %v1132 = vshrl.u32 %v981, 16
      %v1134 = vshll.u32 %v981, 16
      %v1136 = vrot.slane %v1134, 1
      %v1137 = vor.u32 %v1132, %v1136
      %v1139 = vshll.u32 %v1051, 16
      %v1141 = vrot.slane %v1139, 1
      %v1142 = vsel %vm609, %v1137, %v1141
      %v1144 = vshrl.u32 %v982, 16
      %v1146 = vshll.u32 %v982, 16
      %v1148 = vrot.slane %v1146, 1
      %v1149 = vor.u32 %v1144, %v1148
      %v1151 = vshll.u32 %v1052, 16
      %v1153 = vrot.slane %v1151, 1
      %v1154 = vsel %vm609, %v1149, %v1153
      %v1156 = vshrl.u32 %v983, 16
      %v1158 = vshll.u32 %v983, 16
      %v1160 = vrot.slane %v1158, 1
      %v1161 = vor.u32 %v1156, %v1160
      %v1163 = vshll.u32 %v1053, 16
      %v1165 = vrot.slane %v1163, 1
      %v1166 = vsel %vm609, %v1161, %v1165
      %v1168 = vshrl.u32 %v984, 16
      %v1170 = vshll.u32 %v984, 16
      %v1172 = vrot.slane %v1170, 1
      %v1173 = vor.u32 %v1168, %v1172
      %v1175 = vshll.u32 %v1054, 16
      %v1177 = vrot.slane %v1175, 1
      %v1178 = vsel %vm609, %v1173, %v1177
      %v1180 = vshrl.u32 %v985, 16
      %v1182 = vshll.u32 %v985, 16
      %v1184 = vrot.slane %v1182, 1
      %v1185 = vor.u32 %v1180, %v1184
      %v1187 = vshll.u32 %v1055, 16
      %v1189 = vrot.slane %v1187, 1
      %v1190 = vsel %vm609, %v1185, %v1189
      %v1192 = vshrl.u32 %v986, 16
      %v1194 = vshll.u32 %v986, 16
      %v1196 = vrot.slane %v1194, 1
      %v1197 = vor.u32 %v1192, %v1196
      %v1199 = vshll.u32 %v1056, 16
      %v1201 = vrot.slane %v1199, 1
      %v1202 = vsel %vm609, %v1197, %v1201
      %v1204 = vshrl.u32 %v987, 16
      %v1206 = vshll.u32 %v987, 16
      %v1208 = vrot.slane %v1206, 1
      %v1209 = vor.u32 %v1204, %v1208
      %v1211 = vshll.u32 %v1057, 16
      %v1213 = vrot.slane %v1211, 1
      %v1214 = vsel %vm609, %v1209, %v1213
      %v1216 = vshrl.u32 %v988, 16
      %v1218 = vshll.u32 %v988, 16
      %v1220 = vrot.slane %v1218, 1
      %v1221 = vor.u32 %v1216, %v1220
      %v1223 = vshll.u32 %v1058, 16
      %v1225 = vrot.slane %v1223, 1
      %v1226 = vsel %vm609, %v1221, %v1225
      %1227 = vrot.lane.b32.xlu0 %v1070, 16
      %v1228 = vpop.permute.xlu0 %1227
      %1229 = vrot.lane.b32.xlu0 %v1082, 16
      %v1230 = vpop.permute.xlu0 %1229
      %1231 = vrot.lane.b32.xlu0 %v1094, 16
      %v1232 = vpop.permute.xlu0 %1231
      %1233 = vrot.lane.b32.xlu0 %v1106, 16
      %v1234 = vpop.permute.xlu0 %1233
      %1235 = vrot.lane.b32.xlu0 %v1118, 16
      %v1236 = vpop.permute.xlu0 %1235
      %1237 = vrot.lane.b32.xlu0 %v1130, 16
      %v1238 = vpop.permute.xlu0 %1237
      %1239 = vrot.lane.b32.xlu0 %v1142, 16
      %v1240 = vpop.permute.xlu0 %1239
      %1241 = vrot.lane.b32.xlu0 %v1154, 16
      %v1242 = vpop.permute.xlu0 %1241
      %1243 = vrot.lane.b32.xlu0 %v1166, 16
      %v1244 = vpop.permute.xlu0 %1243
      %1245 = vrot.lane.b32.xlu0 %v1178, 16
      %v1246 = vpop.permute.xlu0 %1245
      %1247 = vrot.lane.b32.xlu0 %v1190, 16
      %v1248 = vpop.permute.xlu0 %1247
      %1249 = vrot.lane.b32.xlu0 %v1202, 16
      %v1250 = vpop.permute.xlu0 %1249
      %1251 = vrot.lane.b32.xlu0 %v1214, 16
      %v1252 = vpop.permute.xlu0 %1251
      %1253 = vrot.lane.b32.xlu0 %v1226, 16
      %v1254 = vpop.permute.xlu0 %1253
      %v1269 = vunpack.c.l.b16 %v426
      %v1270 = vunpack.c.l.b16 %v427
      %v1271 = vunpack.c.l.b16 %v428
      %v1272 = vunpack.c.l.b16 %v429
      %v1273 = vunpack.c.l.b16 %v430
      %v1274 = vunpack.c.l.b16 %v431
      %v1275 = vunpack.c.l.b16 %v432
      %v1276 = vunpack.c.l.b16 %v433
      %v1277 = vunpack.c.l.b16 %v434
      %v1278 = vunpack.c.l.b16 %v435
      %v1279 = vunpack.c.l.b16 %v436
      %v1280 = vunpack.c.l.b16 %v437
      %v1281 = vunpack.c.l.b16 %v438
      %v1282 = vunpack.c.l.b16 %v439
      %v1283 = vpack.c.b16 %v948, %v1269
      %v1284 = vpack.c.b16 %v950, %v1270
      %v1285 = vpack.c.b16 %v952, %v1271
      %v1286 = vpack.c.b16 %v954, %v1272
      %v1287 = vpack.c.b16 %v956, %v1273
      %v1288 = vpack.c.b16 %v958, %v1274
      %v1289 = vpack.c.b16 %v960, %v1275
      %v1290 = vpack.c.b16 %v962, %v1276
      %v1291 = vpack.c.b16 %v964, %v1277
      %v1292 = vpack.c.b16 %v966, %v1278
      %v1293 = vpack.c.b16 %v968, %v1279
      %v1294 = vpack.c.b16 %v970, %v1280
      %v1295 = vpack.c.b16 %v972, %v1281
      %v1296 = vpack.c.b16 %v974, %v1282
      %v1297 = vrot.slane %v1283, 1
      %v1298 = vrot.slane %v1045, 1
      %v1299 = vsel %vm848, %v1297, %v1298
      %v1300 = vrot.slane %v1284, 1
      %v1301 = vrot.slane %v1046, 1
      %v1302 = vsel %vm848, %v1300, %v1301
      %v1303 = vrot.slane %v1285, 1
      %v1304 = vrot.slane %v1047, 1
      %v1305 = vsel %vm848, %v1303, %v1304
      %v1306 = vrot.slane %v1286, 1
      %v1307 = vrot.slane %v1048, 1
      %v1308 = vsel %vm848, %v1306, %v1307
      %v1309 = vrot.slane %v1287, 1
      %v1310 = vrot.slane %v1049, 1
      %v1311 = vsel %vm848, %v1309, %v1310
      %v1312 = vrot.slane %v1288, 1
      %v1313 = vrot.slane %v1050, 1
      %v1314 = vsel %vm848, %v1312, %v1313
      %v1315 = vrot.slane %v1289, 1
      %v1316 = vrot.slane %v1051, 1
      %v1317 = vsel %vm848, %v1315, %v1316
      %v1318 = vrot.slane %v1290, 1
      %v1319 = vrot.slane %v1052, 1
      %v1320 = vsel %vm848, %v1318, %v1319
      %v1321 = vrot.slane %v1291, 1
      %v1322 = vrot.slane %v1053, 1
      %v1323 = vsel %vm848, %v1321, %v1322
      %v1324 = vrot.slane %v1292, 1
      %v1325 = vrot.slane %v1054, 1
      %v1326 = vsel %vm848, %v1324, %v1325
      %v1327 = vrot.slane %v1293, 1
      %v1328 = vrot.slane %v1055, 1
      %v1329 = vsel %vm848, %v1327, %v1328
      %v1330 = vrot.slane %v1294, 1
      %v1331 = vrot.slane %v1056, 1
      %v1332 = vsel %vm848, %v1330, %v1331
      %v1333 = vrot.slane %v1295, 1
      %v1334 = vrot.slane %v1057, 1
      %v1335 = vsel %vm848, %v1333, %v1334
      %v1336 = vrot.slane %v1296, 1
      %v1337 = vrot.slane %v1058, 1
      %v1338 = vsel %vm848, %v1336, %v1337
      %1339 = vrot.lane.b32.xlu0 %v1299, 20
      %v1340 = vpop.permute.xlu0 %1339
      %1341 = vrot.lane.b32.xlu0 %v1302, 20
      %v1342 = vpop.permute.xlu0 %1341
      %1343 = vrot.lane.b32.xlu0 %v1305, 20
      %v1344 = vpop.permute.xlu0 %1343
      %1345 = vrot.lane.b32.xlu0 %v1308, 20
      %v1346 = vpop.permute.xlu0 %1345
      %1347 = vrot.lane.b32.xlu0 %v1311, 20
      %v1348 = vpop.permute.xlu0 %1347
      %1349 = vrot.lane.b32.xlu0 %v1314, 20
      %v1350 = vpop.permute.xlu0 %1349
      %1351 = vrot.lane.b32.xlu0 %v1317, 20
      %v1352 = vpop.permute.xlu0 %1351
      %1353 = vrot.lane.b32.xlu0 %v1320, 20
      %v1354 = vpop.permute.xlu0 %1353
      %1355 = vrot.lane.b32.xlu0 %v1323, 20
      %v1356 = vpop.permute.xlu0 %1355
      %1357 = vrot.lane.b32.xlu0 %v1326, 20
      %v1358 = vpop.permute.xlu0 %1357
      %1359 = vrot.lane.b32.xlu0 %v1329, 20
      %v1360 = vpop.permute.xlu0 %1359
      %1361 = vrot.lane.b32.xlu0 %v1332, 20
      %v1362 = vpop.permute.xlu0 %1361
      %1363 = vrot.lane.b32.xlu0 %v1335, 20
      %v1364 = vpop.permute.xlu0 %1363
      %1365 = vrot.lane.b32.xlu0 %v1338, 20
      %v1366 = vpop.permute.xlu0 %1365
      %v1395 = vunpack.c.l.b16 %v441
      %v1396 = vunpack.c.l.b16 %v442
      %v1397 = vunpack.c.l.b16 %v443
      %v1398 = vunpack.c.l.b16 %v444
      %v1399 = vunpack.c.l.b16 %v445
      %v1400 = vunpack.c.l.b16 %v446
      %v1401 = vunpack.c.l.b16 %v447
      %v1402 = vunpack.c.l.b16 %v448
      %v1403 = vunpack.c.l.b16 %v449
      %v1404 = vunpack.c.l.b16 %v450
      %v1405 = vunpack.c.l.b16 %v451
      %v1406 = vunpack.c.l.b16 %v452
      %v1407 = vunpack.c.l.b16 %v453
      %v1408 = vunpack.c.l.b16 %v454
      %v1409 = vunpack.c.l.b16 %v455
      %v1410 = vunpack.c.l.b16 %v456
      %v1411 = vunpack.c.l.b16 %v457
      %v1412 = vunpack.c.l.b16 %v458
      %v1413 = vunpack.c.l.b16 %v459
      %v1414 = vunpack.c.l.b16 %v460
      %v1415 = vunpack.c.l.b16 %v461
      %v1416 = vunpack.c.l.b16 %v462
      %v1417 = vunpack.c.l.b16 %v463
      %v1418 = vunpack.c.l.b16 %v464
      %v1419 = vunpack.c.l.b16 %v465
      %v1420 = vunpack.c.l.b16 %v466
      %v1421 = vunpack.c.l.b16 %v467
      %v1422 = vunpack.c.l.b16 %v468
      %v1423 = vpack.c.b16 %v1396, %v1395
      %v1424 = vpack.c.b16 %v1398, %v1397
      %v1425 = vpack.c.b16 %v1400, %v1399
      %v1426 = vpack.c.b16 %v1402, %v1401
      %v1427 = vpack.c.b16 %v1404, %v1403
      %v1428 = vpack.c.b16 %v1406, %v1405
      %v1429 = vpack.c.b16 %v1408, %v1407
      %v1430 = vpack.c.b16 %v1410, %v1409
      %v1431 = vpack.c.b16 %v1412, %v1411
      %v1432 = vpack.c.b16 %v1414, %v1413
      %v1433 = vpack.c.b16 %v1416, %v1415
      %v1434 = vpack.c.b16 %v1418, %v1417
      %v1435 = vpack.c.b16 %v1420, %v1419
      %v1436 = vpack.c.b16 %v1422, %v1421
      %1437 = vrot.lane.b32.xlu0 %v1423, 24
      %v1438 = vpop.permute.xlu0 %1437
      %1439 = vrot.lane.b32.xlu0 %v1424, 24
      %v1440 = vpop.permute.xlu0 %1439
      %1441 = vrot.lane.b32.xlu0 %v1425, 24
      %v1442 = vpop.permute.xlu0 %1441
      %1443 = vrot.lane.b32.xlu0 %v1426, 24
      %v1444 = vpop.permute.xlu0 %1443
      %1445 = vrot.lane.b32.xlu0 %v1427, 24
      %v1446 = vpop.permute.xlu0 %1445
      %1447 = vrot.lane.b32.xlu0 %v1428, 24
      %v1448 = vpop.permute.xlu0 %1447
      %1449 = vrot.lane.b32.xlu0 %v1429, 24
      %v1450 = vpop.permute.xlu0 %1449
      %1451 = vrot.lane.b32.xlu0 %v1430, 24
      %v1452 = vpop.permute.xlu0 %1451
      %1453 = vrot.lane.b32.xlu0 %v1431, 24
      %v1454 = vpop.permute.xlu0 %1453
      %1455 = vrot.lane.b32.xlu0 %v1432, 24
      %v1456 = vpop.permute.xlu0 %1455
      %1457 = vrot.lane.b32.xlu0 %v1433, 24
      %v1458 = vpop.permute.xlu0 %1457
      %1459 = vrot.lane.b32.xlu0 %v1434, 24
      %v1460 = vpop.permute.xlu0 %1459
      %1461 = vrot.lane.b32.xlu0 %v1435, 24
      %v1462 = vpop.permute.xlu0 %1461
      %1463 = vrot.lane.b32.xlu0 %v1436, 24
      %v1464 = vpop.permute.xlu0 %1463
      %v1479 = vunpack.c.l.b16 %v469
      %v1480 = vunpack.c.l.b16 %v470
      %v1481 = vunpack.c.l.b16 %v471
      %v1482 = vunpack.c.l.b16 %v472
      %v1483 = vunpack.c.l.b16 %v473
      %v1484 = vunpack.c.l.b16 %v474
      %v1485 = vunpack.c.l.b16 %v475
      %v1486 = vunpack.c.l.b16 %v476
      %v1487 = vunpack.c.l.b16 %v477
      %v1488 = vunpack.c.l.b16 %v478
      %v1489 = vunpack.c.l.b16 %v479
      %v1490 = vunpack.c.l.b16 %v480
      %v1491 = vunpack.c.l.b16 %v481
      %v1492 = vunpack.c.l.b16 %v482
      %v1493 = vpack.c.b16 %v1479, %v1479
      %v1494 = vpack.c.b16 %v1480, %v1480
      %v1495 = vpack.c.b16 %v1481, %v1481
      %v1496 = vpack.c.b16 %v1482, %v1482
      %v1497 = vpack.c.b16 %v1483, %v1483
      %v1498 = vpack.c.b16 %v1484, %v1484
      %v1499 = vpack.c.b16 %v1485, %v1485
      %v1500 = vpack.c.b16 %v1486, %v1486
      %v1501 = vpack.c.b16 %v1487, %v1487
      %v1502 = vpack.c.b16 %v1488, %v1488
      %v1503 = vpack.c.b16 %v1489, %v1489
      %v1504 = vpack.c.b16 %v1490, %v1490
      %v1505 = vpack.c.b16 %v1491, %v1491
      %v1506 = vpack.c.b16 %v1492, %v1492
      %v1508 = vshrl.u32 %v1423, 16
      %v1510 = vshll.u32 %v1423, 16
      %v1512 = vrot.slane %v1510, 1
      %v1513 = vor.u32 %v1508, %v1512
      %v1515 = vshll.u32 %v1493, 16
      %v1517 = vrot.slane %v1515, 1
      %v1518 = vsel %vm609, %v1513, %v1517
      %v1520 = vshrl.u32 %v1424, 16
      %v1522 = vshll.u32 %v1424, 16
      %v1524 = vrot.slane %v1522, 1
      %v1525 = vor.u32 %v1520, %v1524
      %v1527 = vshll.u32 %v1494, 16
      %v1529 = vrot.slane %v1527, 1
      %v1530 = vsel %vm609, %v1525, %v1529
      %v1532 = vshrl.u32 %v1425, 16
      %v1534 = vshll.u32 %v1425, 16
      %v1536 = vrot.slane %v1534, 1
      %v1537 = vor.u32 %v1532, %v1536
      %v1539 = vshll.u32 %v1495, 16
      %v1541 = vrot.slane %v1539, 1
      %v1542 = vsel %vm609, %v1537, %v1541
      %v1544 = vshrl.u32 %v1426, 16
      %v1546 = vshll.u32 %v1426, 16
      %v1548 = vrot.slane %v1546, 1
      %v1549 = vor.u32 %v1544, %v1548
      %v1551 = vshll.u32 %v1496, 16
      %v1553 = vrot.slane %v1551, 1
      %v1554 = vsel %vm609, %v1549, %v1553
      %v1556 = vshrl.u32 %v1427, 16
      %v1558 = vshll.u32 %v1427, 16
      %v1560 = vrot.slane %v1558, 1
      %v1561 = vor.u32 %v1556, %v1560
      %v1563 = vshll.u32 %v1497, 16
      %v1565 = vrot.slane %v1563, 1
      %v1566 = vsel %vm609, %v1561, %v1565
      %v1568 = vshrl.u32 %v1428, 16
      %v1570 = vshll.u32 %v1428, 16
      %v1572 = vrot.slane %v1570, 1
      %v1573 = vor.u32 %v1568, %v1572
      %v1575 = vshll.u32 %v1498, 16
      %v1577 = vrot.slane %v1575, 1
      %v1578 = vsel %vm609, %v1573, %v1577
      %v1580 = vshrl.u32 %v1429, 16
      %v1582 = vshll.u32 %v1429, 16
      %v1584 = vrot.slane %v1582, 1
      %v1585 = vor.u32 %v1580, %v1584
      %v1587 = vshll.u32 %v1499, 16
      %v1589 = vrot.slane %v1587, 1
      %v1590 = vsel %vm609, %v1585, %v1589
      %v1592 = vshrl.u32 %v1430, 16
      %v1594 = vshll.u32 %v1430, 16
      %v1596 = vrot.slane %v1594, 1
      %v1597 = vor.u32 %v1592, %v1596
      %v1599 = vshll.u32 %v1500, 16
      %v1601 = vrot.slane %v1599, 1
      %v1602 = vsel %vm609, %v1597, %v1601
      %v1604 = vshrl.u32 %v1431, 16
      %v1606 = vshll.u32 %v1431, 16
      %v1608 = vrot.slane %v1606, 1
      %v1609 = vor.u32 %v1604, %v1608
      %v1611 = vshll.u32 %v1501, 16
      %v1613 = vrot.slane %v1611, 1
      %v1614 = vsel %vm609, %v1609, %v1613
      %v1616 = vshrl.u32 %v1432, 16
      %v1618 = vshll.u32 %v1432, 16
      %v1620 = vrot.slane %v1618, 1
      %v1621 = vor.u32 %v1616, %v1620
      %v1623 = vshll.u32 %v1502, 16
      %v1625 = vrot.slane %v1623, 1
      %v1626 = vsel %vm609, %v1621, %v1625
      %v1628 = vshrl.u32 %v1433, 16
      %v1630 = vshll.u32 %v1433, 16
      %v1632 = vrot.slane %v1630, 1
      %v1633 = vor.u32 %v1628, %v1632
      %v1635 = vshll.u32 %v1503, 16
      %v1637 = vrot.slane %v1635, 1
      %v1638 = vsel %vm609, %v1633, %v1637
      %v1640 = vshrl.u32 %v1434, 16
      %v1642 = vshll.u32 %v1434, 16
      %v1644 = vrot.slane %v1642, 1
      %v1645 = vor.u32 %v1640, %v1644
      %v1647 = vshll.u32 %v1504, 16
      %v1649 = vrot.slane %v1647, 1
      %v1650 = vsel %vm609, %v1645, %v1649
      %v1652 = vshrl.u32 %v1435, 16
      %v1654 = vshll.u32 %v1435, 16
      %v1656 = vrot.slane %v1654, 1
      %v1657 = vor.u32 %v1652, %v1656
      %v1659 = vshll.u32 %v1505, 16
      %v1661 = vrot.slane %v1659, 1
      %v1662 = vsel %vm609, %v1657, %v1661
      %v1664 = vshrl.u32 %v1436, 16
      %v1666 = vshll.u32 %v1436, 16
      %v1668 = vrot.slane %v1666, 1
      %v1669 = vor.u32 %v1664, %v1668
      %v1671 = vshll.u32 %v1506, 16
      %v1673 = vrot.slane %v1671, 1
      %v1674 = vsel %vm609, %v1669, %v1673
      %1675 = vrot.lane.b32.xlu0 %v1518, 28
      %v1676 = vpop.permute.xlu0 %1675
      %1677 = vrot.lane.b32.xlu0 %v1530, 28
      %v1678 = vpop.permute.xlu0 %1677
      %1679 = vrot.lane.b32.xlu0 %v1542, 28
      %v1680 = vpop.permute.xlu0 %1679
      %1681 = vrot.lane.b32.xlu0 %v1554, 28
      %v1682 = vpop.permute.xlu0 %1681
      %1683 = vrot.lane.b32.xlu0 %v1566, 28
      %v1684 = vpop.permute.xlu0 %1683
      %1685 = vrot.lane.b32.xlu0 %v1578, 28
      %v1686 = vpop.permute.xlu0 %1685
      %1687 = vrot.lane.b32.xlu0 %v1590, 28
      %v1688 = vpop.permute.xlu0 %1687
      %1689 = vrot.lane.b32.xlu0 %v1602, 28
      %v1690 = vpop.permute.xlu0 %1689
      %1691 = vrot.lane.b32.xlu0 %v1614, 28
      %v1692 = vpop.permute.xlu0 %1691
      %1693 = vrot.lane.b32.xlu0 %v1626, 28
      %v1694 = vpop.permute.xlu0 %1693
      %1695 = vrot.lane.b32.xlu0 %v1638, 28
      %v1696 = vpop.permute.xlu0 %1695
      %1697 = vrot.lane.b32.xlu0 %v1650, 28
      %v1698 = vpop.permute.xlu0 %1697
      %1699 = vrot.lane.b32.xlu0 %v1662, 28
      %v1700 = vpop.permute.xlu0 %1699
      %1701 = vrot.lane.b32.xlu0 %v1674, 28
      %v1702 = vpop.permute.xlu0 %1701
      %v1717 = vunpack.c.l.b16 %v483
      %v1718 = vunpack.c.l.b16 %v484
      %v1719 = vunpack.c.l.b16 %v485
      %v1720 = vunpack.c.l.b16 %v486
      %v1721 = vunpack.c.l.b16 %v487
      %v1722 = vunpack.c.l.b16 %v488
      %v1723 = vunpack.c.l.b16 %v489
      %v1724 = vunpack.c.l.b16 %v490
      %v1725 = vunpack.c.l.b16 %v491
      %v1726 = vunpack.c.l.b16 %v492
      %v1727 = vunpack.c.l.b16 %v493
      %v1728 = vunpack.c.l.b16 %v494
      %v1729 = vunpack.c.l.b16 %v495
      %v1730 = vunpack.c.l.b16 %v496
      %v1731 = vpack.c.b16 %v1396, %v1717
      %v1732 = vpack.c.b16 %v1398, %v1718
      %v1733 = vpack.c.b16 %v1400, %v1719
      %v1734 = vpack.c.b16 %v1402, %v1720
      %v1735 = vpack.c.b16 %v1404, %v1721
      %v1736 = vpack.c.b16 %v1406, %v1722
      %v1737 = vpack.c.b16 %v1408, %v1723
      %v1738 = vpack.c.b16 %v1410, %v1724
      %v1739 = vpack.c.b16 %v1412, %v1725
      %v1740 = vpack.c.b16 %v1414, %v1726
      %v1741 = vpack.c.b16 %v1416, %v1727
      %v1742 = vpack.c.b16 %v1418, %v1728
      %v1743 = vpack.c.b16 %v1420, %v1729
      %v1744 = vpack.c.b16 %v1422, %v1730
      %v1745 = vrot.slane %v1731, 1
      %v1746 = vrot.slane %v1493, 1
      %v1747 = vsel %vm848, %v1745, %v1746
      %v1748 = vrot.slane %v1732, 1
      %v1749 = vrot.slane %v1494, 1
      %v1750 = vsel %vm848, %v1748, %v1749
      %v1751 = vrot.slane %v1733, 1
      %v1752 = vrot.slane %v1495, 1
      %v1753 = vsel %vm848, %v1751, %v1752
      %v1754 = vrot.slane %v1734, 1
      %v1755 = vrot.slane %v1496, 1
      %v1756 = vsel %vm848, %v1754, %v1755
      %v1757 = vrot.slane %v1735, 1
      %v1758 = vrot.slane %v1497, 1
      %v1759 = vsel %vm848, %v1757, %v1758
      %v1760 = vrot.slane %v1736, 1
      %v1761 = vrot.slane %v1498, 1
      %v1762 = vsel %vm848, %v1760, %v1761
      %v1763 = vrot.slane %v1737, 1
      %v1764 = vrot.slane %v1499, 1
      %v1765 = vsel %vm848, %v1763, %v1764
      %v1766 = vrot.slane %v1738, 1
      %v1767 = vrot.slane %v1500, 1
      %v1768 = vsel %vm848, %v1766, %v1767
      %v1769 = vrot.slane %v1739, 1
      %v1770 = vrot.slane %v1501, 1
      %v1771 = vsel %vm848, %v1769, %v1770
      %v1772 = vrot.slane %v1740, 1
      %v1773 = vrot.slane %v1502, 1
      %v1774 = vsel %vm848, %v1772, %v1773
      %v1775 = vrot.slane %v1741, 1
      %v1776 = vrot.slane %v1503, 1
      %v1777 = vsel %vm848, %v1775, %v1776
      %v1778 = vrot.slane %v1742, 1
      %v1779 = vrot.slane %v1504, 1
      %v1780 = vsel %vm848, %v1778, %v1779
      %v1781 = vrot.slane %v1743, 1
      %v1782 = vrot.slane %v1505, 1
      %v1783 = vsel %vm848, %v1781, %v1782
      %v1784 = vrot.slane %v1744, 1
      %v1785 = vrot.slane %v1506, 1
      %v1786 = vsel %vm848, %v1784, %v1785
      %1787 = vrot.lane.b32.xlu0 %v1747, 32
      %v1788 = vpop.permute.xlu0 %1787
      %1789 = vrot.lane.b32.xlu0 %v1750, 32
      %v1790 = vpop.permute.xlu0 %1789
      %1791 = vrot.lane.b32.xlu0 %v1753, 32
      %v1792 = vpop.permute.xlu0 %1791
      %1793 = vrot.lane.b32.xlu0 %v1756, 32
      %v1794 = vpop.permute.xlu0 %1793
      %1795 = vrot.lane.b32.xlu0 %v1759, 32
      %v1796 = vpop.permute.xlu0 %1795
      %1797 = vrot.lane.b32.xlu0 %v1762, 32
      %v1798 = vpop.permute.xlu0 %1797
      %1799 = vrot.lane.b32.xlu0 %v1765, 32
      %v1800 = vpop.permute.xlu0 %1799
      %1801 = vrot.lane.b32.xlu0 %v1768, 32
      %v1802 = vpop.permute.xlu0 %1801
      %1803 = vrot.lane.b32.xlu0 %v1771, 32
      %v1804 = vpop.permute.xlu0 %1803
      %1805 = vrot.lane.b32.xlu0 %v1774, 32
      %v1806 = vpop.permute.xlu0 %1805
      %1807 = vrot.lane.b32.xlu0 %v1777, 32
      %v1808 = vpop.permute.xlu0 %1807
      %1809 = vrot.lane.b32.xlu0 %v1780, 32
      %v1810 = vpop.permute.xlu0 %1809
      %1811 = vrot.lane.b32.xlu0 %v1783, 32
      %v1812 = vpop.permute.xlu0 %1811
      %1813 = vrot.lane.b32.xlu0 %v1786, 32
      %v1814 = vpop.permute.xlu0 %1813
      %vm1815 = vcmask 31744
      %v1817 = vsel %vm1815, %v553, %v779
      %v1819 = vsel %vm1815, %v554, %v781
      %v1821 = vsel %vm1815, %v555, %v783
      %v1823 = vsel %vm1815, %v556, %v785
      %v1825 = vsel %vm1815, %v557, %v787
      %v1827 = vsel %vm1815, %v558, %v789
      %v1829 = vsel %vm1815, %v559, %v791
      %v1831 = vsel %vm1815, %v560, %v793
      %v1833 = vsel %vm1815, %v561, %v795
      %v1835 = vsel %vm1815, %v562, %v797
      %v1837 = vsel %vm1815, %v563, %v799
      %v1839 = vsel %vm1815, %v564, %v801
      %v1841 = vsel %vm1815, %v565, %v803
      %v1843 = vsel %vm1815, %v566, %v805
      %vm1844 = vcmask 64512
      %v1846 = vsel %vm1844, %v1817, %v892
      %v1848 = vsel %vm1844, %v1819, %v894
      %v1850 = vsel %vm1844, %v1821, %v896
      %v1852 = vsel %vm1844, %v1823, %v898
      %v1854 = vsel %vm1844, %v1825, %v900
      %v1856 = vsel %vm1844, %v1827, %v902
      %v1858 = vsel %vm1844, %v1829, %v904
      %v1860 = vsel %vm1844, %v1831, %v906
      %v1862 = vsel %vm1844, %v1833, %v908
      %v1864 = vsel %vm1844, %v1835, %v910
      %v1866 = vsel %vm1844, %v1837, %v912
      %v1868 = vsel %vm1844, %v1839, %v914
      %v1870 = vsel %vm1844, %v1841, %v916
      %v1872 = vsel %vm1844, %v1843, %v918
      %vm1873 = vcmask 97280
      %v1875 = vsel %vm1873, %v1846, %v990
      %v1877 = vsel %vm1873, %v1848, %v992
      %v1879 = vsel %vm1873, %v1850, %v994
      %v1881 = vsel %vm1873, %v1852, %v996
      %v1883 = vsel %vm1873, %v1854, %v998
      %v1885 = vsel %vm1873, %v1856, %v1000
      %v1887 = vsel %vm1873, %v1858, %v1002
      %v1889 = vsel %vm1873, %v1860, %v1004
      %v1891 = vsel %vm1873, %v1862, %v1006
      %v1893 = vsel %vm1873, %v1864, %v1008
      %v1895 = vsel %vm1873, %v1866, %v1010
      %v1897 = vsel %vm1873, %v1868, %v1012
      %v1899 = vsel %vm1873, %v1870, %v1014
      %v1901 = vsel %vm1873, %v1872, %v1016
      %vm1902 = vcmask 130048
      %v1904 = vsel %vm1902, %v1875, %v1228
      %v1906 = vsel %vm1902, %v1877, %v1230
      %v1908 = vsel %vm1902, %v1879, %v1232
      %v1910 = vsel %vm1902, %v1881, %v1234
      %v1912 = vsel %vm1902, %v1883, %v1236
      %v1914 = vsel %vm1902, %v1885, %v1238
      %v1916 = vsel %vm1902, %v1887, %v1240
      %v1918 = vsel %vm1902, %v1889, %v1242
      %v1920 = vsel %vm1902, %v1891, %v1244
      %v1922 = vsel %vm1902, %v1893, %v1246
      %v1924 = vsel %vm1902, %v1895, %v1248
      %v1926 = vsel %vm1902, %v1897, %v1250
      %v1928 = vsel %vm1902, %v1899, %v1252
      %v1930 = vsel %vm1902, %v1901, %v1254
      %vm1931 = vcmask 162816
      %v1933 = vsel %vm1931, %v1904, %v1340
      %v1935 = vsel %vm1931, %v1906, %v1342
      %v1937 = vsel %vm1931, %v1908, %v1344
      %v1939 = vsel %vm1931, %v1910, %v1346
      %v1941 = vsel %vm1931, %v1912, %v1348
      %v1943 = vsel %vm1931, %v1914, %v1350
      %v1945 = vsel %vm1931, %v1916, %v1352
      %v1947 = vsel %vm1931, %v1918, %v1354
      %v1949 = vsel %vm1931, %v1920, %v1356
      %v1951 = vsel %vm1931, %v1922, %v1358
      %v1953 = vsel %vm1931, %v1924, %v1360
      %v1955 = vsel %vm1931, %v1926, %v1362
      %v1957 = vsel %vm1931, %v1928, %v1364
      %v1959 = vsel %vm1931, %v1930, %v1366
      %vm1960 = vcmask 195584
      %v1962 = vsel %vm1960, %v1933, %v1438
      %v1964 = vsel %vm1960, %v1935, %v1440
      %v1966 = vsel %vm1960, %v1937, %v1442
      %v1968 = vsel %vm1960, %v1939, %v1444
      %v1970 = vsel %vm1960, %v1941, %v1446
      %v1972 = vsel %vm1960, %v1943, %v1448
      %v1974 = vsel %vm1960, %v1945, %v1450
      %v1976 = vsel %vm1960, %v1947, %v1452
      %v1978 = vsel %vm1960, %v1949, %v1454
      %v1980 = vsel %vm1960, %v1951, %v1456
      %v1982 = vsel %vm1960, %v1953, %v1458
      %v1984 = vsel %vm1960, %v1955, %v1460
      %v1986 = vsel %vm1960, %v1957, %v1462
      %v1988 = vsel %vm1960, %v1959, %v1464
      %vm1989 = vcmask 228352
      %v1991 = vsel %vm1989, %v1962, %v1676
      %v1993 = vsel %vm1989, %v1964, %v1678
      %v1995 = vsel %vm1989, %v1966, %v1680
      %v1997 = vsel %vm1989, %v1968, %v1682
      %v1999 = vsel %vm1989, %v1970, %v1684
      %v2001 = vsel %vm1989, %v1972, %v1686
      %v2003 = vsel %vm1989, %v1974, %v1688
      %v2005 = vsel %vm1989, %v1976, %v1690
      %v2007 = vsel %vm1989, %v1978, %v1692
      %v2009 = vsel %vm1989, %v1980, %v1694
      %v2011 = vsel %vm1989, %v1982, %v1696
      %v2013 = vsel %vm1989, %v1984, %v1698
      %v2015 = vsel %vm1989, %v1986, %v1700
      %v2017 = vsel %vm1989, %v1988, %v1702
      %vm2018 = vcmask 261120
      %v2020 = vsel %vm2018, %v1991, %v1788
      %v2022 = vsel %vm2018, %v1993, %v1790
      %v2024 = vsel %vm2018, %v1995, %v1792
      %v2026 = vsel %vm2018, %v1997, %v1794
      %v2028 = vsel %vm2018, %v1999, %v1796
      %v2030 = vsel %vm2018, %v2001, %v1798
      %v2032 = vsel %vm2018, %v2003, %v1800
      %v2034 = vsel %vm2018, %v2005, %v1802
      %v2036 = vsel %vm2018, %v2007, %v1804
      %v2038 = vsel %vm2018, %v2009, %v1806
      %v2040 = vsel %vm2018, %v2011, %v1808
      %v2042 = vsel %vm2018, %v2013, %v1810
      %v2044 = vsel %vm2018, %v2015, %v1812
      %v2046 = vsel %vm2018, %v2017, %v1814
      %v2047 = vld [vmem:[%s2] sm:$0xf]
      %v2048 = vld [vmem:[%s2 + $0x4] sm:$0xf]
      %v2049 = vld [vmem:[%s2 + $0x8] sm:$0xf]
      %v2050 = vld [vmem:[%s2 + $0xc] sm:$0xf]
      %v2051 = vld [vmem:[%s2 + $0x10] sm:$0x3]
      %v2057 = vunpack.c.l.b16 %v2047
      %v2058 = vunpack.c.l.b16 %v2048
      %v2059 = vunpack.c.l.b16 %v2049
      %v2060 = vunpack.c.l.b16 %v2050
      %v2061 = vunpack.c.l.b16 %v2051
      %v2062 = vpack.c.b16 %v2058, %v2057
      %v2063 = vpack.c.b16 %v2060, %v2059
      %v2064 = vpack.c.b16 %v2061, %v2061
      %vm2067 = vcmask 293888
      %v2068 = vsel %vm2067, %v2020, 0
      %v2070 = vsel %vm2067, %v2022, 0
      %v2072 = vsel %vm2067, %v2024, 0
      %v2074 = vsel %vm2067, %v2026, 0
      %v2076 = vsel %vm2067, %v2028, 0
      %v2078 = vsel %vm2067, %v2030, 0
      %v2080 = vsel %vm2067, %v2032, 0
      %v2082 = vsel %vm2067, %v2034, 0
      %v2084 = vsel %vm2067, %v2036, 0
      %v2086 = vsel %vm2067, %v2038, 0
      %v2088 = vsel %vm2067, %v2040, 0
      %v2090 = vsel %vm2067, %v2042, 0
      %v2092 = vsel %vm2067, %v2044, 0
      %v2094 = vsel %vm2067, %v2046, 0
      %vm2096 = vcmask 1041408
      %v2098 = vsel %vm2096, %v2064, 0
      %2100 = vmatprep.subr.bf16.mxu0 0
      %2101 = vmatpush1.bf16.msra.mxu0 %v2062
      %2102 = vmatprep.subr.bf16.mxu0 0
      %2103 = vmatpush1.bf16.msra.mxu0 %v2063
      %2104 = vmatprep.subr.bf16.mxu0 0
      %2105 = vmatpush1.bf16.msra.mxu0 %v2098
      %2106 = vmatprep.subr.bf16.mxu0 0
      %2107 = vmatpush1.bf16.msra.mxu0 0
      %2108 = vmatprep.subr.bf16.mxu0 0
      %2109 = vmatpush1.bf16.msra.mxu0 0
      %2110 = vmatprep.subr.bf16.mxu0 0
      %2111 = vmatpush1.bf16.msra.mxu0 0
      %2112 = vmatprep.subr.bf16.mxu0 0
      %2113 = vmatpush1.bf16.msra.mxu0 0
      %2114 = vmatprep.subr.bf16.mxu0 0
      %2115 = vmatpush1.bf16.msra.mxu0 0
      %2116 = vmatprep.subr.bf16.mxu0 0
      %2117 = vmatpush1.bf16.msra.mxu0 0
      %2118 = vmatprep.subr.bf16.mxu0 0
      %2119 = vmatpush1.bf16.msra.mxu0 0
      %2120 = vmatprep.subr.bf16.mxu0 0
      %2121 = vmatpush1.bf16.msra.mxu0 0
      %2122 = vmatprep.subr.bf16.mxu0 0
      %2123 = vmatpush1.bf16.msra.mxu0 0
      %2124 = vmatprep.subr.bf16.mxu0 0
      %2125 = vmatpush1.bf16.msra.mxu0 0
      %2126 = vmatprep.subr.bf16.mxu0 0
      %2127 = vmatpush1.bf16.msra.mxu0 0
      %2128 = vmatprep.subr.bf16.mxu0 0
      %2129 = vmatpush1.bf16.msra.mxu0 0
      %2130 = vmatprep.subr.bf16.mxu0 0
      %2131 = vmatpush1.bf16.msra.mxu0 0
      %2132 = vmatprep.mubr.bf16.mxu0 0
      %2133 = vmatmul.mubr.bf16.gmra.mrb[0].mxu0 %v2068
      %v2134 = vpop.f32.mrb[0].mxu0
      %v2135 = vadd.f32 0.0, %v2134
      %v2136 = vpop.f32.mrb[0].mxu0
      %v2137 = vpop.f32.mrb[0].mxu0
      %v2138 = vadd.f32 0.0, %v2137
      %v2139 = vpop.f32.mrb[0].mxu0
      %2140 = vmatprep.mubr.bf16.mxu0 0
      %2141 = vmatmul.mubr.bf16.gmra.mrb[0].mxu0 %v2070
      %v2142 = vpop.f32.mrb[0].mxu0
      %v2143 = vadd.f32 0.0, %v2142
      %v2144 = vpop.f32.mrb[0].mxu0
      %v2145 = vpop.f32.mrb[0].mxu0
      %v2146 = vadd.f32 0.0, %v2145
      %v2147 = vpop.f32.mrb[0].mxu0
      %2148 = vmatprep.mubr.bf16.mxu0 0
      %2149 = vmatmul.mubr.bf16.gmra.mrb[0].mxu0 %v2072
      %v2150 = vpop.f32.mrb[0].mxu0
      %v2151 = vadd.f32 0.0, %v2150
      %v2152 = vpop.f32.mrb[0].mxu0
      %v2153 = vpop.f32.mrb[0].mxu0
      %v2154 = vadd.f32 0.0, %v2153
      %v2155 = vpop.f32.mrb[0].mxu0
      %2156 = vmatprep.mubr.bf16.mxu0 0
      %2157 = vmatmul.mubr.bf16.gmra.mrb[0].mxu0 %v2074
      %v2158 = vpop.f32.mrb[0].mxu0
      %v2159 = vadd.f32 0.0, %v2158
      %v2160 = vpop.f32.mrb[0].mxu0
      %v2161 = vpop.f32.mrb[0].mxu0
      %v2162 = vadd.f32 0.0, %v2161
      %v2163 = vpop.f32.mrb[0].mxu0
      %2164 = vmatprep.mubr.bf16.mxu0 0
      %2165 = vmatmul.mubr.bf16.gmra.mrb[0].mxu0 %v2076
      %v2166 = vpop.f32.mrb[0].mxu0
      %v2167 = vadd.f32 0.0, %v2166
      %v2168 = vpop.f32.mrb[0].mxu0
      %v2169 = vpop.f32.mrb[0].mxu0
      %v2170 = vadd.f32 0.0, %v2169
      %v2171 = vpop.f32.mrb[0].mxu0
      %2172 = vmatprep.mubr.bf16.mxu0 0
      %2173 = vmatmul.mubr.bf16.gmra.mrb[0].mxu0 %v2078
      %v2174 = vpop.f32.mrb[0].mxu0
      %v2175 = vadd.f32 0.0, %v2174
      %v2176 = vpop.f32.mrb[0].mxu0
      %v2177 = vpop.f32.mrb[0].mxu0
      %v2178 = vadd.f32 0.0, %v2177
      %v2179 = vpop.f32.mrb[0].mxu0
      %2180 = vmatprep.mubr.bf16.mxu0 0
      %2181 = vmatmul.mubr.bf16.gmra.mrb[0].mxu0 %v2080
      %v2182 = vpop.f32.mrb[0].mxu0
      %v2183 = vadd.f32 0.0, %v2182
      %v2184 = vpop.f32.mrb[0].mxu0
      %v2185 = vpop.f32.mrb[0].mxu0
      %v2186 = vadd.f32 0.0, %v2185
      %v2187 = vpop.f32.mrb[0].mxu0
      %2188 = vmatprep.mubr.bf16.mxu0 0
      %2189 = vmatmul.mubr.bf16.gmra.mrb[0].mxu0 %v2082
      %v2190 = vpop.f32.mrb[0].mxu0
      %v2191 = vadd.f32 0.0, %v2190
      %v2192 = vpop.f32.mrb[0].mxu0
      %v2193 = vpop.f32.mrb[0].mxu0
      %v2194 = vadd.f32 0.0, %v2193
      %v2195 = vpop.f32.mrb[0].mxu0
      %2196 = vmatprep.mubr.bf16.mxu0 0
      %2197 = vmatmul.mubr.bf16.gmra.mrb[0].mxu0 %v2084
      %v2198 = vpop.f32.mrb[0].mxu0
      %v2199 = vadd.f32 0.0, %v2198
      %v2200 = vpop.f32.mrb[0].mxu0
      %v2201 = vpop.f32.mrb[0].mxu0
      %v2202 = vadd.f32 0.0, %v2201
      %v2203 = vpop.f32.mrb[0].mxu0
      %2204 = vmatprep.mubr.bf16.mxu0 0
      %2205 = vmatmul.mubr.bf16.gmra.mrb[0].mxu0 %v2086
      %v2206 = vpop.f32.mrb[0].mxu0
      %v2207 = vadd.f32 0.0, %v2206
      %v2208 = vpop.f32.mrb[0].mxu0
      %v2209 = vpop.f32.mrb[0].mxu0
      %v2210 = vadd.f32 0.0, %v2209
      %v2211 = vpop.f32.mrb[0].mxu0
      %2212 = vmatprep.mubr.bf16.mxu0 0
      %2213 = vmatmul.mubr.bf16.gmra.mrb[0].mxu0 %v2088
      %v2214 = vpop.f32.mrb[0].mxu0
      %v2215 = vadd.f32 0.0, %v2214
      %v2216 = vpop.f32.mrb[0].mxu0
      %v2217 = vpop.f32.mrb[0].mxu0
      %v2218 = vadd.f32 0.0, %v2217
      %v2219 = vpop.f32.mrb[0].mxu0
      %2220 = vmatprep.mubr.bf16.mxu0 0
      %2221 = vmatmul.mubr.bf16.gmra.mrb[0].mxu0 %v2090
      %v2222 = vpop.f32.mrb[0].mxu0
      %v2223 = vadd.f32 0.0, %v2222
      %v2224 = vpop.f32.mrb[0].mxu0
      %v2225 = vpop.f32.mrb[0].mxu0
      %v2226 = vadd.f32 0.0, %v2225
      %v2227 = vpop.f32.mrb[0].mxu0
      %2228 = vmatprep.mubr.bf16.mxu0 0
      %2229 = vmatmul.mubr.bf16.gmra.mrb[0].mxu0 %v2092
      %v2230 = vpop.f32.mrb[0].mxu0
      %v2231 = vadd.f32 0.0, %v2230
      %v2232 = vpop.f32.mrb[0].mxu0
      %v2233 = vpop.f32.mrb[0].mxu0
      %v2234 = vadd.f32 0.0, %v2233
      %v2235 = vpop.f32.mrb[0].mxu0
      %2236 = vmatprep.mubr.bf16.mxu0 0
      %2237 = vmatmul.mubr.bf16.gmra.mrb[0].mxu0 %v2094
      %v2238 = vpop.f32.mrb[0].mxu0
      %v2239 = vadd.f32 0.0, %v2238
      %v2240 = vpop.f32.mrb[0].mxu0
      %v2241 = vpop.f32.mrb[0].mxu0
      %v2242 = vadd.f32 0.0, %v2241
      %v2243 = vpop.f32.mrb[0].mxu0
      %2244 = vdwg.mxu0
      %v2245 = vld [vmem:[%s4] sm:$0x1]
      %v2247 = vlaneseq
      %v2248 = vshrl.u32 %v2247, 7
      %v2249 = vsub.s32 0, %v2248
      %v2250 = vrot.slane %v2245, %v2249
      %v2252 = vmul.f32 %v2135, %v2250
      %v2253 = vmul.f32 %v2138, %v2250
      %v2254 = vmul.f32 %v2143, %v2250
      %v2255 = vmul.f32 %v2146, %v2250
      %v2256 = vmul.f32 %v2151, %v2250
      %v2257 = vmul.f32 %v2154, %v2250
      %v2258 = vmul.f32 %v2159, %v2250
      %v2259 = vmul.f32 %v2162, %v2250
      %v2260 = vmul.f32 %v2167, %v2250
      %v2261 = vmul.f32 %v2170, %v2250
      %v2262 = vmul.f32 %v2175, %v2250
      %v2263 = vmul.f32 %v2178, %v2250
      %v2264 = vmul.f32 %v2183, %v2250
      %v2265 = vmul.f32 %v2186, %v2250
      %v2266 = vmul.f32 %v2191, %v2250
      %v2267 = vmul.f32 %v2194, %v2250
      %v2268 = vmul.f32 %v2199, %v2250
      %v2269 = vmul.f32 %v2202, %v2250
      %v2270 = vmul.f32 %v2207, %v2250
      %v2271 = vmul.f32 %v2210, %v2250
      %v2272 = vmul.f32 %v2215, %v2250
      %v2273 = vmul.f32 %v2218, %v2250
      %v2274 = vmul.f32 %v2223, %v2250
      %v2275 = vmul.f32 %v2226, %v2250
      %v2276 = vmul.f32 %v2231, %v2250
      %v2277 = vmul.f32 %v2234, %v2250
      %v2278 = vmul.f32 %v2239, %v2250
      %v2279 = vmul.f32 %v2242, %v2250
      %v2280 = vld [vmem:[%s5] sm:$0x1]
      %v2282 = vlaneseq
      %v2283 = vshrl.u32 %v2282, 7
      %v2284 = vsub.s32 0, %v2283
      %v2285 = vrot.slane %v2280, %v2284
      %v2287 = vadd.f32 %v2252, %v2285
      %v2288 = vadd.f32 %v2253, %v2285
      %v2289 = vadd.f32 %v2254, %v2285
      %v2290 = vadd.f32 %v2255, %v2285
      %v2291 = vadd.f32 %v2256, %v2285
      %v2292 = vadd.f32 %v2257, %v2285
      %v2293 = vadd.f32 %v2258, %v2285
      %v2294 = vadd.f32 %v2259, %v2285
      %v2295 = vadd.f32 %v2260, %v2285
      %v2296 = vadd.f32 %v2261, %v2285
      %v2297 = vadd.f32 %v2262, %v2285
      %v2298 = vadd.f32 %v2263, %v2285
      %v2299 = vadd.f32 %v2264, %v2285
      %v2300 = vadd.f32 %v2265, %v2285
      %v2301 = vadd.f32 %v2266, %v2285
      %v2302 = vadd.f32 %v2267, %v2285
      %v2303 = vadd.f32 %v2268, %v2285
      %v2304 = vadd.f32 %v2269, %v2285
      %v2305 = vadd.f32 %v2270, %v2285
      %v2306 = vadd.f32 %v2271, %v2285
      %v2307 = vadd.f32 %v2272, %v2285
      %v2308 = vadd.f32 %v2273, %v2285
      %v2309 = vadd.f32 %v2274, %v2285
      %v2310 = vadd.f32 %v2275, %v2285
      %v2311 = vadd.f32 %v2276, %v2285
      %v2312 = vadd.f32 %v2277, %v2285
      %v2313 = vadd.f32 %v2278, %v2285
      %v2314 = vadd.f32 %v2279, %v2285
      %2315 = vst [vmem:[#allocation2] sm:$0xff] %v2287
      %2316 = vst [vmem:[#allocation2 + $0x8] sm:$0xff] %v2288
      %2317 = vst [vmem:[#allocation2 + $0x10] sm:$0xff] %v2289
      %2318 = vst [vmem:[#allocation2 + $0x18] sm:$0xff] %v2290
      %2319 = vst [vmem:[#allocation2 + $0x20] sm:$0xff] %v2291
      %2320 = vst [vmem:[#allocation2 + $0x28] sm:$0xff] %v2292
      %2321 = vst [vmem:[#allocation2 + $0x30] sm:$0xff] %v2293
      %2322 = vst [vmem:[#allocation2 + $0x38] sm:$0xff] %v2294
      %2323 = vst [vmem:[#allocation2 + $0x40] sm:$0xff] %v2295
      %2324 = vst [vmem:[#allocation2 + $0x48] sm:$0xff] %v2296
      %2325 = vst [vmem:[#allocation2 + $0x50] sm:$0xff] %v2297
      %2326 = vst [vmem:[#allocation2 + $0x58] sm:$0xff] %v2298
      %2327 = vst [vmem:[#allocation2 + $0x60] sm:$0xff] %v2299
      %2328 = vst [vmem:[#allocation2 + $0x68] sm:$0xff] %v2300
      %2329 = vst [vmem:[#allocation2 + $0x70] sm:$0xff] %v2301
      %2330 = vst [vmem:[#allocation2 + $0x78] sm:$0xff] %v2302
      %2331 = vst [vmem:[#allocation2 + $0x80] sm:$0xff] %v2303
      %2332 = vst [vmem:[#allocation2 + $0x88] sm:$0xff] %v2304
      %2333 = vst [vmem:[#allocation2 + $0x90] sm:$0xff] %v2305
      %2334 = vst [vmem:[#allocation2 + $0x98] sm:$0xff] %v2306
      %2335 = vst [vmem:[#allocation2 + $0xa0] sm:$0xff] %v2307
      %2336 = vst [vmem:[#allocation2 + $0xa8] sm:$0xff] %v2308
      %2337 = vst [vmem:[#allocation2 + $0xb0] sm:$0xff] %v2309
      %2338 = vst [vmem:[#allocation2 + $0xb8] sm:$0xff] %v2310
      %2339 = vst [vmem:[#allocation2 + $0xc0] sm:$0xff] %v2311
      %2340 = vst [vmem:[#allocation2 + $0xc8] sm:$0xff] %v2312
      %2341 = vst [vmem:[#allocation2 + $0xd0] sm:$0xff] %v2313
      %2342 = vst [vmem:[#allocation2 + $0xd8] sm:$0xff] %v2314
      %v2343 = vld [vmem:[%s320] sm:$0xf]
      %v2344 = vld [vmem:[%s320 + $0x4] sm:$0xf]
      %v2345 = vld [vmem:[%s320 + $0xc] sm:$0xf]
      %v2346 = vld [vmem:[%s320 + $0x10] sm:$0xf]
      %v2347 = vld [vmem:[%s320 + $0x18] sm:$0xf]
      %v2348 = vld [vmem:[%s320 + $0x1c] sm:$0xf]
      %v2349 = vld [vmem:[%s320 + $0x24] sm:$0xf]
      %v2350 = vld [vmem:[%s320 + $0x28] sm:$0xf]
      %v2351 = vld [vmem:[%s320 + $0x30] sm:$0xf]
      %v2352 = vld [vmem:[%s320 + $0x34] sm:$0xf]
      %v2353 = vld [vmem:[%s320 + $0x3c] sm:$0xf]
      %v2354 = vld [vmem:[%s320 + $0x40] sm:$0xf]
      %v2355 = vld [vmem:[%s320 + $0x8] sm:$0x1]
      %v2356 = vld [vmem:[%s320 + $0x14] sm:$0x1]
      %v2357 = vld [vmem:[%s320 + $0x20] sm:$0x1]
      %v2358 = vld [vmem:[%s320 + $0x2c] sm:$0x1]
      %v2359 = vld [vmem:[%s320 + $0x38] sm:$0x1]
      %v2360 = vld [vmem:[%s320 + $0x44] sm:$0x1]
      %v2361 = vld [vmem:[%s320] sm:$0xe]
      %v2362 = vld [vmem:[%s320 + $0xc] sm:$0xe]
      %v2363 = vld [vmem:[%s320 + $0x18] sm:$0xe]
      %v2364 = vld [vmem:[%s320 + $0x24] sm:$0xe]
      %v2365 = vld [vmem:[%s320 + $0x30] sm:$0xe]
      %v2366 = vld [vmem:[%s320 + $0x3c] sm:$0xe]
      %s2367 = scalar_lea.vmem %s320, 12
      %v2368 = vld [vmem:[%s2367] sm:$0xf]
      %v2369 = vld [vmem:[%s2367 + $0x4] sm:$0xf]
      %v2370 = vld [vmem:[%s2367 + $0xc] sm:$0xf]
      %v2371 = vld [vmem:[%s2367 + $0x10] sm:$0xf]
      %v2372 = vld [vmem:[%s2367 + $0x18] sm:$0xf]
      %v2373 = vld [vmem:[%s2367 + $0x1c] sm:$0xf]
      %v2374 = vld [vmem:[%s2367 + $0x24] sm:$0xf]
      %v2375 = vld [vmem:[%s2367 + $0x28] sm:$0xf]
      %v2376 = vld [vmem:[%s2367 + $0x30] sm:$0xf]
      %v2377 = vld [vmem:[%s2367 + $0x34] sm:$0xf]
      %v2378 = vld [vmem:[%s2367 + $0x3c] sm:$0xf]
      %v2379 = vld [vmem:[%s2367 + $0x40] sm:$0xf]
      %v2380 = vld [vmem:[%s2367 + $0x8] sm:$0x1]
      %v2381 = vld [vmem:[%s2367 + $0x14] sm:$0x1]
      %v2382 = vld [vmem:[%s2367 + $0x20] sm:$0x1]
      %v2383 = vld [vmem:[%s2367 + $0x2c] sm:$0x1]
      %v2384 = vld [vmem:[%s2367 + $0x38] sm:$0x1]
      %v2385 = vld [vmem:[%s2367 + $0x44] sm:$0x1]
      %v2386 = vld [vmem:[%s2367] sm:$0xe]
      %v2387 = vld [vmem:[%s2367 + $0xc] sm:$0xe]
      %v2388 = vld [vmem:[%s2367 + $0x18] sm:$0xe]
      %v2389 = vld [vmem:[%s2367 + $0x24] sm:$0xe]
      %v2390 = vld [vmem:[%s2367 + $0x30] sm:$0xe]
      %v2391 = vld [vmem:[%s2367 + $0x3c] sm:$0xe]
      %s2392 = scalar_lea.vmem %s320, 24
      %v2393 = vld [vmem:[%s2392] sm:$0xf]
      %v2394 = vld [vmem:[%s2392 + $0x4] sm:$0xf]
      %v2395 = vld [vmem:[%s2392 + $0xc] sm:$0xf]
      %v2396 = vld [vmem:[%s2392 + $0x10] sm:$0xf]
      %v2397 = vld [vmem:[%s2392 + $0x18] sm:$0xf]
      %v2398 = vld [vmem:[%s2392 + $0x1c] sm:$0xf]
      %v2399 = vld [vmem:[%s2392 + $0x24] sm:$0xf]
      %v2400 = vld [vmem:[%s2392 + $0x28] sm:$0xf]
      %v2401 = vld [vmem:[%s2392 + $0x30] sm:$0xf]
      %v2402 = vld [vmem:[%s2392 + $0x34] sm:$0xf]
      %v2403 = vld [vmem:[%s2392 + $0x3c] sm:$0xf]
      %v2404 = vld [vmem:[%s2392 + $0x40] sm:$0xf]
      %v2405 = vld [vmem:[%s2392 + $0x8] sm:$0x1]
      %v2406 = vld [vmem:[%s2392 + $0x14] sm:$0x1]
      %v2407 = vld [vmem:[%s2392 + $0x20] sm:$0x1]
      %v2408 = vld [vmem:[%s2392 + $0x2c] sm:$0x1]
      %v2409 = vld [vmem:[%s2392 + $0x38] sm:$0x1]
      %v2410 = vld [vmem:[%s2392 + $0x44] sm:$0x1]
      %v2411 = vld [vmem:[%s2392] sm:$0xe]
      %v2412 = vld [vmem:[%s2392 + $0xc] sm:$0xe]
      %v2413 = vld [vmem:[%s2392 + $0x18] sm:$0xe]
      %v2414 = vld [vmem:[%s2392 + $0x24] sm:$0xe]
      %v2415 = vld [vmem:[%s2392 + $0x30] sm:$0xe]
      %v2416 = vld [vmem:[%s2392 + $0x3c] sm:$0xe]
      %v2429 = vunpack.c.l.b16 %v2343
      %v2430 = vunpack.c.l.b16 %v2344
      %v2431 = vunpack.c.l.b16 %v2345
      %v2432 = vunpack.c.l.b16 %v2346
      %v2433 = vunpack.c.l.b16 %v2347
      %v2434 = vunpack.c.l.b16 %v2348
      %v2435 = vunpack.c.l.b16 %v2349
      %v2436 = vunpack.c.l.b16 %v2350
      %v2437 = vunpack.c.l.b16 %v2351
      %v2438 = vunpack.c.l.b16 %v2352
      %v2439 = vunpack.c.l.b16 %v2353
      %v2440 = vunpack.c.l.b16 %v2354
      %v2441 = vpack.c.b16 %v2430, %v2429
      %v2442 = vpack.c.b16 %v2432, %v2431
      %v2443 = vpack.c.b16 %v2434, %v2433
      %v2444 = vpack.c.b16 %v2436, %v2435
      %v2445 = vpack.c.b16 %v2438, %v2437
      %v2446 = vpack.c.b16 %v2440, %v2439
      %v2453 = vunpack.c.l.b16 %v2355
      %v2454 = vunpack.c.l.b16 %v2356
      %v2455 = vunpack.c.l.b16 %v2357
      %v2456 = vunpack.c.l.b16 %v2358
      %v2457 = vunpack.c.l.b16 %v2359
      %v2458 = vunpack.c.l.b16 %v2360
      %v2459 = vpack.c.b16 %v2453, %v2453
      %v2460 = vpack.c.b16 %v2454, %v2454
      %v2461 = vpack.c.b16 %v2455, %v2455
      %v2462 = vpack.c.b16 %v2456, %v2456
      %v2463 = vpack.c.b16 %v2457, %v2457
      %v2464 = vpack.c.b16 %v2458, %v2458
      %v2466 = vshrl.u32 %v2441, 16
      %v2468 = vshll.u32 %v2441, 16
      %v2470 = vrot.slane %v2468, 1
      %v2471 = vor.u32 %v2466, %v2470
      %v2473 = vshll.u32 %v2459, 16
      %v2475 = vrot.slane %v2473, 1
      %v2476 = vsel %vm609, %v2471, %v2475
      %v2478 = vshrl.u32 %v2442, 16
      %v2480 = vshll.u32 %v2442, 16
      %v2482 = vrot.slane %v2480, 1
      %v2483 = vor.u32 %v2478, %v2482
      %v2485 = vshll.u32 %v2460, 16
      %v2487 = vrot.slane %v2485, 1
      %v2488 = vsel %vm609, %v2483, %v2487
      %v2490 = vshrl.u32 %v2443, 16
      %v2492 = vshll.u32 %v2443, 16
      %v2494 = vrot.slane %v2492, 1
      %v2495 = vor.u32 %v2490, %v2494
      %v2497 = vshll.u32 %v2461, 16
      %v2499 = vrot.slane %v2497, 1
      %v2500 = vsel %vm609, %v2495, %v2499
      %v2502 = vshrl.u32 %v2444, 16
      %v2504 = vshll.u32 %v2444, 16
      %v2506 = vrot.slane %v2504, 1
      %v2507 = vor.u32 %v2502, %v2506
      %v2509 = vshll.u32 %v2462, 16
      %v2511 = vrot.slane %v2509, 1
      %v2512 = vsel %vm609, %v2507, %v2511
      %v2514 = vshrl.u32 %v2445, 16
      %v2516 = vshll.u32 %v2445, 16
      %v2518 = vrot.slane %v2516, 1
      %v2519 = vor.u32 %v2514, %v2518
      %v2521 = vshll.u32 %v2463, 16
      %v2523 = vrot.slane %v2521, 1
      %v2524 = vsel %vm609, %v2519, %v2523
      %v2526 = vshrl.u32 %v2446, 16
      %v2528 = vshll.u32 %v2446, 16
      %v2530 = vrot.slane %v2528, 1
      %v2531 = vor.u32 %v2526, %v2530
      %v2533 = vshll.u32 %v2464, 16
      %v2535 = vrot.slane %v2533, 1
      %v2536 = vsel %vm609, %v2531, %v2535
      %2537 = vrot.lane.b32.xlu0 %v2476, 4
      %v2538 = vpop.permute.xlu0 %2537
      %2539 = vrot.lane.b32.xlu0 %v2488, 4
      %v2540 = vpop.permute.xlu0 %2539
      %2541 = vrot.lane.b32.xlu0 %v2500, 4
      %v2542 = vpop.permute.xlu0 %2541
      %2543 = vrot.lane.b32.xlu0 %v2512, 4
      %v2544 = vpop.permute.xlu0 %2543
      %2545 = vrot.lane.b32.xlu0 %v2524, 4
      %v2546 = vpop.permute.xlu0 %2545
      %2547 = vrot.lane.b32.xlu0 %v2536, 4
      %v2548 = vpop.permute.xlu0 %2547
      %v2555 = vunpack.c.l.b16 %v2361
      %v2556 = vunpack.c.l.b16 %v2362
      %v2557 = vunpack.c.l.b16 %v2363
      %v2558 = vunpack.c.l.b16 %v2364
      %v2559 = vunpack.c.l.b16 %v2365
      %v2560 = vunpack.c.l.b16 %v2366
      %v2561 = vpack.c.b16 %v2430, %v2555
      %v2562 = vpack.c.b16 %v2432, %v2556
      %v2563 = vpack.c.b16 %v2434, %v2557
      %v2564 = vpack.c.b16 %v2436, %v2558
      %v2565 = vpack.c.b16 %v2438, %v2559
      %v2566 = vpack.c.b16 %v2440, %v2560
      %v2567 = vrot.slane %v2561, 1
      %v2568 = vrot.slane %v2459, 1
      %v2569 = vsel %vm848, %v2567, %v2568
      %v2570 = vrot.slane %v2562, 1
      %v2571 = vrot.slane %v2460, 1
      %v2572 = vsel %vm848, %v2570, %v2571
      %v2573 = vrot.slane %v2563, 1
      %v2574 = vrot.slane %v2461, 1
      %v2575 = vsel %vm848, %v2573, %v2574
      %v2576 = vrot.slane %v2564, 1
      %v2577 = vrot.slane %v2462, 1
      %v2578 = vsel %vm848, %v2576, %v2577
      %v2579 = vrot.slane %v2565, 1
      %v2580 = vrot.slane %v2463, 1
      %v2581 = vsel %vm848, %v2579, %v2580
      %v2582 = vrot.slane %v2566, 1
      %v2583 = vrot.slane %v2464, 1
      %v2584 = vsel %vm848, %v2582, %v2583
      %2585 = vrot.lane.b32.xlu0 %v2569, 8
      %v2586 = vpop.permute.xlu0 %2585
      %2587 = vrot.lane.b32.xlu0 %v2572, 8
      %v2588 = vpop.permute.xlu0 %2587
      %2589 = vrot.lane.b32.xlu0 %v2575, 8
      %v2590 = vpop.permute.xlu0 %2589
      %2591 = vrot.lane.b32.xlu0 %v2578, 8
      %v2592 = vpop.permute.xlu0 %2591
      %2593 = vrot.lane.b32.xlu0 %v2581, 8
      %v2594 = vpop.permute.xlu0 %2593
      %2595 = vrot.lane.b32.xlu0 %v2584, 8
      %v2596 = vpop.permute.xlu0 %2595
      %v2609 = vunpack.c.l.b16 %v2368
      %v2610 = vunpack.c.l.b16 %v2369
      %v2611 = vunpack.c.l.b16 %v2370
      %v2612 = vunpack.c.l.b16 %v2371
      %v2613 = vunpack.c.l.b16 %v2372
      %v2614 = vunpack.c.l.b16 %v2373
      %v2615 = vunpack.c.l.b16 %v2374
      %v2616 = vunpack.c.l.b16 %v2375
      %v2617 = vunpack.c.l.b16 %v2376
      %v2618 = vunpack.c.l.b16 %v2377
      %v2619 = vunpack.c.l.b16 %v2378
      %v2620 = vunpack.c.l.b16 %v2379
      %v2621 = vpack.c.b16 %v2610, %v2609
      %v2622 = vpack.c.b16 %v2612, %v2611
      %v2623 = vpack.c.b16 %v2614, %v2613
      %v2624 = vpack.c.b16 %v2616, %v2615
      %v2625 = vpack.c.b16 %v2618, %v2617
      %v2626 = vpack.c.b16 %v2620, %v2619
      %2627 = vrot.lane.b32.xlu0 %v2621, 12
      %v2628 = vpop.permute.xlu0 %2627
      %2629 = vrot.lane.b32.xlu0 %v2622, 12
      %v2630 = vpop.permute.xlu0 %2629
      %2631 = vrot.lane.b32.xlu0 %v2623, 12
      %v2632 = vpop.permute.xlu0 %2631
      %2633 = vrot.lane.b32.xlu0 %v2624, 12
      %v2634 = vpop.permute.xlu0 %2633
      %2635 = vrot.lane.b32.xlu0 %v2625, 12
      %v2636 = vpop.permute.xlu0 %2635
      %2637 = vrot.lane.b32.xlu0 %v2626, 12
      %v2638 = vpop.permute.xlu0 %2637
      %v2645 = vunpack.c.l.b16 %v2380
      %v2646 = vunpack.c.l.b16 %v2381
      %v2647 = vunpack.c.l.b16 %v2382
      %v2648 = vunpack.c.l.b16 %v2383
      %v2649 = vunpack.c.l.b16 %v2384
      %v2650 = vunpack.c.l.b16 %v2385
      %v2651 = vpack.c.b16 %v2645, %v2645
      %v2652 = vpack.c.b16 %v2646, %v2646
      %v2653 = vpack.c.b16 %v2647, %v2647
      %v2654 = vpack.c.b16 %v2648, %v2648
      %v2655 = vpack.c.b16 %v2649, %v2649
      %v2656 = vpack.c.b16 %v2650, %v2650
      %v2658 = vshrl.u32 %v2621, 16
      %v2660 = vshll.u32 %v2621, 16
      %v2662 = vrot.slane %v2660, 1
      %v2663 = vor.u32 %v2658, %v2662
      %v2665 = vshll.u32 %v2651, 16
      %v2667 = vrot.slane %v2665, 1
      %v2668 = vsel %vm609, %v2663, %v2667
      %v2670 = vshrl.u32 %v2622, 16
      %v2672 = vshll.u32 %v2622, 16
      %v2674 = vrot.slane %v2672, 1
      %v2675 = vor.u32 %v2670, %v2674
      %v2677 = vshll.u32 %v2652, 16
      %v2679 = vrot.slane %v2677, 1
      %v2680 = vsel %vm609, %v2675, %v2679
      %v2682 = vshrl.u32 %v2623, 16
      %v2684 = vshll.u32 %v2623, 16
      %v2686 = vrot.slane %v2684, 1
      %v2687 = vor.u32 %v2682, %v2686
      %v2689 = vshll.u32 %v2653, 16
      %v2691 = vrot.slane %v2689, 1
      %v2692 = vsel %vm609, %v2687, %v2691
      %v2694 = vshrl.u32 %v2624, 16
      %v2696 = vshll.u32 %v2624, 16
      %v2698 = vrot.slane %v2696, 1
      %v2699 = vor.u32 %v2694, %v2698
      %v2701 = vshll.u32 %v2654, 16
      %v2703 = vrot.slane %v2701, 1
      %v2704 = vsel %vm609, %v2699, %v2703
      %v2706 = vshrl.u32 %v2625, 16
      %v2708 = vshll.u32 %v2625, 16
      %v2710 = vrot.slane %v2708, 1
      %v2711 = vor.u32 %v2706, %v2710
      %v2713 = vshll.u32 %v2655, 16
      %v2715 = vrot.slane %v2713, 1
      %v2716 = vsel %vm609, %v2711, %v2715
      %v2718 = vshrl.u32 %v2626, 16
      %v2720 = vshll.u32 %v2626, 16
      %v2722 = vrot.slane %v2720, 1
      %v2723 = vor.u32 %v2718, %v2722
      %v2725 = vshll.u32 %v2656, 16
      %v2727 = vrot.slane %v2725, 1
      %v2728 = vsel %vm609, %v2723, %v2727
      %2729 = vrot.lane.b32.xlu0 %v2668, 16
      %v2730 = vpop.permute.xlu0 %2729
      %2731 = vrot.lane.b32.xlu0 %v2680, 16
      %v2732 = vpop.permute.xlu0 %2731
      %2733 = vrot.lane.b32.xlu0 %v2692, 16
      %v2734 = vpop.permute.xlu0 %2733
      %2735 = vrot.lane.b32.xlu0 %v2704, 16
      %v2736 = vpop.permute.xlu0 %2735
      %2737 = vrot.lane.b32.xlu0 %v2716, 16
      %v2738 = vpop.permute.xlu0 %2737
      %2739 = vrot.lane.b32.xlu0 %v2728, 16
      %v2740 = vpop.permute.xlu0 %2739
      %v2747 = vunpack.c.l.b16 %v2386
      %v2748 = vunpack.c.l.b16 %v2387
      %v2749 = vunpack.c.l.b16 %v2388
      %v2750 = vunpack.c.l.b16 %v2389
      %v2751 = vunpack.c.l.b16 %v2390
      %v2752 = vunpack.c.l.b16 %v2391
      %v2753 = vpack.c.b16 %v2610, %v2747
      %v2754 = vpack.c.b16 %v2612, %v2748
      %v2755 = vpack.c.b16 %v2614, %v2749
      %v2756 = vpack.c.b16 %v2616, %v2750
      %v2757 = vpack.c.b16 %v2618, %v2751
      %v2758 = vpack.c.b16 %v2620, %v2752
      %v2759 = vrot.slane %v2753, 1
      %v2760 = vrot.slane %v2651, 1
      %v2761 = vsel %vm848, %v2759, %v2760
      %v2762 = vrot.slane %v2754, 1
      %v2763 = vrot.slane %v2652, 1
      %v2764 = vsel %vm848, %v2762, %v2763
      %v2765 = vrot.slane %v2755, 1
      %v2766 = vrot.slane %v2653, 1
      %v2767 = vsel %vm848, %v2765, %v2766
      %v2768 = vrot.slane %v2756, 1
      %v2769 = vrot.slane %v2654, 1
      %v2770 = vsel %vm848, %v2768, %v2769
      %v2771 = vrot.slane %v2757, 1
      %v2772 = vrot.slane %v2655, 1
      %v2773 = vsel %vm848, %v2771, %v2772
      %v2774 = vrot.slane %v2758, 1
      %v2775 = vrot.slane %v2656, 1
      %v2776 = vsel %vm848, %v2774, %v2775
      %2777 = vrot.lane.b32.xlu0 %v2761, 20
      %v2778 = vpop.permute.xlu0 %2777
      %2779 = vrot.lane.b32.xlu0 %v2764, 20
      %v2780 = vpop.permute.xlu0 %2779
      %2781 = vrot.lane.b32.xlu0 %v2767, 20
      %v2782 = vpop.permute.xlu0 %2781
      %2783 = vrot.lane.b32.xlu0 %v2770, 20
      %v2784 = vpop.permute.xlu0 %2783
      %2785 = vrot.lane.b32.xlu0 %v2773, 20
      %v2786 = vpop.permute.xlu0 %2785
      %2787 = vrot.lane.b32.xlu0 %v2776, 20
      %v2788 = vpop.permute.xlu0 %2787
      %v2801 = vunpack.c.l.b16 %v2393
      %v2802 = vunpack.c.l.b16 %v2394
      %v2803 = vunpack.c.l.b16 %v2395
      %v2804 = vunpack.c.l.b16 %v2396
      %v2805 = vunpack.c.l.b16 %v2397
      %v2806 = vunpack.c.l.b16 %v2398
      %v2807 = vunpack.c.l.b16 %v2399
      %v2808 = vunpack.c.l.b16 %v2400
      %v2809 = vunpack.c.l.b16 %v2401
      %v2810 = vunpack.c.l.b16 %v2402
      %v2811 = vunpack.c.l.b16 %v2403
      %v2812 = vunpack.c.l.b16 %v2404
      %v2813 = vpack.c.b16 %v2802, %v2801
      %v2814 = vpack.c.b16 %v2804, %v2803
      %v2815 = vpack.c.b16 %v2806, %v2805
      %v2816 = vpack.c.b16 %v2808, %v2807
      %v2817 = vpack.c.b16 %v2810, %v2809
      %v2818 = vpack.c.b16 %v2812, %v2811
      %2819 = vrot.lane.b32.xlu0 %v2813, 24
      %v2820 = vpop.permute.xlu0 %2819
      %2821 = vrot.lane.b32.xlu0 %v2814, 24
      %v2822 = vpop.permute.xlu0 %2821
      %2823 = vrot.lane.b32.xlu0 %v2815, 24
      %v2824 = vpop.permute.xlu0 %2823
      %2825 = vrot.lane.b32.xlu0 %v2816, 24
      %v2826 = vpop.permute.xlu0 %2825
      %2827 = vrot.lane.b32.xlu0 %v2817, 24
      %v2828 = vpop.permute.xlu0 %2827
      %2829 = vrot.lane.b32.xlu0 %v2818, 24
      %v2830 = vpop.permute.xlu0 %2829
      %v2837 = vunpack.c.l.b16 %v2405
      %v2838 = vunpack.c.l.b16 %v2406
      %v2839 = vunpack.c.l.b16 %v2407
      %v2840 = vunpack.c.l.b16 %v2408
      %v2841 = vunpack.c.l.b16 %v2409
      %v2842 = vunpack.c.l.b16 %v2410
      %v2843 = vpack.c.b16 %v2837, %v2837
      %v2844 = vpack.c.b16 %v2838, %v2838
      %v2845 = vpack.c.b16 %v2839, %v2839
      %v2846 = vpack.c.b16 %v2840, %v2840
      %v2847 = vpack.c.b16 %v2841, %v2841
      %v2848 = vpack.c.b16 %v2842, %v2842
      %v2850 = vshrl.u32 %v2813, 16
      %v2852 = vshll.u32 %v2813, 16
      %v2854 = vrot.slane %v2852, 1
      %v2855 = vor.u32 %v2850, %v2854
      %v2857 = vshll.u32 %v2843, 16
      %v2859 = vrot.slane %v2857, 1
      %v2860 = vsel %vm609, %v2855, %v2859
      %v2862 = vshrl.u32 %v2814, 16
      %v2864 = vshll.u32 %v2814, 16
      %v2866 = vrot.slane %v2864, 1
      %v2867 = vor.u32 %v2862, %v2866
      %v2869 = vshll.u32 %v2844, 16
      %v2871 = vrot.slane %v2869, 1
      %v2872 = vsel %vm609, %v2867, %v2871
      %v2874 = vshrl.u32 %v2815, 16
      %v2876 = vshll.u32 %v2815, 16
      %v2878 = vrot.slane %v2876, 1
      %v2879 = vor.u32 %v2874, %v2878
      %v2881 = vshll.u32 %v2845, 16
      %v2883 = vrot.slane %v2881, 1
      %v2884 = vsel %vm609, %v2879, %v2883
      %v2886 = vshrl.u32 %v2816, 16
      %v2888 = vshll.u32 %v2816, 16
      %v2890 = vrot.slane %v2888, 1
      %v2891 = vor.u32 %v2886, %v2890
      %v2893 = vshll.u32 %v2846, 16
      %v2895 = vrot.slane %v2893, 1
      %v2896 = vsel %vm609, %v2891, %v2895
      %v2898 = vshrl.u32 %v2817, 16
      %v2900 = vshll.u32 %v2817, 16
      %v2902 = vrot.slane %v2900, 1
      %v2903 = vor.u32 %v2898, %v2902
      %v2905 = vshll.u32 %v2847, 16
      %v2907 = vrot.slane %v2905, 1
      %v2908 = vsel %vm609, %v2903, %v2907
      %v2910 = vshrl.u32 %v2818, 16
      %v2912 = vshll.u32 %v2818, 16
      %v2914 = vrot.slane %v2912, 1
      %v2915 = vor.u32 %v2910, %v2914
      %v2917 = vshll.u32 %v2848, 16
      %v2919 = vrot.slane %v2917, 1
      %v2920 = vsel %vm609, %v2915, %v2919
      %2921 = vrot.lane.b32.xlu0 %v2860, 28
      %v2922 = vpop.permute.xlu0 %2921
      %2923 = vrot.lane.b32.xlu0 %v2872, 28
      %v2924 = vpop.permute.xlu0 %2923
      %2925 = vrot.lane.b32.xlu0 %v2884, 28
      %v2926 = vpop.permute.xlu0 %2925
      %2927 = vrot.lane.b32.xlu0 %v2896, 28
      %v2928 = vpop.permute.xlu0 %2927
      %2929 = vrot.lane.b32.xlu0 %v2908, 28
      %v2930 = vpop.permute.xlu0 %2929
      %2931 = vrot.lane.b32.xlu0 %v2920, 28
      %v2932 = vpop.permute.xlu0 %2931
      %v2939 = vunpack.c.l.b16 %v2411
      %v2940 = vunpack.c.l.b16 %v2412
      %v2941 = vunpack.c.l.b16 %v2413
      %v2942 = vunpack.c.l.b16 %v2414
      %v2943 = vunpack.c.l.b16 %v2415
      %v2944 = vunpack.c.l.b16 %v2416
      %v2945 = vpack.c.b16 %v2802, %v2939
      %v2946 = vpack.c.b16 %v2804, %v2940
      %v2947 = vpack.c.b16 %v2806, %v2941
      %v2948 = vpack.c.b16 %v2808, %v2942
      %v2949 = vpack.c.b16 %v2810, %v2943
      %v2950 = vpack.c.b16 %v2812, %v2944
      %v2951 = vrot.slane %v2945, 1
      %v2952 = vrot.slane %v2843, 1
      %v2953 = vsel %vm848, %v2951, %v2952
      %v2954 = vrot.slane %v2946, 1
      %v2955 = vrot.slane %v2844, 1
      %v2956 = vsel %vm848, %v2954, %v2955
      %v2957 = vrot.slane %v2947, 1
      %v2958 = vrot.slane %v2845, 1
      %v2959 = vsel %vm848, %v2957, %v2958
      %v2960 = vrot.slane %v2948, 1
      %v2961 = vrot.slane %v2846, 1
      %v2962 = vsel %vm848, %v2960, %v2961
      %v2963 = vrot.slane %v2949, 1
      %v2964 = vrot.slane %v2847, 1
      %v2965 = vsel %vm848, %v2963, %v2964
      %v2966 = vrot.slane %v2950, 1
      %v2967 = vrot.slane %v2848, 1
      %v2968 = vsel %vm848, %v2966, %v2967
      %2969 = vrot.lane.b32.xlu0 %v2953, 32
      %v2970 = vpop.permute.xlu0 %2969
      %2971 = vrot.lane.b32.xlu0 %v2956, 32
      %v2972 = vpop.permute.xlu0 %2971
      %2973 = vrot.lane.b32.xlu0 %v2959, 32
      %v2974 = vpop.permute.xlu0 %2973
      %2975 = vrot.lane.b32.xlu0 %v2962, 32
      %v2976 = vpop.permute.xlu0 %2975
      %2977 = vrot.lane.b32.xlu0 %v2965, 32
      %v2978 = vpop.permute.xlu0 %2977
      %2979 = vrot.lane.b32.xlu0 %v2968, 32
      %v2980 = vpop.permute.xlu0 %2979
      %v2982 = vsel %vm1815, %v2441, %v2538
      %v2984 = vsel %vm1815, %v2442, %v2540
      %v2986 = vsel %vm1815, %v2443, %v2542
      %v2988 = vsel %vm1815, %v2444, %v2544
      %v2990 = vsel %vm1815, %v2445, %v2546
      %v2992 = vsel %vm1815, %v2446, %v2548
      %v2994 = vsel %vm1844, %v2982, %v2586
      %v2996 = vsel %vm1844, %v2984, %v2588
      %v2998 = vsel %vm1844, %v2986, %v2590
      %v3000 = vsel %vm1844, %v2988, %v2592
      %v3002 = vsel %vm1844, %v2990, %v2594
      %v3004 = vsel %vm1844, %v2992, %v2596
      %v3006 = vsel %vm1873, %v2994, %v2628
      %v3008 = vsel %vm1873, %v2996, %v2630
      %v3010 = vsel %vm1873, %v2998, %v2632
      %v3012 = vsel %vm1873, %v3000, %v2634
      %v3014 = vsel %vm1873, %v3002, %v2636
      %v3016 = vsel %vm1873, %v3004, %v2638
      %v3018 = vsel %vm1902, %v3006, %v2730
      %v3020 = vsel %vm1902, %v3008, %v2732
      %v3022 = vsel %vm1902, %v3010, %v2734
      %v3024 = vsel %vm1902, %v3012, %v2736
      %v3026 = vsel %vm1902, %v3014, %v2738
      %v3028 = vsel %vm1902, %v3016, %v2740
      %v3030 = vsel %vm1931, %v3018, %v2778
      %v3032 = vsel %vm1931, %v3020, %v2780
      %v3034 = vsel %vm1931, %v3022, %v2782
      %v3036 = vsel %vm1931, %v3024, %v2784
      %v3038 = vsel %vm1931, %v3026, %v2786
      %v3040 = vsel %vm1931, %v3028, %v2788
      %v3042 = vsel %vm1960, %v3030, %v2820
      %v3044 = vsel %vm1960, %v3032, %v2822
      %v3046 = vsel %vm1960, %v3034, %v2824
      %v3048 = vsel %vm1960, %v3036, %v2826
      %v3050 = vsel %vm1960, %v3038, %v2828
      %v3052 = vsel %vm1960, %v3040, %v2830
      %v3054 = vsel %vm1989, %v3042, %v2922
      %v3056 = vsel %vm1989, %v3044, %v2924
      %v3058 = vsel %vm1989, %v3046, %v2926
      %v3060 = vsel %vm1989, %v3048, %v2928
      %v3062 = vsel %vm1989, %v3050, %v2930
      %v3064 = vsel %vm1989, %v3052, %v2932
      %v3066 = vsel %vm2018, %v3054, %v2970
      %v3068 = vsel %vm2018, %v3056, %v2972
      %v3070 = vsel %vm2018, %v3058, %v2974
      %v3072 = vsel %vm2018, %v3060, %v2976
      %v3074 = vsel %vm2018, %v3062, %v2978
      %v3076 = vsel %vm2018, %v3064, %v2980
      %v3077 = vld [vmem:[%s3] sm:$0xf]
      %v3078 = vld [vmem:[%s3 + $0x4] sm:$0xf]
      %v3079 = vld [vmem:[%s3 + $0x8] sm:$0xf]
      %v3080 = vld [vmem:[%s3 + $0xc] sm:$0xf]
      %v3081 = vld [vmem:[%s3 + $0x10] sm:$0x3]
      %v3087 = vunpack.c.l.b16 %v3077
      %v3088 = vunpack.c.l.b16 %v3078
      %v3089 = vunpack.c.l.b16 %v3079
      %v3090 = vunpack.c.l.b16 %v3080
      %v3091 = vunpack.c.l.b16 %v3081
      %v3092 = vpack.c.b16 %v3088, %v3087
      %v3093 = vpack.c.b16 %v3090, %v3089
      %v3094 = vpack.c.b16 %v3091, %v3091
      %v3097 = vsel %vm2067, %v3066, 0
      %v3099 = vsel %vm2067, %v3068, 0
      %v3101 = vsel %vm2067, %v3070, 0
      %v3103 = vsel %vm2067, %v3072, 0
      %v3105 = vsel %vm2067, %v3074, 0
      %v3107 = vsel %vm2067, %v3076, 0
      %v3110 = vsel %vm2096, %v3094, 0
      %3112 = vmatprep.subr.bf16.mxu0 0
      %3113 = vmatpush1.bf16.msra.mxu0 %v3092
      %3114 = vmatprep.subr.bf16.mxu0 0
      %3115 = vmatpush1.bf16.msra.mxu0 %v3093
      %3116 = vmatprep.subr.bf16.mxu0 0
      %3117 = vmatpush1.bf16.msra.mxu0 %v3110
      %3118 = vmatprep.subr.bf16.mxu0 0
      %3119 = vmatpush1.bf16.msra.mxu0 0
      %3120 = vmatprep.subr.bf16.mxu0 0
      %3121 = vmatpush1.bf16.msra.mxu0 0
      %3122 = vmatprep.subr.bf16.mxu0 0
      %3123 = vmatpush1.bf16.msra.mxu0 0
      %3124 = vmatprep.subr.bf16.mxu0 0
      %3125 = vmatpush1.bf16.msra.mxu0 0
      %3126 = vmatprep.subr.bf16.mxu0 0
      %3127 = vmatpush1.bf16.msra.mxu0 0
      %3128 = vmatprep.subr.bf16.mxu0 0
      %3129 = vmatpush1.bf16.msra.mxu0 0
      %3130 = vmatprep.subr.bf16.mxu0 0
      %3131 = vmatpush1.bf16.msra.mxu0 0
      %3132 = vmatprep.subr.bf16.mxu0 0
      %3133 = vmatpush1.bf16.msra.mxu0 0
      %3134 = vmatprep.subr.bf16.mxu0 0
      %3135 = vmatpush1.bf16.msra.mxu0 0
      %3136 = vmatprep.subr.bf16.mxu0 0
      %3137 = vmatpush1.bf16.msra.mxu0 0
      %3138 = vmatprep.subr.bf16.mxu0 0
      %3139 = vmatpush1.bf16.msra.mxu0 0
      %3140 = vmatprep.subr.bf16.mxu0 0
      %3141 = vmatpush1.bf16.msra.mxu0 0
      %3142 = vmatprep.subr.bf16.mxu0 0
      %3143 = vmatpush1.bf16.msra.mxu0 0
      %3144 = vmatprep.mubr.bf16.mxu0 0
      %3145 = vmatmul.mubr.bf16.gmra.mrb[0].mxu0 %v3097
      %v3146 = vpop.f32.mrb[0].mxu0
      %v3147 = vadd.f32 0.0, %v3146
      %v3148 = vpop.f32.mrb[0].mxu0
      %v3149 = vpop.f32.mrb[0].mxu0
      %v3150 = vadd.f32 0.0, %v3149
      %v3151 = vpop.f32.mrb[0].mxu0
      %3152 = vmatprep.mubr.bf16.mxu0 0
      %3153 = vmatmul.mubr.bf16.gmra.mrb[0].mxu0 %v3099
      %v3154 = vpop.f32.mrb[0].mxu0
      %v3155 = vadd.f32 0.0, %v3154
      %v3156 = vpop.f32.mrb[0].mxu0
      %v3157 = vpop.f32.mrb[0].mxu0
      %v3158 = vadd.f32 0.0, %v3157
      %v3159 = vpop.f32.mrb[0].mxu0
      %3160 = vmatprep.mubr.bf16.mxu0 0
      %3161 = vmatmul.mubr.bf16.gmra.mrb[0].mxu0 %v3101
      %v3162 = vpop.f32.mrb[0].mxu0
      %v3163 = vadd.f32 0.0, %v3162
      %v3164 = vpop.f32.mrb[0].mxu0
      %v3165 = vpop.f32.mrb[0].mxu0
      %v3166 = vadd.f32 0.0, %v3165
      %v3167 = vpop.f32.mrb[0].mxu0
      %3168 = vmatprep.mubr.bf16.mxu0 0
      %3169 = vmatmul.mubr.bf16.gmra.mrb[0].mxu0 %v3103
      %v3170 = vpop.f32.mrb[0].mxu0
      %v3171 = vadd.f32 0.0, %v3170
      %v3172 = vpop.f32.mrb[0].mxu0
      %v3173 = vpop.f32.mrb[0].mxu0
      %v3174 = vadd.f32 0.0, %v3173
      %v3175 = vpop.f32.mrb[0].mxu0
      %3176 = vmatprep.mubr.bf16.mxu0 0
      %3177 = vmatmul.mubr.bf16.gmra.mrb[0].mxu0 %v3105
      %v3178 = vpop.f32.mrb[0].mxu0
      %v3179 = vadd.f32 0.0, %v3178
      %v3180 = vpop.f32.mrb[0].mxu0
      %v3181 = vpop.f32.mrb[0].mxu0
      %v3182 = vadd.f32 0.0, %v3181
      %v3183 = vpop.f32.mrb[0].mxu0
      %3184 = vmatprep.mubr.bf16.mxu0 0
      %3185 = vmatmul.mubr.bf16.gmra.mrb[0].mxu0 %v3107
      %v3186 = vpop.f32.mrb[0].mxu0
      %v3187 = vadd.f32 0.0, %v3186
      %v3188 = vpop.f32.mrb[0].mxu0
      %v3189 = vpop.f32.mrb[0].mxu0
      %v3190 = vadd.f32 0.0, %v3189
      %v3191 = vpop.f32.mrb[0].mxu0
      %3192 = vdwg.mxu0
      %v3193 = vld [vmem:[%s6] sm:$0x1]
      %v3195 = vlaneseq
      %v3196 = vshrl.u32 %v3195, 7
      %v3197 = vsub.s32 0, %v3196
      %v3198 = vrot.slane %v3193, %v3197
      %v3200 = vmul.f32 %v3147, %v3198
      %v3201 = vmul.f32 %v3150, %v3198
      %v3202 = vmul.f32 %v3155, %v3198
      %v3203 = vmul.f32 %v3158, %v3198
      %v3204 = vmul.f32 %v3163, %v3198
      %v3205 = vmul.f32 %v3166, %v3198
      %v3206 = vmul.f32 %v3171, %v3198
      %v3207 = vmul.f32 %v3174, %v3198
      %v3208 = vmul.f32 %v3179, %v3198
      %v3209 = vmul.f32 %v3182, %v3198
      %v3210 = vmul.f32 %v3187, %v3198
      %v3211 = vmul.f32 %v3190, %v3198
      %v3212 = vld [vmem:[%s7] sm:$0x1]
      %v3214 = vlaneseq
      %v3215 = vshrl.u32 %v3214, 7
      %v3216 = vsub.s32 0, %v3215
      %v3217 = vrot.slane %v3212, %v3216
      %v3219 = vadd.f32 %v3200, %v3217
      %v3220 = vadd.f32 %v3201, %v3217
      %v3221 = vadd.f32 %v3202, %v3217
      %v3222 = vadd.f32 %v3203, %v3217
      %v3223 = vadd.f32 %v3204, %v3217
      %v3224 = vadd.f32 %v3205, %v3217
      %v3225 = vadd.f32 %v3206, %v3217
      %v3226 = vadd.f32 %v3207, %v3217
      %v3227 = vadd.f32 %v3208, %v3217
      %v3228 = vadd.f32 %v3209, %v3217
      %v3229 = vadd.f32 %v3210, %v3217
      %v3230 = vadd.f32 %v3211, %v3217
      %3231 = vst [vmem:[#allocation3] sm:$0xff] %v3219
      %3232 = vst [vmem:[#allocation3 + $0x8] sm:$0xff] %v3220
      %3233 = vst [vmem:[#allocation3 + $0x10] sm:$0xff] %v3221
      %3234 = vst [vmem:[#allocation3 + $0x18] sm:$0xff] %v3222
      %3235 = vst [vmem:[#allocation3 + $0x20] sm:$0xff] %v3223
      %3236 = vst [vmem:[#allocation3 + $0x28] sm:$0xff] %v3224
      %3237 = vst [vmem:[#allocation3 + $0x30] sm:$0xff] %v3225
      %3238 = vst [vmem:[#allocation3 + $0x38] sm:$0xff] %v3226
      %3239 = vst [vmem:[#allocation3 + $0x40] sm:$0xff] %v3227
      %3240 = vst [vmem:[#allocation3 + $0x48] sm:$0xff] %v3228
      %3241 = vst [vmem:[#allocation3 + $0x50] sm:$0xff] %v3229
      %3242 = vst [vmem:[#allocation3 + $0x58] sm:$0xff] %v3230
      %v3243 = vld [vmem:[#allocation2] sm:$0xff]
      %v3244 = vld [vmem:[#allocation2 + $0x8] sm:$0x3f]
      %v3245 = vld [vmem:[#allocation3] sm:$0x3f]
      %v3246 = vlaneseq
      %v3247 = vshrl.u32 %v3246, 7
      %v3248 = vsub.s32 0, %v3247
      %v3249 = vrot.slane %v3245, %v3248
      %v3250 = vmul.f32 %v3243, %v3249
      %v3251 = vmul.f32 %v3244, %v3249
      %v3252 = vadd.f32 %v3250, 0.0
      %v3253 = vadd.f32 %v3251, 0.0
      %v3254 = vlaneseq
      %v3255 = vshrl.u32 %v3254, 7
      %v3256 = vsub.s32 1, %v3255
      %v3257 = vrot.slane %v3245, %v3256
      %v3258 = vmul.f32 %v3243, %v3257
      %v3259 = vmul.f32 %v3244, %v3257
      %v3260 = vadd.f32 %v3258, 0.0
      %v3261 = vadd.f32 %v3259, 0.0
      %v3262 = vlaneseq
      %v3263 = vshrl.u32 %v3262, 7
      %v3264 = vsub.s32 2, %v3263
      %v3265 = vrot.slane %v3245, %v3264
      %v3266 = vmul.f32 %v3243, %v3265
      %v3267 = vmul.f32 %v3244, %v3265
      %vm3270 = vcmask 1045504
      %v3271 = vrot.slane %v3266, 2
      %v3272 = vrot.slane %v3267, 2
      %v3273 = vsel %vm3270, %v3271, %v3272
      %v3276 = vadd.f32 %v3252, %v3273
      %v3277 = vadd.f32 %v3253, %v3272
      %v3278 = vlaneseq
      %v3279 = vshrl.u32 %v3278, 7
      %v3280 = vsub.s32 3, %v3279
      %v3281 = vrot.slane %v3245, %v3280
      %v3282 = vmul.f32 %v3243, %v3281
      %v3283 = vmul.f32 %v3244, %v3281
      %v3286 = vrot.slane %v3282, 2
      %v3287 = vrot.slane %v3283, 2
      %v3288 = vsel %vm3270, %v3286, %v3287
      %v3291 = vadd.f32 %v3260, %v3288
      %v3292 = vadd.f32 %v3261, %v3287
      %v3293 = vlaneseq
      %v3294 = vshrl.u32 %v3293, 7
      %v3295 = vsub.s32 4, %v3294
      %v3296 = vrot.slane %v3245, %v3295
      %v3297 = vmul.f32 %v3243, %v3296
      %v3298 = vmul.f32 %v3244, %v3296
      %vm3301 = vcmask 1043456
      %v3302 = vrot.slane %v3297, 4
      %v3303 = vrot.slane %v3298, 4
      %v3304 = vsel %vm3301, %v3302, %v3303
      %v3307 = vadd.f32 %v3276, %v3304
      %v3308 = vadd.f32 %v3277, %v3303
      %v3309 = vlaneseq
      %v3310 = vshrl.u32 %v3309, 7
      %v3311 = vsub.s32 5, %v3310
      %v3312 = vrot.slane %v3245, %v3311
      %v3313 = vmul.f32 %v3243, %v3312
      %v3314 = vmul.f32 %v3244, %v3312
      %v3317 = vrot.slane %v3313, 4
      %v3318 = vrot.slane %v3314, 4
      %v3319 = vsel %vm3301, %v3317, %v3318
      %v3322 = vadd.f32 %v3291, %v3319
      %v3323 = vadd.f32 %v3292, %v3318
      %v3324 = vld [vmem:[#allocation2 + $0x10] sm:$0xff]
      %v3325 = vld [vmem:[#allocation2 + $0x18] sm:$0x3f]
      %v3326 = vld [vmem:[#allocation3 + $0x10] sm:$0x3f]
      %v3327 = vlaneseq
      %v3328 = vshrl.u32 %v3327, 7
      %v3329 = vsub.s32 0, %v3328
      %v3330 = vrot.slane %v3326, %v3329
      %v3331 = vmul.f32 %v3324, %v3330
      %v3332 = vmul.f32 %v3325, %v3330
      %v3333 = vadd.f32 %v3307, %v3331
      %v3334 = vadd.f32 %v3308, %v3332
      %v3335 = vlaneseq
      %v3336 = vshrl.u32 %v3335, 7
      %v3337 = vsub.s32 1, %v3336
      %v3338 = vrot.slane %v3326, %v3337
      %v3339 = vmul.f32 %v3324, %v3338
      %v3340 = vmul.f32 %v3325, %v3338
      %v3341 = vadd.f32 %v3322, %v3339
      %v3342 = vadd.f32 %v3323, %v3340
      %v3343 = vlaneseq
      %v3344 = vshrl.u32 %v3343, 7
      %v3345 = vsub.s32 2, %v3344
      %v3346 = vrot.slane %v3326, %v3345
      %v3347 = vmul.f32 %v3324, %v3346
      %v3348 = vmul.f32 %v3325, %v3346
      %v3351 = vrot.slane %v3347, 2
      %v3352 = vrot.slane %v3348, 2
      %v3353 = vsel %vm3270, %v3351, %v3352
      %v3356 = vadd.f32 %v3333, %v3353
      %v3357 = vadd.f32 %v3334, %v3352
      %v3358 = vlaneseq
      %v3359 = vshrl.u32 %v3358, 7
      %v3360 = vsub.s32 3, %v3359
      %v3361 = vrot.slane %v3326, %v3360
      %v3362 = vmul.f32 %v3324, %v3361
      %v3363 = vmul.f32 %v3325, %v3361
      %v3366 = vrot.slane %v3362, 2
      %v3367 = vrot.slane %v3363, 2
      %v3368 = vsel %vm3270, %v3366, %v3367
      %v3371 = vadd.f32 %v3341, %v3368
      %v3372 = vadd.f32 %v3342, %v3367
      %v3373 = vlaneseq
      %v3374 = vshrl.u32 %v3373, 7
      %v3375 = vsub.s32 4, %v3374
      %v3376 = vrot.slane %v3326, %v3375
      %v3377 = vmul.f32 %v3324, %v3376
      %v3378 = vmul.f32 %v3325, %v3376
      %v3381 = vrot.slane %v3377, 4
      %v3382 = vrot.slane %v3378, 4
      %v3383 = vsel %vm3301, %v3381, %v3382
      %v3386 = vadd.f32 %v3356, %v3383
      %v3387 = vadd.f32 %v3357, %v3382
      %v3388 = vlaneseq
      %v3389 = vshrl.u32 %v3388, 7
      %v3390 = vsub.s32 5, %v3389
      %v3391 = vrot.slane %v3326, %v3390
      %v3392 = vmul.f32 %v3324, %v3391
      %v3393 = vmul.f32 %v3325, %v3391
      %v3396 = vrot.slane %v3392, 4
      %v3397 = vrot.slane %v3393, 4
      %v3398 = vsel %vm3301, %v3396, %v3397
      %v3401 = vadd.f32 %v3371, %v3398
      %v3402 = vadd.f32 %v3372, %v3397
      %v3403 = vld [vmem:[#allocation2 + $0x20] sm:$0xff]
      %v3404 = vld [vmem:[#allocation2 + $0x28] sm:$0x3f]
      %v3405 = vld [vmem:[#allocation3 + $0x20] sm:$0x3f]
      %v3406 = vlaneseq
      %v3407 = vshrl.u32 %v3406, 7
      %v3408 = vsub.s32 0, %v3407
      %v3409 = vrot.slane %v3405, %v3408
      %v3410 = vmul.f32 %v3403, %v3409
      %v3411 = vmul.f32 %v3404, %v3409
      %v3412 = vadd.f32 %v3386, %v3410
      %v3413 = vadd.f32 %v3387, %v3411
      %v3414 = vlaneseq
      %v3415 = vshrl.u32 %v3414, 7
      %v3416 = vsub.s32 1, %v3415
      %v3417 = vrot.slane %v3405, %v3416
      %v3418 = vmul.f32 %v3403, %v3417
      %v3419 = vmul.f32 %v3404, %v3417
      %v3420 = vadd.f32 %v3401, %v3418
      %v3421 = vadd.f32 %v3402, %v3419
      %v3422 = vlaneseq
      %v3423 = vshrl.u32 %v3422, 7
      %v3424 = vsub.s32 2, %v3423
      %v3425 = vrot.slane %v3405, %v3424
      %v3426 = vmul.f32 %v3403, %v3425
      %v3427 = vmul.f32 %v3404, %v3425
      %v3430 = vrot.slane %v3426, 2
      %v3431 = vrot.slane %v3427, 2
      %v3432 = vsel %vm3270, %v3430, %v3431
      %v3435 = vadd.f32 %v3412, %v3432
      %v3436 = vadd.f32 %v3413, %v3431
      %v3437 = vlaneseq
      %v3438 = vshrl.u32 %v3437, 7
      %v3439 = vsub.s32 3, %v3438
      %v3440 = vrot.slane %v3405, %v3439
      %v3441 = vmul.f32 %v3403, %v3440
      %v3442 = vmul.f32 %v3404, %v3440
      %v3445 = vrot.slane %v3441, 2
      %v3446 = vrot.slane %v3442, 2
      %v3447 = vsel %vm3270, %v3445, %v3446
      %v3450 = vadd.f32 %v3420, %v3447
      %v3451 = vadd.f32 %v3421, %v3446
      %v3452 = vlaneseq
      %v3453 = vshrl.u32 %v3452, 7
      %v3454 = vsub.s32 4, %v3453
      %v3455 = vrot.slane %v3405, %v3454
      %v3456 = vmul.f32 %v3403, %v3455
      %v3457 = vmul.f32 %v3404, %v3455
      %v3460 = vrot.slane %v3456, 4
      %v3461 = vrot.slane %v3457, 4
      %v3462 = vsel %vm3301, %v3460, %v3461
      %v3465 = vadd.f32 %v3435, %v3462
      %v3466 = vadd.f32 %v3436, %v3461
      %v3467 = vlaneseq
      %v3468 = vshrl.u32 %v3467, 7
      %v3469 = vsub.s32 5, %v3468
      %v3470 = vrot.slane %v3405, %v3469
      %v3471 = vmul.f32 %v3403, %v3470
      %v3472 = vmul.f32 %v3404, %v3470
      %v3475 = vrot.slane %v3471, 4
      %v3476 = vrot.slane %v3472, 4
      %v3477 = vsel %vm3301, %v3475, %v3476
      %v3480 = vadd.f32 %v3450, %v3477
      %v3481 = vadd.f32 %v3451, %v3476
      %v3482 = vld [vmem:[#allocation2 + $0x30] sm:$0xff]
      %v3483 = vld [vmem:[#allocation2 + $0x38] sm:$0x3f]
      %v3484 = vld [vmem:[#allocation3 + $0x30] sm:$0x3f]
      %v3485 = vlaneseq
      %v3486 = vshrl.u32 %v3485, 7
      %v3487 = vsub.s32 0, %v3486
      %v3488 = vrot.slane %v3484, %v3487
      %v3489 = vmul.f32 %v3482, %v3488
      %v3490 = vmul.f32 %v3483, %v3488
      %v3491 = vadd.f32 %v3465, %v3489
      %v3492 = vadd.f32 %v3466, %v3490
      %v3493 = vlaneseq
      %v3494 = vshrl.u32 %v3493, 7
      %v3495 = vsub.s32 1, %v3494
      %v3496 = vrot.slane %v3484, %v3495
      %v3497 = vmul.f32 %v3482, %v3496
      %v3498 = vmul.f32 %v3483, %v3496
      %v3499 = vadd.f32 %v3480, %v3497
      %v3500 = vadd.f32 %v3481, %v3498
      %v3501 = vlaneseq
      %v3502 = vshrl.u32 %v3501, 7
      %v3503 = vsub.s32 2, %v3502
      %v3504 = vrot.slane %v3484, %v3503
      %v3505 = vmul.f32 %v3482, %v3504
      %v3506 = vmul.f32 %v3483, %v3504
      %v3509 = vrot.slane %v3505, 2
      %v3510 = vrot.slane %v3506, 2
      %v3511 = vsel %vm3270, %v3509, %v3510
      %v3514 = vadd.f32 %v3491, %v3511
      %v3515 = vadd.f32 %v3492, %v3510
      %v3516 = vlaneseq
      %v3517 = vshrl.u32 %v3516, 7
      %v3518 = vsub.s32 3, %v3517
      %v3519 = vrot.slane %v3484, %v3518
      %v3520 = vmul.f32 %v3482, %v3519
      %v3521 = vmul.f32 %v3483, %v3519
      %v3524 = vrot.slane %v3520, 2
      %v3525 = vrot.slane %v3521, 2
      %v3526 = vsel %vm3270, %v3524, %v3525
      %v3529 = vadd.f32 %v3499, %v3526
      %v3530 = vadd.f32 %v3500, %v3525
      %v3531 = vlaneseq
      %v3532 = vshrl.u32 %v3531, 7
      %v3533 = vsub.s32 4, %v3532
      %v3534 = vrot.slane %v3484, %v3533
      %v3535 = vmul.f32 %v3482, %v3534
      %v3536 = vmul.f32 %v3483, %v3534
      %v3539 = vrot.slane %v3535, 4
      %v3540 = vrot.slane %v3536, 4
      %v3541 = vsel %vm3301, %v3539, %v3540
      %v3544 = vadd.f32 %v3514, %v3541
      %v3545 = vadd.f32 %v3515, %v3540
      %v3546 = vlaneseq
      %v3547 = vshrl.u32 %v3546, 7
      %v3548 = vsub.s32 5, %v3547
      %v3549 = vrot.slane %v3484, %v3548
      %v3550 = vmul.f32 %v3482, %v3549
      %v3551 = vmul.f32 %v3483, %v3549
      %v3554 = vrot.slane %v3550, 4
      %v3555 = vrot.slane %v3551, 4
      %v3556 = vsel %vm3301, %v3554, %v3555
      %v3559 = vadd.f32 %v3529, %v3556
      %v3560 = vadd.f32 %v3530, %v3555
      %v3561 = vld [vmem:[#allocation2 + $0x40] sm:$0xff]
      %v3562 = vld [vmem:[#allocation2 + $0x48] sm:$0x3f]
      %v3563 = vld [vmem:[#allocation3 + $0x40] sm:$0x3f]
      %v3564 = vlaneseq
      %v3565 = vshrl.u32 %v3564, 7
      %v3566 = vsub.s32 0, %v3565
      %v3567 = vrot.slane %v3563, %v3566
      %v3568 = vmul.f32 %v3561, %v3567
      %v3569 = vmul.f32 %v3562, %v3567
      %v3570 = vadd.f32 %v3544, %v3568
      %v3571 = vadd.f32 %v3545, %v3569
      %v3572 = vlaneseq
      %v3573 = vshrl.u32 %v3572, 7
      %v3574 = vsub.s32 1, %v3573
      %v3575 = vrot.slane %v3563, %v3574
      %v3576 = vmul.f32 %v3561, %v3575
      %v3577 = vmul.f32 %v3562, %v3575
      %v3578 = vadd.f32 %v3559, %v3576
      %v3579 = vadd.f32 %v3560, %v3577
      %v3580 = vlaneseq
      %v3581 = vshrl.u32 %v3580, 7
      %v3582 = vsub.s32 2, %v3581
      %v3583 = vrot.slane %v3563, %v3582
      %v3584 = vmul.f32 %v3561, %v3583
      %v3585 = vmul.f32 %v3562, %v3583
      %v3588 = vrot.slane %v3584, 2
      %v3589 = vrot.slane %v3585, 2
      %v3590 = vsel %vm3270, %v3588, %v3589
      %v3593 = vadd.f32 %v3570, %v3590
      %v3594 = vadd.f32 %v3571, %v3589
      %v3595 = vlaneseq
      %v3596 = vshrl.u32 %v3595, 7
      %v3597 = vsub.s32 3, %v3596
      %v3598 = vrot.slane %v3563, %v3597
      %v3599 = vmul.f32 %v3561, %v3598
      %v3600 = vmul.f32 %v3562, %v3598
      %v3603 = vrot.slane %v3599, 2
      %v3604 = vrot.slane %v3600, 2
      %v3605 = vsel %vm3270, %v3603, %v3604
      %v3608 = vadd.f32 %v3578, %v3605
      %v3609 = vadd.f32 %v3579, %v3604
      %v3610 = vlaneseq
      %v3611 = vshrl.u32 %v3610, 7
      %v3612 = vsub.s32 4, %v3611
      %v3613 = vrot.slane %v3563, %v3612
      %v3614 = vmul.f32 %v3561, %v3613
      %v3615 = vmul.f32 %v3562, %v3613
      %v3618 = vrot.slane %v3614, 4
      %v3619 = vrot.slane %v3615, 4
      %v3620 = vsel %vm3301, %v3618, %v3619
      %v3623 = vadd.f32 %v3593, %v3620
      %v3624 = vadd.f32 %v3594, %v3619
      %v3625 = vlaneseq
      %v3626 = vshrl.u32 %v3625, 7
      %v3627 = vsub.s32 5, %v3626
      %v3628 = vrot.slane %v3563, %v3627
      %v3629 = vmul.f32 %v3561, %v3628
      %v3630 = vmul.f32 %v3562, %v3628
      %v3633 = vrot.slane %v3629, 4
      %v3634 = vrot.slane %v3630, 4
      %v3635 = vsel %vm3301, %v3633, %v3634
      %v3638 = vadd.f32 %v3608, %v3635
      %v3639 = vadd.f32 %v3609, %v3634
      %v3640 = vld [vmem:[#allocation2 + $0x50] sm:$0xff]
      %v3641 = vld [vmem:[#allocation2 + $0x58] sm:$0x3f]
      %v3642 = vld [vmem:[#allocation3 + $0x50] sm:$0x3f]
      %v3643 = vlaneseq
      %v3644 = vshrl.u32 %v3643, 7
      %v3645 = vsub.s32 0, %v3644
      %v3646 = vrot.slane %v3642, %v3645
      %v3647 = vmul.f32 %v3640, %v3646
      %v3648 = vmul.f32 %v3641, %v3646
      %v3649 = vadd.f32 %v3623, %v3647
      %v3650 = vadd.f32 %v3624, %v3648
      %v3651 = vlaneseq
      %v3652 = vshrl.u32 %v3651, 7
      %v3653 = vsub.s32 1, %v3652
      %v3654 = vrot.slane %v3642, %v3653
      %v3655 = vmul.f32 %v3640, %v3654
      %v3656 = vmul.f32 %v3641, %v3654
      %v3657 = vadd.f32 %v3638, %v3655
      %v3658 = vadd.f32 %v3639, %v3656
      %v3659 = vlaneseq
      %v3660 = vshrl.u32 %v3659, 7
      %v3661 = vsub.s32 2, %v3660
      %v3662 = vrot.slane %v3642, %v3661
      %v3663 = vmul.f32 %v3640, %v3662
      %v3664 = vmul.f32 %v3641, %v3662
      %v3667 = vrot.slane %v3663, 2
      %v3668 = vrot.slane %v3664, 2
      %v3669 = vsel %vm3270, %v3667, %v3668
      %v3672 = vadd.f32 %v3649, %v3669
      %v3673 = vadd.f32 %v3650, %v3668
      %v3674 = vlaneseq
      %v3675 = vshrl.u32 %v3674, 7
      %v3676 = vsub.s32 3, %v3675
      %v3677 = vrot.slane %v3642, %v3676
      %v3678 = vmul.f32 %v3640, %v3677
      %v3679 = vmul.f32 %v3641, %v3677
      %v3682 = vrot.slane %v3678, 2
      %v3683 = vrot.slane %v3679, 2
      %v3684 = vsel %vm3270, %v3682, %v3683
      %v3687 = vadd.f32 %v3657, %v3684
      %v3688 = vadd.f32 %v3658, %v3683
      %v3689 = vlaneseq
      %v3690 = vshrl.u32 %v3689, 7
      %v3691 = vsub.s32 4, %v3690
      %v3692 = vrot.slane %v3642, %v3691
      %v3693 = vmul.f32 %v3640, %v3692
      %v3694 = vmul.f32 %v3641, %v3692
      %v3697 = vrot.slane %v3693, 4
      %v3698 = vrot.slane %v3694, 4
      %v3699 = vsel %vm3301, %v3697, %v3698
      %v3702 = vadd.f32 %v3672, %v3699
      %v3703 = vadd.f32 %v3673, %v3698
      %v3704 = vlaneseq
      %v3705 = vshrl.u32 %v3704, 7
      %v3706 = vsub.s32 5, %v3705
      %v3707 = vrot.slane %v3642, %v3706
      %v3708 = vmul.f32 %v3640, %v3707
      %v3709 = vmul.f32 %v3641, %v3707
      %v3712 = vrot.slane %v3708, 4
      %v3713 = vrot.slane %v3709, 4
      %v3714 = vsel %vm3301, %v3712, %v3713
      %v3717 = vadd.f32 %v3687, %v3714
      %v3718 = vadd.f32 %v3688, %v3713
      %vm3721 = vcmask 1046528
      %v3722 = vrot.slane %v3717, 1
      %v3723 = vrot.slane %v3718, 1
      %v3724 = vsel %vm3721, %v3722, %v3723
      %v3727 = vadd.f32 %v3702, %v3724
      %v3728 = vadd.f32 %v3703, %v3723
      %3729 = vst [vmem:[%s325] sm:$0xff] %v3727
      %3730 = vst [vmem:[%s325 + $0x8] sm:$0x1] %v3728
      %v3731 = vld [vmem:[#allocation2 + $0x10] sm:$0xff]
      %v3732 = vld [vmem:[#allocation2 + $0x18] sm:$0x3f]
      %v3733 = vld [vmem:[#allocation3] sm:$0x3f]
      %v3734 = vlaneseq
      %v3735 = vshrl.u32 %v3734, 7
      %v3736 = vsub.s32 0, %v3735
      %v3737 = vrot.slane %v3733, %v3736
      %v3738 = vmul.f32 %v3731, %v3737
      %v3739 = vmul.f32 %v3732, %v3737
      %v3740 = vadd.f32 %v3738, 0.0
      %v3741 = vadd.f32 %v3739, 0.0
      %v3742 = vlaneseq
      %v3743 = vshrl.u32 %v3742, 7
      %v3744 = vsub.s32 1, %v3743
      %v3745 = vrot.slane %v3733, %v3744
      %v3746 = vmul.f32 %v3731, %v3745
      %v3747 = vmul.f32 %v3732, %v3745
      %v3748 = vadd.f32 %v3746, 0.0
      %v3749 = vadd.f32 %v3747, 0.0
      %v3750 = vlaneseq
      %v3751 = vshrl.u32 %v3750, 7
      %v3752 = vsub.s32 2, %v3751
      %v3753 = vrot.slane %v3733, %v3752
      %v3754 = vmul.f32 %v3731, %v3753
      %v3755 = vmul.f32 %v3732, %v3753
      %v3758 = vrot.slane %v3754, 2
      %v3759 = vrot.slane %v3755, 2
      %v3760 = vsel %vm3270, %v3758, %v3759
      %v3763 = vadd.f32 %v3740, %v3760
      %v3764 = vadd.f32 %v3741, %v3759
      %v3765 = vlaneseq
      %v3766 = vshrl.u32 %v3765, 7
      %v3767 = vsub.s32 3, %v3766
      %v3768 = vrot.slane %v3733, %v3767
      %v3769 = vmul.f32 %v3731, %v3768
      %v3770 = vmul.f32 %v3732, %v3768
      %v3773 = vrot.slane %v3769, 2
      %v3774 = vrot.slane %v3770, 2
      %v3775 = vsel %vm3270, %v3773, %v3774
      %v3778 = vadd.f32 %v3748, %v3775
      %v3779 = vadd.f32 %v3749, %v3774
      %v3780 = vlaneseq
      %v3781 = vshrl.u32 %v3780, 7
      %v3782 = vsub.s32 4, %v3781
      %v3783 = vrot.slane %v3733, %v3782
      %v3784 = vmul.f32 %v3731, %v3783
      %v3785 = vmul.f32 %v3732, %v3783
      %v3788 = vrot.slane %v3784, 4
      %v3789 = vrot.slane %v3785, 4
      %v3790 = vsel %vm3301, %v3788, %v3789
      %v3793 = vadd.f32 %v3763, %v3790
      %v3794 = vadd.f32 %v3764, %v3789
      %v3795 = vlaneseq
      %v3796 = vshrl.u32 %v3795, 7
      %v3797 = vsub.s32 5, %v3796
      %v3798 = vrot.slane %v3733, %v3797
      %v3799 = vmul.f32 %v3731, %v3798
      %v3800 = vmul.f32 %v3732, %v3798
      %v3803 = vrot.slane %v3799, 4
      %v3804 = vrot.slane %v3800, 4
      %v3805 = vsel %vm3301, %v3803, %v3804
      %v3808 = vadd.f32 %v3778, %v3805
      %v3809 = vadd.f32 %v3779, %v3804
      %v3810 = vld [vmem:[#allocation2 + $0x20] sm:$0xff]
      %v3811 = vld [vmem:[#allocation2 + $0x28] sm:$0x3f]
      %v3812 = vld [vmem:[#allocation3 + $0x10] sm:$0x3f]
      %v3813 = vlaneseq
      %v3814 = vshrl.u32 %v3813, 7
      %v3815 = vsub.s32 0, %v3814
      %v3816 = vrot.slane %v3812, %v3815
      %v3817 = vmul.f32 %v3810, %v3816
      %v3818 = vmul.f32 %v3811, %v3816
      %v3819 = vadd.f32 %v3793, %v3817
      %v3820 = vadd.f32 %v3794, %v3818
      %v3821 = vlaneseq
      %v3822 = vshrl.u32 %v3821, 7
      %v3823 = vsub.s32 1, %v3822
      %v3824 = vrot.slane %v3812, %v3823
      %v3825 = vmul.f32 %v3810, %v3824
      %v3826 = vmul.f32 %v3811, %v3824
      %v3827 = vadd.f32 %v3808, %v3825
      %v3828 = vadd.f32 %v3809, %v3826
      %v3829 = vlaneseq
      %v3830 = vshrl.u32 %v3829, 7
      %v3831 = vsub.s32 2, %v3830
      %v3832 = vrot.slane %v3812, %v3831
      %v3833 = vmul.f32 %v3810, %v3832
      %v3834 = vmul.f32 %v3811, %v3832
      %v3837 = vrot.slane %v3833, 2
      %v3838 = vrot.slane %v3834, 2
      %v3839 = vsel %vm3270, %v3837, %v3838
      %v3842 = vadd.f32 %v3819, %v3839
      %v3843 = vadd.f32 %v3820, %v3838
      %v3844 = vlaneseq
      %v3845 = vshrl.u32 %v3844, 7
      %v3846 = vsub.s32 3, %v3845
      %v3847 = vrot.slane %v3812, %v3846
      %v3848 = vmul.f32 %v3810, %v3847
      %v3849 = vmul.f32 %v3811, %v3847
      %v3852 = vrot.slane %v3848, 2
      %v3853 = vrot.slane %v3849, 2
      %v3854 = vsel %vm3270, %v3852, %v3853
      %v3857 = vadd.f32 %v3827, %v3854
      %v3858 = vadd.f32 %v3828, %v3853
      %v3859 = vlaneseq
      %v3860 = vshrl.u32 %v3859, 7
      %v3861 = vsub.s32 4, %v3860
      %v3862 = vrot.slane %v3812, %v3861
      %v3863 = vmul.f32 %v3810, %v3862
      %v3864 = vmul.f32 %v3811, %v3862
      %v3867 = vrot.slane %v3863, 4
      %v3868 = vrot.slane %v3864, 4
      %v3869 = vsel %vm3301, %v3867, %v3868
      %v3872 = vadd.f32 %v3842, %v3869
      %v3873 = vadd.f32 %v3843, %v3868
      %v3874 = vlaneseq
      %v3875 = vshrl.u32 %v3874, 7
      %v3876 = vsub.s32 5, %v3875
      %v3877 = vrot.slane %v3812, %v3876
      %v3878 = vmul.f32 %v3810, %v3877
      %v3879 = vmul.f32 %v3811, %v3877
      %v3882 = vrot.slane %v3878, 4
      %v3883 = vrot.slane %v3879, 4
      %v3884 = vsel %vm3301, %v3882, %v3883
      %v3887 = vadd.f32 %v3857, %v3884
      %v3888 = vadd.f32 %v3858, %v3883
      %v3889 = vld [vmem:[#allocation2 + $0x30] sm:$0xff]
      %v3890 = vld [vmem:[#allocation2 + $0x38] sm:$0x3f]
      %v3891 = vld [vmem:[#allocation3 + $0x20] sm:$0x3f]
      %v3892 = vlaneseq
      %v3893 = vshrl.u32 %v3892, 7
      %v3894 = vsub.s32 0, %v3893
      %v3895 = vrot.slane %v3891, %v3894
      %v3896 = vmul.f32 %v3889, %v3895
      %v3897 = vmul.f32 %v3890, %v3895
      %v3898 = vadd.f32 %v3872, %v3896
      %v3899 = vadd.f32 %v3873, %v3897
      %v3900 = vlaneseq
      %v3901 = vshrl.u32 %v3900, 7
      %v3902 = vsub.s32 1, %v3901
      %v3903 = vrot.slane %v3891, %v3902
      %v3904 = vmul.f32 %v3889, %v3903
      %v3905 = vmul.f32 %v3890, %v3903
      %v3906 = vadd.f32 %v3887, %v3904
      %v3907 = vadd.f32 %v3888, %v3905
      %v3908 = vlaneseq
      %v3909 = vshrl.u32 %v3908, 7
      %v3910 = vsub.s32 2, %v3909
      %v3911 = vrot.slane %v3891, %v3910
      %v3912 = vmul.f32 %v3889, %v3911
      %v3913 = vmul.f32 %v3890, %v3911
      %v3916 = vrot.slane %v3912, 2
      %v3917 = vrot.slane %v3913, 2
      %v3918 = vsel %vm3270, %v3916, %v3917
      %v3921 = vadd.f32 %v3898, %v3918
      %v3922 = vadd.f32 %v3899, %v3917
      %v3923 = vlaneseq
      %v3924 = vshrl.u32 %v3923, 7
      %v3925 = vsub.s32 3, %v3924
      %v3926 = vrot.slane %v3891, %v3925
      %v3927 = vmul.f32 %v3889, %v3926
      %v3928 = vmul.f32 %v3890, %v3926
      %v3931 = vrot.slane %v3927, 2
      %v3932 = vrot.slane %v3928, 2
      %v3933 = vsel %vm3270, %v3931, %v3932
      %v3936 = vadd.f32 %v3906, %v3933
      %v3937 = vadd.f32 %v3907, %v3932
      %v3938 = vlaneseq
      %v3939 = vshrl.u32 %v3938, 7
      %v3940 = vsub.s32 4, %v3939
      %v3941 = vrot.slane %v3891, %v3940
      %v3942 = vmul.f32 %v3889, %v3941
      %v3943 = vmul.f32 %v3890, %v3941
      %v3946 = vrot.slane %v3942, 4
      %v3947 = vrot.slane %v3943, 4
      %v3948 = vsel %vm3301, %v3946, %v3947
      %v3951 = vadd.f32 %v3921, %v3948
      %v3952 = vadd.f32 %v3922, %v3947
      %v3953 = vlaneseq
      %v3954 = vshrl.u32 %v3953, 7
      %v3955 = vsub.s32 5, %v3954
      %v3956 = vrot.slane %v3891, %v3955
      %v3957 = vmul.f32 %v3889, %v3956
      %v3958 = vmul.f32 %v3890, %v3956
      %v3961 = vrot.slane %v3957, 4
      %v3962 = vrot.slane %v3958, 4
      %v3963 = vsel %vm3301, %v3961, %v3962
      %v3966 = vadd.f32 %v3936, %v3963
      %v3967 = vadd.f32 %v3937, %v3962
      %v3968 = vld [vmem:[#allocation2 + $0x40] sm:$0xff]
      %v3969 = vld [vmem:[#allocation2 + $0x48] sm:$0x3f]
      %v3970 = vld [vmem:[#allocation3 + $0x30] sm:$0x3f]
      %v3971 = vlaneseq
      %v3972 = vshrl.u32 %v3971, 7
      %v3973 = vsub.s32 0, %v3972
      %v3974 = vrot.slane %v3970, %v3973
      %v3975 = vmul.f32 %v3968, %v3974
      %v3976 = vmul.f32 %v3969, %v3974
      %v3977 = vadd.f32 %v3951, %v3975
      %v3978 = vadd.f32 %v3952, %v3976
      %v3979 = vlaneseq
      %v3980 = vshrl.u32 %v3979, 7
      %v3981 = vsub.s32 1, %v3980
      %v3982 = vrot.slane %v3970, %v3981
      %v3983 = vmul.f32 %v3968, %v3982
      %v3984 = vmul.f32 %v3969, %v3982
      %v3985 = vadd.f32 %v3966, %v3983
      %v3986 = vadd.f32 %v3967, %v3984
      %v3987 = vlaneseq
      %v3988 = vshrl.u32 %v3987, 7
      %v3989 = vsub.s32 2, %v3988
      %v3990 = vrot.slane %v3970, %v3989
      %v3991 = vmul.f32 %v3968, %v3990
      %v3992 = vmul.f32 %v3969, %v3990
      %v3995 = vrot.slane %v3991, 2
      %v3996 = vrot.slane %v3992, 2
      %v3997 = vsel %vm3270, %v3995, %v3996
      %v4000 = vadd.f32 %v3977, %v3997
      %v4001 = vadd.f32 %v3978, %v3996
      %v4002 = vlaneseq
      %v4003 = vshrl.u32 %v4002, 7
      %v4004 = vsub.s32 3, %v4003
      %v4005 = vrot.slane %v3970, %v4004
      %v4006 = vmul.f32 %v3968, %v4005
      %v4007 = vmul.f32 %v3969, %v4005
      %v4010 = vrot.slane %v4006, 2
      %v4011 = vrot.slane %v4007, 2
      %v4012 = vsel %vm3270, %v4010, %v4011
      %v4015 = vadd.f32 %v3985, %v4012
      %v4016 = vadd.f32 %v3986, %v4011
      %v4017 = vlaneseq
      %v4018 = vshrl.u32 %v4017, 7
      %v4019 = vsub.s32 4, %v4018
      %v4020 = vrot.slane %v3970, %v4019
      %v4021 = vmul.f32 %v3968, %v4020
      %v4022 = vmul.f32 %v3969, %v4020
      %v4025 = vrot.slane %v4021, 4
      %v4026 = vrot.slane %v4022, 4
      %v4027 = vsel %vm3301, %v4025, %v4026
      %v4030 = vadd.f32 %v4000, %v4027
      %v4031 = vadd.f32 %v4001, %v4026
      %v4032 = vlaneseq
      %v4033 = vshrl.u32 %v4032, 7
      %v4034 = vsub.s32 5, %v4033
      %v4035 = vrot.slane %v3970, %v4034
      %v4036 = vmul.f32 %v3968, %v4035
      %v4037 = vmul.f32 %v3969, %v4035
      %v4040 = vrot.slane %v4036, 4
      %v4041 = vrot.slane %v4037, 4
      %v4042 = vsel %vm3301, %v4040, %v4041
      %v4045 = vadd.f32 %v4015, %v4042
      %v4046 = vadd.f32 %v4016, %v4041
      %v4047 = vld [vmem:[#allocation2 + $0x50] sm:$0xff]
      %v4048 = vld [vmem:[#allocation2 + $0x58] sm:$0x3f]
      %v4049 = vld [vmem:[#allocation3 + $0x40] sm:$0x3f]
      %v4050 = vlaneseq
      %v4051 = vshrl.u32 %v4050, 7
      %v4052 = vsub.s32 0, %v4051
      %v4053 = vrot.slane %v4049, %v4052
      %v4054 = vmul.f32 %v4047, %v4053
      %v4055 = vmul.f32 %v4048, %v4053
      %v4056 = vadd.f32 %v4030, %v4054
      %v4057 = vadd.f32 %v4031, %v4055
      %v4058 = vlaneseq
      %v4059 = vshrl.u32 %v4058, 7
      %v4060 = vsub.s32 1, %v4059
      %v4061 = vrot.slane %v4049, %v4060
      %v4062 = vmul.f32 %v4047, %v4061
      %v4063 = vmul.f32 %v4048, %v4061
      %v4064 = vadd.f32 %v4045, %v4062
      %v4065 = vadd.f32 %v4046, %v4063
      %v4066 = vlaneseq
      %v4067 = vshrl.u32 %v4066, 7
      %v4068 = vsub.s32 2, %v4067
      %v4069 = vrot.slane %v4049, %v4068
      %v4070 = vmul.f32 %v4047, %v4069
      %v4071 = vmul.f32 %v4048, %v4069
      %v4074 = vrot.slane %v4070, 2
      %v4075 = vrot.slane %v4071, 2
      %v4076 = vsel %vm3270, %v4074, %v4075
      %v4079 = vadd.f32 %v4056, %v4076
      %v4080 = vadd.f32 %v4057, %v4075
      %v4081 = vlaneseq
      %v4082 = vshrl.u32 %v4081, 7
      %v4083 = vsub.s32 3, %v4082
      %v4084 = vrot.slane %v4049, %v4083
      %v4085 = vmul.f32 %v4047, %v4084
      %v4086 = vmul.f32 %v4048, %v4084
      %v4089 = vrot.slane %v4085, 2
      %v4090 = vrot.slane %v4086, 2
      %v4091 = vsel %vm3270, %v4089, %v4090
      %v4094 = vadd.f32 %v4064, %v4091
      %v4095 = vadd.f32 %v4065, %v4090
      %v4096 = vlaneseq
      %v4097 = vshrl.u32 %v4096, 7
      %v4098 = vsub.s32 4, %v4097
      %v4099 = vrot.slane %v4049, %v4098
      %v4100 = vmul.f32 %v4047, %v4099
      %v4101 = vmul.f32 %v4048, %v4099
      %v4104 = vrot.slane %v4100, 4
      %v4105 = vrot.slane %v4101, 4
      %v4106 = vsel %vm3301, %v4104, %v4105
      %v4109 = vadd.f32 %v4079, %v4106
      %v4110 = vadd.f32 %v4080, %v4105
      %v4111 = vlaneseq
      %v4112 = vshrl.u32 %v4111, 7
      %v4113 = vsub.s32 5, %v4112
      %v4114 = vrot.slane %v4049, %v4113
      %v4115 = vmul.f32 %v4047, %v4114
      %v4116 = vmul.f32 %v4048, %v4114
      %v4119 = vrot.slane %v4115, 4
      %v4120 = vrot.slane %v4116, 4
      %v4121 = vsel %vm3301, %v4119, %v4120
      %v4124 = vadd.f32 %v4094, %v4121
      %v4125 = vadd.f32 %v4095, %v4120
      %v4126 = vld [vmem:[#allocation2 + $0x60] sm:$0xff]
      %v4127 = vld [vmem:[#allocation2 + $0x68] sm:$0x3f]
      %v4128 = vld [vmem:[#allocation3 + $0x50] sm:$0x3f]
      %v4129 = vlaneseq
      %v4130 = vshrl.u32 %v4129, 7
      %v4131 = vsub.s32 0, %v4130
      %v4132 = vrot.slane %v4128, %v4131
      %v4133 = vmul.f32 %v4126, %v4132
      %v4134 = vmul.f32 %v4127, %v4132
      %v4135 = vadd.f32 %v4109, %v4133
      %v4136 = vadd.f32 %v4110, %v4134
      %v4137 = vlaneseq
      %v4138 = vshrl.u32 %v4137, 7
      %v4139 = vsub.s32 1, %v4138
      %v4140 = vrot.slane %v4128, %v4139
      %v4141 = vmul.f32 %v4126, %v4140
      %v4142 = vmul.f32 %v4127, %v4140
      %v4143 = vadd.f32 %v4124, %v4141
      %v4144 = vadd.f32 %v4125, %v4142
      %v4145 = vlaneseq
      %v4146 = vshrl.u32 %v4145, 7
      %v4147 = vsub.s32 2, %v4146
      %v4148 = vrot.slane %v4128, %v4147
      %v4149 = vmul.f32 %v4126, %v4148
      %v4150 = vmul.f32 %v4127, %v4148
      %v4153 = vrot.slane %v4149, 2
      %v4154 = vrot.slane %v4150, 2
      %v4155 = vsel %vm3270, %v4153, %v4154
      %v4158 = vadd.f32 %v4135, %v4155
      %v4159 = vadd.f32 %v4136, %v4154
      %v4160 = vlaneseq
      %v4161 = vshrl.u32 %v4160, 7
      %v4162 = vsub.s32 3, %v4161
      %v4163 = vrot.slane %v4128, %v4162
      %v4164 = vmul.f32 %v4126, %v4163
      %v4165 = vmul.f32 %v4127, %v4163
      %v4168 = vrot.slane %v4164, 2
      %v4169 = vrot.slane %v4165, 2
      %v4170 = vsel %vm3270, %v4168, %v4169
      %v4173 = vadd.f32 %v4143, %v4170
      %v4174 = vadd.f32 %v4144, %v4169
      %v4175 = vlaneseq
      %v4176 = vshrl.u32 %v4175, 7
      %v4177 = vsub.s32 4, %v4176
      %v4178 = vrot.slane %v4128, %v4177
      %v4179 = vmul.f32 %v4126, %v4178
      %v4180 = vmul.f32 %v4127, %v4178
      %v4183 = vrot.slane %v4179, 4
      %v4184 = vrot.slane %v4180, 4
      %v4185 = vsel %vm3301, %v4183, %v4184
      %v4188 = vadd.f32 %v4158, %v4185
      %v4189 = vadd.f32 %v4159, %v4184
      %v4190 = vlaneseq
      %v4191 = vshrl.u32 %v4190, 7
      %v4192 = vsub.s32 5, %v4191
      %v4193 = vrot.slane %v4128, %v4192
      %v4194 = vmul.f32 %v4126, %v4193
      %v4195 = vmul.f32 %v4127, %v4193
      %v4198 = vrot.slane %v4194, 4
      %v4199 = vrot.slane %v4195, 4
      %v4200 = vsel %vm3301, %v4198, %v4199
      %v4203 = vadd.f32 %v4173, %v4200
      %v4204 = vadd.f32 %v4174, %v4199
      %v4207 = vrot.slane %v4203, 1
      %v4208 = vrot.slane %v4204, 1
      %v4209 = vsel %vm3721, %v4207, %v4208
      %v4212 = vadd.f32 %v4188, %v4209
      %v4213 = vadd.f32 %v4189, %v4208
      %s4214 = scalar_lea.vmem %s325, 16
      %4215 = vst [vmem:[%s4214] sm:$0xff] %v4212
      %4216 = vst [vmem:[%s4214 + $0x8] sm:$0x1] %v4213
      %v4217 = vld [vmem:[#allocation2 + $0x20] sm:$0xff]
      %v4218 = vld [vmem:[#allocation2 + $0x28] sm:$0x3f]
      %v4219 = vld [vmem:[#allocation3] sm:$0x3f]
      %v4220 = vlaneseq
      %v4221 = vshrl.u32 %v4220, 7
      %v4222 = vsub.s32 0, %v4221
      %v4223 = vrot.slane %v4219, %v4222
      %v4224 = vmul.f32 %v4217, %v4223
      %v4225 = vmul.f32 %v4218, %v4223
      %v4226 = vadd.f32 %v4224, 0.0
      %v4227 = vadd.f32 %v4225, 0.0
      %v4228 = vlaneseq
      %v4229 = vshrl.u32 %v4228, 7
      %v4230 = vsub.s32 1, %v4229
      %v4231 = vrot.slane %v4219, %v4230
      %v4232 = vmul.f32 %v4217, %v4231
      %v4233 = vmul.f32 %v4218, %v4231
      %v4234 = vadd.f32 %v4232, 0.0
      %v4235 = vadd.f32 %v4233, 0.0
      %v4236 = vlaneseq
      %v4237 = vshrl.u32 %v4236, 7
      %v4238 = vsub.s32 2, %v4237
      %v4239 = vrot.slane %v4219, %v4238
      %v4240 = vmul.f32 %v4217, %v4239
      %v4241 = vmul.f32 %v4218, %v4239
      %v4244 = vrot.slane %v4240, 2
      %v4245 = vrot.slane %v4241, 2
      %v4246 = vsel %vm3270, %v4244, %v4245
      %v4249 = vadd.f32 %v4226, %v4246
      %v4250 = vadd.f32 %v4227, %v4245
      %v4251 = vlaneseq
      %v4252 = vshrl.u32 %v4251, 7
      %v4253 = vsub.s32 3, %v4252
      %v4254 = vrot.slane %v4219, %v4253
      %v4255 = vmul.f32 %v4217, %v4254
      %v4256 = vmul.f32 %v4218, %v4254
      %v4259 = vrot.slane %v4255, 2
      %v4260 = vrot.slane %v4256, 2
      %v4261 = vsel %vm3270, %v4259, %v4260
      %v4264 = vadd.f32 %v4234, %v4261
      %v4265 = vadd.f32 %v4235, %v4260
      %v4266 = vlaneseq
      %v4267 = vshrl.u32 %v4266, 7
      %v4268 = vsub.s32 4, %v4267
      %v4269 = vrot.slane %v4219, %v4268
      %v4270 = vmul.f32 %v4217, %v4269
      %v4271 = vmul.f32 %v4218, %v4269
      %v4274 = vrot.slane %v4270, 4
      %v4275 = vrot.slane %v4271, 4
      %v4276 = vsel %vm3301, %v4274, %v4275
      %v4279 = vadd.f32 %v4249, %v4276
      %v4280 = vadd.f32 %v4250, %v4275
      %v4281 = vlaneseq
      %v4282 = vshrl.u32 %v4281, 7
      %v4283 = vsub.s32 5, %v4282
      %v4284 = vrot.slane %v4219, %v4283
      %v4285 = vmul.f32 %v4217, %v4284
      %v4286 = vmul.f32 %v4218, %v4284
      %v4289 = vrot.slane %v4285, 4
      %v4290 = vrot.slane %v4286, 4
      %v4291 = vsel %vm3301, %v4289, %v4290
      %v4294 = vadd.f32 %v4264, %v4291
      %v4295 = vadd.f32 %v4265, %v4290
      %v4296 = vld [vmem:[#allocation2 + $0x30] sm:$0xff]
      %v4297 = vld [vmem:[#allocation2 + $0x38] sm:$0x3f]
      %v4298 = vld [vmem:[#allocation3 + $0x10] sm:$0x3f]
      %v4299 = vlaneseq
      %v4300 = vshrl.u32 %v4299, 7
      %v4301 = vsub.s32 0, %v4300
      %v4302 = vrot.slane %v4298, %v4301
      %v4303 = vmul.f32 %v4296, %v4302
      %v4304 = vmul.f32 %v4297, %v4302
      %v4305 = vadd.f32 %v4279, %v4303
      %v4306 = vadd.f32 %v4280, %v4304
      %v4307 = vlaneseq
      %v4308 = vshrl.u32 %v4307, 7
      %v4309 = vsub.s32 1, %v4308
      %v4310 = vrot.slane %v4298, %v4309
      %v4311 = vmul.f32 %v4296, %v4310
      %v4312 = vmul.f32 %v4297, %v4310
      %v4313 = vadd.f32 %v4294, %v4311
      %v4314 = vadd.f32 %v4295, %v4312
      %v4315 = vlaneseq
      %v4316 = vshrl.u32 %v4315, 7
      %v4317 = vsub.s32 2, %v4316
      %v4318 = vrot.slane %v4298, %v4317
      %v4319 = vmul.f32 %v4296, %v4318
      %v4320 = vmul.f32 %v4297, %v4318
      %v4323 = vrot.slane %v4319, 2
      %v4324 = vrot.slane %v4320, 2
      %v4325 = vsel %vm3270, %v4323, %v4324
      %v4328 = vadd.f32 %v4305, %v4325
      %v4329 = vadd.f32 %v4306, %v4324
      %v4330 = vlaneseq
      %v4331 = vshrl.u32 %v4330, 7
      %v4332 = vsub.s32 3, %v4331
      %v4333 = vrot.slane %v4298, %v4332
      %v4334 = vmul.f32 %v4296, %v4333
      %v4335 = vmul.f32 %v4297, %v4333
      %v4338 = vrot.slane %v4334, 2
      %v4339 = vrot.slane %v4335, 2
      %v4340 = vsel %vm3270, %v4338, %v4339
      %v4343 = vadd.f32 %v4313, %v4340
      %v4344 = vadd.f32 %v4314, %v4339
      %v4345 = vlaneseq
      %v4346 = vshrl.u32 %v4345, 7
      %v4347 = vsub.s32 4, %v4346
      %v4348 = vrot.slane %v4298, %v4347
      %v4349 = vmul.f32 %v4296, %v4348
      %v4350 = vmul.f32 %v4297, %v4348
      %v4353 = vrot.slane %v4349, 4
      %v4354 = vrot.slane %v4350, 4
      %v4355 = vsel %vm3301, %v4353, %v4354
      %v4358 = vadd.f32 %v4328, %v4355
      %v4359 = vadd.f32 %v4329, %v4354
      %v4360 = vlaneseq
      %v4361 = vshrl.u32 %v4360, 7
      %v4362 = vsub.s32 5, %v4361
      %v4363 = vrot.slane %v4298, %v4362
      %v4364 = vmul.f32 %v4296, %v4363
      %v4365 = vmul.f32 %v4297, %v4363
      %v4368 = vrot.slane %v4364, 4
      %v4369 = vrot.slane %v4365, 4
      %v4370 = vsel %vm3301, %v4368, %v4369
      %v4373 = vadd.f32 %v4343, %v4370
      %v4374 = vadd.f32 %v4344, %v4369
      %v4375 = vld [vmem:[#allocation2 + $0x40] sm:$0xff]
      %v4376 = vld [vmem:[#allocation2 + $0x48] sm:$0x3f]
      %v4377 = vld [vmem:[#allocation3 + $0x20] sm:$0x3f]
      %v4378 = vlaneseq
      %v4379 = vshrl.u32 %v4378, 7
      %v4380 = vsub.s32 0, %v4379
      %v4381 = vrot.slane %v4377, %v4380
      %v4382 = vmul.f32 %v4375, %v4381
      %v4383 = vmul.f32 %v4376, %v4381
      %v4384 = vadd.f32 %v4358, %v4382
      %v4385 = vadd.f32 %v4359, %v4383
      %v4386 = vlaneseq
      %v4387 = vshrl.u32 %v4386, 7
      %v4388 = vsub.s32 1, %v4387
      %v4389 = vrot.slane %v4377, %v4388
      %v4390 = vmul.f32 %v4375, %v4389
      %v4391 = vmul.f32 %v4376, %v4389
      %v4392 = vadd.f32 %v4373, %v4390
      %v4393 = vadd.f32 %v4374, %v4391
      %v4394 = vlaneseq
      %v4395 = vshrl.u32 %v4394, 7
      %v4396 = vsub.s32 2, %v4395
      %v4397 = vrot.slane %v4377, %v4396
      %v4398 = vmul.f32 %v4375, %v4397
      %v4399 = vmul.f32 %v4376, %v4397
      %v4402 = vrot.slane %v4398, 2
      %v4403 = vrot.slane %v4399, 2
      %v4404 = vsel %vm3270, %v4402, %v4403
      %v4407 = vadd.f32 %v4384, %v4404
      %v4408 = vadd.f32 %v4385, %v4403
      %v4409 = vlaneseq
      %v4410 = vshrl.u32 %v4409, 7
      %v4411 = vsub.s32 3, %v4410
      %v4412 = vrot.slane %v4377, %v4411
      %v4413 = vmul.f32 %v4375, %v4412
      %v4414 = vmul.f32 %v4376, %v4412
      %v4417 = vrot.slane %v4413, 2
      %v4418 = vrot.slane %v4414, 2
      %v4419 = vsel %vm3270, %v4417, %v4418
      %v4422 = vadd.f32 %v4392, %v4419
      %v4423 = vadd.f32 %v4393, %v4418
      %v4424 = vlaneseq
      %v4425 = vshrl.u32 %v4424, 7
      %v4426 = vsub.s32 4, %v4425
      %v4427 = vrot.slane %v4377, %v4426
      %v4428 = vmul.f32 %v4375, %v4427
      %v4429 = vmul.f32 %v4376, %v4427
      %v4432 = vrot.slane %v4428, 4
      %v4433 = vrot.slane %v4429, 4
      %v4434 = vsel %vm3301, %v4432, %v4433
      %v4437 = vadd.f32 %v4407, %v4434
      %v4438 = vadd.f32 %v4408, %v4433
      %v4439 = vlaneseq
      %v4440 = vshrl.u32 %v4439, 7
      %v4441 = vsub.s32 5, %v4440
      %v4442 = vrot.slane %v4377, %v4441
      %v4443 = vmul.f32 %v4375, %v4442
      %v4444 = vmul.f32 %v4376, %v4442
      %v4447 = vrot.slane %v4443, 4
      %v4448 = vrot.slane %v4444, 4
      %v4449 = vsel %vm3301, %v4447, %v4448
      %v4452 = vadd.f32 %v4422, %v4449
      %v4453 = vadd.f32 %v4423, %v4448
      %v4454 = vld [vmem:[#allocation2 + $0x50] sm:$0xff]
      %v4455 = vld [vmem:[#allocation2 + $0x58] sm:$0x3f]
      %v4456 = vld [vmem:[#allocation3 + $0x30] sm:$0x3f]
      %v4457 = vlaneseq
      %v4458 = vshrl.u32 %v4457, 7
      %v4459 = vsub.s32 0, %v4458
      %v4460 = vrot.slane %v4456, %v4459
      %v4461 = vmul.f32 %v4454, %v4460
      %v4462 = vmul.f32 %v4455, %v4460
      %v4463 = vadd.f32 %v4437, %v4461
      %v4464 = vadd.f32 %v4438, %v4462
      %v4465 = vlaneseq
      %v4466 = vshrl.u32 %v4465, 7
      %v4467 = vsub.s32 1, %v4466
      %v4468 = vrot.slane %v4456, %v4467
      %v4469 = vmul.f32 %v4454, %v4468
      %v4470 = vmul.f32 %v4455, %v4468
      %v4471 = vadd.f32 %v4452, %v4469
      %v4472 = vadd.f32 %v4453, %v4470
      %v4473 = vlaneseq
      %v4474 = vshrl.u32 %v4473, 7
      %v4475 = vsub.s32 2, %v4474
      %v4476 = vrot.slane %v4456, %v4475
      %v4477 = vmul.f32 %v4454, %v4476
      %v4478 = vmul.f32 %v4455, %v4476
      %v4481 = vrot.slane %v4477, 2
      %v4482 = vrot.slane %v4478, 2
      %v4483 = vsel %vm3270, %v4481, %v4482
      %v4486 = vadd.f32 %v4463, %v4483
      %v4487 = vadd.f32 %v4464, %v4482
      %v4488 = vlaneseq
      %v4489 = vshrl.u32 %v4488, 7
      %v4490 = vsub.s32 3, %v4489
      %v4491 = vrot.slane %v4456, %v4490
      %v4492 = vmul.f32 %v4454, %v4491
      %v4493 = vmul.f32 %v4455, %v4491
      %v4496 = vrot.slane %v4492, 2
      %v4497 = vrot.slane %v4493, 2
      %v4498 = vsel %vm3270, %v4496, %v4497
      %v4501 = vadd.f32 %v4471, %v4498
      %v4502 = vadd.f32 %v4472, %v4497
      %v4503 = vlaneseq
      %v4504 = vshrl.u32 %v4503, 7
      %v4505 = vsub.s32 4, %v4504
      %v4506 = vrot.slane %v4456, %v4505
      %v4507 = vmul.f32 %v4454, %v4506
      %v4508 = vmul.f32 %v4455, %v4506
      %v4511 = vrot.slane %v4507, 4
      %v4512 = vrot.slane %v4508, 4
      %v4513 = vsel %vm3301, %v4511, %v4512
      %v4516 = vadd.f32 %v4486, %v4513
      %v4517 = vadd.f32 %v4487, %v4512
      %v4518 = vlaneseq
      %v4519 = vshrl.u32 %v4518, 7
      %v4520 = vsub.s32 5, %v4519
      %v4521 = vrot.slane %v4456, %v4520
      %v4522 = vmul.f32 %v4454, %v4521
      %v4523 = vmul.f32 %v4455, %v4521
      %v4526 = vrot.slane %v4522, 4
      %v4527 = vrot.slane %v4523, 4
      %v4528 = vsel %vm3301, %v4526, %v4527
      %v4531 = vadd.f32 %v4501, %v4528
      %v4532 = vadd.f32 %v4502, %v4527
      %v4533 = vld [vmem:[#allocation2 + $0x60] sm:$0xff]
      %v4534 = vld [vmem:[#allocation2 + $0x68] sm:$0x3f]
      %v4535 = vld [vmem:[#allocation3 + $0x40] sm:$0x3f]
      %v4536 = vlaneseq
      %v4537 = vshrl.u32 %v4536, 7
      %v4538 = vsub.s32 0, %v4537
      %v4539 = vrot.slane %v4535, %v4538
      %v4540 = vmul.f32 %v4533, %v4539
      %v4541 = vmul.f32 %v4534, %v4539
      %v4542 = vadd.f32 %v4516, %v4540
      %v4543 = vadd.f32 %v4517, %v4541
      %v4544 = vlaneseq
      %v4545 = vshrl.u32 %v4544, 7
      %v4546 = vsub.s32 1, %v4545
      %v4547 = vrot.slane %v4535, %v4546
      %v4548 = vmul.f32 %v4533, %v4547
      %v4549 = vmul.f32 %v4534, %v4547
      %v4550 = vadd.f32 %v4531, %v4548
      %v4551 = vadd.f32 %v4532, %v4549
      %v4552 = vlaneseq
      %v4553 = vshrl.u32 %v4552, 7
      %v4554 = vsub.s32 2, %v4553
      %v4555 = vrot.slane %v4535, %v4554
      %v4556 = vmul.f32 %v4533, %v4555
      %v4557 = vmul.f32 %v4534, %v4555
      %v4560 = vrot.slane %v4556, 2
      %v4561 = vrot.slane %v4557, 2
      %v4562 = vsel %vm3270, %v4560, %v4561
      %v4565 = vadd.f32 %v4542, %v4562
      %v4566 = vadd.f32 %v4543, %v4561
      %v4567 = vlaneseq
      %v4568 = vshrl.u32 %v4567, 7
      %v4569 = vsub.s32 3, %v4568
      %v4570 = vrot.slane %v4535, %v4569
      %v4571 = vmul.f32 %v4533, %v4570
      %v4572 = vmul.f32 %v4534, %v4570
      %v4575 = vrot.slane %v4571, 2
      %v4576 = vrot.slane %v4572, 2
      %v4577 = vsel %vm3270, %v4575, %v4576
      %v4580 = vadd.f32 %v4550, %v4577
      %v4581 = vadd.f32 %v4551, %v4576
      %v4582 = vlaneseq
      %v4583 = vshrl.u32 %v4582, 7
      %v4584 = vsub.s32 4, %v4583
      %v4585 = vrot.slane %v4535, %v4584
      %v4586 = vmul.f32 %v4533, %v4585
      %v4587 = vmul.f32 %v4534, %v4585
      %v4590 = vrot.slane %v4586, 4
      %v4591 = vrot.slane %v4587, 4
      %v4592 = vsel %vm3301, %v4590, %v4591
      %v4595 = vadd.f32 %v4565, %v4592
      %v4596 = vadd.f32 %v4566, %v4591
      %v4597 = vlaneseq
      %v4598 = vshrl.u32 %v4597, 7
      %v4599 = vsub.s32 5, %v4598
      %v4600 = vrot.slane %v4535, %v4599
      %v4601 = vmul.f32 %v4533, %v4600
      %v4602 = vmul.f32 %v4534, %v4600
      %v4605 = vrot.slane %v4601, 4
      %v4606 = vrot.slane %v4602, 4
      %v4607 = vsel %vm3301, %v4605, %v4606
      %v4610 = vadd.f32 %v4580, %v4607
      %v4611 = vadd.f32 %v4581, %v4606
      %v4612 = vld [vmem:[#allocation2 + $0x70] sm:$0xff]
      %v4613 = vld [vmem:[#allocation2 + $0x78] sm:$0x3f]
      %v4614 = vld [vmem:[#allocation3 + $0x50] sm:$0x3f]
      %v4615 = vlaneseq
      %v4616 = vshrl.u32 %v4615, 7
      %v4617 = vsub.s32 0, %v4616
      %v4618 = vrot.slane %v4614, %v4617
      %v4619 = vmul.f32 %v4612, %v4618
      %v4620 = vmul.f32 %v4613, %v4618
      %v4621 = vadd.f32 %v4595, %v4619
      %v4622 = vadd.f32 %v4596, %v4620
      %v4623 = vlaneseq
      %v4624 = vshrl.u32 %v4623, 7
      %v4625 = vsub.s32 1, %v4624
      %v4626 = vrot.slane %v4614, %v4625
      %v4627 = vmul.f32 %v4612, %v4626
      %v4628 = vmul.f32 %v4613, %v4626
      %v4629 = vadd.f32 %v4610, %v4627
      %v4630 = vadd.f32 %v4611, %v4628
      %v4631 = vlaneseq
      %v4632 = vshrl.u32 %v4631, 7
      %v4633 = vsub.s32 2, %v4632
      %v4634 = vrot.slane %v4614, %v4633
      %v4635 = vmul.f32 %v4612, %v4634
      %v4636 = vmul.f32 %v4613, %v4634
      %v4639 = vrot.slane %v4635, 2
      %v4640 = vrot.slane %v4636, 2
      %v4641 = vsel %vm3270, %v4639, %v4640
      %v4644 = vadd.f32 %v4621, %v4641
      %v4645 = vadd.f32 %v4622, %v4640
      %v4646 = vlaneseq
      %v4647 = vshrl.u32 %v4646, 7
      %v4648 = vsub.s32 3, %v4647
      %v4649 = vrot.slane %v4614, %v4648
      %v4650 = vmul.f32 %v4612, %v4649
      %v4651 = vmul.f32 %v4613, %v4649
      %v4654 = vrot.slane %v4650, 2
      %v4655 = vrot.slane %v4651, 2
      %v4656 = vsel %vm3270, %v4654, %v4655
      %v4659 = vadd.f32 %v4629, %v4656
      %v4660 = vadd.f32 %v4630, %v4655
      %v4661 = vlaneseq
      %v4662 = vshrl.u32 %v4661, 7
      %v4663 = vsub.s32 4, %v4662
      %v4664 = vrot.slane %v4614, %v4663
      %v4665 = vmul.f32 %v4612, %v4664
      %v4666 = vmul.f32 %v4613, %v4664
      %v4669 = vrot.slane %v4665, 4
      %v4670 = vrot.slane %v4666, 4
      %v4671 = vsel %vm3301, %v4669, %v4670
      %v4674 = vadd.f32 %v4644, %v4671
      %v4675 = vadd.f32 %v4645, %v4670
      %v4676 = vlaneseq
      %v4677 = vshrl.u32 %v4676, 7
      %v4678 = vsub.s32 5, %v4677
      %v4679 = vrot.slane %v4614, %v4678
      %v4680 = vmul.f32 %v4612, %v4679
      %v4681 = vmul.f32 %v4613, %v4679
      %v4684 = vrot.slane %v4680, 4
      %v4685 = vrot.slane %v4681, 4
      %v4686 = vsel %vm3301, %v4684, %v4685
      %v4689 = vadd.f32 %v4659, %v4686
      %v4690 = vadd.f32 %v4660, %v4685
      %v4693 = vrot.slane %v4689, 1
      %v4694 = vrot.slane %v4690, 1
      %v4695 = vsel %vm3721, %v4693, %v4694
      %v4698 = vadd.f32 %v4674, %v4695
      %v4699 = vadd.f32 %v4675, %v4694
      %s4700 = scalar_lea.vmem %s325, 32
      %4701 = vst [vmem:[%s4700] sm:$0xff] %v4698
      %4702 = vst [vmem:[%s4700 + $0x8] sm:$0x1] %v4699
      %v4703 = vld [vmem:[#allocation2 + $0x30] sm:$0xff]
      %v4704 = vld [vmem:[#allocation2 + $0x38] sm:$0x3f]
      %v4705 = vld [vmem:[#allocation3] sm:$0x3f]
      %v4706 = vlaneseq
      %v4707 = vshrl.u32 %v4706, 7
      %v4708 = vsub.s32 0, %v4707
      %v4709 = vrot.slane %v4705, %v4708
      %v4710 = vmul.f32 %v4703, %v4709
      %v4711 = vmul.f32 %v4704, %v4709
      %v4712 = vadd.f32 %v4710, 0.0
      %v4713 = vadd.f32 %v4711, 0.0
      %v4714 = vlaneseq
      %v4715 = vshrl.u32 %v4714, 7
      %v4716 = vsub.s32 1, %v4715
      %v4717 = vrot.slane %v4705, %v4716
      %v4718 = vmul.f32 %v4703, %v4717
      %v4719 = vmul.f32 %v4704, %v4717
      %v4720 = vadd.f32 %v4718, 0.0
      %v4721 = vadd.f32 %v4719, 0.0
      %v4722 = vlaneseq
      %v4723 = vshrl.u32 %v4722, 7
      %v4724 = vsub.s32 2, %v4723
      %v4725 = vrot.slane %v4705, %v4724
      %v4726 = vmul.f32 %v4703, %v4725
      %v4727 = vmul.f32 %v4704, %v4725
      %v4730 = vrot.slane %v4726, 2
      %v4731 = vrot.slane %v4727, 2
      %v4732 = vsel %vm3270, %v4730, %v4731
      %v4735 = vadd.f32 %v4712, %v4732
      %v4736 = vadd.f32 %v4713, %v4731
      %v4737 = vlaneseq
      %v4738 = vshrl.u32 %v4737, 7
      %v4739 = vsub.s32 3, %v4738
      %v4740 = vrot.slane %v4705, %v4739
      %v4741 = vmul.f32 %v4703, %v4740
      %v4742 = vmul.f32 %v4704, %v4740
      %v4745 = vrot.slane %v4741, 2
      %v4746 = vrot.slane %v4742, 2
      %v4747 = vsel %vm3270, %v4745, %v4746
      %v4750 = vadd.f32 %v4720, %v4747
      %v4751 = vadd.f32 %v4721, %v4746
      %v4752 = vlaneseq
      %v4753 = vshrl.u32 %v4752, 7
      %v4754 = vsub.s32 4, %v4753
      %v4755 = vrot.slane %v4705, %v4754
      %v4756 = vmul.f32 %v4703, %v4755
      %v4757 = vmul.f32 %v4704, %v4755
      %v4760 = vrot.slane %v4756, 4
      %v4761 = vrot.slane %v4757, 4
      %v4762 = vsel %vm3301, %v4760, %v4761
      %v4765 = vadd.f32 %v4735, %v4762
      %v4766 = vadd.f32 %v4736, %v4761
      %v4767 = vlaneseq
      %v4768 = vshrl.u32 %v4767, 7
      %v4769 = vsub.s32 5, %v4768
      %v4770 = vrot.slane %v4705, %v4769
      %v4771 = vmul.f32 %v4703, %v4770
      %v4772 = vmul.f32 %v4704, %v4770
      %v4775 = vrot.slane %v4771, 4
      %v4776 = vrot.slane %v4772, 4
      %v4777 = vsel %vm3301, %v4775, %v4776
      %v4780 = vadd.f32 %v4750, %v4777
      %v4781 = vadd.f32 %v4751, %v4776
      %v4782 = vld [vmem:[#allocation2 + $0x40] sm:$0xff]
      %v4783 = vld [vmem:[#allocation2 + $0x48] sm:$0x3f]
      %v4784 = vld [vmem:[#allocation3 + $0x10] sm:$0x3f]
      %v4785 = vlaneseq
      %v4786 = vshrl.u32 %v4785, 7
      %v4787 = vsub.s32 0, %v4786
      %v4788 = vrot.slane %v4784, %v4787
      %v4789 = vmul.f32 %v4782, %v4788
      %v4790 = vmul.f32 %v4783, %v4788
      %v4791 = vadd.f32 %v4765, %v4789
      %v4792 = vadd.f32 %v4766, %v4790
      %v4793 = vlaneseq
      %v4794 = vshrl.u32 %v4793, 7
      %v4795 = vsub.s32 1, %v4794
      %v4796 = vrot.slane %v4784, %v4795
      %v4797 = vmul.f32 %v4782, %v4796
      %v4798 = vmul.f32 %v4783, %v4796
      %v4799 = vadd.f32 %v4780, %v4797
      %v4800 = vadd.f32 %v4781, %v4798
      %v4801 = vlaneseq
      %v4802 = vshrl.u32 %v4801, 7
      %v4803 = vsub.s32 2, %v4802
      %v4804 = vrot.slane %v4784, %v4803
      %v4805 = vmul.f32 %v4782, %v4804
      %v4806 = vmul.f32 %v4783, %v4804
      %v4809 = vrot.slane %v4805, 2
      %v4810 = vrot.slane %v4806, 2
      %v4811 = vsel %vm3270, %v4809, %v4810
      %v4814 = vadd.f32 %v4791, %v4811
      %v4815 = vadd.f32 %v4792, %v4810
      %v4816 = vlaneseq
      %v4817 = vshrl.u32 %v4816, 7
      %v4818 = vsub.s32 3, %v4817
      %v4819 = vrot.slane %v4784, %v4818
      %v4820 = vmul.f32 %v4782, %v4819
      %v4821 = vmul.f32 %v4783, %v4819
      %v4824 = vrot.slane %v4820, 2
      %v4825 = vrot.slane %v4821, 2
      %v4826 = vsel %vm3270, %v4824, %v4825
      %v4829 = vadd.f32 %v4799, %v4826
      %v4830 = vadd.f32 %v4800, %v4825
      %v4831 = vlaneseq
      %v4832 = vshrl.u32 %v4831, 7
      %v4833 = vsub.s32 4, %v4832
      %v4834 = vrot.slane %v4784, %v4833
      %v4835 = vmul.f32 %v4782, %v4834
      %v4836 = vmul.f32 %v4783, %v4834
      %v4839 = vrot.slane %v4835, 4
      %v4840 = vrot.slane %v4836, 4
      %v4841 = vsel %vm3301, %v4839, %v4840
      %v4844 = vadd.f32 %v4814, %v4841
      %v4845 = vadd.f32 %v4815, %v4840
      %v4846 = vlaneseq
      %v4847 = vshrl.u32 %v4846, 7
      %v4848 = vsub.s32 5, %v4847
      %v4849 = vrot.slane %v4784, %v4848
      %v4850 = vmul.f32 %v4782, %v4849
      %v4851 = vmul.f32 %v4783, %v4849
      %v4854 = vrot.slane %v4850, 4
      %v4855 = vrot.slane %v4851, 4
      %v4856 = vsel %vm3301, %v4854, %v4855
      %v4859 = vadd.f32 %v4829, %v4856
      %v4860 = vadd.f32 %v4830, %v4855
      %v4861 = vld [vmem:[#allocation2 + $0x50] sm:$0xff]
      %v4862 = vld [vmem:[#allocation2 + $0x58] sm:$0x3f]
      %v4863 = vld [vmem:[#allocation3 + $0x20] sm:$0x3f]
      %v4864 = vlaneseq
      %v4865 = vshrl.u32 %v4864, 7
      %v4866 = vsub.s32 0, %v4865
      %v4867 = vrot.slane %v4863, %v4866
      %v4868 = vmul.f32 %v4861, %v4867
      %v4869 = vmul.f32 %v4862, %v4867
      %v4870 = vadd.f32 %v4844, %v4868
      %v4871 = vadd.f32 %v4845, %v4869
      %v4872 = vlaneseq
      %v4873 = vshrl.u32 %v4872, 7
      %v4874 = vsub.s32 1, %v4873
      %v4875 = vrot.slane %v4863, %v4874
      %v4876 = vmul.f32 %v4861, %v4875
      %v4877 = vmul.f32 %v4862, %v4875
      %v4878 = vadd.f32 %v4859, %v4876
      %v4879 = vadd.f32 %v4860, %v4877
      %v4880 = vlaneseq
      %v4881 = vshrl.u32 %v4880, 7
      %v4882 = vsub.s32 2, %v4881
      %v4883 = vrot.slane %v4863, %v4882
      %v4884 = vmul.f32 %v4861, %v4883
      %v4885 = vmul.f32 %v4862, %v4883
      %v4888 = vrot.slane %v4884, 2
      %v4889 = vrot.slane %v4885, 2
      %v4890 = vsel %vm3270, %v4888, %v4889
      %v4893 = vadd.f32 %v4870, %v4890
      %v4894 = vadd.f32 %v4871, %v4889
      %v4895 = vlaneseq
      %v4896 = vshrl.u32 %v4895, 7
      %v4897 = vsub.s32 3, %v4896
      %v4898 = vrot.slane %v4863, %v4897
      %v4899 = vmul.f32 %v4861, %v4898
      %v4900 = vmul.f32 %v4862, %v4898
      %v4903 = vrot.slane %v4899, 2
      %v4904 = vrot.slane %v4900, 2
      %v4905 = vsel %vm3270, %v4903, %v4904
      %v4908 = vadd.f32 %v4878, %v4905
      %v4909 = vadd.f32 %v4879, %v4904
      %v4910 = vlaneseq
      %v4911 = vshrl.u32 %v4910, 7
      %v4912 = vsub.s32 4, %v4911
      %v4913 = vrot.slane %v4863, %v4912
      %v4914 = vmul.f32 %v4861, %v4913
      %v4915 = vmul.f32 %v4862, %v4913
      %v4918 = vrot.slane %v4914, 4
      %v4919 = vrot.slane %v4915, 4
      %v4920 = vsel %vm3301, %v4918, %v4919
      %v4923 = vadd.f32 %v4893, %v4920
      %v4924 = vadd.f32 %v4894, %v4919
      %v4925 = vlaneseq
      %v4926 = vshrl.u32 %v4925, 7
      %v4927 = vsub.s32 5, %v4926
      %v4928 = vrot.slane %v4863, %v4927
      %v4929 = vmul.f32 %v4861, %v4928
      %v4930 = vmul.f32 %v4862, %v4928
      %v4933 = vrot.slane %v4929, 4
      %v4934 = vrot.slane %v4930, 4
      %v4935 = vsel %vm3301, %v4933, %v4934
      %v4938 = vadd.f32 %v4908, %v4935
      %v4939 = vadd.f32 %v4909, %v4934
      %v4940 = vld [vmem:[#allocation2 + $0x60] sm:$0xff]
      %v4941 = vld [vmem:[#allocation2 + $0x68] sm:$0x3f]
      %v4942 = vld [vmem:[#allocation3 + $0x30] sm:$0x3f]
      %v4943 = vlaneseq
      %v4944 = vshrl.u32 %v4943, 7
      %v4945 = vsub.s32 0, %v4944
      %v4946 = vrot.slane %v4942, %v4945
      %v4947 = vmul.f32 %v4940, %v4946
      %v4948 = vmul.f32 %v4941, %v4946
      %v4949 = vadd.f32 %v4923, %v4947
      %v4950 = vadd.f32 %v4924, %v4948
      %v4951 = vlaneseq
      %v4952 = vshrl.u32 %v4951, 7
      %v4953 = vsub.s32 1, %v4952
      %v4954 = vrot.slane %v4942, %v4953
      %v4955 = vmul.f32 %v4940, %v4954
      %v4956 = vmul.f32 %v4941, %v4954
      %v4957 = vadd.f32 %v4938, %v4955
      %v4958 = vadd.f32 %v4939, %v4956
      %v4959 = vlaneseq
      %v4960 = vshrl.u32 %v4959, 7
      %v4961 = vsub.s32 2, %v4960
      %v4962 = vrot.slane %v4942, %v4961
      %v4963 = vmul.f32 %v4940, %v4962
      %v4964 = vmul.f32 %v4941, %v4962
      %v4967 = vrot.slane %v4963, 2
      %v4968 = vrot.slane %v4964, 2
      %v4969 = vsel %vm3270, %v4967, %v4968
      %v4972 = vadd.f32 %v4949, %v4969
      %v4973 = vadd.f32 %v4950, %v4968
      %v4974 = vlaneseq
      %v4975 = vshrl.u32 %v4974, 7
      %v4976 = vsub.s32 3, %v4975
      %v4977 = vrot.slane %v4942, %v4976
      %v4978 = vmul.f32 %v4940, %v4977
      %v4979 = vmul.f32 %v4941, %v4977
      %v4982 = vrot.slane %v4978, 2
      %v4983 = vrot.slane %v4979, 2
      %v4984 = vsel %vm3270, %v4982, %v4983
      %v4987 = vadd.f32 %v4957, %v4984
      %v4988 = vadd.f32 %v4958, %v4983
      %v4989 = vlaneseq
      %v4990 = vshrl.u32 %v4989, 7
      %v4991 = vsub.s32 4, %v4990
      %v4992 = vrot.slane %v4942, %v4991
      %v4993 = vmul.f32 %v4940, %v4992
      %v4994 = vmul.f32 %v4941, %v4992
      %v4997 = vrot.slane %v4993, 4
      %v4998 = vrot.slane %v4994, 4
      %v4999 = vsel %vm3301, %v4997, %v4998
      %v5002 = vadd.f32 %v4972, %v4999
      %v5003 = vadd.f32 %v4973, %v4998
      %v5004 = vlaneseq
      %v5005 = vshrl.u32 %v5004, 7
      %v5006 = vsub.s32 5, %v5005
      %v5007 = vrot.slane %v4942, %v5006
      %v5008 = vmul.f32 %v4940, %v5007
      %v5009 = vmul.f32 %v4941, %v5007
      %v5012 = vrot.slane %v5008, 4
      %v5013 = vrot.slane %v5009, 4
      %v5014 = vsel %vm3301, %v5012, %v5013
      %v5017 = vadd.f32 %v4987, %v5014
      %v5018 = vadd.f32 %v4988, %v5013
      %v5019 = vld [vmem:[#allocation2 + $0x70] sm:$0xff]
      %v5020 = vld [vmem:[#allocation2 + $0x78] sm:$0x3f]
      %v5021 = vld [vmem:[#allocation3 + $0x40] sm:$0x3f]
      %v5022 = vlaneseq
      %v5023 = vshrl.u32 %v5022, 7
      %v5024 = vsub.s32 0, %v5023
      %v5025 = vrot.slane %v5021, %v5024
      %v5026 = vmul.f32 %v5019, %v5025
      %v5027 = vmul.f32 %v5020, %v5025
      %v5028 = vadd.f32 %v5002, %v5026
      %v5029 = vadd.f32 %v5003, %v5027
      %v5030 = vlaneseq
      %v5031 = vshrl.u32 %v5030, 7
      %v5032 = vsub.s32 1, %v5031
      %v5033 = vrot.slane %v5021, %v5032
      %v5034 = vmul.f32 %v5019, %v5033
      %v5035 = vmul.f32 %v5020, %v5033
      %v5036 = vadd.f32 %v5017, %v5034
      %v5037 = vadd.f32 %v5018, %v5035
      %v5038 = vlaneseq
      %v5039 = vshrl.u32 %v5038, 7
      %v5040 = vsub.s32 2, %v5039
      %v5041 = vrot.slane %v5021, %v5040
      %v5042 = vmul.f32 %v5019, %v5041
      %v5043 = vmul.f32 %v5020, %v5041
      %v5046 = vrot.slane %v5042, 2
      %v5047 = vrot.slane %v5043, 2
      %v5048 = vsel %vm3270, %v5046, %v5047
      %v5051 = vadd.f32 %v5028, %v5048
      %v5052 = vadd.f32 %v5029, %v5047
      %v5053 = vlaneseq
      %v5054 = vshrl.u32 %v5053, 7
      %v5055 = vsub.s32 3, %v5054
      %v5056 = vrot.slane %v5021, %v5055
      %v5057 = vmul.f32 %v5019, %v5056
      %v5058 = vmul.f32 %v5020, %v5056
      %v5061 = vrot.slane %v5057, 2
      %v5062 = vrot.slane %v5058, 2
      %v5063 = vsel %vm3270, %v5061, %v5062
      %v5066 = vadd.f32 %v5036, %v5063
      %v5067 = vadd.f32 %v5037, %v5062
      %v5068 = vlaneseq
      %v5069 = vshrl.u32 %v5068, 7
      %v5070 = vsub.s32 4, %v5069
      %v5071 = vrot.slane %v5021, %v5070
      %v5072 = vmul.f32 %v5019, %v5071
      %v5073 = vmul.f32 %v5020, %v5071
      %v5076 = vrot.slane %v5072, 4
      %v5077 = vrot.slane %v5073, 4
      %v5078 = vsel %vm3301, %v5076, %v5077
      %v5081 = vadd.f32 %v5051, %v5078
      %v5082 = vadd.f32 %v5052, %v5077
      %v5083 = vlaneseq
      %v5084 = vshrl.u32 %v5083, 7
      %v5085 = vsub.s32 5, %v5084
      %v5086 = vrot.slane %v5021, %v5085
      %v5087 = vmul.f32 %v5019, %v5086
      %v5088 = vmul.f32 %v5020, %v5086
      %v5091 = vrot.slane %v5087, 4
      %v5092 = vrot.slane %v5088, 4
      %v5093 = vsel %vm3301, %v5091, %v5092
      %v5096 = vadd.f32 %v5066, %v5093
      %v5097 = vadd.f32 %v5067, %v5092
      %v5098 = vld [vmem:[#allocation2 + $0x80] sm:$0xff]
      %v5099 = vld [vmem:[#allocation2 + $0x88] sm:$0x3f]
      %v5100 = vld [vmem:[#allocation3 + $0x50] sm:$0x3f]
      %v5101 = vlaneseq
      %v5102 = vshrl.u32 %v5101, 7
      %v5103 = vsub.s32 0, %v5102
      %v5104 = vrot.slane %v5100, %v5103
      %v5105 = vmul.f32 %v5098, %v5104
      %v5106 = vmul.f32 %v5099, %v5104
      %v5107 = vadd.f32 %v5081, %v5105
      %v5108 = vadd.f32 %v5082, %v5106
      %v5109 = vlaneseq
      %v5110 = vshrl.u32 %v5109, 7
      %v5111 = vsub.s32 1, %v5110
      %v5112 = vrot.slane %v5100, %v5111
      %v5113 = vmul.f32 %v5098, %v5112
      %v5114 = vmul.f32 %v5099, %v5112
      %v5115 = vadd.f32 %v5096, %v5113
      %v5116 = vadd.f32 %v5097, %v5114
      %v5117 = vlaneseq
      %v5118 = vshrl.u32 %v5117, 7
      %v5119 = vsub.s32 2, %v5118
      %v5120 = vrot.slane %v5100, %v5119
      %v5121 = vmul.f32 %v5098, %v5120
      %v5122 = vmul.f32 %v5099, %v5120
      %v5125 = vrot.slane %v5121, 2
      %v5126 = vrot.slane %v5122, 2
      %v5127 = vsel %vm3270, %v5125, %v5126
      %v5130 = vadd.f32 %v5107, %v5127
      %v5131 = vadd.f32 %v5108, %v5126
      %v5132 = vlaneseq
      %v5133 = vshrl.u32 %v5132, 7
      %v5134 = vsub.s32 3, %v5133
      %v5135 = vrot.slane %v5100, %v5134
      %v5136 = vmul.f32 %v5098, %v5135
      %v5137 = vmul.f32 %v5099, %v5135
      %v5140 = vrot.slane %v5136, 2
      %v5141 = vrot.slane %v5137, 2
      %v5142 = vsel %vm3270, %v5140, %v5141
      %v5145 = vadd.f32 %v5115, %v5142
      %v5146 = vadd.f32 %v5116, %v5141
      %v5147 = vlaneseq
      %v5148 = vshrl.u32 %v5147, 7
      %v5149 = vsub.s32 4, %v5148
      %v5150 = vrot.slane %v5100, %v5149
      %v5151 = vmul.f32 %v5098, %v5150
      %v5152 = vmul.f32 %v5099, %v5150
      %v5155 = vrot.slane %v5151, 4
      %v5156 = vrot.slane %v5152, 4
      %v5157 = vsel %vm3301, %v5155, %v5156
      %v5160 = vadd.f32 %v5130, %v5157
      %v5161 = vadd.f32 %v5131, %v5156
      %v5162 = vlaneseq
      %v5163 = vshrl.u32 %v5162, 7
      %v5164 = vsub.s32 5, %v5163
      %v5165 = vrot.slane %v5100, %v5164
      %v5166 = vmul.f32 %v5098, %v5165
      %v5167 = vmul.f32 %v5099, %v5165
      %v5170 = vrot.slane %v5166, 4
      %v5171 = vrot.slane %v5167, 4
      %v5172 = vsel %vm3301, %v5170, %v5171
      %v5175 = vadd.f32 %v5145, %v5172
      %v5176 = vadd.f32 %v5146, %v5171
      %v5179 = vrot.slane %v5175, 1
      %v5180 = vrot.slane %v5176, 1
      %v5181 = vsel %vm3721, %v5179, %v5180
      %v5184 = vadd.f32 %v5160, %v5181
      %v5185 = vadd.f32 %v5161, %v5180
      %s5186 = scalar_lea.vmem %s325, 48
      %5187 = vst [vmem:[%s5186] sm:$0xff] %v5184
      %5188 = vst [vmem:[%s5186 + $0x8] sm:$0x1] %v5185
      %v5189 = vld [vmem:[#allocation2 + $0x40] sm:$0xff]
      %v5190 = vld [vmem:[#allocation2 + $0x48] sm:$0x3f]
      %v5191 = vld [vmem:[#allocation3] sm:$0x3f]
      %v5192 = vlaneseq
      %v5193 = vshrl.u32 %v5192, 7
      %v5194 = vsub.s32 0, %v5193
      %v5195 = vrot.slane %v5191, %v5194
      %v5196 = vmul.f32 %v5189, %v5195
      %v5197 = vmul.f32 %v5190, %v5195
      %v5198 = vadd.f32 %v5196, 0.0
      %v5199 = vadd.f32 %v5197, 0.0
      %v5200 = vlaneseq
      %v5201 = vshrl.u32 %v5200, 7
      %v5202 = vsub.s32 1, %v5201
      %v5203 = vrot.slane %v5191, %v5202
      %v5204 = vmul.f32 %v5189, %v5203
      %v5205 = vmul.f32 %v5190, %v5203
      %v5206 = vadd.f32 %v5204, 0.0
      %v5207 = vadd.f32 %v5205, 0.0
      %v5208 = vlaneseq
      %v5209 = vshrl.u32 %v5208, 7
      %v5210 = vsub.s32 2, %v5209
      %v5211 = vrot.slane %v5191, %v5210
      %v5212 = vmul.f32 %v5189, %v5211
      %v5213 = vmul.f32 %v5190, %v5211
      %v5216 = vrot.slane %v5212, 2
      %v5217 = vrot.slane %v5213, 2
      %v5218 = vsel %vm3270, %v5216, %v5217
      %v5221 = vadd.f32 %v5198, %v5218
      %v5222 = vadd.f32 %v5199, %v5217
      %v5223 = vlaneseq
      %v5224 = vshrl.u32 %v5223, 7
      %v5225 = vsub.s32 3, %v5224
      %v5226 = vrot.slane %v5191, %v5225
      %v5227 = vmul.f32 %v5189, %v5226
      %v5228 = vmul.f32 %v5190, %v5226
      %v5231 = vrot.slane %v5227, 2
      %v5232 = vrot.slane %v5228, 2
      %v5233 = vsel %vm3270, %v5231, %v5232
      %v5236 = vadd.f32 %v5206, %v5233
      %v5237 = vadd.f32 %v5207, %v5232
      %v5238 = vlaneseq
      %v5239 = vshrl.u32 %v5238, 7
      %v5240 = vsub.s32 4, %v5239
      %v5241 = vrot.slane %v5191, %v5240
      %v5242 = vmul.f32 %v5189, %v5241
      %v5243 = vmul.f32 %v5190, %v5241
      %v5246 = vrot.slane %v5242, 4
      %v5247 = vrot.slane %v5243, 4
      %v5248 = vsel %vm3301, %v5246, %v5247
      %v5251 = vadd.f32 %v5221, %v5248
      %v5252 = vadd.f32 %v5222, %v5247
      %v5253 = vlaneseq
      %v5254 = vshrl.u32 %v5253, 7
      %v5255 = vsub.s32 5, %v5254
      %v5256 = vrot.slane %v5191, %v5255
      %v5257 = vmul.f32 %v5189, %v5256
      %v5258 = vmul.f32 %v5190, %v5256
      %v5261 = vrot.slane %v5257, 4
      %v5262 = vrot.slane %v5258, 4
      %v5263 = vsel %vm3301, %v5261, %v5262
      %v5266 = vadd.f32 %v5236, %v5263
      %v5267 = vadd.f32 %v5237, %v5262
      %v5268 = vld [vmem:[#allocation2 + $0x50] sm:$0xff]
      %v5269 = vld [vmem:[#allocation2 + $0x58] sm:$0x3f]
      %v5270 = vld [vmem:[#allocation3 + $0x10] sm:$0x3f]
      %v5271 = vlaneseq
      %v5272 = vshrl.u32 %v5271, 7
      %v5273 = vsub.s32 0, %v5272
      %v5274 = vrot.slane %v5270, %v5273
      %v5275 = vmul.f32 %v5268, %v5274
      %v5276 = vmul.f32 %v5269, %v5274
      %v5277 = vadd.f32 %v5251, %v5275
      %v5278 = vadd.f32 %v5252, %v5276
      %v5279 = vlaneseq
      %v5280 = vshrl.u32 %v5279, 7
      %v5281 = vsub.s32 1, %v5280
      %v5282 = vrot.slane %v5270, %v5281
      %v5283 = vmul.f32 %v5268, %v5282
      %v5284 = vmul.f32 %v5269, %v5282
      %v5285 = vadd.f32 %v5266, %v5283
      %v5286 = vadd.f32 %v5267, %v5284
      %v5287 = vlaneseq
      %v5288 = vshrl.u32 %v5287, 7
      %v5289 = vsub.s32 2, %v5288
      %v5290 = vrot.slane %v5270, %v5289
      %v5291 = vmul.f32 %v5268, %v5290
      %v5292 = vmul.f32 %v5269, %v5290
      %v5295 = vrot.slane %v5291, 2
      %v5296 = vrot.slane %v5292, 2
      %v5297 = vsel %vm3270, %v5295, %v5296
      %v5300 = vadd.f32 %v5277, %v5297
      %v5301 = vadd.f32 %v5278, %v5296
      %v5302 = vlaneseq
      %v5303 = vshrl.u32 %v5302, 7
      %v5304 = vsub.s32 3, %v5303
      %v5305 = vrot.slane %v5270, %v5304
      %v5306 = vmul.f32 %v5268, %v5305
      %v5307 = vmul.f32 %v5269, %v5305
      %v5310 = vrot.slane %v5306, 2
      %v5311 = vrot.slane %v5307, 2
      %v5312 = vsel %vm3270, %v5310, %v5311
      %v5315 = vadd.f32 %v5285, %v5312
      %v5316 = vadd.f32 %v5286, %v5311
      %v5317 = vlaneseq
      %v5318 = vshrl.u32 %v5317, 7
      %v5319 = vsub.s32 4, %v5318
      %v5320 = vrot.slane %v5270, %v5319
      %v5321 = vmul.f32 %v5268, %v5320
      %v5322 = vmul.f32 %v5269, %v5320
      %v5325 = vrot.slane %v5321, 4
      %v5326 = vrot.slane %v5322, 4
      %v5327 = vsel %vm3301, %v5325, %v5326
      %v5330 = vadd.f32 %v5300, %v5327
      %v5331 = vadd.f32 %v5301, %v5326
      %v5332 = vlaneseq
      %v5333 = vshrl.u32 %v5332, 7
      %v5334 = vsub.s32 5, %v5333
      %v5335 = vrot.slane %v5270, %v5334
      %v5336 = vmul.f32 %v5268, %v5335
      %v5337 = vmul.f32 %v5269, %v5335
      %v5340 = vrot.slane %v5336, 4
      %v5341 = vrot.slane %v5337, 4
      %v5342 = vsel %vm3301, %v5340, %v5341
      %v5345 = vadd.f32 %v5315, %v5342
      %v5346 = vadd.f32 %v5316, %v5341
      %v5347 = vld [vmem:[#allocation2 + $0x60] sm:$0xff]
      %v5348 = vld [vmem:[#allocation2 + $0x68] sm:$0x3f]
      %v5349 = vld [vmem:[#allocation3 + $0x20] sm:$0x3f]
      %v5350 = vlaneseq
      %v5351 = vshrl.u32 %v5350, 7
      %v5352 = vsub.s32 0, %v5351
      %v5353 = vrot.slane %v5349, %v5352
      %v5354 = vmul.f32 %v5347, %v5353
      %v5355 = vmul.f32 %v5348, %v5353
      %v5356 = vadd.f32 %v5330, %v5354
      %v5357 = vadd.f32 %v5331, %v5355
      %v5358 = vlaneseq
      %v5359 = vshrl.u32 %v5358, 7
      %v5360 = vsub.s32 1, %v5359
      %v5361 = vrot.slane %v5349, %v5360
      %v5362 = vmul.f32 %v5347, %v5361
      %v5363 = vmul.f32 %v5348, %v5361
      %v5364 = vadd.f32 %v5345, %v5362
      %v5365 = vadd.f32 %v5346, %v5363
      %v5366 = vlaneseq
      %v5367 = vshrl.u32 %v5366, 7
      %v5368 = vsub.s32 2, %v5367
      %v5369 = vrot.slane %v5349, %v5368
      %v5370 = vmul.f32 %v5347, %v5369
      %v5371 = vmul.f32 %v5348, %v5369
      %v5374 = vrot.slane %v5370, 2
      %v5375 = vrot.slane %v5371, 2
      %v5376 = vsel %vm3270, %v5374, %v5375
      %v5379 = vadd.f32 %v5356, %v5376
      %v5380 = vadd.f32 %v5357, %v5375
      %v5381 = vlaneseq
      %v5382 = vshrl.u32 %v5381, 7
      %v5383 = vsub.s32 3, %v5382
      %v5384 = vrot.slane %v5349, %v5383
      %v5385 = vmul.f32 %v5347, %v5384
      %v5386 = vmul.f32 %v5348, %v5384
      %v5389 = vrot.slane %v5385, 2
      %v5390 = vrot.slane %v5386, 2
      %v5391 = vsel %vm3270, %v5389, %v5390
      %v5394 = vadd.f32 %v5364, %v5391
      %v5395 = vadd.f32 %v5365, %v5390
      %v5396 = vlaneseq
      %v5397 = vshrl.u32 %v5396, 7
      %v5398 = vsub.s32 4, %v5397
      %v5399 = vrot.slane %v5349, %v5398
      %v5400 = vmul.f32 %v5347, %v5399
      %v5401 = vmul.f32 %v5348, %v5399
      %v5404 = vrot.slane %v5400, 4
      %v5405 = vrot.slane %v5401, 4
      %v5406 = vsel %vm3301, %v5404, %v5405
      %v5409 = vadd.f32 %v5379, %v5406
      %v5410 = vadd.f32 %v5380, %v5405
      %v5411 = vlaneseq
      %v5412 = vshrl.u32 %v5411, 7
      %v5413 = vsub.s32 5, %v5412
      %v5414 = vrot.slane %v5349, %v5413
      %v5415 = vmul.f32 %v5347, %v5414
      %v5416 = vmul.f32 %v5348, %v5414
      %v5419 = vrot.slane %v5415, 4
      %v5420 = vrot.slane %v5416, 4
      %v5421 = vsel %vm3301, %v5419, %v5420
      %v5424 = vadd.f32 %v5394, %v5421
      %v5425 = vadd.f32 %v5395, %v5420
      %v5426 = vld [vmem:[#allocation2 + $0x70] sm:$0xff]
      %v5427 = vld [vmem:[#allocation2 + $0x78] sm:$0x3f]
      %v5428 = vld [vmem:[#allocation3 + $0x30] sm:$0x3f]
      %v5429 = vlaneseq
      %v5430 = vshrl.u32 %v5429, 7
      %v5431 = vsub.s32 0, %v5430
      %v5432 = vrot.slane %v5428, %v5431
      %v5433 = vmul.f32 %v5426, %v5432
      %v5434 = vmul.f32 %v5427, %v5432
      %v5435 = vadd.f32 %v5409, %v5433
      %v5436 = vadd.f32 %v5410, %v5434
      %v5437 = vlaneseq
      %v5438 = vshrl.u32 %v5437, 7
      %v5439 = vsub.s32 1, %v5438
      %v5440 = vrot.slane %v5428, %v5439
      %v5441 = vmul.f32 %v5426, %v5440
      %v5442 = vmul.f32 %v5427, %v5440
      %v5443 = vadd.f32 %v5424, %v5441
      %v5444 = vadd.f32 %v5425, %v5442
      %v5445 = vlaneseq
      %v5446 = vshrl.u32 %v5445, 7
      %v5447 = vsub.s32 2, %v5446
      %v5448 = vrot.slane %v5428, %v5447
      %v5449 = vmul.f32 %v5426, %v5448
      %v5450 = vmul.f32 %v5427, %v5448
      %v5453 = vrot.slane %v5449, 2
      %v5454 = vrot.slane %v5450, 2
      %v5455 = vsel %vm3270, %v5453, %v5454
      %v5458 = vadd.f32 %v5435, %v5455
      %v5459 = vadd.f32 %v5436, %v5454
      %v5460 = vlaneseq
      %v5461 = vshrl.u32 %v5460, 7
      %v5462 = vsub.s32 3, %v5461
      %v5463 = vrot.slane %v5428, %v5462
      %v5464 = vmul.f32 %v5426, %v5463
      %v5465 = vmul.f32 %v5427, %v5463
      %v5468 = vrot.slane %v5464, 2
      %v5469 = vrot.slane %v5465, 2
      %v5470 = vsel %vm3270, %v5468, %v5469
      %v5473 = vadd.f32 %v5443, %v5470
      %v5474 = vadd.f32 %v5444, %v5469
      %v5475 = vlaneseq
      %v5476 = vshrl.u32 %v5475, 7
      %v5477 = vsub.s32 4, %v5476
      %v5478 = vrot.slane %v5428, %v5477
      %v5479 = vmul.f32 %v5426, %v5478
      %v5480 = vmul.f32 %v5427, %v5478
      %v5483 = vrot.slane %v5479, 4
      %v5484 = vrot.slane %v5480, 4
      %v5485 = vsel %vm3301, %v5483, %v5484
      %v5488 = vadd.f32 %v5458, %v5485
      %v5489 = vadd.f32 %v5459, %v5484
      %v5490 = vlaneseq
      %v5491 = vshrl.u32 %v5490, 7
      %v5492 = vsub.s32 5, %v5491
      %v5493 = vrot.slane %v5428, %v5492
      %v5494 = vmul.f32 %v5426, %v5493
      %v5495 = vmul.f32 %v5427, %v5493
      %v5498 = vrot.slane %v5494, 4
      %v5499 = vrot.slane %v5495, 4
      %v5500 = vsel %vm3301, %v5498, %v5499
      %v5503 = vadd.f32 %v5473, %v5500
      %v5504 = vadd.f32 %v5474, %v5499
      %v5505 = vld [vmem:[#allocation2 + $0x80] sm:$0xff]
      %v5506 = vld [vmem:[#allocation2 + $0x88] sm:$0x3f]
      %v5507 = vld [vmem:[#allocation3 + $0x40] sm:$0x3f]
      %v5508 = vlaneseq
      %v5509 = vshrl.u32 %v5508, 7
      %v5510 = vsub.s32 0, %v5509
      %v5511 = vrot.slane %v5507, %v5510
      %v5512 = vmul.f32 %v5505, %v5511
      %v5513 = vmul.f32 %v5506, %v5511
      %v5514 = vadd.f32 %v5488, %v5512
      %v5515 = vadd.f32 %v5489, %v5513
      %v5516 = vlaneseq
      %v5517 = vshrl.u32 %v5516, 7
      %v5518 = vsub.s32 1, %v5517
      %v5519 = vrot.slane %v5507, %v5518
      %v5520 = vmul.f32 %v5505, %v5519
      %v5521 = vmul.f32 %v5506, %v5519
      %v5522 = vadd.f32 %v5503, %v5520
      %v5523 = vadd.f32 %v5504, %v5521
      %v5524 = vlaneseq
      %v5525 = vshrl.u32 %v5524, 7
      %v5526 = vsub.s32 2, %v5525
      %v5527 = vrot.slane %v5507, %v5526
      %v5528 = vmul.f32 %v5505, %v5527
      %v5529 = vmul.f32 %v5506, %v5527
      %v5532 = vrot.slane %v5528, 2
      %v5533 = vrot.slane %v5529, 2
      %v5534 = vsel %vm3270, %v5532, %v5533
      %v5537 = vadd.f32 %v5514, %v5534
      %v5538 = vadd.f32 %v5515, %v5533
      %v5539 = vlaneseq
      %v5540 = vshrl.u32 %v5539, 7
      %v5541 = vsub.s32 3, %v5540
      %v5542 = vrot.slane %v5507, %v5541
      %v5543 = vmul.f32 %v5505, %v5542
      %v5544 = vmul.f32 %v5506, %v5542
      %v5547 = vrot.slane %v5543, 2
      %v5548 = vrot.slane %v5544, 2
      %v5549 = vsel %vm3270, %v5547, %v5548
      %v5552 = vadd.f32 %v5522, %v5549
      %v5553 = vadd.f32 %v5523, %v5548
      %v5554 = vlaneseq
      %v5555 = vshrl.u32 %v5554, 7
      %v5556 = vsub.s32 4, %v5555
      %v5557 = vrot.slane %v5507, %v5556
      %v5558 = vmul.f32 %v5505, %v5557
      %v5559 = vmul.f32 %v5506, %v5557
      %v5562 = vrot.slane %v5558, 4
      %v5563 = vrot.slane %v5559, 4
      %v5564 = vsel %vm3301, %v5562, %v5563
      %v5567 = vadd.f32 %v5537, %v5564
      %v5568 = vadd.f32 %v5538, %v5563
      %v5569 = vlaneseq
      %v5570 = vshrl.u32 %v5569, 7
      %v5571 = vsub.s32 5, %v5570
      %v5572 = vrot.slane %v5507, %v5571
      %v5573 = vmul.f32 %v5505, %v5572
      %v5574 = vmul.f32 %v5506, %v5572
      %v5577 = vrot.slane %v5573, 4
      %v5578 = vrot.slane %v5574, 4
      %v5579 = vsel %vm3301, %v5577, %v5578
      %v5582 = vadd.f32 %v5552, %v5579
      %v5583 = vadd.f32 %v5553, %v5578
      %v5584 = vld [vmem:[#allocation2 + $0x90] sm:$0xff]
      %v5585 = vld [vmem:[#allocation2 + $0x98] sm:$0x3f]
      %v5586 = vld [vmem:[#allocation3 + $0x50] sm:$0x3f]
      %v5587 = vlaneseq
      %v5588 = vshrl.u32 %v5587, 7
      %v5589 = vsub.s32 0, %v5588
      %v5590 = vrot.slane %v5586, %v5589
      %v5591 = vmul.f32 %v5584, %v5590
      %v5592 = vmul.f32 %v5585, %v5590
      %v5593 = vadd.f32 %v5567, %v5591
      %v5594 = vadd.f32 %v5568, %v5592
      %v5595 = vlaneseq
      %v5596 = vshrl.u32 %v5595, 7
      %v5597 = vsub.s32 1, %v5596
      %v5598 = vrot.slane %v5586, %v5597
      %v5599 = vmul.f32 %v5584, %v5598
      %v5600 = vmul.f32 %v5585, %v5598
      %v5601 = vadd.f32 %v5582, %v5599
      %v5602 = vadd.f32 %v5583, %v5600
      %v5603 = vlaneseq
      %v5604 = vshrl.u32 %v5603, 7
      %v5605 = vsub.s32 2, %v5604
      %v5606 = vrot.slane %v5586, %v5605
      %v5607 = vmul.f32 %v5584, %v5606
      %v5608 = vmul.f32 %v5585, %v5606
      %v5611 = vrot.slane %v5607, 2
      %v5612 = vrot.slane %v5608, 2
      %v5613 = vsel %vm3270, %v5611, %v5612
      %v5616 = vadd.f32 %v5593, %v5613
      %v5617 = vadd.f32 %v5594, %v5612
      %v5618 = vlaneseq
      %v5619 = vshrl.u32 %v5618, 7
      %v5620 = vsub.s32 3, %v5619
      %v5621 = vrot.slane %v5586, %v5620
      %v5622 = vmul.f32 %v5584, %v5621
      %v5623 = vmul.f32 %v5585, %v5621
      %v5626 = vrot.slane %v5622, 2
      %v5627 = vrot.slane %v5623, 2
      %v5628 = vsel %vm3270, %v5626, %v5627
      %v5631 = vadd.f32 %v5601, %v5628
      %v5632 = vadd.f32 %v5602, %v5627
      %v5633 = vlaneseq
      %v5634 = vshrl.u32 %v5633, 7
      %v5635 = vsub.s32 4, %v5634
      %v5636 = vrot.slane %v5586, %v5635
      %v5637 = vmul.f32 %v5584, %v5636
      %v5638 = vmul.f32 %v5585, %v5636
      %v5641 = vrot.slane %v5637, 4
      %v5642 = vrot.slane %v5638, 4
      %v5643 = vsel %vm3301, %v5641, %v5642
      %v5646 = vadd.f32 %v5616, %v5643
      %v5647 = vadd.f32 %v5617, %v5642
      %v5648 = vlaneseq
      %v5649 = vshrl.u32 %v5648, 7
      %v5650 = vsub.s32 5, %v5649
      %v5651 = vrot.slane %v5586, %v5650
      %v5652 = vmul.f32 %v5584, %v5651
      %v5653 = vmul.f32 %v5585, %v5651
      %v5656 = vrot.slane %v5652, 4
      %v5657 = vrot.slane %v5653, 4
      %v5658 = vsel %vm3301, %v5656, %v5657
      %v5661 = vadd.f32 %v5631, %v5658
      %v5662 = vadd.f32 %v5632, %v5657
      %v5665 = vrot.slane %v5661, 1
      %v5666 = vrot.slane %v5662, 1
      %v5667 = vsel %vm3721, %v5665, %v5666
      %v5670 = vadd.f32 %v5646, %v5667
      %v5671 = vadd.f32 %v5647, %v5666
      %s5672 = scalar_lea.vmem %s325, 64
      %5673 = vst [vmem:[%s5672] sm:$0xff] %v5670
      %5674 = vst [vmem:[%s5672 + $0x8] sm:$0x1] %v5671
      %v5675 = vld [vmem:[#allocation2 + $0x50] sm:$0xff]
      %v5676 = vld [vmem:[#allocation2 + $0x58] sm:$0x3f]
      %v5677 = vld [vmem:[#allocation3] sm:$0x3f]
      %v5678 = vlaneseq
      %v5679 = vshrl.u32 %v5678, 7
      %v5680 = vsub.s32 0, %v5679
      %v5681 = vrot.slane %v5677, %v5680
      %v5682 = vmul.f32 %v5675, %v5681
      %v5683 = vmul.f32 %v5676, %v5681
      %v5684 = vadd.f32 %v5682, 0.0
      %v5685 = vadd.f32 %v5683, 0.0
      %v5686 = vlaneseq
      %v5687 = vshrl.u32 %v5686, 7
      %v5688 = vsub.s32 1, %v5687
      %v5689 = vrot.slane %v5677, %v5688
      %v5690 = vmul.f32 %v5675, %v5689
      %v5691 = vmul.f32 %v5676, %v5689
      %v5692 = vadd.f32 %v5690, 0.0
      %v5693 = vadd.f32 %v5691, 0.0
      %v5694 = vlaneseq
      %v5695 = vshrl.u32 %v5694, 7
      %v5696 = vsub.s32 2, %v5695
      %v5697 = vrot.slane %v5677, %v5696
      %v5698 = vmul.f32 %v5675, %v5697
      %v5699 = vmul.f32 %v5676, %v5697
      %v5702 = vrot.slane %v5698, 2
      %v5703 = vrot.slane %v5699, 2
      %v5704 = vsel %vm3270, %v5702, %v5703
      %v5707 = vadd.f32 %v5684, %v5704
      %v5708 = vadd.f32 %v5685, %v5703
      %v5709 = vlaneseq
      %v5710 = vshrl.u32 %v5709, 7
      %v5711 = vsub.s32 3, %v5710
      %v5712 = vrot.slane %v5677, %v5711
      %v5713 = vmul.f32 %v5675, %v5712
      %v5714 = vmul.f32 %v5676, %v5712
      %v5717 = vrot.slane %v5713, 2
      %v5718 = vrot.slane %v5714, 2
      %v5719 = vsel %vm3270, %v5717, %v5718
      %v5722 = vadd.f32 %v5692, %v5719
      %v5723 = vadd.f32 %v5693, %v5718
      %v5724 = vlaneseq
      %v5725 = vshrl.u32 %v5724, 7
      %v5726 = vsub.s32 4, %v5725
      %v5727 = vrot.slane %v5677, %v5726
      %v5728 = vmul.f32 %v5675, %v5727
      %v5729 = vmul.f32 %v5676, %v5727
      %v5732 = vrot.slane %v5728, 4
      %v5733 = vrot.slane %v5729, 4
      %v5734 = vsel %vm3301, %v5732, %v5733
      %v5737 = vadd.f32 %v5707, %v5734
      %v5738 = vadd.f32 %v5708, %v5733
      %v5739 = vlaneseq
      %v5740 = vshrl.u32 %v5739, 7
      %v5741 = vsub.s32 5, %v5740
      %v5742 = vrot.slane %v5677, %v5741
      %v5743 = vmul.f32 %v5675, %v5742
      %v5744 = vmul.f32 %v5676, %v5742
      %v5747 = vrot.slane %v5743, 4
      %v5748 = vrot.slane %v5744, 4
      %v5749 = vsel %vm3301, %v5747, %v5748
      %v5752 = vadd.f32 %v5722, %v5749
      %v5753 = vadd.f32 %v5723, %v5748
      %v5754 = vld [vmem:[#allocation2 + $0x60] sm:$0xff]
      %v5755 = vld [vmem:[#allocation2 + $0x68] sm:$0x3f]
      %v5756 = vld [vmem:[#allocation3 + $0x10] sm:$0x3f]
      %v5757 = vlaneseq
      %v5758 = vshrl.u32 %v5757, 7
      %v5759 = vsub.s32 0, %v5758
      %v5760 = vrot.slane %v5756, %v5759
      %v5761 = vmul.f32 %v5754, %v5760
      %v5762 = vmul.f32 %v5755, %v5760
      %v5763 = vadd.f32 %v5737, %v5761
      %v5764 = vadd.f32 %v5738, %v5762
      %v5765 = vlaneseq
      %v5766 = vshrl.u32 %v5765, 7
      %v5767 = vsub.s32 1, %v5766
      %v5768 = vrot.slane %v5756, %v5767
      %v5769 = vmul.f32 %v5754, %v5768
      %v5770 = vmul.f32 %v5755, %v5768
      %v5771 = vadd.f32 %v5752, %v5769
      %v5772 = vadd.f32 %v5753, %v5770
      %v5773 = vlaneseq
      %v5774 = vshrl.u32 %v5773, 7
      %v5775 = vsub.s32 2, %v5774
      %v5776 = vrot.slane %v5756, %v5775
      %v5777 = vmul.f32 %v5754, %v5776
      %v5778 = vmul.f32 %v5755, %v5776
      %v5781 = vrot.slane %v5777, 2
      %v5782 = vrot.slane %v5778, 2
      %v5783 = vsel %vm3270, %v5781, %v5782
      %v5786 = vadd.f32 %v5763, %v5783
      %v5787 = vadd.f32 %v5764, %v5782
      %v5788 = vlaneseq
      %v5789 = vshrl.u32 %v5788, 7
      %v5790 = vsub.s32 3, %v5789
      %v5791 = vrot.slane %v5756, %v5790
      %v5792 = vmul.f32 %v5754, %v5791
      %v5793 = vmul.f32 %v5755, %v5791
      %v5796 = vrot.slane %v5792, 2
      %v5797 = vrot.slane %v5793, 2
      %v5798 = vsel %vm3270, %v5796, %v5797
      %v5801 = vadd.f32 %v5771, %v5798
      %v5802 = vadd.f32 %v5772, %v5797
      %v5803 = vlaneseq
      %v5804 = vshrl.u32 %v5803, 7
      %v5805 = vsub.s32 4, %v5804
      %v5806 = vrot.slane %v5756, %v5805
      %v5807 = vmul.f32 %v5754, %v5806
      %v5808 = vmul.f32 %v5755, %v5806
      %v5811 = vrot.slane %v5807, 4
      %v5812 = vrot.slane %v5808, 4
      %v5813 = vsel %vm3301, %v5811, %v5812
      %v5816 = vadd.f32 %v5786, %v5813
      %v5817 = vadd.f32 %v5787, %v5812
      %v5818 = vlaneseq
      %v5819 = vshrl.u32 %v5818, 7
      %v5820 = vsub.s32 5, %v5819
      %v5821 = vrot.slane %v5756, %v5820
      %v5822 = vmul.f32 %v5754, %v5821
      %v5823 = vmul.f32 %v5755, %v5821
      %v5826 = vrot.slane %v5822, 4
      %v5827 = vrot.slane %v5823, 4
      %v5828 = vsel %vm3301, %v5826, %v5827
      %v5831 = vadd.f32 %v5801, %v5828
      %v5832 = vadd.f32 %v5802, %v5827
      %v5833 = vld [vmem:[#allocation2 + $0x70] sm:$0xff]
      %v5834 = vld [vmem:[#allocation2 + $0x78] sm:$0x3f]
      %v5835 = vld [vmem:[#allocation3 + $0x20] sm:$0x3f]
      %v5836 = vlaneseq
      %v5837 = vshrl.u32 %v5836, 7
      %v5838 = vsub.s32 0, %v5837
      %v5839 = vrot.slane %v5835, %v5838
      %v5840 = vmul.f32 %v5833, %v5839
      %v5841 = vmul.f32 %v5834, %v5839
      %v5842 = vadd.f32 %v5816, %v5840
      %v5843 = vadd.f32 %v5817, %v5841
      %v5844 = vlaneseq
      %v5845 = vshrl.u32 %v5844, 7
      %v5846 = vsub.s32 1, %v5845
      %v5847 = vrot.slane %v5835, %v5846
      %v5848 = vmul.f32 %v5833, %v5847
      %v5849 = vmul.f32 %v5834, %v5847
      %v5850 = vadd.f32 %v5831, %v5848
      %v5851 = vadd.f32 %v5832, %v5849
      %v5852 = vlaneseq
      %v5853 = vshrl.u32 %v5852, 7
      %v5854 = vsub.s32 2, %v5853
      %v5855 = vrot.slane %v5835, %v5854
      %v5856 = vmul.f32 %v5833, %v5855
      %v5857 = vmul.f32 %v5834, %v5855
      %v5860 = vrot.slane %v5856, 2
      %v5861 = vrot.slane %v5857, 2
      %v5862 = vsel %vm3270, %v5860, %v5861
      %v5865 = vadd.f32 %v5842, %v5862
      %v5866 = vadd.f32 %v5843, %v5861
      %v5867 = vlaneseq
      %v5868 = vshrl.u32 %v5867, 7
      %v5869 = vsub.s32 3, %v5868
      %v5870 = vrot.slane %v5835, %v5869
      %v5871 = vmul.f32 %v5833, %v5870
      %v5872 = vmul.f32 %v5834, %v5870
      %v5875 = vrot.slane %v5871, 2
      %v5876 = vrot.slane %v5872, 2
      %v5877 = vsel %vm3270, %v5875, %v5876
      %v5880 = vadd.f32 %v5850, %v5877
      %v5881 = vadd.f32 %v5851, %v5876
      %v5882 = vlaneseq
      %v5883 = vshrl.u32 %v5882, 7
      %v5884 = vsub.s32 4, %v5883
      %v5885 = vrot.slane %v5835, %v5884
      %v5886 = vmul.f32 %v5833, %v5885
      %v5887 = vmul.f32 %v5834, %v5885
      %v5890 = vrot.slane %v5886, 4
      %v5891 = vrot.slane %v5887, 4
      %v5892 = vsel %vm3301, %v5890, %v5891
      %v5895 = vadd.f32 %v5865, %v5892
      %v5896 = vadd.f32 %v5866, %v5891
      %v5897 = vlaneseq
      %v5898 = vshrl.u32 %v5897, 7
      %v5899 = vsub.s32 5, %v5898
      %v5900 = vrot.slane %v5835, %v5899
      %v5901 = vmul.f32 %v5833, %v5900
      %v5902 = vmul.f32 %v5834, %v5900
      %v5905 = vrot.slane %v5901, 4
      %v5906 = vrot.slane %v5902, 4
      %v5907 = vsel %vm3301, %v5905, %v5906
      %v5910 = vadd.f32 %v5880, %v5907
      %v5911 = vadd.f32 %v5881, %v5906
      %v5912 = vld [vmem:[#allocation2 + $0x80] sm:$0xff]
      %v5913 = vld [vmem:[#allocation2 + $0x88] sm:$0x3f]
      %v5914 = vld [vmem:[#allocation3 + $0x30] sm:$0x3f]
      %v5915 = vlaneseq
      %v5916 = vshrl.u32 %v5915, 7
      %v5917 = vsub.s32 0, %v5916
      %v5918 = vrot.slane %v5914, %v5917
      %v5919 = vmul.f32 %v5912, %v5918
      %v5920 = vmul.f32 %v5913, %v5918
      %v5921 = vadd.f32 %v5895, %v5919
      %v5922 = vadd.f32 %v5896, %v5920
      %v5923 = vlaneseq
      %v5924 = vshrl.u32 %v5923, 7
      %v5925 = vsub.s32 1, %v5924
      %v5926 = vrot.slane %v5914, %v5925
      %v5927 = vmul.f32 %v5912, %v5926
      %v5928 = vmul.f32 %v5913, %v5926
      %v5929 = vadd.f32 %v5910, %v5927
      %v5930 = vadd.f32 %v5911, %v5928
      %v5931 = vlaneseq
      %v5932 = vshrl.u32 %v5931, 7
      %v5933 = vsub.s32 2, %v5932
      %v5934 = vrot.slane %v5914, %v5933
      %v5935 = vmul.f32 %v5912, %v5934
      %v5936 = vmul.f32 %v5913, %v5934
      %v5939 = vrot.slane %v5935, 2
      %v5940 = vrot.slane %v5936, 2
      %v5941 = vsel %vm3270, %v5939, %v5940
      %v5944 = vadd.f32 %v5921, %v5941
      %v5945 = vadd.f32 %v5922, %v5940
      %v5946 = vlaneseq
      %v5947 = vshrl.u32 %v5946, 7
      %v5948 = vsub.s32 3, %v5947
      %v5949 = vrot.slane %v5914, %v5948
      %v5950 = vmul.f32 %v5912, %v5949
      %v5951 = vmul.f32 %v5913, %v5949
      %v5954 = vrot.slane %v5950, 2
      %v5955 = vrot.slane %v5951, 2
      %v5956 = vsel %vm3270, %v5954, %v5955
      %v5959 = vadd.f32 %v5929, %v5956
      %v5960 = vadd.f32 %v5930, %v5955
      %v5961 = vlaneseq
      %v5962 = vshrl.u32 %v5961, 7
      %v5963 = vsub.s32 4, %v5962
      %v5964 = vrot.slane %v5914, %v5963
      %v5965 = vmul.f32 %v5912, %v5964
      %v5966 = vmul.f32 %v5913, %v5964
      %v5969 = vrot.slane %v5965, 4
      %v5970 = vrot.slane %v5966, 4
      %v5971 = vsel %vm3301, %v5969, %v5970
      %v5974 = vadd.f32 %v5944, %v5971
      %v5975 = vadd.f32 %v5945, %v5970
      %v5976 = vlaneseq
      %v5977 = vshrl.u32 %v5976, 7
      %v5978 = vsub.s32 5, %v5977
      %v5979 = vrot.slane %v5914, %v5978
      %v5980 = vmul.f32 %v5912, %v5979
      %v5981 = vmul.f32 %v5913, %v5979
      %v5984 = vrot.slane %v5980, 4
      %v5985 = vrot.slane %v5981, 4
      %v5986 = vsel %vm3301, %v5984, %v5985
      %v5989 = vadd.f32 %v5959, %v5986
      %v5990 = vadd.f32 %v5960, %v5985
      %v5991 = vld [vmem:[#allocation2 + $0x90] sm:$0xff]
      %v5992 = vld [vmem:[#allocation2 + $0x98] sm:$0x3f]
      %v5993 = vld [vmem:[#allocation3 + $0x40] sm:$0x3f]
      %v5994 = vlaneseq
      %v5995 = vshrl.u32 %v5994, 7
      %v5996 = vsub.s32 0, %v5995
      %v5997 = vrot.slane %v5993, %v5996
      %v5998 = vmul.f32 %v5991, %v5997
      %v5999 = vmul.f32 %v5992, %v5997
      %v6000 = vadd.f32 %v5974, %v5998
      %v6001 = vadd.f32 %v5975, %v5999
      %v6002 = vlaneseq
      %v6003 = vshrl.u32 %v6002, 7
      %v6004 = vsub.s32 1, %v6003
      %v6005 = vrot.slane %v5993, %v6004
      %v6006 = vmul.f32 %v5991, %v6005
      %v6007 = vmul.f32 %v5992, %v6005
      %v6008 = vadd.f32 %v5989, %v6006
      %v6009 = vadd.f32 %v5990, %v6007
      %v6010 = vlaneseq
      %v6011 = vshrl.u32 %v6010, 7
      %v6012 = vsub.s32 2, %v6011
      %v6013 = vrot.slane %v5993, %v6012
      %v6014 = vmul.f32 %v5991, %v6013
      %v6015 = vmul.f32 %v5992, %v6013
      %v6018 = vrot.slane %v6014, 2
      %v6019 = vrot.slane %v6015, 2
      %v6020 = vsel %vm3270, %v6018, %v6019
      %v6023 = vadd.f32 %v6000, %v6020
      %v6024 = vadd.f32 %v6001, %v6019
      %v6025 = vlaneseq
      %v6026 = vshrl.u32 %v6025, 7
      %v6027 = vsub.s32 3, %v6026
      %v6028 = vrot.slane %v5993, %v6027
      %v6029 = vmul.f32 %v5991, %v6028
      %v6030 = vmul.f32 %v5992, %v6028
      %v6033 = vrot.slane %v6029, 2
      %v6034 = vrot.slane %v6030, 2
      %v6035 = vsel %vm3270, %v6033, %v6034
      %v6038 = vadd.f32 %v6008, %v6035
      %v6039 = vadd.f32 %v6009, %v6034
      %v6040 = vlaneseq
      %v6041 = vshrl.u32 %v6040, 7
      %v6042 = vsub.s32 4, %v6041
      %v6043 = vrot.slane %v5993, %v6042
      %v6044 = vmul.f32 %v5991, %v6043
      %v6045 = vmul.f32 %v5992, %v6043
      %v6048 = vrot.slane %v6044, 4
      %v6049 = vrot.slane %v6045, 4
      %v6050 = vsel %vm3301, %v6048, %v6049
      %v6053 = vadd.f32 %v6023, %v6050
      %v6054 = vadd.f32 %v6024, %v6049
      %v6055 = vlaneseq
      %v6056 = vshrl.u32 %v6055, 7
      %v6057 = vsub.s32 5, %v6056
      %v6058 = vrot.slane %v5993, %v6057
      %v6059 = vmul.f32 %v5991, %v6058
      %v6060 = vmul.f32 %v5992, %v6058
      %v6063 = vrot.slane %v6059, 4
      %v6064 = vrot.slane %v6060, 4
      %v6065 = vsel %vm3301, %v6063, %v6064
      %v6068 = vadd.f32 %v6038, %v6065
      %v6069 = vadd.f32 %v6039, %v6064
      %v6070 = vld [vmem:[#allocation2 + $0xa0] sm:$0xff]
      %v6071 = vld [vmem:[#allocation2 + $0xa8] sm:$0x3f]
      %v6072 = vld [vmem:[#allocation3 + $0x50] sm:$0x3f]
      %v6073 = vlaneseq
      %v6074 = vshrl.u32 %v6073, 7
      %v6075 = vsub.s32 0, %v6074
      %v6076 = vrot.slane %v6072, %v6075
      %v6077 = vmul.f32 %v6070, %v6076
      %v6078 = vmul.f32 %v6071, %v6076
      %v6079 = vadd.f32 %v6053, %v6077
      %v6080 = vadd.f32 %v6054, %v6078
      %v6081 = vlaneseq
      %v6082 = vshrl.u32 %v6081, 7
      %v6083 = vsub.s32 1, %v6082
      %v6084 = vrot.slane %v6072, %v6083
      %v6085 = vmul.f32 %v6070, %v6084
      %v6086 = vmul.f32 %v6071, %v6084
      %v6087 = vadd.f32 %v6068, %v6085
      %v6088 = vadd.f32 %v6069, %v6086
      %v6089 = vlaneseq
      %v6090 = vshrl.u32 %v6089, 7
      %v6091 = vsub.s32 2, %v6090
      %v6092 = vrot.slane %v6072, %v6091
      %v6093 = vmul.f32 %v6070, %v6092
      %v6094 = vmul.f32 %v6071, %v6092
      %v6097 = vrot.slane %v6093, 2
      %v6098 = vrot.slane %v6094, 2
      %v6099 = vsel %vm3270, %v6097, %v6098
      %v6102 = vadd.f32 %v6079, %v6099
      %v6103 = vadd.f32 %v6080, %v6098
      %v6104 = vlaneseq
      %v6105 = vshrl.u32 %v6104, 7
      %v6106 = vsub.s32 3, %v6105
      %v6107 = vrot.slane %v6072, %v6106
      %v6108 = vmul.f32 %v6070, %v6107
      %v6109 = vmul.f32 %v6071, %v6107
      %v6112 = vrot.slane %v6108, 2
      %v6113 = vrot.slane %v6109, 2
      %v6114 = vsel %vm3270, %v6112, %v6113
      %v6117 = vadd.f32 %v6087, %v6114
      %v6118 = vadd.f32 %v6088, %v6113
      %v6119 = vlaneseq
      %v6120 = vshrl.u32 %v6119, 7
      %v6121 = vsub.s32 4, %v6120
      %v6122 = vrot.slane %v6072, %v6121
      %v6123 = vmul.f32 %v6070, %v6122
      %v6124 = vmul.f32 %v6071, %v6122
      %v6127 = vrot.slane %v6123, 4
      %v6128 = vrot.slane %v6124, 4
      %v6129 = vsel %vm3301, %v6127, %v6128
      %v6132 = vadd.f32 %v6102, %v6129
      %v6133 = vadd.f32 %v6103, %v6128
      %v6134 = vlaneseq
      %v6135 = vshrl.u32 %v6134, 7
      %v6136 = vsub.s32 5, %v6135
      %v6137 = vrot.slane %v6072, %v6136
      %v6138 = vmul.f32 %v6070, %v6137
      %v6139 = vmul.f32 %v6071, %v6137
      %v6142 = vrot.slane %v6138, 4
      %v6143 = vrot.slane %v6139, 4
      %v6144 = vsel %vm3301, %v6142, %v6143
      %v6147 = vadd.f32 %v6117, %v6144
      %v6148 = vadd.f32 %v6118, %v6143
      %v6151 = vrot.slane %v6147, 1
      %v6152 = vrot.slane %v6148, 1
      %v6153 = vsel %vm3721, %v6151, %v6152
      %v6156 = vadd.f32 %v6132, %v6153
      %v6157 = vadd.f32 %v6133, %v6152
      %s6158 = scalar_lea.vmem %s325, 80
      %6159 = vst [vmem:[%s6158] sm:$0xff] %v6156
      %6160 = vst [vmem:[%s6158 + $0x8] sm:$0x1] %v6157
      %v6161 = vld [vmem:[#allocation2 + $0x60] sm:$0xff]
      %v6162 = vld [vmem:[#allocation2 + $0x68] sm:$0x3f]
      %v6163 = vld [vmem:[#allocation3] sm:$0x3f]
      %v6164 = vlaneseq
      %v6165 = vshrl.u32 %v6164, 7
      %v6166 = vsub.s32 0, %v6165
      %v6167 = vrot.slane %v6163, %v6166
      %v6168 = vmul.f32 %v6161, %v6167
      %v6169 = vmul.f32 %v6162, %v6167
      %v6170 = vadd.f32 %v6168, 0.0
      %v6171 = vadd.f32 %v6169, 0.0
      %v6172 = vlaneseq
      %v6173 = vshrl.u32 %v6172, 7
      %v6174 = vsub.s32 1, %v6173
      %v6175 = vrot.slane %v6163, %v6174
      %v6176 = vmul.f32 %v6161, %v6175
      %v6177 = vmul.f32 %v6162, %v6175
      %v6178 = vadd.f32 %v6176, 0.0
      %v6179 = vadd.f32 %v6177, 0.0
      %v6180 = vlaneseq
      %v6181 = vshrl.u32 %v6180, 7
      %v6182 = vsub.s32 2, %v6181
      %v6183 = vrot.slane %v6163, %v6182
      %v6184 = vmul.f32 %v6161, %v6183
      %v6185 = vmul.f32 %v6162, %v6183
      %v6188 = vrot.slane %v6184, 2
      %v6189 = vrot.slane %v6185, 2
      %v6190 = vsel %vm3270, %v6188, %v6189
      %v6193 = vadd.f32 %v6170, %v6190
      %v6194 = vadd.f32 %v6171, %v6189
      %v6195 = vlaneseq
      %v6196 = vshrl.u32 %v6195, 7
      %v6197 = vsub.s32 3, %v6196
      %v6198 = vrot.slane %v6163, %v6197
      %v6199 = vmul.f32 %v6161, %v6198
      %v6200 = vmul.f32 %v6162, %v6198
      %v6203 = vrot.slane %v6199, 2
      %v6204 = vrot.slane %v6200, 2
      %v6205 = vsel %vm3270, %v6203, %v6204
      %v6208 = vadd.f32 %v6178, %v6205
      %v6209 = vadd.f32 %v6179, %v6204
      %v6210 = vlaneseq
      %v6211 = vshrl.u32 %v6210, 7
      %v6212 = vsub.s32 4, %v6211
      %v6213 = vrot.slane %v6163, %v6212
      %v6214 = vmul.f32 %v6161, %v6213
      %v6215 = vmul.f32 %v6162, %v6213
      %v6218 = vrot.slane %v6214, 4
      %v6219 = vrot.slane %v6215, 4
      %v6220 = vsel %vm3301, %v6218, %v6219
      %v6223 = vadd.f32 %v6193, %v6220
      %v6224 = vadd.f32 %v6194, %v6219
      %v6225 = vlaneseq
      %v6226 = vshrl.u32 %v6225, 7
      %v6227 = vsub.s32 5, %v6226
      %v6228 = vrot.slane %v6163, %v6227
      %v6229 = vmul.f32 %v6161, %v6228
      %v6230 = vmul.f32 %v6162, %v6228
      %v6233 = vrot.slane %v6229, 4
      %v6234 = vrot.slane %v6230, 4
      %v6235 = vsel %vm3301, %v6233, %v6234
      %v6238 = vadd.f32 %v6208, %v6235
      %v6239 = vadd.f32 %v6209, %v6234
      %v6240 = vld [vmem:[#allocation2 + $0x70] sm:$0xff]
      %v6241 = vld [vmem:[#allocation2 + $0x78] sm:$0x3f]
      %v6242 = vld [vmem:[#allocation3 + $0x10] sm:$0x3f]
      %v6243 = vlaneseq
      %v6244 = vshrl.u32 %v6243, 7
      %v6245 = vsub.s32 0, %v6244
      %v6246 = vrot.slane %v6242, %v6245
      %v6247 = vmul.f32 %v6240, %v6246
      %v6248 = vmul.f32 %v6241, %v6246
      %v6249 = vadd.f32 %v6223, %v6247
      %v6250 = vadd.f32 %v6224, %v6248
      %v6251 = vlaneseq
      %v6252 = vshrl.u32 %v6251, 7
      %v6253 = vsub.s32 1, %v6252
      %v6254 = vrot.slane %v6242, %v6253
      %v6255 = vmul.f32 %v6240, %v6254
      %v6256 = vmul.f32 %v6241, %v6254
      %v6257 = vadd.f32 %v6238, %v6255
      %v6258 = vadd.f32 %v6239, %v6256
      %v6259 = vlaneseq
      %v6260 = vshrl.u32 %v6259, 7
      %v6261 = vsub.s32 2, %v6260
      %v6262 = vrot.slane %v6242, %v6261
      %v6263 = vmul.f32 %v6240, %v6262
      %v6264 = vmul.f32 %v6241, %v6262
      %v6267 = vrot.slane %v6263, 2
      %v6268 = vrot.slane %v6264, 2
      %v6269 = vsel %vm3270, %v6267, %v6268
      %v6272 = vadd.f32 %v6249, %v6269
      %v6273 = vadd.f32 %v6250, %v6268
      %v6274 = vlaneseq
      %v6275 = vshrl.u32 %v6274, 7
      %v6276 = vsub.s32 3, %v6275
      %v6277 = vrot.slane %v6242, %v6276
      %v6278 = vmul.f32 %v6240, %v6277
      %v6279 = vmul.f32 %v6241, %v6277
      %v6282 = vrot.slane %v6278, 2
      %v6283 = vrot.slane %v6279, 2
      %v6284 = vsel %vm3270, %v6282, %v6283
      %v6287 = vadd.f32 %v6257, %v6284
      %v6288 = vadd.f32 %v6258, %v6283
      %v6289 = vlaneseq
      %v6290 = vshrl.u32 %v6289, 7
      %v6291 = vsub.s32 4, %v6290
      %v6292 = vrot.slane %v6242, %v6291
      %v6293 = vmul.f32 %v6240, %v6292
      %v6294 = vmul.f32 %v6241, %v6292
      %v6297 = vrot.slane %v6293, 4
      %v6298 = vrot.slane %v6294, 4
      %v6299 = vsel %vm3301, %v6297, %v6298
      %v6302 = vadd.f32 %v6272, %v6299
      %v6303 = vadd.f32 %v6273, %v6298
      %v6304 = vlaneseq
      %v6305 = vshrl.u32 %v6304, 7
      %v6306 = vsub.s32 5, %v6305
      %v6307 = vrot.slane %v6242, %v6306
      %v6308 = vmul.f32 %v6240, %v6307
      %v6309 = vmul.f32 %v6241, %v6307
      %v6312 = vrot.slane %v6308, 4
      %v6313 = vrot.slane %v6309, 4
      %v6314 = vsel %vm3301, %v6312, %v6313
      %v6317 = vadd.f32 %v6287, %v6314
      %v6318 = vadd.f32 %v6288, %v6313
      %v6319 = vld [vmem:[#allocation2 + $0x80] sm:$0xff]
      %v6320 = vld [vmem:[#allocation2 + $0x88] sm:$0x3f]
      %v6321 = vld [vmem:[#allocation3 + $0x20] sm:$0x3f]
      %v6322 = vlaneseq
      %v6323 = vshrl.u32 %v6322, 7
      %v6324 = vsub.s32 0, %v6323
      %v6325 = vrot.slane %v6321, %v6324
      %v6326 = vmul.f32 %v6319, %v6325
      %v6327 = vmul.f32 %v6320, %v6325
      %v6328 = vadd.f32 %v6302, %v6326
      %v6329 = vadd.f32 %v6303, %v6327
      %v6330 = vlaneseq
      %v6331 = vshrl.u32 %v6330, 7
      %v6332 = vsub.s32 1, %v6331
      %v6333 = vrot.slane %v6321, %v6332
      %v6334 = vmul.f32 %v6319, %v6333
      %v6335 = vmul.f32 %v6320, %v6333
      %v6336 = vadd.f32 %v6317, %v6334
      %v6337 = vadd.f32 %v6318, %v6335
      %v6338 = vlaneseq
      %v6339 = vshrl.u32 %v6338, 7
      %v6340 = vsub.s32 2, %v6339
      %v6341 = vrot.slane %v6321, %v6340
      %v6342 = vmul.f32 %v6319, %v6341
      %v6343 = vmul.f32 %v6320, %v6341
      %v6346 = vrot.slane %v6342, 2
      %v6347 = vrot.slane %v6343, 2
      %v6348 = vsel %vm3270, %v6346, %v6347
      %v6351 = vadd.f32 %v6328, %v6348
      %v6352 = vadd.f32 %v6329, %v6347
      %v6353 = vlaneseq
      %v6354 = vshrl.u32 %v6353, 7
      %v6355 = vsub.s32 3, %v6354
      %v6356 = vrot.slane %v6321, %v6355
      %v6357 = vmul.f32 %v6319, %v6356
      %v6358 = vmul.f32 %v6320, %v6356
      %v6361 = vrot.slane %v6357, 2
      %v6362 = vrot.slane %v6358, 2
      %v6363 = vsel %vm3270, %v6361, %v6362
      %v6366 = vadd.f32 %v6336, %v6363
      %v6367 = vadd.f32 %v6337, %v6362
      %v6368 = vlaneseq
      %v6369 = vshrl.u32 %v6368, 7
      %v6370 = vsub.s32 4, %v6369
      %v6371 = vrot.slane %v6321, %v6370
      %v6372 = vmul.f32 %v6319, %v6371
      %v6373 = vmul.f32 %v6320, %v6371
      %v6376 = vrot.slane %v6372, 4
      %v6377 = vrot.slane %v6373, 4
      %v6378 = vsel %vm3301, %v6376, %v6377
      %v6381 = vadd.f32 %v6351, %v6378
      %v6382 = vadd.f32 %v6352, %v6377
      %v6383 = vlaneseq
      %v6384 = vshrl.u32 %v6383, 7
      %v6385 = vsub.s32 5, %v6384
      %v6386 = vrot.slane %v6321, %v6385
      %v6387 = vmul.f32 %v6319, %v6386
      %v6388 = vmul.f32 %v6320, %v6386
      %v6391 = vrot.slane %v6387, 4
      %v6392 = vrot.slane %v6388, 4
      %v6393 = vsel %vm3301, %v6391, %v6392
      %v6396 = vadd.f32 %v6366, %v6393
      %v6397 = vadd.f32 %v6367, %v6392
      %v6398 = vld [vmem:[#allocation2 + $0x90] sm:$0xff]
      %v6399 = vld [vmem:[#allocation2 + $0x98] sm:$0x3f]
      %v6400 = vld [vmem:[#allocation3 + $0x30] sm:$0x3f]
      %v6401 = vlaneseq
      %v6402 = vshrl.u32 %v6401, 7
      %v6403 = vsub.s32 0, %v6402
      %v6404 = vrot.slane %v6400, %v6403
      %v6405 = vmul.f32 %v6398, %v6404
      %v6406 = vmul.f32 %v6399, %v6404
      %v6407 = vadd.f32 %v6381, %v6405
      %v6408 = vadd.f32 %v6382, %v6406
      %v6409 = vlaneseq
      %v6410 = vshrl.u32 %v6409, 7
      %v6411 = vsub.s32 1, %v6410
      %v6412 = vrot.slane %v6400, %v6411
      %v6413 = vmul.f32 %v6398, %v6412
      %v6414 = vmul.f32 %v6399, %v6412
      %v6415 = vadd.f32 %v6396, %v6413
      %v6416 = vadd.f32 %v6397, %v6414
      %v6417 = vlaneseq
      %v6418 = vshrl.u32 %v6417, 7
      %v6419 = vsub.s32 2, %v6418
      %v6420 = vrot.slane %v6400, %v6419
      %v6421 = vmul.f32 %v6398, %v6420
      %v6422 = vmul.f32 %v6399, %v6420
      %v6425 = vrot.slane %v6421, 2
      %v6426 = vrot.slane %v6422, 2
      %v6427 = vsel %vm3270, %v6425, %v6426
      %v6430 = vadd.f32 %v6407, %v6427
      %v6431 = vadd.f32 %v6408, %v6426
      %v6432 = vlaneseq
      %v6433 = vshrl.u32 %v6432, 7
      %v6434 = vsub.s32 3, %v6433
      %v6435 = vrot.slane %v6400, %v6434
      %v6436 = vmul.f32 %v6398, %v6435
      %v6437 = vmul.f32 %v6399, %v6435
      %v6440 = vrot.slane %v6436, 2
      %v6441 = vrot.slane %v6437, 2
      %v6442 = vsel %vm3270, %v6440, %v6441
      %v6445 = vadd.f32 %v6415, %v6442
      %v6446 = vadd.f32 %v6416, %v6441
      %v6447 = vlaneseq
      %v6448 = vshrl.u32 %v6447, 7
      %v6449 = vsub.s32 4, %v6448
      %v6450 = vrot.slane %v6400, %v6449
      %v6451 = vmul.f32 %v6398, %v6450
      %v6452 = vmul.f32 %v6399, %v6450
      %v6455 = vrot.slane %v6451, 4
      %v6456 = vrot.slane %v6452, 4
      %v6457 = vsel %vm3301, %v6455, %v6456
      %v6460 = vadd.f32 %v6430, %v6457
      %v6461 = vadd.f32 %v6431, %v6456
      %v6462 = vlaneseq
      %v6463 = vshrl.u32 %v6462, 7
      %v6464 = vsub.s32 5, %v6463
      %v6465 = vrot.slane %v6400, %v6464
      %v6466 = vmul.f32 %v6398, %v6465
      %v6467 = vmul.f32 %v6399, %v6465
      %v6470 = vrot.slane %v6466, 4
      %v6471 = vrot.slane %v6467, 4
      %v6472 = vsel %vm3301, %v6470, %v6471
      %v6475 = vadd.f32 %v6445, %v6472
      %v6476 = vadd.f32 %v6446, %v6471
      %v6477 = vld [vmem:[#allocation2 + $0xa0] sm:$0xff]
      %v6478 = vld [vmem:[#allocation2 + $0xa8] sm:$0x3f]
      %v6479 = vld [vmem:[#allocation3 + $0x40] sm:$0x3f]
      %v6480 = vlaneseq
      %v6481 = vshrl.u32 %v6480, 7
      %v6482 = vsub.s32 0, %v6481
      %v6483 = vrot.slane %v6479, %v6482
      %v6484 = vmul.f32 %v6477, %v6483
      %v6485 = vmul.f32 %v6478, %v6483
      %v6486 = vadd.f32 %v6460, %v6484
      %v6487 = vadd.f32 %v6461, %v6485
      %v6488 = vlaneseq
      %v6489 = vshrl.u32 %v6488, 7
      %v6490 = vsub.s32 1, %v6489
      %v6491 = vrot.slane %v6479, %v6490
      %v6492 = vmul.f32 %v6477, %v6491
      %v6493 = vmul.f32 %v6478, %v6491
      %v6494 = vadd.f32 %v6475, %v6492
      %v6495 = vadd.f32 %v6476, %v6493
      %v6496 = vlaneseq
      %v6497 = vshrl.u32 %v6496, 7
      %v6498 = vsub.s32 2, %v6497
      %v6499 = vrot.slane %v6479, %v6498
      %v6500 = vmul.f32 %v6477, %v6499
      %v6501 = vmul.f32 %v6478, %v6499
      %v6504 = vrot.slane %v6500, 2
      %v6505 = vrot.slane %v6501, 2
      %v6506 = vsel %vm3270, %v6504, %v6505
      %v6509 = vadd.f32 %v6486, %v6506
      %v6510 = vadd.f32 %v6487, %v6505
      %v6511 = vlaneseq
      %v6512 = vshrl.u32 %v6511, 7
      %v6513 = vsub.s32 3, %v6512
      %v6514 = vrot.slane %v6479, %v6513
      %v6515 = vmul.f32 %v6477, %v6514
      %v6516 = vmul.f32 %v6478, %v6514
      %v6519 = vrot.slane %v6515, 2
      %v6520 = vrot.slane %v6516, 2
      %v6521 = vsel %vm3270, %v6519, %v6520
      %v6524 = vadd.f32 %v6494, %v6521
      %v6525 = vadd.f32 %v6495, %v6520
      %v6526 = vlaneseq
      %v6527 = vshrl.u32 %v6526, 7
      %v6528 = vsub.s32 4, %v6527
      %v6529 = vrot.slane %v6479, %v6528
      %v6530 = vmul.f32 %v6477, %v6529
      %v6531 = vmul.f32 %v6478, %v6529
      %v6534 = vrot.slane %v6530, 4
      %v6535 = vrot.slane %v6531, 4
      %v6536 = vsel %vm3301, %v6534, %v6535
      %v6539 = vadd.f32 %v6509, %v6536
      %v6540 = vadd.f32 %v6510, %v6535
      %v6541 = vlaneseq
      %v6542 = vshrl.u32 %v6541, 7
      %v6543 = vsub.s32 5, %v6542
      %v6544 = vrot.slane %v6479, %v6543
      %v6545 = vmul.f32 %v6477, %v6544
      %v6546 = vmul.f32 %v6478, %v6544
      %v6549 = vrot.slane %v6545, 4
      %v6550 = vrot.slane %v6546, 4
      %v6551 = vsel %vm3301, %v6549, %v6550
      %v6554 = vadd.f32 %v6524, %v6551
      %v6555 = vadd.f32 %v6525, %v6550
      %v6556 = vld [vmem:[#allocation2 + $0xb0] sm:$0xff]
      %v6557 = vld [vmem:[#allocation2 + $0xb8] sm:$0x3f]
      %v6558 = vld [vmem:[#allocation3 + $0x50] sm:$0x3f]
      %v6559 = vlaneseq
      %v6560 = vshrl.u32 %v6559, 7
      %v6561 = vsub.s32 0, %v6560
      %v6562 = vrot.slane %v6558, %v6561
      %v6563 = vmul.f32 %v6556, %v6562
      %v6564 = vmul.f32 %v6557, %v6562
      %v6565 = vadd.f32 %v6539, %v6563
      %v6566 = vadd.f32 %v6540, %v6564
      %v6567 = vlaneseq
      %v6568 = vshrl.u32 %v6567, 7
      %v6569 = vsub.s32 1, %v6568
      %v6570 = vrot.slane %v6558, %v6569
      %v6571 = vmul.f32 %v6556, %v6570
      %v6572 = vmul.f32 %v6557, %v6570
      %v6573 = vadd.f32 %v6554, %v6571
      %v6574 = vadd.f32 %v6555, %v6572
      %v6575 = vlaneseq
      %v6576 = vshrl.u32 %v6575, 7
      %v6577 = vsub.s32 2, %v6576
      %v6578 = vrot.slane %v6558, %v6577
      %v6579 = vmul.f32 %v6556, %v6578
      %v6580 = vmul.f32 %v6557, %v6578
      %v6583 = vrot.slane %v6579, 2
      %v6584 = vrot.slane %v6580, 2
      %v6585 = vsel %vm3270, %v6583, %v6584
      %v6588 = vadd.f32 %v6565, %v6585
      %v6589 = vadd.f32 %v6566, %v6584
      %v6590 = vlaneseq
      %v6591 = vshrl.u32 %v6590, 7
      %v6592 = vsub.s32 3, %v6591
      %v6593 = vrot.slane %v6558, %v6592
      %v6594 = vmul.f32 %v6556, %v6593
      %v6595 = vmul.f32 %v6557, %v6593
      %v6598 = vrot.slane %v6594, 2
      %v6599 = vrot.slane %v6595, 2
      %v6600 = vsel %vm3270, %v6598, %v6599
      %v6603 = vadd.f32 %v6573, %v6600
      %v6604 = vadd.f32 %v6574, %v6599
      %v6605 = vlaneseq
      %v6606 = vshrl.u32 %v6605, 7
      %v6607 = vsub.s32 4, %v6606
      %v6608 = vrot.slane %v6558, %v6607
      %v6609 = vmul.f32 %v6556, %v6608
      %v6610 = vmul.f32 %v6557, %v6608
      %v6613 = vrot.slane %v6609, 4
      %v6614 = vrot.slane %v6610, 4
      %v6615 = vsel %vm3301, %v6613, %v6614
      %v6618 = vadd.f32 %v6588, %v6615
      %v6619 = vadd.f32 %v6589, %v6614
      %v6620 = vlaneseq
      %v6621 = vshrl.u32 %v6620, 7
      %v6622 = vsub.s32 5, %v6621
      %v6623 = vrot.slane %v6558, %v6622
      %v6624 = vmul.f32 %v6556, %v6623
      %v6625 = vmul.f32 %v6557, %v6623
      %v6628 = vrot.slane %v6624, 4
      %v6629 = vrot.slane %v6625, 4
      %v6630 = vsel %vm3301, %v6628, %v6629
      %v6633 = vadd.f32 %v6603, %v6630
      %v6634 = vadd.f32 %v6604, %v6629
      %v6637 = vrot.slane %v6633, 1
      %v6638 = vrot.slane %v6634, 1
      %v6639 = vsel %vm3721, %v6637, %v6638
      %v6642 = vadd.f32 %v6618, %v6639
      %v6643 = vadd.f32 %v6619, %v6638
      %s6644 = scalar_lea.vmem %s325, 96
      %6645 = vst [vmem:[%s6644] sm:$0xff] %v6642
      %6646 = vst [vmem:[%s6644 + $0x8] sm:$0x1] %v6643
      %v6647 = vld [vmem:[#allocation2 + $0x70] sm:$0xff]
      %v6648 = vld [vmem:[#allocation2 + $0x78] sm:$0x3f]
      %v6649 = vld [vmem:[#allocation3] sm:$0x3f]
      %v6650 = vlaneseq
      %v6651 = vshrl.u32 %v6650, 7
      %v6652 = vsub.s32 0, %v6651
      %v6653 = vrot.slane %v6649, %v6652
      %v6654 = vmul.f32 %v6647, %v6653
      %v6655 = vmul.f32 %v6648, %v6653
      %v6656 = vadd.f32 %v6654, 0.0
      %v6657 = vadd.f32 %v6655, 0.0
      %v6658 = vlaneseq
      %v6659 = vshrl.u32 %v6658, 7
      %v6660 = vsub.s32 1, %v6659
      %v6661 = vrot.slane %v6649, %v6660
      %v6662 = vmul.f32 %v6647, %v6661
      %v6663 = vmul.f32 %v6648, %v6661
      %v6664 = vadd.f32 %v6662, 0.0
      %v6665 = vadd.f32 %v6663, 0.0
      %v6666 = vlaneseq
      %v6667 = vshrl.u32 %v6666, 7
      %v6668 = vsub.s32 2, %v6667
      %v6669 = vrot.slane %v6649, %v6668
      %v6670 = vmul.f32 %v6647, %v6669
      %v6671 = vmul.f32 %v6648, %v6669
      %v6674 = vrot.slane %v6670, 2
      %v6675 = vrot.slane %v6671, 2
      %v6676 = vsel %vm3270, %v6674, %v6675
      %v6679 = vadd.f32 %v6656, %v6676
      %v6680 = vadd.f32 %v6657, %v6675
      %v6681 = vlaneseq
      %v6682 = vshrl.u32 %v6681, 7
      %v6683 = vsub.s32 3, %v6682
      %v6684 = vrot.slane %v6649, %v6683
      %v6685 = vmul.f32 %v6647, %v6684
      %v6686 = vmul.f32 %v6648, %v6684
      %v6689 = vrot.slane %v6685, 2
      %v6690 = vrot.slane %v6686, 2
      %v6691 = vsel %vm3270, %v6689, %v6690
      %v6694 = vadd.f32 %v6664, %v6691
      %v6695 = vadd.f32 %v6665, %v6690
      %v6696 = vlaneseq
      %v6697 = vshrl.u32 %v6696, 7
      %v6698 = vsub.s32 4, %v6697
      %v6699 = vrot.slane %v6649, %v6698
      %v6700 = vmul.f32 %v6647, %v6699
      %v6701 = vmul.f32 %v6648, %v6699
      %v6704 = vrot.slane %v6700, 4
      %v6705 = vrot.slane %v6701, 4
      %v6706 = vsel %vm3301, %v6704, %v6705
      %v6709 = vadd.f32 %v6679, %v6706
      %v6710 = vadd.f32 %v6680, %v6705
      %v6711 = vlaneseq
      %v6712 = vshrl.u32 %v6711, 7
      %v6713 = vsub.s32 5, %v6712
      %v6714 = vrot.slane %v6649, %v6713
      %v6715 = vmul.f32 %v6647, %v6714
      %v6716 = vmul.f32 %v6648, %v6714
      %v6719 = vrot.slane %v6715, 4
      %v6720 = vrot.slane %v6716, 4
      %v6721 = vsel %vm3301, %v6719, %v6720
      %v6724 = vadd.f32 %v6694, %v6721
      %v6725 = vadd.f32 %v6695, %v6720
      %v6726 = vld [vmem:[#allocation2 + $0x80] sm:$0xff]
      %v6727 = vld [vmem:[#allocation2 + $0x88] sm:$0x3f]
      %v6728 = vld [vmem:[#allocation3 + $0x10] sm:$0x3f]
      %v6729 = vlaneseq
      %v6730 = vshrl.u32 %v6729, 7
      %v6731 = vsub.s32 0, %v6730
      %v6732 = vrot.slane %v6728, %v6731
      %v6733 = vmul.f32 %v6726, %v6732
      %v6734 = vmul.f32 %v6727, %v6732
      %v6735 = vadd.f32 %v6709, %v6733
      %v6736 = vadd.f32 %v6710, %v6734
      %v6737 = vlaneseq
      %v6738 = vshrl.u32 %v6737, 7
      %v6739 = vsub.s32 1, %v6738
      %v6740 = vrot.slane %v6728, %v6739
      %v6741 = vmul.f32 %v6726, %v6740
      %v6742 = vmul.f32 %v6727, %v6740
      %v6743 = vadd.f32 %v6724, %v6741
      %v6744 = vadd.f32 %v6725, %v6742
      %v6745 = vlaneseq
      %v6746 = vshrl.u32 %v6745, 7
      %v6747 = vsub.s32 2, %v6746
      %v6748 = vrot.slane %v6728, %v6747
      %v6749 = vmul.f32 %v6726, %v6748
      %v6750 = vmul.f32 %v6727, %v6748
      %v6753 = vrot.slane %v6749, 2
      %v6754 = vrot.slane %v6750, 2
      %v6755 = vsel %vm3270, %v6753, %v6754
      %v6758 = vadd.f32 %v6735, %v6755
      %v6759 = vadd.f32 %v6736, %v6754
      %v6760 = vlaneseq
      %v6761 = vshrl.u32 %v6760, 7
      %v6762 = vsub.s32 3, %v6761
      %v6763 = vrot.slane %v6728, %v6762
      %v6764 = vmul.f32 %v6726, %v6763
      %v6765 = vmul.f32 %v6727, %v6763
      %v6768 = vrot.slane %v6764, 2
      %v6769 = vrot.slane %v6765, 2
      %v6770 = vsel %vm3270, %v6768, %v6769
      %v6773 = vadd.f32 %v6743, %v6770
      %v6774 = vadd.f32 %v6744, %v6769
      %v6775 = vlaneseq
      %v6776 = vshrl.u32 %v6775, 7
      %v6777 = vsub.s32 4, %v6776
      %v6778 = vrot.slane %v6728, %v6777
      %v6779 = vmul.f32 %v6726, %v6778
      %v6780 = vmul.f32 %v6727, %v6778
      %v6783 = vrot.slane %v6779, 4
      %v6784 = vrot.slane %v6780, 4
      %v6785 = vsel %vm3301, %v6783, %v6784
      %v6788 = vadd.f32 %v6758, %v6785
      %v6789 = vadd.f32 %v6759, %v6784
      %v6790 = vlaneseq
      %v6791 = vshrl.u32 %v6790, 7
      %v6792 = vsub.s32 5, %v6791
      %v6793 = vrot.slane %v6728, %v6792
      %v6794 = vmul.f32 %v6726, %v6793
      %v6795 = vmul.f32 %v6727, %v6793
      %v6798 = vrot.slane %v6794, 4
      %v6799 = vrot.slane %v6795, 4
      %v6800 = vsel %vm3301, %v6798, %v6799
      %v6803 = vadd.f32 %v6773, %v6800
      %v6804 = vadd.f32 %v6774, %v6799
      %v6805 = vld [vmem:[#allocation2 + $0x90] sm:$0xff]
      %v6806 = vld [vmem:[#allocation2 + $0x98] sm:$0x3f]
      %v6807 = vld [vmem:[#allocation3 + $0x20] sm:$0x3f]
      %v6808 = vlaneseq
      %v6809 = vshrl.u32 %v6808, 7
      %v6810 = vsub.s32 0, %v6809
      %v6811 = vrot.slane %v6807, %v6810
      %v6812 = vmul.f32 %v6805, %v6811
      %v6813 = vmul.f32 %v6806, %v6811
      %v6814 = vadd.f32 %v6788, %v6812
      %v6815 = vadd.f32 %v6789, %v6813
      %v6816 = vlaneseq
      %v6817 = vshrl.u32 %v6816, 7
      %v6818 = vsub.s32 1, %v6817
      %v6819 = vrot.slane %v6807, %v6818
      %v6820 = vmul.f32 %v6805, %v6819
      %v6821 = vmul.f32 %v6806, %v6819
      %v6822 = vadd.f32 %v6803, %v6820
      %v6823 = vadd.f32 %v6804, %v6821
      %v6824 = vlaneseq
      %v6825 = vshrl.u32 %v6824, 7
      %v6826 = vsub.s32 2, %v6825
      %v6827 = vrot.slane %v6807, %v6826
      %v6828 = vmul.f32 %v6805, %v6827
      %v6829 = vmul.f32 %v6806, %v6827
      %v6832 = vrot.slane %v6828, 2
      %v6833 = vrot.slane %v6829, 2
      %v6834 = vsel %vm3270, %v6832, %v6833
      %v6837 = vadd.f32 %v6814, %v6834
      %v6838 = vadd.f32 %v6815, %v6833
      %v6839 = vlaneseq
      %v6840 = vshrl.u32 %v6839, 7
      %v6841 = vsub.s32 3, %v6840
      %v6842 = vrot.slane %v6807, %v6841
      %v6843 = vmul.f32 %v6805, %v6842
      %v6844 = vmul.f32 %v6806, %v6842
      %v6847 = vrot.slane %v6843, 2
      %v6848 = vrot.slane %v6844, 2
      %v6849 = vsel %vm3270, %v6847, %v6848
      %v6852 = vadd.f32 %v6822, %v6849
      %v6853 = vadd.f32 %v6823, %v6848
      %v6854 = vlaneseq
      %v6855 = vshrl.u32 %v6854, 7
      %v6856 = vsub.s32 4, %v6855
      %v6857 = vrot.slane %v6807, %v6856
      %v6858 = vmul.f32 %v6805, %v6857
      %v6859 = vmul.f32 %v6806, %v6857
      %v6862 = vrot.slane %v6858, 4
      %v6863 = vrot.slane %v6859, 4
      %v6864 = vsel %vm3301, %v6862, %v6863
      %v6867 = vadd.f32 %v6837, %v6864
      %v6868 = vadd.f32 %v6838, %v6863
      %v6869 = vlaneseq
      %v6870 = vshrl.u32 %v6869, 7
      %v6871 = vsub.s32 5, %v6870
      %v6872 = vrot.slane %v6807, %v6871
      %v6873 = vmul.f32 %v6805, %v6872
      %v6874 = vmul.f32 %v6806, %v6872
      %v6877 = vrot.slane %v6873, 4
      %v6878 = vrot.slane %v6874, 4
      %v6879 = vsel %vm3301, %v6877, %v6878
      %v6882 = vadd.f32 %v6852, %v6879
      %v6883 = vadd.f32 %v6853, %v6878
      %v6884 = vld [vmem:[#allocation2 + $0xa0] sm:$0xff]
      %v6885 = vld [vmem:[#allocation2 + $0xa8] sm:$0x3f]
      %v6886 = vld [vmem:[#allocation3 + $0x30] sm:$0x3f]
      %v6887 = vlaneseq
      %v6888 = vshrl.u32 %v6887, 7
      %v6889 = vsub.s32 0, %v6888
      %v6890 = vrot.slane %v6886, %v6889
      %v6891 = vmul.f32 %v6884, %v6890
      %v6892 = vmul.f32 %v6885, %v6890
      %v6893 = vadd.f32 %v6867, %v6891
      %v6894 = vadd.f32 %v6868, %v6892
      %v6895 = vlaneseq
      %v6896 = vshrl.u32 %v6895, 7
      %v6897 = vsub.s32 1, %v6896
      %v6898 = vrot.slane %v6886, %v6897
      %v6899 = vmul.f32 %v6884, %v6898
      %v6900 = vmul.f32 %v6885, %v6898
      %v6901 = vadd.f32 %v6882, %v6899
      %v6902 = vadd.f32 %v6883, %v6900
      %v6903 = vlaneseq
      %v6904 = vshrl.u32 %v6903, 7
      %v6905 = vsub.s32 2, %v6904
      %v6906 = vrot.slane %v6886, %v6905
      %v6907 = vmul.f32 %v6884, %v6906
      %v6908 = vmul.f32 %v6885, %v6906
      %v6911 = vrot.slane %v6907, 2
      %v6912 = vrot.slane %v6908, 2
      %v6913 = vsel %vm3270, %v6911, %v6912
      %v6916 = vadd.f32 %v6893, %v6913
      %v6917 = vadd.f32 %v6894, %v6912
      %v6918 = vlaneseq
      %v6919 = vshrl.u32 %v6918, 7
      %v6920 = vsub.s32 3, %v6919
      %v6921 = vrot.slane %v6886, %v6920
      %v6922 = vmul.f32 %v6884, %v6921
      %v6923 = vmul.f32 %v6885, %v6921
      %v6926 = vrot.slane %v6922, 2
      %v6927 = vrot.slane %v6923, 2
      %v6928 = vsel %vm3270, %v6926, %v6927
      %v6931 = vadd.f32 %v6901, %v6928
      %v6932 = vadd.f32 %v6902, %v6927
      %v6933 = vlaneseq
      %v6934 = vshrl.u32 %v6933, 7
      %v6935 = vsub.s32 4, %v6934
      %v6936 = vrot.slane %v6886, %v6935
      %v6937 = vmul.f32 %v6884, %v6936
      %v6938 = vmul.f32 %v6885, %v6936
      %v6941 = vrot.slane %v6937, 4
      %v6942 = vrot.slane %v6938, 4
      %v6943 = vsel %vm3301, %v6941, %v6942
      %v6946 = vadd.f32 %v6916, %v6943
      %v6947 = vadd.f32 %v6917, %v6942
      %v6948 = vlaneseq
      %v6949 = vshrl.u32 %v6948, 7
      %v6950 = vsub.s32 5, %v6949
      %v6951 = vrot.slane %v6886, %v6950
      %v6952 = vmul.f32 %v6884, %v6951
      %v6953 = vmul.f32 %v6885, %v6951
      %v6956 = vrot.slane %v6952, 4
      %v6957 = vrot.slane %v6953, 4
      %v6958 = vsel %vm3301, %v6956, %v6957
      %v6961 = vadd.f32 %v6931, %v6958
      %v6962 = vadd.f32 %v6932, %v6957
      %v6963 = vld [vmem:[#allocation2 + $0xb0] sm:$0xff]
      %v6964 = vld [vmem:[#allocation2 + $0xb8] sm:$0x3f]
      %v6965 = vld [vmem:[#allocation3 + $0x40] sm:$0x3f]
      %v6966 = vlaneseq
      %v6967 = vshrl.u32 %v6966, 7
      %v6968 = vsub.s32 0, %v6967
      %v6969 = vrot.slane %v6965, %v6968
      %v6970 = vmul.f32 %v6963, %v6969
      %v6971 = vmul.f32 %v6964, %v6969
      %v6972 = vadd.f32 %v6946, %v6970
      %v6973 = vadd.f32 %v6947, %v6971
      %v6974 = vlaneseq
      %v6975 = vshrl.u32 %v6974, 7
      %v6976 = vsub.s32 1, %v6975
      %v6977 = vrot.slane %v6965, %v6976
      %v6978 = vmul.f32 %v6963, %v6977
      %v6979 = vmul.f32 %v6964, %v6977
      %v6980 = vadd.f32 %v6961, %v6978
      %v6981 = vadd.f32 %v6962, %v6979
      %v6982 = vlaneseq
      %v6983 = vshrl.u32 %v6982, 7
      %v6984 = vsub.s32 2, %v6983
      %v6985 = vrot.slane %v6965, %v6984
      %v6986 = vmul.f32 %v6963, %v6985
      %v6987 = vmul.f32 %v6964, %v6985
      %v6990 = vrot.slane %v6986, 2
      %v6991 = vrot.slane %v6987, 2
      %v6992 = vsel %vm3270, %v6990, %v6991
      %v6995 = vadd.f32 %v6972, %v6992
      %v6996 = vadd.f32 %v6973, %v6991
      %v6997 = vlaneseq
      %v6998 = vshrl.u32 %v6997, 7
      %v6999 = vsub.s32 3, %v6998
      %v7000 = vrot.slane %v6965, %v6999
      %v7001 = vmul.f32 %v6963, %v7000
      %v7002 = vmul.f32 %v6964, %v7000
      %v7005 = vrot.slane %v7001, 2
      %v7006 = vrot.slane %v7002, 2
      %v7007 = vsel %vm3270, %v7005, %v7006
      %v7010 = vadd.f32 %v6980, %v7007
      %v7011 = vadd.f32 %v6981, %v7006
      %v7012 = vlaneseq
      %v7013 = vshrl.u32 %v7012, 7
      %v7014 = vsub.s32 4, %v7013
      %v7015 = vrot.slane %v6965, %v7014
      %v7016 = vmul.f32 %v6963, %v7015
      %v7017 = vmul.f32 %v6964, %v7015
      %v7020 = vrot.slane %v7016, 4
      %v7021 = vrot.slane %v7017, 4
      %v7022 = vsel %vm3301, %v7020, %v7021
      %v7025 = vadd.f32 %v6995, %v7022
      %v7026 = vadd.f32 %v6996, %v7021
      %v7027 = vlaneseq
      %v7028 = vshrl.u32 %v7027, 7
      %v7029 = vsub.s32 5, %v7028
      %v7030 = vrot.slane %v6965, %v7029
      %v7031 = vmul.f32 %v6963, %v7030
      %v7032 = vmul.f32 %v6964, %v7030
      %v7035 = vrot.slane %v7031, 4
      %v7036 = vrot.slane %v7032, 4
      %v7037 = vsel %vm3301, %v7035, %v7036
      %v7040 = vadd.f32 %v7010, %v7037
      %v7041 = vadd.f32 %v7011, %v7036
      %v7042 = vld [vmem:[#allocation2 + $0xc0] sm:$0xff]
      %v7043 = vld [vmem:[#allocation2 + $0xc8] sm:$0x3f]
      %v7044 = vld [vmem:[#allocation3 + $0x50] sm:$0x3f]
      %v7045 = vlaneseq
      %v7046 = vshrl.u32 %v7045, 7
      %v7047 = vsub.s32 0, %v7046
      %v7048 = vrot.slane %v7044, %v7047
      %v7049 = vmul.f32 %v7042, %v7048
      %v7050 = vmul.f32 %v7043, %v7048
      %v7051 = vadd.f32 %v7025, %v7049
      %v7052 = vadd.f32 %v7026, %v7050
      %v7053 = vlaneseq
      %v7054 = vshrl.u32 %v7053, 7
      %v7055 = vsub.s32 1, %v7054
      %v7056 = vrot.slane %v7044, %v7055
      %v7057 = vmul.f32 %v7042, %v7056
      %v7058 = vmul.f32 %v7043, %v7056
      %v7059 = vadd.f32 %v7040, %v7057
      %v7060 = vadd.f32 %v7041, %v7058
      %v7061 = vlaneseq
      %v7062 = vshrl.u32 %v7061, 7
      %v7063 = vsub.s32 2, %v7062
      %v7064 = vrot.slane %v7044, %v7063
      %v7065 = vmul.f32 %v7042, %v7064
      %v7066 = vmul.f32 %v7043, %v7064
      %v7069 = vrot.slane %v7065, 2
      %v7070 = vrot.slane %v7066, 2
      %v7071 = vsel %vm3270, %v7069, %v7070
      %v7074 = vadd.f32 %v7051, %v7071
      %v7075 = vadd.f32 %v7052, %v7070
      %v7076 = vlaneseq
      %v7077 = vshrl.u32 %v7076, 7
      %v7078 = vsub.s32 3, %v7077
      %v7079 = vrot.slane %v7044, %v7078
      %v7080 = vmul.f32 %v7042, %v7079
      %v7081 = vmul.f32 %v7043, %v7079
      %v7084 = vrot.slane %v7080, 2
      %v7085 = vrot.slane %v7081, 2
      %v7086 = vsel %vm3270, %v7084, %v7085
      %v7089 = vadd.f32 %v7059, %v7086
      %v7090 = vadd.f32 %v7060, %v7085
      %v7091 = vlaneseq
      %v7092 = vshrl.u32 %v7091, 7
      %v7093 = vsub.s32 4, %v7092
      %v7094 = vrot.slane %v7044, %v7093
      %v7095 = vmul.f32 %v7042, %v7094
      %v7096 = vmul.f32 %v7043, %v7094
      %v7099 = vrot.slane %v7095, 4
      %v7100 = vrot.slane %v7096, 4
      %v7101 = vsel %vm3301, %v7099, %v7100
      %v7104 = vadd.f32 %v7074, %v7101
      %v7105 = vadd.f32 %v7075, %v7100
      %v7106 = vlaneseq
      %v7107 = vshrl.u32 %v7106, 7
      %v7108 = vsub.s32 5, %v7107
      %v7109 = vrot.slane %v7044, %v7108
      %v7110 = vmul.f32 %v7042, %v7109
      %v7111 = vmul.f32 %v7043, %v7109
      %v7114 = vrot.slane %v7110, 4
      %v7115 = vrot.slane %v7111, 4
      %v7116 = vsel %vm3301, %v7114, %v7115
      %v7119 = vadd.f32 %v7089, %v7116
      %v7120 = vadd.f32 %v7090, %v7115
      %v7123 = vrot.slane %v7119, 1
      %v7124 = vrot.slane %v7120, 1
      %v7125 = vsel %vm3721, %v7123, %v7124
      %v7128 = vadd.f32 %v7104, %v7125
      %v7129 = vadd.f32 %v7105, %v7124
      %s7130 = scalar_lea.vmem %s325, 112
      %7131 = vst [vmem:[%s7130] sm:$0xff] %v7128
      %7132 = vst [vmem:[%s7130 + $0x8] sm:$0x1] %v7129
      %v7133 = vld [vmem:[#allocation2 + $0x80] sm:$0xff]
      %v7134 = vld [vmem:[#allocation2 + $0x88] sm:$0x3f]
      %v7135 = vld [vmem:[#allocation3] sm:$0x3f]
      %v7136 = vlaneseq
      %v7137 = vshrl.u32 %v7136, 7
      %v7138 = vsub.s32 0, %v7137
      %v7139 = vrot.slane %v7135, %v7138
      %v7140 = vmul.f32 %v7133, %v7139
      %v7141 = vmul.f32 %v7134, %v7139
      %v7142 = vadd.f32 %v7140, 0.0
      %v7143 = vadd.f32 %v7141, 0.0
      %v7144 = vlaneseq
      %v7145 = vshrl.u32 %v7144, 7
      %v7146 = vsub.s32 1, %v7145
      %v7147 = vrot.slane %v7135, %v7146
      %v7148 = vmul.f32 %v7133, %v7147
      %v7149 = vmul.f32 %v7134, %v7147
      %v7150 = vadd.f32 %v7148, 0.0
      %v7151 = vadd.f32 %v7149, 0.0
      %v7152 = vlaneseq
      %v7153 = vshrl.u32 %v7152, 7
      %v7154 = vsub.s32 2, %v7153
      %v7155 = vrot.slane %v7135, %v7154
      %v7156 = vmul.f32 %v7133, %v7155
      %v7157 = vmul.f32 %v7134, %v7155
      %v7160 = vrot.slane %v7156, 2
      %v7161 = vrot.slane %v7157, 2
      %v7162 = vsel %vm3270, %v7160, %v7161
      %v7165 = vadd.f32 %v7142, %v7162
      %v7166 = vadd.f32 %v7143, %v7161
      %v7167 = vlaneseq
      %v7168 = vshrl.u32 %v7167, 7
      %v7169 = vsub.s32 3, %v7168
      %v7170 = vrot.slane %v7135, %v7169
      %v7171 = vmul.f32 %v7133, %v7170
      %v7172 = vmul.f32 %v7134, %v7170
      %v7175 = vrot.slane %v7171, 2
      %v7176 = vrot.slane %v7172, 2
      %v7177 = vsel %vm3270, %v7175, %v7176
      %v7180 = vadd.f32 %v7150, %v7177
      %v7181 = vadd.f32 %v7151, %v7176
      %v7182 = vlaneseq
      %v7183 = vshrl.u32 %v7182, 7
      %v7184 = vsub.s32 4, %v7183
      %v7185 = vrot.slane %v7135, %v7184
      %v7186 = vmul.f32 %v7133, %v7185
      %v7187 = vmul.f32 %v7134, %v7185
      %v7190 = vrot.slane %v7186, 4
      %v7191 = vrot.slane %v7187, 4
      %v7192 = vsel %vm3301, %v7190, %v7191
      %v7195 = vadd.f32 %v7165, %v7192
      %v7196 = vadd.f32 %v7166, %v7191
      %v7197 = vlaneseq
      %v7198 = vshrl.u32 %v7197, 7
      %v7199 = vsub.s32 5, %v7198
      %v7200 = vrot.slane %v7135, %v7199
      %v7201 = vmul.f32 %v7133, %v7200
      %v7202 = vmul.f32 %v7134, %v7200
      %v7205 = vrot.slane %v7201, 4
      %v7206 = vrot.slane %v7202, 4
      %v7207 = vsel %vm3301, %v7205, %v7206
      %v7210 = vadd.f32 %v7180, %v7207
      %v7211 = vadd.f32 %v7181, %v7206
      %v7212 = vld [vmem:[#allocation2 + $0x90] sm:$0xff]
      %v7213 = vld [vmem:[#allocation2 + $0x98] sm:$0x3f]
      %v7214 = vld [vmem:[#allocation3 + $0x10] sm:$0x3f]
      %v7215 = vlaneseq
      %v7216 = vshrl.u32 %v7215, 7
      %v7217 = vsub.s32 0, %v7216
      %v7218 = vrot.slane %v7214, %v7217
      %v7219 = vmul.f32 %v7212, %v7218
      %v7220 = vmul.f32 %v7213, %v7218
      %v7221 = vadd.f32 %v7195, %v7219
      %v7222 = vadd.f32 %v7196, %v7220
      %v7223 = vlaneseq
      %v7224 = vshrl.u32 %v7223, 7
      %v7225 = vsub.s32 1, %v7224
      %v7226 = vrot.slane %v7214, %v7225
      %v7227 = vmul.f32 %v7212, %v7226
      %v7228 = vmul.f32 %v7213, %v7226
      %v7229 = vadd.f32 %v7210, %v7227
      %v7230 = vadd.f32 %v7211, %v7228
      %v7231 = vlaneseq
      %v7232 = vshrl.u32 %v7231, 7
      %v7233 = vsub.s32 2, %v7232
      %v7234 = vrot.slane %v7214, %v7233
      %v7235 = vmul.f32 %v7212, %v7234
      %v7236 = vmul.f32 %v7213, %v7234
      %v7239 = vrot.slane %v7235, 2
      %v7240 = vrot.slane %v7236, 2
      %v7241 = vsel %vm3270, %v7239, %v7240
      %v7244 = vadd.f32 %v7221, %v7241
      %v7245 = vadd.f32 %v7222, %v7240
      %v7246 = vlaneseq
      %v7247 = vshrl.u32 %v7246, 7
      %v7248 = vsub.s32 3, %v7247
      %v7249 = vrot.slane %v7214, %v7248
      %v7250 = vmul.f32 %v7212, %v7249
      %v7251 = vmul.f32 %v7213, %v7249
      %v7254 = vrot.slane %v7250, 2
      %v7255 = vrot.slane %v7251, 2
      %v7256 = vsel %vm3270, %v7254, %v7255
      %v7259 = vadd.f32 %v7229, %v7256
      %v7260 = vadd.f32 %v7230, %v7255
      %v7261 = vlaneseq
      %v7262 = vshrl.u32 %v7261, 7
      %v7263 = vsub.s32 4, %v7262
      %v7264 = vrot.slane %v7214, %v7263
      %v7265 = vmul.f32 %v7212, %v7264
      %v7266 = vmul.f32 %v7213, %v7264
      %v7269 = vrot.slane %v7265, 4
      %v7270 = vrot.slane %v7266, 4
      %v7271 = vsel %vm3301, %v7269, %v7270
      %v7274 = vadd.f32 %v7244, %v7271
      %v7275 = vadd.f32 %v7245, %v7270
      %v7276 = vlaneseq
      %v7277 = vshrl.u32 %v7276, 7
      %v7278 = vsub.s32 5, %v7277
      %v7279 = vrot.slane %v7214, %v7278
      %v7280 = vmul.f32 %v7212, %v7279
      %v7281 = vmul.f32 %v7213, %v7279
      %v7284 = vrot.slane %v7280, 4
      %v7285 = vrot.slane %v7281, 4
      %v7286 = vsel %vm3301, %v7284, %v7285
      %v7289 = vadd.f32 %v7259, %v7286
      %v7290 = vadd.f32 %v7260, %v7285
      %v7291 = vld [vmem:[#allocation2 + $0xa0] sm:$0xff]
      %v7292 = vld [vmem:[#allocation2 + $0xa8] sm:$0x3f]
      %v7293 = vld [vmem:[#allocation3 + $0x20] sm:$0x3f]
      %v7294 = vlaneseq
      %v7295 = vshrl.u32 %v7294, 7
      %v7296 = vsub.s32 0, %v7295
      %v7297 = vrot.slane %v7293, %v7296
      %v7298 = vmul.f32 %v7291, %v7297
      %v7299 = vmul.f32 %v7292, %v7297
      %v7300 = vadd.f32 %v7274, %v7298
      %v7301 = vadd.f32 %v7275, %v7299
      %v7302 = vlaneseq
      %v7303 = vshrl.u32 %v7302, 7
      %v7304 = vsub.s32 1, %v7303
      %v7305 = vrot.slane %v7293, %v7304
      %v7306 = vmul.f32 %v7291, %v7305
      %v7307 = vmul.f32 %v7292, %v7305
      %v7308 = vadd.f32 %v7289, %v7306
      %v7309 = vadd.f32 %v7290, %v7307
      %v7310 = vlaneseq
      %v7311 = vshrl.u32 %v7310, 7
      %v7312 = vsub.s32 2, %v7311
      %v7313 = vrot.slane %v7293, %v7312
      %v7314 = vmul.f32 %v7291, %v7313
      %v7315 = vmul.f32 %v7292, %v7313
      %v7318 = vrot.slane %v7314, 2
      %v7319 = vrot.slane %v7315, 2
      %v7320 = vsel %vm3270, %v7318, %v7319
      %v7323 = vadd.f32 %v7300, %v7320
      %v7324 = vadd.f32 %v7301, %v7319
      %v7325 = vlaneseq
      %v7326 = vshrl.u32 %v7325, 7
      %v7327 = vsub.s32 3, %v7326
      %v7328 = vrot.slane %v7293, %v7327
      %v7329 = vmul.f32 %v7291, %v7328
      %v7330 = vmul.f32 %v7292, %v7328
      %v7333 = vrot.slane %v7329, 2
      %v7334 = vrot.slane %v7330, 2
      %v7335 = vsel %vm3270, %v7333, %v7334
      %v7338 = vadd.f32 %v7308, %v7335
      %v7339 = vadd.f32 %v7309, %v7334
      %v7340 = vlaneseq
      %v7341 = vshrl.u32 %v7340, 7
      %v7342 = vsub.s32 4, %v7341
      %v7343 = vrot.slane %v7293, %v7342
      %v7344 = vmul.f32 %v7291, %v7343
      %v7345 = vmul.f32 %v7292, %v7343
      %v7348 = vrot.slane %v7344, 4
      %v7349 = vrot.slane %v7345, 4
      %v7350 = vsel %vm3301, %v7348, %v7349
      %v7353 = vadd.f32 %v7323, %v7350
      %v7354 = vadd.f32 %v7324, %v7349
      %v7355 = vlaneseq
      %v7356 = vshrl.u32 %v7355, 7
      %v7357 = vsub.s32 5, %v7356
      %v7358 = vrot.slane %v7293, %v7357
      %v7359 = vmul.f32 %v7291, %v7358
      %v7360 = vmul.f32 %v7292, %v7358
      %v7363 = vrot.slane %v7359, 4
      %v7364 = vrot.slane %v7360, 4
      %v7365 = vsel %vm3301, %v7363, %v7364
      %v7368 = vadd.f32 %v7338, %v7365
      %v7369 = vadd.f32 %v7339, %v7364
      %v7370 = vld [vmem:[#allocation2 + $0xb0] sm:$0xff]
      %v7371 = vld [vmem:[#allocation2 + $0xb8] sm:$0x3f]
      %v7372 = vld [vmem:[#allocation3 + $0x30] sm:$0x3f]
      %v7373 = vlaneseq
      %v7374 = vshrl.u32 %v7373, 7
      %v7375 = vsub.s32 0, %v7374
      %v7376 = vrot.slane %v7372, %v7375
      %v7377 = vmul.f32 %v7370, %v7376
      %v7378 = vmul.f32 %v7371, %v7376
      %v7379 = vadd.f32 %v7353, %v7377
      %v7380 = vadd.f32 %v7354, %v7378
      %v7381 = vlaneseq
      %v7382 = vshrl.u32 %v7381, 7
      %v7383 = vsub.s32 1, %v7382
      %v7384 = vrot.slane %v7372, %v7383
      %v7385 = vmul.f32 %v7370, %v7384
      %v7386 = vmul.f32 %v7371, %v7384
      %v7387 = vadd.f32 %v7368, %v7385
      %v7388 = vadd.f32 %v7369, %v7386
      %v7389 = vlaneseq
      %v7390 = vshrl.u32 %v7389, 7
      %v7391 = vsub.s32 2, %v7390
      %v7392 = vrot.slane %v7372, %v7391
      %v7393 = vmul.f32 %v7370, %v7392
      %v7394 = vmul.f32 %v7371, %v7392
      %v7397 = vrot.slane %v7393, 2
      %v7398 = vrot.slane %v7394, 2
      %v7399 = vsel %vm3270, %v7397, %v7398
      %v7402 = vadd.f32 %v7379, %v7399
      %v7403 = vadd.f32 %v7380, %v7398
      %v7404 = vlaneseq
      %v7405 = vshrl.u32 %v7404, 7
      %v7406 = vsub.s32 3, %v7405
      %v7407 = vrot.slane %v7372, %v7406
      %v7408 = vmul.f32 %v7370, %v7407
      %v7409 = vmul.f32 %v7371, %v7407
      %v7412 = vrot.slane %v7408, 2
      %v7413 = vrot.slane %v7409, 2
      %v7414 = vsel %vm3270, %v7412, %v7413
      %v7417 = vadd.f32 %v7387, %v7414
      %v7418 = vadd.f32 %v7388, %v7413
      %v7419 = vlaneseq
      %v7420 = vshrl.u32 %v7419, 7
      %v7421 = vsub.s32 4, %v7420
      %v7422 = vrot.slane %v7372, %v7421
      %v7423 = vmul.f32 %v7370, %v7422
      %v7424 = vmul.f32 %v7371, %v7422
      %v7427 = vrot.slane %v7423, 4
      %v7428 = vrot.slane %v7424, 4
      %v7429 = vsel %vm3301, %v7427, %v7428
      %v7432 = vadd.f32 %v7402, %v7429
      %v7433 = vadd.f32 %v7403, %v7428
      %v7434 = vlaneseq
      %v7435 = vshrl.u32 %v7434, 7
      %v7436 = vsub.s32 5, %v7435
      %v7437 = vrot.slane %v7372, %v7436
      %v7438 = vmul.f32 %v7370, %v7437
      %v7439 = vmul.f32 %v7371, %v7437
      %v7442 = vrot.slane %v7438, 4
      %v7443 = vrot.slane %v7439, 4
      %v7444 = vsel %vm3301, %v7442, %v7443
      %v7447 = vadd.f32 %v7417, %v7444
      %v7448 = vadd.f32 %v7418, %v7443
      %v7449 = vld [vmem:[#allocation2 + $0xc0] sm:$0xff]
      %v7450 = vld [vmem:[#allocation2 + $0xc8] sm:$0x3f]
      %v7451 = vld [vmem:[#allocation3 + $0x40] sm:$0x3f]
      %v7452 = vlaneseq
      %v7453 = vshrl.u32 %v7452, 7
      %v7454 = vsub.s32 0, %v7453
      %v7455 = vrot.slane %v7451, %v7454
      %v7456 = vmul.f32 %v7449, %v7455
      %v7457 = vmul.f32 %v7450, %v7455
      %v7458 = vadd.f32 %v7432, %v7456
      %v7459 = vadd.f32 %v7433, %v7457
      %v7460 = vlaneseq
      %v7461 = vshrl.u32 %v7460, 7
      %v7462 = vsub.s32 1, %v7461
      %v7463 = vrot.slane %v7451, %v7462
      %v7464 = vmul.f32 %v7449, %v7463
      %v7465 = vmul.f32 %v7450, %v7463
      %v7466 = vadd.f32 %v7447, %v7464
      %v7467 = vadd.f32 %v7448, %v7465
      %v7468 = vlaneseq
      %v7469 = vshrl.u32 %v7468, 7
      %v7470 = vsub.s32 2, %v7469
      %v7471 = vrot.slane %v7451, %v7470
      %v7472 = vmul.f32 %v7449, %v7471
      %v7473 = vmul.f32 %v7450, %v7471
      %v7476 = vrot.slane %v7472, 2
      %v7477 = vrot.slane %v7473, 2
      %v7478 = vsel %vm3270, %v7476, %v7477
      %v7481 = vadd.f32 %v7458, %v7478
      %v7482 = vadd.f32 %v7459, %v7477
      %v7483 = vlaneseq
      %v7484 = vshrl.u32 %v7483, 7
      %v7485 = vsub.s32 3, %v7484
      %v7486 = vrot.slane %v7451, %v7485
      %v7487 = vmul.f32 %v7449, %v7486
      %v7488 = vmul.f32 %v7450, %v7486
      %v7491 = vrot.slane %v7487, 2
      %v7492 = vrot.slane %v7488, 2
      %v7493 = vsel %vm3270, %v7491, %v7492
      %v7496 = vadd.f32 %v7466, %v7493
      %v7497 = vadd.f32 %v7467, %v7492
      %v7498 = vlaneseq
      %v7499 = vshrl.u32 %v7498, 7
      %v7500 = vsub.s32 4, %v7499
      %v7501 = vrot.slane %v7451, %v7500
      %v7502 = vmul.f32 %v7449, %v7501
      %v7503 = vmul.f32 %v7450, %v7501
      %v7506 = vrot.slane %v7502, 4
      %v7507 = vrot.slane %v7503, 4
      %v7508 = vsel %vm3301, %v7506, %v7507
      %v7511 = vadd.f32 %v7481, %v7508
      %v7512 = vadd.f32 %v7482, %v7507
      %v7513 = vlaneseq
      %v7514 = vshrl.u32 %v7513, 7
      %v7515 = vsub.s32 5, %v7514
      %v7516 = vrot.slane %v7451, %v7515
      %v7517 = vmul.f32 %v7449, %v7516
      %v7518 = vmul.f32 %v7450, %v7516
      %v7521 = vrot.slane %v7517, 4
      %v7522 = vrot.slane %v7518, 4
      %v7523 = vsel %vm3301, %v7521, %v7522
      %v7526 = vadd.f32 %v7496, %v7523
      %v7527 = vadd.f32 %v7497, %v7522
      %v7528 = vld [vmem:[#allocation2 + $0xd0] sm:$0xff]
      %v7529 = vld [vmem:[#allocation2 + $0xd8] sm:$0x3f]
      %v7530 = vld [vmem:[#allocation3 + $0x50] sm:$0x3f]
      %v7531 = vlaneseq
      %v7532 = vshrl.u32 %v7531, 7
      %v7533 = vsub.s32 0, %v7532
      %v7534 = vrot.slane %v7530, %v7533
      %v7535 = vmul.f32 %v7528, %v7534
      %v7536 = vmul.f32 %v7529, %v7534
      %v7537 = vadd.f32 %v7511, %v7535
      %v7538 = vadd.f32 %v7512, %v7536
      %v7539 = vlaneseq
      %v7540 = vshrl.u32 %v7539, 7
      %v7541 = vsub.s32 1, %v7540
      %v7542 = vrot.slane %v7530, %v7541
      %v7543 = vmul.f32 %v7528, %v7542
      %v7544 = vmul.f32 %v7529, %v7542
      %v7545 = vadd.f32 %v7526, %v7543
      %v7546 = vadd.f32 %v7527, %v7544
      %v7547 = vlaneseq
      %v7548 = vshrl.u32 %v7547, 7
      %v7549 = vsub.s32 2, %v7548
      %v7550 = vrot.slane %v7530, %v7549
      %v7551 = vmul.f32 %v7528, %v7550
      %v7552 = vmul.f32 %v7529, %v7550
      %v7555 = vrot.slane %v7551, 2
      %v7556 = vrot.slane %v7552, 2
      %v7557 = vsel %vm3270, %v7555, %v7556
      %v7560 = vadd.f32 %v7537, %v7557
      %v7561 = vadd.f32 %v7538, %v7556
      %v7562 = vlaneseq
      %v7563 = vshrl.u32 %v7562, 7
      %v7564 = vsub.s32 3, %v7563
      %v7565 = vrot.slane %v7530, %v7564
      %v7566 = vmul.f32 %v7528, %v7565
      %v7567 = vmul.f32 %v7529, %v7565
      %v7570 = vrot.slane %v7566, 2
      %v7571 = vrot.slane %v7567, 2
      %v7572 = vsel %vm3270, %v7570, %v7571
      %v7575 = vadd.f32 %v7545, %v7572
      %v7576 = vadd.f32 %v7546, %v7571
      %v7577 = vlaneseq
      %v7578 = vshrl.u32 %v7577, 7
      %v7579 = vsub.s32 4, %v7578
      %v7580 = vrot.slane %v7530, %v7579
      %v7581 = vmul.f32 %v7528, %v7580
      %v7582 = vmul.f32 %v7529, %v7580
      %v7585 = vrot.slane %v7581, 4
      %v7586 = vrot.slane %v7582, 4
      %v7587 = vsel %vm3301, %v7585, %v7586
      %v7590 = vadd.f32 %v7560, %v7587
      %v7591 = vadd.f32 %v7561, %v7586
      %v7592 = vlaneseq
      %v7593 = vshrl.u32 %v7592, 7
      %v7594 = vsub.s32 5, %v7593
      %v7595 = vrot.slane %v7530, %v7594
      %v7596 = vmul.f32 %v7528, %v7595
      %v7597 = vmul.f32 %v7529, %v7595
      %v7600 = vrot.slane %v7596, 4
      %v7601 = vrot.slane %v7597, 4
      %v7602 = vsel %vm3301, %v7600, %v7601
      %v7605 = vadd.f32 %v7575, %v7602
      %v7606 = vadd.f32 %v7576, %v7601
      %v7609 = vrot.slane %v7605, 1
      %v7610 = vrot.slane %v7606, 1
      %v7611 = vsel %vm3721, %v7609, %v7610
      %v7614 = vadd.f32 %v7590, %v7611
      %v7615 = vadd.f32 %v7591, %v7610
      %s7616 = scalar_lea.vmem %s325, 128
      %7617 = vst [vmem:[%s7616] sm:$0xff] %v7614
      %7618 = vst [vmem:[%s7616 + $0x8] sm:$0x1] %v7615
      %p7619 = scmp.lt.s32.totalorder %s19, 1
      %s7620 = scalar_select %p7619, %s19, 1
      %s7621 = smul.addr %s7620, 18
      %s7622 = smul.addr %s7621, 8
      %s7623 = scalar_lea.vmem %s8, %s7622
      // Predicated region
      $region53: #{siamfc_forward.1} parent=51 // pred_check
        %p7624 = pneg %p215
      $region54: #{siamfc_forward.1} parent=51 // pred_check_branch
        %7626 = sbr.rel (%p7624) target = $region56
      $region55: #{siamfc_forward.1} parent=51 // pred_region
        _
      $region56: #{siamfc_forward.1} parent=51 // pred_fallthru
        _
    $region52: #{siamfc_forward.1} parent=5 // pred_fallthru
      _
    %p7627 = scmp.le.s32.totalorder 2, %s14
    // Predicated region
    $region57: #{siamfc_forward.1} parent=5 // pred_check
      %p7628 = pneg %p7627
    $region58: #{siamfc_forward.1} parent=5 // pred_check_branch
      %7630 = sbr.rel (%p7628) target = $region60
    $region59: #{siamfc_forward.1} parent=5 // pred_region
      %s7631 = ssub.s32 %s14, 2
      // Predicated region
      $region61: #{siamfc_forward.1} parent=59 // pred_check
        %p7632 = pneg %p221
      $region62: #{siamfc_forward.1} parent=59 // pred_check_branch
        %7634 = sbr.rel (%p7632) target = $region64
      $region63: #{siamfc_forward.1} parent=59 // pred_region
        %p7635 = scmp.lt.s32.totalorder %s20, 1
        %s7636 = scalar_select %p7635, %s20, 1
        %s7637 = smul.addr %s7636, 18
        %s7638 = smul.addr %s7637, 8
        %s7639 = scalar_lea.vmem %s8, %s7638
      $region64: #{siamfc_forward.1} parent=59 // pred_fallthru
        _
    $region60: #{siamfc_forward.1} parent=5 // pred_fallthru
      _
  $region6: #{siamfc_forward.1} parent=0 // loop_footer
    %s18 = sadd.s32 1, %s14
  $region7: #{siamfc_forward.1} parent=0 // loop_footer_branch
    %13 = sbr.rel target = $region3
  $region8: #{siamfc_forward.1} parent=0 // loop_exit
    _

</llo_original>
